<compile_context>
chip_gen: v7x
topology: tpu7x:2x2x1
jax: 0.10.0
libtpu: 0.0.40
codegen_flags: <defaults>
</compile_context>

<pallas_src>
import functools

import numpy as np
import jax
import jax.numpy as jnp
from jax.experimental import pallas as pl
from jax.experimental.pallas import tpu as pltpu

_VMEM_LIMIT = 32 * 1024 * 1024   # < v7x 64 MiB physical; demand here < ~12 MiB


# -----------------------------------------------------------------------------
# In-kernel helpers (traced values; all shapes / offsets are static Python ints)
# -----------------------------------------------------------------------------
def _shift2d(z, dh, dw, H, W, C):
    """out[h, w, :] = z[h + dh, w + dw, :], zero where out of range."""
    if dh > 0:
        z = jnp.concatenate([z[dh:, :, :], jnp.zeros((dh, W, C), z.dtype)], axis=0)
    elif dh < 0:
        z = jnp.concatenate([jnp.zeros((-dh, W, C), z.dtype), z[:H + dh, :, :]], axis=0)
    if dw > 0:
        z = jnp.concatenate([z[:, dw:, :], jnp.zeros((H, dw, C), z.dtype)], axis=1)
    elif dw < 0:
        z = jnp.concatenate([jnp.zeros((H, -dw, C), z.dtype), z[:, :W + dw, :]], axis=1)
    return z


def _conv3x3_from_taps(z, col_off, dil, H, W, C):
    """'same'-padded 3x3 dilated conv assembled from per-tap matmul results.

    z: (H*W, >= col_off + 9*C); columns [col_off + t*C, col_off + (t+1)*C)
    hold x @ W[kh, kw] for tap t = kh*3 + kw.  With padding == dilation,
      y[h, w] = sum_t z_t[h + (kh-1)*dil, w + (kw-1)*dil]   (zero if OOB)
    so we shift the small (H, W, C) per-tap outputs instead of shifting the
    wide-channel input.
    """
    acc = jnp.zeros((H, W, C), jnp.float32)
    for kh in range(3):
        for kw in range(3):
            dh, dw = (kh - 1) * dil, (kw - 1) * dil
            if dh <= -H or dh >= H or dw <= -W or dw >= W:
                continue
            t = kh * 3 + kw
            zt = z[:, col_off + t * C:col_off + (t + 1) * C].reshape(H, W, C)
            acc = acc + _shift2d(zt, dh, dw, H, W, C)
    return acc


# -----------------------------------------------------------------------------
# Pallas kernels
# -----------------------------------------------------------------------------
def _aspp_kernel(x_ref, wbig_ref, wf_ref, b_ref, o_ref, *, H, W, C):
    """Fused MyASPP for one sample.

    x_ref:    (1, H, W, Cin) f32
    wbig_ref: (Cin, >=29*C) bf16   columns = [conv1 | conv2 taps | conv3 taps |
                                              conv4 taps | conv5] (+ zero pad)
    wf_ref:   (5*C, 9*C) bf16      fuse-conv taps, packed
    b_ref:    (6, C) f32           [b1, b2, b3, b4, b5, b_fuse]
    o_ref:    (1, H, W, C)
    """
    Cin = x_ref.shape[-1]
    HW = H * W
    xf = x_ref[0].reshape(HW, Cin).astype(jnp.bfloat16)
    # One lane-dense MXU matmul covers every branch and every tap.
    z = jnp.dot(xf, wbig_ref[...], preferred_element_type=jnp.float32)

    def bias(i):
        return b_ref[i:i + 1, :].reshape(1, 1, C)

    # conv1: 1x1
    y1 = jnp.maximum(z[:, 0:C].reshape(H, W, C) + bias(0), 0.0)
    # conv2/3/4: 3x3, dilation 2 / 5 / 7, padding == dilation
    branches = []
    for i, (off, dil) in enumerate(((C, 2), (10 * C, 5), (19 * C, 7))):
        acc = _conv3x3_from_taps(z, off, dil, H, W, C)
        branches.append(jnp.maximum(acc + bias(i + 1), 0.0))
    # conv5: GAP + 1x1 conv.  The mean and the (linear) matmul commute, so it
    # is the row-mean of the conv5 column block; the bilinear upsample of a
    # 1x1 map back to HxW is an exact broadcast.
    p5 = jnp.mean(z[:, 28 * C:29 * C], axis=0, keepdims=True)        # (1, C)
    y5 = jnp.maximum(p5.reshape(1, 1, C) + bias(4), 0.0)
    y5 = jnp.broadcast_to(y5, (H, W, C))

    cat = jnp.concatenate([y1, branches[0], branches[1], branches[2], y5],
                          axis=-1)                                    # (H, W, 5C)
    zf = jnp.dot(cat.reshape(HW, 5 * C).astype(jnp.bfloat16), wf_ref[...],
                 preferred_element_type=jnp.float32)                  # (HW, 9C)
    yf = _conv3x3_from_taps(zf, 0, 1, H, W, C)
    o_ref[...] = jnp.maximum(yf + bias(5), 0.0).reshape(1, H, W, C).astype(o_ref.dtype)


def _down_conv_kernel(x_ref, w_ref, b_ref, o_ref, *, H, W, C):
    """3x3 / pad=1 ConvBNReLU (c1..c4_down) for one sample, taps packed on lanes.

    x_ref: (1, H, W, Cin); w_ref: (Cin, 9*C) bf16; b_ref: (1, C); o_ref: (1, H, W, C).
    """
    Cin = x_ref.shape[-1]
    HW = H * W
    xf = x_ref[0].reshape(HW, Cin).astype(jnp.bfloat16)
    z = jnp.dot(xf, w_ref[...], preferred_element_type=jnp.float32)   # (HW, 9C)
    acc = _conv3x3_from_taps(z, 0, 1, H, W, C)
    y = jnp.maximum(acc + b_ref[0:1, :].reshape(1, 1, C), 0.0)
    o_ref[...] = y.reshape(1, H, W, C).astype(o_ref.dtype)


# -----------------------------------------------------------------------------
# Weight packing + pallas_call wrappers
# -----------------------------------------------------------------------------
def _pack_taps(w):
    """(KH, KW, Cin, Cout) -> (Cin, KH*KW*Cout), tap-major column blocks."""
    KH, KW, Cin, Cout = w.shape
    return jnp.transpose(w.reshape(KH * KW, Cin, Cout), (1, 0, 2)).reshape(
        Cin, KH * KW * Cout)


def _pack_aspp_params(p):
    (w1, b1), (w2, b2), (w3, b3) = p['conv1'], p['conv2'], p['conv3']
    (w4, b4), (w5, b5), (wf, bf) = p['conv4'], p['conv5'], p['fuse']
    Cin, C = w1.shape[2], w1.shape[3]
    w_big = jnp.concatenate(
        [w1.reshape(Cin, C), _pack_taps(w2), _pack_taps(w3), _pack_taps(w4),
         w5.reshape(Cin, C)], axis=1)                       # (Cin, 29*C)
    # Zero-pad the output-column dim to a multiple of 256 so the RHS matches
    # the native MXU width on v6e/v7x (and a multiple of 128 on v5e).
    pad = (-w_big.shape[1]) % 256
    w_big = jnp.pad(w_big, ((0, 0), (0, pad))).astype(jnp.bfloat16)
    w_fuse = _pack_taps(wf).astype(jnp.bfloat16)            # (5*C, 9*C)
    bias = jnp.stack([b1, b2, b3, b4, b5, bf], axis=0)      # (6, C) f32
    return w_big, w_fuse, bias


def my_aspp(x_nhwc, p):
    """Whole MyASPP block as a single pallas_call (grid over batch)."""
    w_big, w_fuse, bias = _pack_aspp_params(p)
    N, H, W, Cin = x_nhwc.shape
    C = bias.shape[-1]
    kernel = functools.partial(_aspp_kernel, H=H, W=W, C=C)
    return pl.pallas_call(
        kernel,
        out_shape=jax.ShapeDtypeStruct((N, H, W, C), x_nhwc.dtype),
        grid=(N,),
        in_specs=[
            pl.BlockSpec((1, H, W, Cin), lambda n: (n, 0, 0, 0)),
            pl.BlockSpec(w_big.shape, lambda n: (0, 0)),
            pl.BlockSpec(w_fuse.shape, lambda n: (0, 0)),
            pl.BlockSpec(bias.shape, lambda n: (0, 0)),
        ],
        out_specs=pl.BlockSpec((1, H, W, C), lambda n: (n, 0, 0, 0)),
        compiler_params=pltpu.CompilerParams(
            dimension_semantics=("parallel",),
            vmem_limit_bytes=_VMEM_LIMIT),
    )(x_nhwc, w_big, w_fuse, bias)


def conv3x3_bn_relu(x_nhwc, w, b):
    """3x3 / pad=1 ConvBNReLU with tap-packed, lane-dense bf16 weights."""
    N, H, W, Cin = x_nhwc.shape
    C = b.shape[-1]
    w_packed = _pack_taps(w).astype(jnp.bfloat16)           # (Cin, 9*C)
    kernel = functools.partial(_down_conv_kernel, H=H, W=W, C=C)
    return pl.pallas_call(
        kernel,
        out_shape=jax.ShapeDtypeStruct((N, H, W, C), x_nhwc.dtype),
        grid=(N,),
        in_specs=[
            pl.BlockSpec((1, H, W, Cin), lambda n: (n, 0, 0, 0)),
            pl.BlockSpec(w_packed.shape, lambda n: (0, 0)),
            pl.BlockSpec((1, C), lambda n: (0, 0)),
        ],
        out_specs=pl.BlockSpec((1, H, W, C), lambda n: (n, 0, 0, 0)),
        compiler_params=pltpu.CompilerParams(
            dimension_semantics=("parallel",),
            vmem_limit_bytes=_VMEM_LIMIT),
    )(x_nhwc, w_packed, b.reshape(1, -1))


def trans_layer(xs_nchw, params):
    assert isinstance(xs_nchw, (tuple, list)) and len(xs_nchw) == 5
    c1, c2, c3, c4, c5 = [jnp.transpose(x, (0, 2, 3, 1)) for x in xs_nchw]
    c5 = my_aspp(c5, params['c5_down'])
    c4 = conv3x3_bn_relu(c4, *params['c4_down'])
    c3 = conv3x3_bn_relu(c3, *params['c3_down'])
    c2 = conv3x3_bn_relu(c2, *params['c2_down'])
    c1 = conv3x3_bn_relu(c1, *params['c1_down'])
    return tuple(jnp.transpose(x, (0, 3, 1, 2)) for x in (c5, c4, c3, c2, c1))


# -----------------------------------------------------------------------------
# Deterministic parameter construction (conv weight + folded eval-mode BN)
# -----------------------------------------------------------------------------
# TODO(synk): BatchNorm is modeled in eval mode (running stats folded into the
# conv); train-mode batch statistics are not reproduced.
def make_conv_bn(key, cin, cout, k, eps=1e-5):
    kw, kg, kb, km, kv = jax.random.split(key, 5)
    w = jax.random.normal(kw, (k, k, cin, cout), jnp.float32) / np.sqrt(k * k * cin)
    gamma = 1.0 + 0.1 * jax.random.normal(kg, (cout,), jnp.float32)
    beta = 0.1 * jax.random.normal(kb, (cout,), jnp.float32)
    mean = 0.1 * jax.random.normal(km, (cout,), jnp.float32)
    var = 1.0 + 0.5 * jax.random.uniform(kv, (cout,), jnp.float32)
    scale = gamma / jnp.sqrt(var + eps)
    return w * scale[None, None, None, :], beta - mean * scale


def make_translayer_params(key, out_c):
    ks = jax.random.split(key, 10)
    return {
        'c5_down': {
            'conv1': make_conv_bn(ks[0], 2048, out_c, 1),
            'conv2': make_conv_bn(ks[1], 2048, out_c, 3),
            'conv3': make_conv_bn(ks[2], 2048, out_c, 3),
            'conv4': make_conv_bn(ks[3], 2048, out_c, 3),
            'conv5': make_conv_bn(ks[4], 2048, out_c, 1),
            'fuse': make_conv_bn(ks[5], 5 * out_c, out_c, 3),
        },
        'c4_down': make_conv_bn(ks[6], 1024, out_c, 3),
        'c3_down': make_conv_bn(ks[7], 512, out_c, 3),
        'c2_down': make_conv_bn(ks[8], 256, out_c, 3),
        'c1_down': make_conv_bn(ks[9], 64, out_c, 3),
    }


# -----------------------------------------------------------------------------
# Pure-JAX reference (correctness check only; f32, HIGHEST precision)
# -----------------------------------------------------------------------------
def _ref_conv(x, w, b, dilation, padding):
    y = jax.lax.conv_general_dilated(
        x, w, window_strides=(1, 1),
        padding=[(padding, padding), (padding, padding)],
        rhs_dilation=(dilation, dilation),
        dimension_numbers=('NHWC', 'HWIO', 'NHWC'),
        precision=jax.lax.Precision.HIGHEST)
    return jnp.maximum(y + b.reshape(1, 1, 1, -1), 0.0)


def _ref_aspp(x, p):
    N, H, W, _ = x.shape
    c1 = _ref_conv(x, *p['conv1'], 1, 0)
    c2 = _ref_conv(x, *p['conv2'], 2, 2)
    c3 = _ref_conv(x, *p['conv3'], 5, 5)
    c4 = _ref_conv(x, *p['conv4'], 7, 7)
    pooled = jnp.mean(x, axis=(1, 2), keepdims=True)
    g = _ref_conv(pooled, *p['conv5'], 1, 0)
    c5 = jnp.broadcast_to(g, (N, H, W, g.shape[-1]))
    cat = jnp.concatenate([c1, c2, c3, c4, c5], axis=-1)
    return _ref_conv(cat, *p['fuse'], 1, 1)


def _ref_trans_layer(xs_nchw, params):
    c1, c2, c3, c4, c5 = [jnp.transpose(x, (0, 2, 3, 1)) for x in xs_nchw]
    c5 = _ref_aspp(c5, params['c5_down'])
    c4 = _ref_conv(c4, *params['c4_down'], 1, 1)
    c3 = _ref_conv(c3, *params['c3_down'], 1, 1)
    c2 = _ref_conv(c2, *params['c2_down'], 1, 1)
    c1 = _ref_conv(c1, *params['c1_down'], 1, 1)
    return tuple(jnp.transpose(x, (0, 3, 1, 2)) for x in (c5, c4, c3, c2, c1))


# -----------------------------------------------------------------------------
if __name__ == "__main__":
    key = jax.random.PRNGKey(0)
    k_in, k_p = jax.random.split(key)
    out_c = 32

    # NCHW inputs, channels fixed by the module (64/256/512/1024/2048).
    shapes = [(2, 64, 16, 16), (2, 256, 16, 16), (2, 512, 8, 8),
              (2, 1024, 8, 8), (2, 2048, 8, 8)]
    ks = jax.random.split(k_in, 5)
    xs = [jax.random.normal(k, s, jnp.float32) for k, s in zip(ks, shapes)]

    params = make_translayer_params(k_p, out_c)

    outs = trans_layer(xs, params)
    outs = jax.block_until_ready(outs)

    refs = _ref_trans_layer(xs, params)
    # Tolerance covers the bfloat16 weight/activation cast (f32 accumulation).
    for o, r in zip(outs, refs):
        assert o.shape == r.shape and o.dtype == r.dtype
        np.testing.assert_allclose(np.asarray(o), np.asarray(r),
                                   rtol=5e-2, atol=5e-2)

    print("KERNEL_OK")
</pallas_src>

<mosaic_0001>
module attributes {stable_mosaic.version = 11 : i64} {
  func.func @_aspp_kernel(%arg0: i32, %arg1: memref<1x8x8x2048xf32, #tpu.memory_space<vmem>>, %arg2: memref<2048x1024xbf16, #tpu.memory_space<vmem>>, %arg3: memref<160x288xbf16, #tpu.memory_space<vmem>>, %arg4: memref<6x32xf32, #tpu.memory_space<vmem>>, %arg5: memref<1x8x8x32xf32, #tpu.memory_space<vmem>>) attributes {dimension_semantics = [#tpu.dimension_semantics<parallel>], iteration_bounds = array<i64: 2>, scalar_prefetch = 0 : i64, scratch_operands = 0 : i64, tpu.core_type = #tpu.core_type<tc>, window_params = [{transform_indices = @transform_0, window_bounds = array<i64: 1, 8, 8, 2048>}, {pipeline_mode = #tpu.pipeline_mode<synchronous>, transform_indices = @transform_1, window_bounds = array<i64: 2048, 1024>}, {pipeline_mode = #tpu.pipeline_mode<synchronous>, transform_indices = @transform_2, window_bounds = array<i64: 160, 288>}, {pipeline_mode = #tpu.pipeline_mode<synchronous>, transform_indices = @transform_3, window_bounds = array<i64: 6, 32>}, {transform_indices = @transform_4, window_bounds = array<i64: 1, 8, 8, 32>}]} {
    %c0 = arith.constant 0 : index
    %c0_0 = arith.constant 0 : index
    %c0_1 = arith.constant 0 : index
    %c0_2 = arith.constant 0 : index
    %0 = vector.load %arg1[%c0, %c0_0, %c0_1, %c0_2] : memref<1x8x8x2048xf32, #tpu.memory_space<vmem>>, vector<1x8x8x2048xf32>
    %1 = vector.shape_cast %0 : vector<1x8x8x2048xf32> to vector<8x8x2048xf32>
    %2 = vector.shape_cast %1 : vector<8x8x2048xf32> to vector<64x2048xf32>
    %3 = arith.truncf %2 : vector<64x2048xf32> to vector<64x2048xbf16>
    %c0_3 = arith.constant 0 : index
    %c0_4 = arith.constant 0 : index
    %4 = vector.load %arg2[%c0_3, %c0_4] : memref<2048x1024xbf16, #tpu.memory_space<vmem>>, vector<2048x1024xbf16>
    %cst = arith.constant dense<0.000000e+00> : vector<64x1024xf32>
    %5 = tpu.matmul %3, %4, %cst {dimension_numbers = #tpu.dot_dimension_numbers<[1], [0], [0], [1], [0, 0, 1, 1], [], []>} : vector<64x2048xbf16>, vector<2048x1024xbf16>, vector<64x1024xf32> -> vector<64x1024xf32>
    %6 = vector.extract_strided_slice %5 {offsets = [0, 0], sizes = [64, 32], strides = [1, 1]} : vector<64x1024xf32> to vector<64x32xf32>
    %7 = vector.shape_cast %6 : vector<64x32xf32> to vector<8x8x32xf32>
    %c0_5 = arith.constant 0 : index
    %c0_6 = arith.constant 0 : index
    %8 = vector.load %arg4[%c0_5, %c0_6] : memref<6x32xf32, #tpu.memory_space<vmem>>, vector<1x32xf32>
    %9 = vector.shape_cast %8 : vector<1x32xf32> to vector<1x1x32xf32>
    %10 = vector.broadcast %9 : vector<1x1x32xf32> to vector<8x8x32xf32>
    %11 = arith.addf %7, %10 : vector<8x8x32xf32>
    %cst_7 = arith.constant 0.000000e+00 : f32
    %12 = vector.broadcast %cst_7 : f32 to vector<8x8x32xf32>
    %13 = arith.maximumf %11, %12 : vector<8x8x32xf32>
    %cst_8 = arith.constant 0.000000e+00 : f32
    %14 = vector.broadcast %cst_8 : f32 to vector<8x8x32xf32>
    %15 = vector.extract_strided_slice %5 {offsets = [0, 32], sizes = [64, 32], strides = [1, 1]} : vector<64x1024xf32> to vector<64x32xf32>
    %16 = vector.shape_cast %15 : vector<64x32xf32> to vector<8x8x32xf32>
    %cst_9 = arith.constant 0.000000e+00 : f32
    %17 = vector.broadcast %cst_9 : f32 to vector<2x8x32xf32>
    %18 = vector.extract_strided_slice %16 {offsets = [0, 0, 0], sizes = [6, 8, 32], strides = [1, 1, 1]} : vector<8x8x32xf32> to vector<6x8x32xf32>
    %19 = tpu.concatenate %17, %18 in 0 : vector<2x8x32xf32>, vector<6x8x32xf32> -> vector<8x8x32xf32>
    %cst_10 = arith.constant 0.000000e+00 : f32
    %20 = vector.broadcast %cst_10 : f32 to vector<8x2x32xf32>
    %21 = vector.extract_strided_slice %19 {offsets = [0, 0, 0], sizes = [8, 6, 32], strides = [1, 1, 1]} : vector<8x8x32xf32> to vector<8x6x32xf32>
    %22 = tpu.concatenate %20, %21 in 1 : vector<8x2x32xf32>, vector<8x6x32xf32> -> vector<8x8x32xf32>
    %23 = arith.addf %14, %22 : vector<8x8x32xf32>
    %24 = vector.extract_strided_slice %5 {offsets = [0, 64], sizes = [64, 32], strides = [1, 1]} : vector<64x1024xf32> to vector<64x32xf32>
    %25 = vector.shape_cast %24 : vector<64x32xf32> to vector<8x8x32xf32>
    %cst_11 = arith.constant 0.000000e+00 : f32
    %26 = vector.broadcast %cst_11 : f32 to vector<2x8x32xf32>
    %27 = vector.extract_strided_slice %25 {offsets = [0, 0, 0], sizes = [6, 8, 32], strides = [1, 1, 1]} : vector<8x8x32xf32> to vector<6x8x32xf32>
    %28 = tpu.concatenate %26, %27 in 0 : vector<2x8x32xf32>, vector<6x8x32xf32> -> vector<8x8x32xf32>
    %29 = arith.addf %23, %28 : vector<8x8x32xf32>
    %30 = vector.extract_strided_slice %5 {offsets = [0, 96], sizes = [64, 32], strides = [1, 1]} : vector<64x1024xf32> to vector<64x32xf32>
    %31 = vector.shape_cast %30 : vector<64x32xf32> to vector<8x8x32xf32>
    %cst_12 = arith.constant 0.000000e+00 : f32
    %32 = vector.broadcast %cst_12 : f32 to vector<2x8x32xf32>
    %33 = vector.extract_strided_slice %31 {offsets = [0, 0, 0], sizes = [6, 8, 32], strides = [1, 1, 1]} : vector<8x8x32xf32> to vector<6x8x32xf32>
    %34 = tpu.concatenate %32, %33 in 0 : vector<2x8x32xf32>, vector<6x8x32xf32> -> vector<8x8x32xf32>
    %35 = vector.extract_strided_slice %34 {offsets = [0, 2, 0], sizes = [8, 6, 32], strides = [1, 1, 1]} : vector<8x8x32xf32> to vector<8x6x32xf32>
    %cst_13 = arith.constant 0.000000e+00 : f32
    %36 = vector.broadcast %cst_13 : f32 to vector<8x2x32xf32>
    %37 = tpu.concatenate %35, %36 in 1 : vector<8x6x32xf32>, vector<8x2x32xf32> -> vector<8x8x32xf32>
    %38 = arith.addf %29, %37 : vector<8x8x32xf32>
    %39 = vector.extract_strided_slice %5 {offsets = [0, 128], sizes = [64, 32], strides = [1, 1]} : vector<64x1024xf32> to vector<64x32xf32>
    %40 = vector.shape_cast %39 : vector<64x32xf32> to vector<8x8x32xf32>
    %cst_14 = arith.constant 0.000000e+00 : f32
    %41 = vector.broadcast %cst_14 : f32 to vector<8x2x32xf32>
    %42 = vector.extract_strided_slice %40 {offsets = [0, 0, 0], sizes = [8, 6, 32], strides = [1, 1, 1]} : vector<8x8x32xf32> to vector<8x6x32xf32>
    %43 = tpu.concatenate %41, %42 in 1 : vector<8x2x32xf32>, vector<8x6x32xf32> -> vector<8x8x32xf32>
    %44 = arith.addf %38, %43 : vector<8x8x32xf32>
    %45 = vector.extract_strided_slice %5 {offsets = [0, 160], sizes = [64, 32], strides = [1, 1]} : vector<64x1024xf32> to vector<64x32xf32>
    %46 = vector.shape_cast %45 : vector<64x32xf32> to vector<8x8x32xf32>
    %47 = arith.addf %44, %46 : vector<8x8x32xf32>
    %48 = vector.extract_strided_slice %5 {offsets = [0, 192], sizes = [64, 32], strides = [1, 1]} : vector<64x1024xf32> to vector<64x32xf32>
    %49 = vector.shape_cast %48 : vector<64x32xf32> to vector<8x8x32xf32>
    %50 = vector.extract_strided_slice %49 {offsets = [0, 2, 0], sizes = [8, 6, 32], strides = [1, 1, 1]} : vector<8x8x32xf32> to vector<8x6x32xf32>
    %cst_15 = arith.constant 0.000000e+00 : f32
    %51 = vector.broadcast %cst_15 : f32 to vector<8x2x32xf32>
    %52 = tpu.concatenate %50, %51 in 1 : vector<8x6x32xf32>, vector<8x2x32xf32> -> vector<8x8x32xf32>
    %53 = arith.addf %47, %52 : vector<8x8x32xf32>
    %54 = vector.extract_strided_slice %5 {offsets = [0, 224], sizes = [64, 32], strides = [1, 1]} : vector<64x1024xf32> to vector<64x32xf32>
    %55 = vector.shape_cast %54 : vector<64x32xf32> to vector<8x8x32xf32>
    %56 = vector.extract_strided_slice %55 {offsets = [2, 0, 0], sizes = [6, 8, 32], strides = [1, 1, 1]} : vector<8x8x32xf32> to vector<6x8x32xf32>
    %cst_16 = arith.constant 0.000000e+00 : f32
    %57 = vector.broadcast %cst_16 : f32 to vector<2x8x32xf32>
    %58 = tpu.concatenate %56, %57 in 0 : vector<6x8x32xf32>, vector<2x8x32xf32> -> vector<8x8x32xf32>
    %cst_17 = arith.constant 0.000000e+00 : f32
    %59 = vector.broadcast %cst_17 : f32 to vector<8x2x32xf32>
    %60 = vector.extract_strided_slice %58 {offsets = [0, 0, 0], sizes = [8, 6, 32], strides = [1, 1, 1]} : vector<8x8x32xf32> to vector<8x6x32xf32>
    %61 = tpu.concatenate %59, %60 in 1 : vector<8x2x32xf32>, vector<8x6x32xf32> -> vector<8x8x32xf32>
    %62 = arith.addf %53, %61 : vector<8x8x32xf32>
    %63 = vector.extract_strided_slice %5 {offsets = [0, 256], sizes = [64, 32], strides = [1, 1]} : vector<64x1024xf32> to vector<64x32xf32>
    %64 = vector.shape_cast %63 : vector<64x32xf32> to vector<8x8x32xf32>
    %65 = vector.extract_strided_slice %64 {offsets = [2, 0, 0], sizes = [6, 8, 32], strides = [1, 1, 1]} : vector<8x8x32xf32> to vector<6x8x32xf32>
    %cst_18 = arith.constant 0.000000e+00 : f32
    %66 = vector.broadcast %cst_18 : f32 to vector<2x8x32xf32>
    %67 = tpu.concatenate %65, %66 in 0 : vector<6x8x32xf32>, vector<2x8x32xf32> -> vector<8x8x32xf32>
    %68 = arith.addf %62, %67 : vector<8x8x32xf32>
    %69 = vector.extract_strided_slice %5 {offsets = [0, 288], sizes = [64, 32], strides = [1, 1]} : vector<64x1024xf32> to vector<64x32xf32>
    %70 = vector.shape_cast %69 : vector<64x32xf32> to vector<8x8x32xf32>
    %71 = vector.extract_strided_slice %70 {offsets = [2, 0, 0], sizes = [6, 8, 32], strides = [1, 1, 1]} : vector<8x8x32xf32> to vector<6x8x32xf32>
    %cst_19 = arith.constant 0.000000e+00 : f32
    %72 = vector.broadcast %cst_19 : f32 to vector<2x8x32xf32>
    %73 = tpu.concatenate %71, %72 in 0 : vector<6x8x32xf32>, vector<2x8x32xf32> -> vector<8x8x32xf32>
    %74 = vector.extract_strided_slice %73 {offsets = [0, 2, 0], sizes = [8, 6, 32], strides = [1, 1, 1]} : vector<8x8x32xf32> to vector<8x6x32xf32>
    %cst_20 = arith.constant 0.000000e+00 : f32
    %75 = vector.broadcast %cst_20 : f32 to vector<8x2x32xf32>
    %76 = tpu.concatenate %74, %75 in 1 : vector<8x6x32xf32>, vector<8x2x32xf32> -> vector<8x8x32xf32>
    %77 = arith.addf %68, %76 : vector<8x8x32xf32>
    %c1 = arith.constant 1 : index
    %c0_21 = arith.constant 0 : index
    %78 = vector.load %arg4[%c1, %c0_21] : memref<6x32xf32, #tpu.memory_space<vmem>>, vector<1x32xf32>
    %79 = vector.shape_cast %78 : vector<1x32xf32> to vector<1x1x32xf32>
    %80 = vector.broadcast %79 : vector<1x1x32xf32> to vector<8x8x32xf32>
    %81 = arith.addf %77, %80 : vector<8x8x32xf32>
    %cst_22 = arith.constant 0.000000e+00 : f32
    %82 = vector.broadcast %cst_22 : f32 to vector<8x8x32xf32>
    %83 = arith.maximumf %81, %82 : vector<8x8x32xf32>
    %cst_23 = arith.constant 0.000000e+00 : f32
    %84 = vector.broadcast %cst_23 : f32 to vector<8x8x32xf32>
    %85 = vector.extract_strided_slice %5 {offsets = [0, 320], sizes = [64, 32], strides = [1, 1]} : vector<64x1024xf32> to vector<64x32xf32>
    %86 = vector.shape_cast %85 : vector<64x32xf32> to vector<8x8x32xf32>
    %cst_24 = arith.constant 0.000000e+00 : f32
    %87 = vector.broadcast %cst_24 : f32 to vector<5x8x32xf32>
    %88 = vector.extract_strided_slice %86 {offsets = [0, 0, 0], sizes = [3, 8, 32], strides = [1, 1, 1]} : vector<8x8x32xf32> to vector<3x8x32xf32>
    %89 = tpu.concatenate %87, %88 in 0 : vector<5x8x32xf32>, vector<3x8x32xf32> -> vector<8x8x32xf32>
    %cst_25 = arith.constant 0.000000e+00 : f32
    %90 = vector.broadcast %cst_25 : f32 to vector<8x5x32xf32>
    %91 = vector.extract_strided_slice %89 {offsets = [0, 0, 0], sizes = [8, 3, 32], strides = [1, 1, 1]} : vector<8x8x32xf32> to vector<8x3x32xf32>
    %92 = tpu.concatenate %90, %91 in 1 : vector<8x5x32xf32>, vector<8x3x32xf32> -> vector<8x8x32xf32>
    %93 = arith.addf %84, %92 : vector<8x8x32xf32>
    %94 = vector.extract_strided_slice %5 {offsets = [0, 352], sizes = [64, 32], strides = [1, 1]} : vector<64x1024xf32> to vector<64x32xf32>
    %95 = vector.shape_cast %94 : vector<64x32xf32> to vector<8x8x32xf32>
    %cst_26 = arith.constant 0.000000e+00 : f32
    %96 = vector.broadcast %cst_26 : f32 to vector<5x8x32xf32>
    %97 = vector.extract_strided_slice %95 {offsets = [0, 0, 0], sizes = [3, 8, 32], strides = [1, 1, 1]} : vector<8x8x32xf32> to vector<3x8x32xf32>
    %98 = tpu.concatenate %96, %97 in 0 : vector<5x8x32xf32>, vector<3x8x32xf32> -> vector<8x8x32xf32>
    %99 = arith.addf %93, %98 : vector<8x8x32xf32>
    %100 = vector.extract_strided_slice %5 {offsets = [0, 384], sizes = [64, 32], strides = [1, 1]} : vector<64x1024xf32> to vector<64x32xf32>
    %101 = vector.shape_cast %100 : vector<64x32xf32> to vector<8x8x32xf32>
    %cst_27 = arith.constant 0.000000e+00 : f32
    %102 = vector.broadcast %cst_27 : f32 to vector<5x8x32xf32>
    %103 = vector.extract_strided_slice %101 {offsets = [0, 0, 0], sizes = [3, 8, 32], strides = [1, 1, 1]} : vector<8x8x32xf32> to vector<3x8x32xf32>
    %104 = tpu.concatenate %102, %103 in 0 : vector<5x8x32xf32>, vector<3x8x32xf32> -> vector<8x8x32xf32>
    %105 = vector.extract_strided_slice %104 {offsets = [0, 5, 0], sizes = [8, 3, 32], strides = [1, 1, 1]} : vector<8x8x32xf32> to vector<8x3x32xf32>
    %cst_28 = arith.constant 0.000000e+00 : f32
    %106 = vector.broadcast %cst_28 : f32 to vector<8x5x32xf32>
    %107 = tpu.concatenate %105, %106 in 1 : vector<8x3x32xf32>, vector<8x5x32xf32> -> vector<8x8x32xf32>
    %108 = arith.addf %99, %107 : vector<8x8x32xf32>
    %109 = vector.extract_strided_slice %5 {offsets = [0, 416], sizes = [64, 32], strides = [1, 1]} : vector<64x1024xf32> to vector<64x32xf32>
    %110 = vector.shape_cast %109 : vector<64x32xf32> to vector<8x8x32xf32>
    %cst_29 = arith.constant 0.000000e+00 : f32
    %111 = vector.broadcast %cst_29 : f32 to vector<8x5x32xf32>
    %112 = vector.extract_strided_slice %110 {offsets = [0, 0, 0], sizes = [8, 3, 32], strides = [1, 1, 1]} : vector<8x8x32xf32> to vector<8x3x32xf32>
    %113 = tpu.concatenate %111, %112 in 1 : vector<8x5x32xf32>, vector<8x3x32xf32> -> vector<8x8x32xf32>
    %114 = arith.addf %108, %113 : vector<8x8x32xf32>
    %115 = vector.extract_strided_slice %5 {offsets = [0, 448], sizes = [64, 32], strides = [1, 1]} : vector<64x1024xf32> to vector<64x32xf32>
    %116 = vector.shape_cast %115 : vector<64x32xf32> to vector<8x8x32xf32>
    %117 = arith.addf %114, %116 : vector<8x8x32xf32>
    %118 = vector.extract_strided_slice %5 {offsets = [0, 480], sizes = [64, 32], strides = [1, 1]} : vector<64x1024xf32> to vector<64x32xf32>
    %119 = vector.shape_cast %118 : vector<64x32xf32> to vector<8x8x32xf32>
    %120 = vector.extract_strided_slice %119 {offsets = [0, 5, 0], sizes = [8, 3, 32], strides = [1, 1, 1]} : vector<8x8x32xf32> to vector<8x3x32xf32>
    %cst_30 = arith.constant 0.000000e+00 : f32
    %121 = vector.broadcast %cst_30 : f32 to vector<8x5x32xf32>
    %122 = tpu.concatenate %120, %121 in 1 : vector<8x3x32xf32>, vector<8x5x32xf32> -> vector<8x8x32xf32>
    %123 = arith.addf %117, %122 : vector<8x8x32xf32>
    %124 = vector.extract_strided_slice %5 {offsets = [0, 512], sizes = [64, 32], strides = [1, 1]} : vector<64x1024xf32> to vector<64x32xf32>
    %125 = vector.shape_cast %124 : vector<64x32xf32> to vector<8x8x32xf32>
    %126 = vector.extract_strided_slice %125 {offsets = [5, 0, 0], sizes = [3, 8, 32], strides = [1, 1, 1]} : vector<8x8x32xf32> to vector<3x8x32xf32>
    %cst_31 = arith.constant 0.000000e+00 : f32
    %127 = vector.broadcast %cst_31 : f32 to vector<5x8x32xf32>
    %128 = tpu.concatenate %126, %127 in 0 : vector<3x8x32xf32>, vector<5x8x32xf32> -> vector<8x8x32xf32>
    %cst_32 = arith.constant 0.000000e+00 : f32
    %129 = vector.broadcast %cst_32 : f32 to vector<8x5x32xf32>
    %130 = vector.extract_strided_slice %128 {offsets = [0, 0, 0], sizes = [8, 3, 32], strides = [1, 1, 1]} : vector<8x8x32xf32> to vector<8x3x32xf32>
    %131 = tpu.concatenate %129, %130 in 1 : vector<8x5x32xf32>, vector<8x3x32xf32> -> vector<8x8x32xf32>
    %132 = arith.addf %123, %131 : vector<8x8x32xf32>
    %133 = vector.extract_strided_slice %5 {offsets = [0, 544], sizes = [64, 32], strides = [1, 1]} : vector<64x1024xf32> to vector<64x32xf32>
    %134 = vector.shape_cast %133 : vector<64x32xf32> to vector<8x8x32xf32>
    %135 = vector.extract_strided_slice %134 {offsets = [5, 0, 0], sizes = [3, 8, 32], strides = [1, 1, 1]} : vector<8x8x32xf32> to vector<3x8x32xf32>
    %cst_33 = arith.constant 0.000000e+00 : f32
    %136 = vector.broadcast %cst_33 : f32 to vector<5x8x32xf32>
    %137 = tpu.concatenate %135, %136 in 0 : vector<3x8x32xf32>, vector<5x8x32xf32> -> vector<8x8x32xf32>
    %138 = arith.addf %132, %137 : vector<8x8x32xf32>
    %139 = vector.extract_strided_slice %5 {offsets = [0, 576], sizes = [64, 32], strides = [1, 1]} : vector<64x1024xf32> to vector<64x32xf32>
    %140 = vector.shape_cast %139 : vector<64x32xf32> to vector<8x8x32xf32>
    %141 = vector.extract_strided_slice %140 {offsets = [5, 0, 0], sizes = [3, 8, 32], strides = [1, 1, 1]} : vector<8x8x32xf32> to vector<3x8x32xf32>
    %cst_34 = arith.constant 0.000000e+00 : f32
    %142 = vector.broadcast %cst_34 : f32 to vector<5x8x32xf32>
    %143 = tpu.concatenate %141, %142 in 0 : vector<3x8x32xf32>, vector<5x8x32xf32> -> vector<8x8x32xf32>
    %144 = vector.extract_strided_slice %143 {offsets = [0, 5, 0], sizes = [8, 3, 32], strides = [1, 1, 1]} : vector<8x8x32xf32> to vector<8x3x32xf32>
    %cst_35 = arith.constant 0.000000e+00 : f32
    %145 = vector.broadcast %cst_35 : f32 to vector<8x5x32xf32>
    %146 = tpu.concatenate %144, %145 in 1 : vector<8x3x32xf32>, vector<8x5x32xf32> -> vector<8x8x32xf32>
    %147 = arith.addf %138, %146 : vector<8x8x32xf32>
    %c2 = arith.constant 2 : index
    %c0_36 = arith.constant 0 : index
    %148 = vector.load %arg4[%c2, %c0_36] : memref<6x32xf32, #tpu.memory_space<vmem>>, vector<1x32xf32>
    %149 = vector.shape_cast %148 : vector<1x32xf32> to vector<1x1x32xf32>
    %150 = vector.broadcast %149 : vector<1x1x32xf32> to vector<8x8x32xf32>
    %151 = arith.addf %147, %150 : vector<8x8x32xf32>
    %cst_37 = arith.constant 0.000000e+00 : f32
    %152 = vector.broadcast %cst_37 : f32 to vector<8x8x32xf32>
    %153 = arith.maximumf %151, %152 : vector<8x8x32xf32>
    %cst_38 = arith.constant 0.000000e+00 : f32
    %154 = vector.broadcast %cst_38 : f32 to vector<8x8x32xf32>
    %155 = vector.extract_strided_slice %5 {offsets = [0, 608], sizes = [64, 32], strides = [1, 1]} : vector<64x1024xf32> to vector<64x32xf32>
    %156 = vector.shape_cast %155 : vector<64x32xf32> to vector<8x8x32xf32>
    %cst_39 = arith.constant 0.000000e+00 : f32
    %157 = vector.broadcast %cst_39 : f32 to vector<7x8x32xf32>
    %158 = vector.extract_strided_slice %156 {offsets = [0, 0, 0], sizes = [1, 8, 32], strides = [1, 1, 1]} : vector<8x8x32xf32> to vector<1x8x32xf32>
    %159 = tpu.concatenate %157, %158 in 0 : vector<7x8x32xf32>, vector<1x8x32xf32> -> vector<8x8x32xf32>
    %cst_40 = arith.constant 0.000000e+00 : f32
    %160 = vector.broadcast %cst_40 : f32 to vector<8x7x32xf32>
    %161 = vector.extract_strided_slice %159 {offsets = [0, 0, 0], sizes = [8, 1, 32], strides = [1, 1, 1]} : vector<8x8x32xf32> to vector<8x1x32xf32>
    %162 = tpu.concatenate %160, %161 in 1 : vector<8x7x32xf32>, vector<8x1x32xf32> -> vector<8x8x32xf32>
    %163 = arith.addf %154, %162 : vector<8x8x32xf32>
    %164 = vector.extract_strided_slice %5 {offsets = [0, 640], sizes = [64, 32], strides = [1, 1]} : vector<64x1024xf32> to vector<64x32xf32>
    %165 = vector.shape_cast %164 : vector<64x32xf32> to vector<8x8x32xf32>
    %cst_41 = arith.constant 0.000000e+00 : f32
    %166 = vector.broadcast %cst_41 : f32 to vector<7x8x32xf32>
    %167 = vector.extract_strided_slice %165 {offsets = [0, 0, 0], sizes = [1, 8, 32], strides = [1, 1, 1]} : vector<8x8x32xf32> to vector<1x8x32xf32>
    %168 = tpu.concatenate %166, %167 in 0 : vector<7x8x32xf32>, vector<1x8x32xf32> -> vector<8x8x32xf32>
    %169 = arith.addf %163, %168 : vector<8x8x32xf32>
    %170 = vector.extract_strided_slice %5 {offsets = [0, 672], sizes = [64, 32], strides = [1, 1]} : vector<64x1024xf32> to vector<64x32xf32>
    %171 = vector.shape_cast %170 : vector<64x32xf32> to vector<8x8x32xf32>
    %cst_42 = arith.constant 0.000000e+00 : f32
    %172 = vector.broadcast %cst_42 : f32 to vector<7x8x32xf32>
    %173 = vector.extract_strided_slice %171 {offsets = [0, 0, 0], sizes = [1, 8, 32], strides = [1, 1, 1]} : vector<8x8x32xf32> to vector<1x8x32xf32>
    %174 = tpu.concatenate %172, %173 in 0 : vector<7x8x32xf32>, vector<1x8x32xf32> -> vector<8x8x32xf32>
    %175 = vector.extract_strided_slice %174 {offsets = [0, 7, 0], sizes = [8, 1, 32], strides = [1, 1, 1]} : vector<8x8x32xf32> to vector<8x1x32xf32>
    %cst_43 = arith.constant 0.000000e+00 : f32
    %176 = vector.broadcast %cst_43 : f32 to vector<8x7x32xf32>
    %177 = tpu.concatenate %175, %176 in 1 : vector<8x1x32xf32>, vector<8x7x32xf32> -> vector<8x8x32xf32>
    %178 = arith.addf %169, %177 : vector<8x8x32xf32>
    %179 = vector.extract_strided_slice %5 {offsets = [0, 704], sizes = [64, 32], strides = [1, 1]} : vector<64x1024xf32> to vector<64x32xf32>
    %180 = vector.shape_cast %179 : vector<64x32xf32> to vector<8x8x32xf32>
    %cst_44 = arith.constant 0.000000e+00 : f32
    %181 = vector.broadcast %cst_44 : f32 to vector<8x7x32xf32>
    %182 = vector.extract_strided_slice %180 {offsets = [0, 0, 0], sizes = [8, 1, 32], strides = [1, 1, 1]} : vector<8x8x32xf32> to vector<8x1x32xf32>
    %183 = tpu.concatenate %181, %182 in 1 : vector<8x7x32xf32>, vector<8x1x32xf32> -> vector<8x8x32xf32>
    %184 = arith.addf %178, %183 : vector<8x8x32xf32>
    %185 = vector.extract_strided_slice %5 {offsets = [0, 736], sizes = [64, 32], strides = [1, 1]} : vector<64x1024xf32> to vector<64x32xf32>
    %186 = vector.shape_cast %185 : vector<64x32xf32> to vector<8x8x32xf32>
    %187 = arith.addf %184, %186 : vector<8x8x32xf32>
    %188 = vector.extract_strided_slice %5 {offsets = [0, 768], sizes = [64, 32], strides = [1, 1]} : vector<64x1024xf32> to vector<64x32xf32>
    %189 = vector.shape_cast %188 : vector<64x32xf32> to vector<8x8x32xf32>
    %190 = vector.extract_strided_slice %189 {offsets = [0, 7, 0], sizes = [8, 1, 32], strides = [1, 1, 1]} : vector<8x8x32xf32> to vector<8x1x32xf32>
    %cst_45 = arith.constant 0.000000e+00 : f32
    %191 = vector.broadcast %cst_45 : f32 to vector<8x7x32xf32>
    %192 = tpu.concatenate %190, %191 in 1 : vector<8x1x32xf32>, vector<8x7x32xf32> -> vector<8x8x32xf32>
    %193 = arith.addf %187, %192 : vector<8x8x32xf32>
    %194 = vector.extract_strided_slice %5 {offsets = [0, 800], sizes = [64, 32], strides = [1, 1]} : vector<64x1024xf32> to vector<64x32xf32>
    %195 = vector.shape_cast %194 : vector<64x32xf32> to vector<8x8x32xf32>
    %196 = vector.extract_strided_slice %195 {offsets = [7, 0, 0], sizes = [1, 8, 32], strides = [1, 1, 1]} : vector<8x8x32xf32> to vector<1x8x32xf32>
    %cst_46 = arith.constant 0.000000e+00 : f32
    %197 = vector.broadcast %cst_46 : f32 to vector<7x8x32xf32>
    %198 = tpu.concatenate %196, %197 in 0 : vector<1x8x32xf32>, vector<7x8x32xf32> -> vector<8x8x32xf32>
    %cst_47 = arith.constant 0.000000e+00 : f32
    %199 = vector.broadcast %cst_47 : f32 to vector<8x7x32xf32>
    %200 = vector.extract_strided_slice %198 {offsets = [0, 0, 0], sizes = [8, 1, 32], strides = [1, 1, 1]} : vector<8x8x32xf32> to vector<8x1x32xf32>
    %201 = tpu.concatenate %199, %200 in 1 : vector<8x7x32xf32>, vector<8x1x32xf32> -> vector<8x8x32xf32>
    %202 = arith.addf %193, %201 : vector<8x8x32xf32>
    %203 = vector.extract_strided_slice %5 {offsets = [0, 832], sizes = [64, 32], strides = [1, 1]} : vector<64x1024xf32> to vector<64x32xf32>
    %204 = vector.shape_cast %203 : vector<64x32xf32> to vector<8x8x32xf32>
    %205 = vector.extract_strided_slice %204 {offsets = [7, 0, 0], sizes = [1, 8, 32], strides = [1, 1, 1]} : vector<8x8x32xf32> to vector<1x8x32xf32>
    %cst_48 = arith.constant 0.000000e+00 : f32
    %206 = vector.broadcast %cst_48 : f32 to vector<7x8x32xf32>
    %207 = tpu.concatenate %205, %206 in 0 : vector<1x8x32xf32>, vector<7x8x32xf32> -> vector<8x8x32xf32>
    %208 = arith.addf %202, %207 : vector<8x8x32xf32>
    %209 = vector.extract_strided_slice %5 {offsets = [0, 864], sizes = [64, 32], strides = [1, 1]} : vector<64x1024xf32> to vector<64x32xf32>
    %210 = vector.shape_cast %209 : vector<64x32xf32> to vector<8x8x32xf32>
    %211 = vector.extract_strided_slice %210 {offsets = [7, 0, 0], sizes = [1, 8, 32], strides = [1, 1, 1]} : vector<8x8x32xf32> to vector<1x8x32xf32>
    %cst_49 = arith.constant 0.000000e+00 : f32
    %212 = vector.broadcast %cst_49 : f32 to vector<7x8x32xf32>
    %213 = tpu.concatenate %211, %212 in 0 : vector<1x8x32xf32>, vector<7x8x32xf32> -> vector<8x8x32xf32>
    %214 = vector.extract_strided_slice %213 {offsets = [0, 7, 0], sizes = [8, 1, 32], strides = [1, 1, 1]} : vector<8x8x32xf32> to vector<8x1x32xf32>
    %cst_50 = arith.constant 0.000000e+00 : f32
    %215 = vector.broadcast %cst_50 : f32 to vector<8x7x32xf32>
    %216 = tpu.concatenate %214, %215 in 1 : vector<8x1x32xf32>, vector<8x7x32xf32> -> vector<8x8x32xf32>
    %217 = arith.addf %208, %216 : vector<8x8x32xf32>
    %c3 = arith.constant 3 : index
    %c0_51 = arith.constant 0 : index
    %218 = vector.load %arg4[%c3, %c0_51] : memref<6x32xf32, #tpu.memory_space<vmem>>, vector<1x32xf32>
    %219 = vector.shape_cast %218 : vector<1x32xf32> to vector<1x1x32xf32>
    %220 = vector.broadcast %219 : vector<1x1x32xf32> to vector<8x8x32xf32>
    %221 = arith.addf %217, %220 : vector<8x8x32xf32>
    %cst_52 = arith.constant 0.000000e+00 : f32
    %222 = vector.broadcast %cst_52 : f32 to vector<8x8x32xf32>
    %223 = arith.maximumf %221, %222 : vector<8x8x32xf32>
    %224 = vector.extract_strided_slice %5 {offsets = [0, 896], sizes = [64, 32], strides = [1, 1]} : vector<64x1024xf32> to vector<64x32xf32>
    %cst_53 = arith.constant dense<0.000000e+00> : vector<32xf32>
    %225 = vector.multi_reduction <add>, %224, %cst_53 [0] : vector<64x32xf32> to vector<32xf32>
    %226 = vector.shape_cast %225 : vector<32xf32> to vector<1x32xf32>
    %cst_54 = arith.constant 6.400000e+01 : f32
    %227 = vector.broadcast %cst_54 : f32 to vector<1x32xf32>
    %228 = arith.divf %226, %227 : vector<1x32xf32>
    %229 = vector.shape_cast %228 : vector<1x32xf32> to vector<1x1x32xf32>
    %c4 = arith.constant 4 : index
    %c0_55 = arith.constant 0 : index
    %230 = vector.load %arg4[%c4, %c0_55] : memref<6x32xf32, #tpu.memory_space<vmem>>, vector<1x32xf32>
    %231 = vector.shape_cast %230 : vector<1x32xf32> to vector<1x1x32xf32>
    %232 = arith.addf %229, %231 : vector<1x1x32xf32>
    %cst_56 = arith.constant 0.000000e+00 : f32
    %233 = vector.broadcast %cst_56 : f32 to vector<1x1x32xf32>
    %234 = arith.maximumf %232, %233 : vector<1x1x32xf32>
    %235 = vector.shape_cast %234 : vector<1x1x32xf32> to vector<1x1x32xf32>
    %236 = vector.broadcast %235 : vector<1x1x32xf32> to vector<8x8x32xf32>
    %237 = tpu.concatenate %13, %83, %153, %223, %236 in 2 : vector<8x8x32xf32>, vector<8x8x32xf32>, vector<8x8x32xf32>, vector<8x8x32xf32>, vector<8x8x32xf32> -> vector<8x8x160xf32>
    %238 = vector.shape_cast %237 : vector<8x8x160xf32> to vector<64x160xf32>
    %239 = arith.truncf %238 : vector<64x160xf32> to vector<64x160xbf16>
    %c0_57 = arith.constant 0 : index
    %c0_58 = arith.constant 0 : index
    %240 = vector.load %arg3[%c0_57, %c0_58] : memref<160x288xbf16, #tpu.memory_space<vmem>>, vector<160x288xbf16>
    %cst_59 = arith.constant dense<0.000000e+00> : vector<64x288xf32>
    %241 = tpu.matmul %239, %240, %cst_59 {dimension_numbers = #tpu.dot_dimension_numbers<[1], [0], [0], [1], [0, 0, 1, 1], [], []>} : vector<64x160xbf16>, vector<160x288xbf16>, vector<64x288xf32> -> vector<64x288xf32>
    %cst_60 = arith.constant 0.000000e+00 : f32
    %242 = vector.broadcast %cst_60 : f32 to vector<8x8x32xf32>
    %243 = vector.extract_strided_slice %241 {offsets = [0, 0], sizes = [64, 32], strides = [1, 1]} : vector<64x288xf32> to vector<64x32xf32>
    %244 = vector.shape_cast %243 : vector<64x32xf32> to vector<8x8x32xf32>
    %cst_61 = arith.constant 0.000000e+00 : f32
    %245 = vector.broadcast %cst_61 : f32 to vector<1x8x32xf32>
    %246 = vector.extract_strided_slice %244 {offsets = [0, 0, 0], sizes = [7, 8, 32], strides = [1, 1, 1]} : vector<8x8x32xf32> to vector<7x8x32xf32>
    %247 = tpu.concatenate %245, %246 in 0 : vector<1x8x32xf32>, vector<7x8x32xf32> -> vector<8x8x32xf32>
    %cst_62 = arith.constant 0.000000e+00 : f32
    %248 = vector.broadcast %cst_62 : f32 to vector<8x1x32xf32>
    %249 = vector.extract_strided_slice %247 {offsets = [0, 0, 0], sizes = [8, 7, 32], strides = [1, 1, 1]} : vector<8x8x32xf32> to vector<8x7x32xf32>
    %250 = tpu.concatenate %248, %249 in 1 : vector<8x1x32xf32>, vector<8x7x32xf32> -> vector<8x8x32xf32>
    %251 = arith.addf %242, %250 : vector<8x8x32xf32>
    %252 = vector.extract_strided_slice %241 {offsets = [0, 32], sizes = [64, 32], strides = [1, 1]} : vector<64x288xf32> to vector<64x32xf32>
    %253 = vector.shape_cast %252 : vector<64x32xf32> to vector<8x8x32xf32>
    %cst_63 = arith.constant 0.000000e+00 : f32
    %254 = vector.broadcast %cst_63 : f32 to vector<1x8x32xf32>
    %255 = vector.extract_strided_slice %253 {offsets = [0, 0, 0], sizes = [7, 8, 32], strides = [1, 1, 1]} : vector<8x8x32xf32> to vector<7x8x32xf32>
    %256 = tpu.concatenate %254, %255 in 0 : vector<1x8x32xf32>, vector<7x8x32xf32> -> vector<8x8x32xf32>
    %257 = arith.addf %251, %256 : vector<8x8x32xf32>
    %258 = vector.extract_strided_slice %241 {offsets = [0, 64], sizes = [64, 32], strides = [1, 1]} : vector<64x288xf32> to vector<64x32xf32>
    %259 = vector.shape_cast %258 : vector<64x32xf32> to vector<8x8x32xf32>
    %cst_64 = arith.constant 0.000000e+00 : f32
    %260 = vector.broadcast %cst_64 : f32 to vector<1x8x32xf32>
    %261 = vector.extract_strided_slice %259 {offsets = [0, 0, 0], sizes = [7, 8, 32], strides = [1, 1, 1]} : vector<8x8x32xf32> to vector<7x8x32xf32>
    %262 = tpu.concatenate %260, %261 in 0 : vector<1x8x32xf32>, vector<7x8x32xf32> -> vector<8x8x32xf32>
    %263 = vector.extract_strided_slice %262 {offsets = [0, 1, 0], sizes = [8, 7, 32], strides = [1, 1, 1]} : vector<8x8x32xf32> to vector<8x7x32xf32>
    %cst_65 = arith.constant 0.000000e+00 : f32
    %264 = vector.broadcast %cst_65 : f32 to vector<8x1x32xf32>
    %265 = tpu.concatenate %263, %264 in 1 : vector<8x7x32xf32>, vector<8x1x32xf32> -> vector<8x8x32xf32>
    %266 = arith.addf %257, %265 : vector<8x8x32xf32>
    %267 = vector.extract_strided_slice %241 {offsets = [0, 96], sizes = [64, 32], strides = [1, 1]} : vector<64x288xf32> to vector<64x32xf32>
    %268 = vector.shape_cast %267 : vector<64x32xf32> to vector<8x8x32xf32>
    %cst_66 = arith.constant 0.000000e+00 : f32
    %269 = vector.broadcast %cst_66 : f32 to vector<8x1x32xf32>
    %270 = vector.extract_strided_slice %268 {offsets = [0, 0, 0], sizes = [8, 7, 32], strides = [1, 1, 1]} : vector<8x8x32xf32> to vector<8x7x32xf32>
    %271 = tpu.concatenate %269, %270 in 1 : vector<8x1x32xf32>, vector<8x7x32xf32> -> vector<8x8x32xf32>
    %272 = arith.addf %266, %271 : vector<8x8x32xf32>
    %273 = vector.extract_strided_slice %241 {offsets = [0, 128], sizes = [64, 32], strides = [1, 1]} : vector<64x288xf32> to vector<64x32xf32>
    %274 = vector.shape_cast %273 : vector<64x32xf32> to vector<8x8x32xf32>
    %275 = arith.addf %272, %274 : vector<8x8x32xf32>
    %276 = vector.extract_strided_slice %241 {offsets = [0, 160], sizes = [64, 32], strides = [1, 1]} : vector<64x288xf32> to vector<64x32xf32>
    %277 = vector.shape_cast %276 : vector<64x32xf32> to vector<8x8x32xf32>
    %278 = vector.extract_strided_slice %277 {offsets = [0, 1, 0], sizes = [8, 7, 32], strides = [1, 1, 1]} : vector<8x8x32xf32> to vector<8x7x32xf32>
    %cst_67 = arith.constant 0.000000e+00 : f32
    %279 = vector.broadcast %cst_67 : f32 to vector<8x1x32xf32>
    %280 = tpu.concatenate %278, %279 in 1 : vector<8x7x32xf32>, vector<8x1x32xf32> -> vector<8x8x32xf32>
    %281 = arith.addf %275, %280 : vector<8x8x32xf32>
    %282 = vector.extract_strided_slice %241 {offsets = [0, 192], sizes = [64, 32], strides = [1, 1]} : vector<64x288xf32> to vector<64x32xf32>
    %283 = vector.shape_cast %282 : vector<64x32xf32> to vector<8x8x32xf32>
    %284 = vector.extract_strided_slice %283 {offsets = [1, 0, 0], sizes = [7, 8, 32], strides = [1, 1, 1]} : vector<8x8x32xf32> to vector<7x8x32xf32>
    %cst_68 = arith.constant 0.000000e+00 : f32
    %285 = vector.broadcast %cst_68 : f32 to vector<1x8x32xf32>
    %286 = tpu.concatenate %284, %285 in 0 : vector<7x8x32xf32>, vector<1x8x32xf32> -> vector<8x8x32xf32>
    %cst_69 = arith.constant 0.000000e+00 : f32
    %287 = vector.broadcast %cst_69 : f32 to vector<8x1x32xf32>
    %288 = vector.extract_strided_slice %286 {offsets = [0, 0, 0], sizes = [8, 7, 32], strides = [1, 1, 1]} : vector<8x8x32xf32> to vector<8x7x32xf32>
    %289 = tpu.concatenate %287, %288 in 1 : vector<8x1x32xf32>, vector<8x7x32xf32> -> vector<8x8x32xf32>
    %290 = arith.addf %281, %289 : vector<8x8x32xf32>
    %291 = vector.extract_strided_slice %241 {offsets = [0, 224], sizes = [64, 32], strides = [1, 1]} : vector<64x288xf32> to vector<64x32xf32>
    %292 = vector.shape_cast %291 : vector<64x32xf32> to vector<8x8x32xf32>
    %293 = vector.extract_strided_slice %292 {offsets = [1, 0, 0], sizes = [7, 8, 32], strides = [1, 1, 1]} : vector<8x8x32xf32> to vector<7x8x32xf32>
    %cst_70 = arith.constant 0.000000e+00 : f32
    %294 = vector.broadcast %cst_70 : f32 to vector<1x8x32xf32>
    %295 = tpu.concatenate %293, %294 in 0 : vector<7x8x32xf32>, vector<1x8x32xf32> -> vector<8x8x32xf32>
    %296 = arith.addf %290, %295 : vector<8x8x32xf32>
    %297 = vector.extract_strided_slice %241 {offsets = [0, 256], sizes = [64, 32], strides = [1, 1]} : vector<64x288xf32> to vector<64x32xf32>
    %298 = vector.shape_cast %297 : vector<64x32xf32> to vector<8x8x32xf32>
    %299 = vector.extract_strided_slice %298 {offsets = [1, 0, 0], sizes = [7, 8, 32], strides = [1, 1, 1]} : vector<8x8x32xf32> to vector<7x8x32xf32>
    %cst_71 = arith.constant 0.000000e+00 : f32
    %300 = vector.broadcast %cst_71 : f32 to vector<1x8x32xf32>
    %301 = tpu.concatenate %299, %300 in 0 : vector<7x8x32xf32>, vector<1x8x32xf32> -> vector<8x8x32xf32>
    %302 = vector.extract_strided_slice %301 {offsets = [0, 1, 0], sizes = [8, 7, 32], strides = [1, 1, 1]} : vector<8x8x32xf32> to vector<8x7x32xf32>
    %cst_72 = arith.constant 0.000000e+00 : f32
    %303 = vector.broadcast %cst_72 : f32 to vector<8x1x32xf32>
    %304 = tpu.concatenate %302, %303 in 1 : vector<8x7x32xf32>, vector<8x1x32xf32> -> vector<8x8x32xf32>
    %305 = arith.addf %296, %304 : vector<8x8x32xf32>
    %c5 = arith.constant 5 : index
    %c0_73 = arith.constant 0 : index
    %306 = vector.load %arg4[%c5, %c0_73] : memref<6x32xf32, #tpu.memory_space<vmem>>, vector<1x32xf32>
    %307 = vector.shape_cast %306 : vector<1x32xf32> to vector<1x1x32xf32>
    %308 = vector.broadcast %307 : vector<1x1x32xf32> to vector<8x8x32xf32>
    %309 = arith.addf %305, %308 : vector<8x8x32xf32>
    %cst_74 = arith.constant 0.000000e+00 : f32
    %310 = vector.broadcast %cst_74 : f32 to vector<8x8x32xf32>
    %311 = arith.maximumf %309, %310 : vector<8x8x32xf32>
    %312 = vector.shape_cast %311 : vector<8x8x32xf32> to vector<1x8x8x32xf32>
    %c0_75 = arith.constant 0 : index
    %c0_76 = arith.constant 0 : index
    %c0_77 = arith.constant 0 : index
    %c0_78 = arith.constant 0 : index
    %313 = vector.load %arg5[%c0_75, %c0_76, %c0_77, %c0_78] : memref<1x8x8x32xf32, #tpu.memory_space<vmem>>, vector<1x8x8x32xf32>
    tpu.vector_store %arg5[%c0_75, %c0_76, %c0_77, %c0_78], %312 {strides = array<i32>} : memref<1x8x8x32xf32, #tpu.memory_space<vmem>>, vector<1x8x8x32xf32>,
    return
  }
  func.func @transform_0(%arg0: i32) -> (i32, i32, i32, i32) {
    %c0_i32 = arith.constant 0 : i32
    %c0_i32_0 = arith.constant 0 : i32
    %c0_i32_1 = arith.constant 0 : i32
    %c0_i32_2 = arith.constant 0 : i32
    return %arg0, %c0_i32, %c0_i32_0, %c0_i32_1 : i32, i32, i32, i32
  }
  func.func @transform_1(%arg0: i32) -> (i32, i32) {
    %c0_i32 = arith.constant 0 : i32
    %c0_i32_0 = arith.constant 0 : i32
    %c0_i32_1 = arith.constant 0 : i32
    return %c0_i32, %c0_i32_0 : i32, i32
  }
  func.func @transform_2(%arg0: i32) -> (i32, i32) {
    %c0_i32 = arith.constant 0 : i32
    %c0_i32_0 = arith.constant 0 : i32
    %c0_i32_1 = arith.constant 0 : i32
    return %c0_i32, %c0_i32_0 : i32, i32
  }
  func.func @transform_3(%arg0: i32) -> (i32, i32) {
    %c0_i32 = arith.constant 0 : i32
    %c0_i32_0 = arith.constant 0 : i32
    %c0_i32_1 = arith.constant 0 : i32
    return %c0_i32, %c0_i32_0 : i32, i32
  }
  func.func @transform_4(%arg0: i32) -> (i32, i32, i32, i32) {
    %c0_i32 = arith.constant 0 : i32
    %c0_i32_0 = arith.constant 0 : i32
    %c0_i32_1 = arith.constant 0 : i32
    %c0_i32_2 = arith.constant 0 : i32
    return %arg0, %c0_i32, %c0_i32_0, %c0_i32_1 : i32, i32, i32, i32
  }
}

</mosaic_0001>

<llo_original>
// kernel: tpu_custom_call.1
$region0: #{tpu_custom_call.1}
  #allocation0 [shape = 'u32[]', space=smem, size = 0x4, offset = 0x4, fixed_abs, tag = 'smem constant byte address 0x4 - core index']
  #allocation1 [shape = 'u32[144,128]{1,0:T(1,128)}', space=vmem, size = 0x12000, scoped, tag = 'internal scratch']
  %s0 = inlined_call_operand.hbm [shape: f32[2,8,8,2048], index: 0, kind: input, shape index: {}]
  %s1 = inlined_call_operand.hbm [shape: bf16[2048,1024], index: 1, kind: input, shape index: {}]
  %s2 = inlined_call_operand.hbm [shape: bf16[160,288], index: 2, kind: input, shape index: {}]
  %s3 = inlined_call_operand.hbm [shape: f32[6,32], index: 3, kind: input, shape index: {}]
  %s4 = inlined_call_operand.hbm [shape: f32[2,8,8,32], index: 4, kind: output, shape index: {}]
  %s5 = sld [smem:[#allocation0]]
  $region65: #{tpu_custom_call.1} parent=0
    _
  %s7 = ssub.s32 1, %s5
  %s8 = scalar_select 0, %s7, %s5
  $region1: #{tpu_custom_call.1} parent=0
    #allocation2 [shape = 'u8[1048576]{0}', space=vmem, size = 0x100000, scoped, tag = 'input window, operand 0']
    #allocation3 [shape = 's32[2]{0}', space=sflag, size = 0x8, scoped, tag = 'scoped memory for tpu_custom_call.1']
    #allocation4 [shape = 's32[2]{0}', space=sflag, size = 0x8, scoped, tag = 'scoped memory for tpu_custom_call.1']
    #allocation5 [shape = 'u8[4194304]{0}', space=vmem, size = 0x400000, scoped, tag = 'input window, operand 1, single buffered']
    #allocation6 [shape = 's32[1]{0}', space=sflag, size = 0x4, scoped, tag = 'scoped memory for tpu_custom_call.1']
    #allocation7 [shape = 'u8[122880]{0}', space=vmem, size = 0x1e000, scoped, tag = 'input window, operand 2, single buffered']
    #allocation8 [shape = 'u8[4096]{0}', space=vmem, size = 0x1000, scoped, tag = 'input window, operand 3, single buffered']
    #allocation9 [shape = 's32[1]{0}', space=sflag, size = 0x4, scoped, tag = 'scoped memory for tpu_custom_call.1']
    #allocation10 [shape = 'u8[65536]{0}', space=vmem, size = 0x10000, scoped, tag = 'output window, operand 0']
    %9 = vsyncpa [#allocation3], 0
    %s10 = scalar_lea.sflag [#allocation3], 1
    %11 = vsyncpa %s10, 0
    %12 = vsyncpa [#allocation6], 0
    %13 = vsyncpa [#allocation9], 0
    %14 = vsyncpa [#allocation4], 0
    %s15 = scalar_lea.sflag [#allocation4], 1
    %16 = vsyncpa %s15, 0
    loop: start=0, step=1, limit=4
    $region2: #{tpu_custom_call.1} parent=1 // loop_pre_header
      _
    $region3: #{tpu_custom_call.1} parent=1 // loop_header
      %s18 = sphi 0, %s22
      %p19 = scmp.ge.s32.totalorder %s18, 4
      %s28 = sphi 0, %s30
      %s31 = sphi 0, %s28
      %s32 = sphi 0, %s31
      %s48 = sphi 0, %s32
      %s52 = sphi 0, %s52
      %s54 = sphi 0, %s52
      %s55 = sphi 0, %s54
      %s69 = sphi 0, %s55
      %s73 = sphi 0, %s73
      %s75 = sphi 0, %s73
      %s76 = sphi 0, %s75
      %s90 = sphi 0, %s76
      %s94 = sphi 0, %s94
      %s96 = sphi 0, %s94
      %s97 = sphi 0, %s96
      %s111 = sphi 0, %s97
      %s117 = sphi 0, %s119
      %s120 = sphi 0, %s117
      %s121 = sphi 0, %s120
      %s137 = sphi 0, %s121
    $region4: #{tpu_custom_call.1} parent=1 // loop_header_branch
      %21 = sbr.rel (%p19) target = $region8
    $region5: #{tpu_custom_call.1} parent=1 // loop_body
      %s23 = ssub.s32 %s18, 1
      %s24 = ssub.s32 %s18, 2
      %s25 = sadd.s32 %s18, 1
      %s26 = ssub.s32 %s18, %s25
      %p27 = scmp.eq.s32.totalorder %s26, 0
      %s29 = sadd.s32 %s28, 1
      %s30 = scalar_select %p27, %s28, %s29
      %p33 = pneg %p27
      %p34 = scmp.eq.s32.totalorder %s18, 1
      %p35 = por %p33, %p34
      %p36 = scmp.ne.s32.totalorder %s28, %s31
      %p37 = scmp.eq.s32.totalorder %s18, 0
      %p38 = por %p36, %p37
      %p39 = scmp.ne.s32.totalorder %s28, %s31
      %p40 = scmp.eq.s32.totalorder %s23, 1
      %p41 = por %p39, %p40
      %p42 = scmp.ne.s32.totalorder %s31, %s32
      %p43 = scmp.eq.s32.totalorder %s23, 0
      %p44 = por %p42, %p43
      %p45 = scmp.ne.s32.totalorder %s31, %s32
      %p46 = scmp.eq.s32.totalorder %s24, 1
      %p47 = por %p45, %p46
      %p49 = scmp.ne.s32.totalorder %s32, %s48
      %p50 = scmp.eq.s32.totalorder %s24, 0
      %p51 = por %p49, %p50
      %s53 = sadd.s32 %s52, 1
      %p56 = scmp.eq.s32.totalorder %s18, 1
      %p57 = scmp.ne.s32.totalorder %s52, %s54
      %p58 = scmp.eq.s32.totalorder %s18, 0
      %p59 = por %p57, %p58
      %p60 = scmp.ne.s32.totalorder %s52, %s54
      %p61 = scmp.eq.s32.totalorder %s23, 1
      %p62 = por %p60, %p61
      %p63 = scmp.ne.s32.totalorder %s54, %s55
      %p64 = scmp.eq.s32.totalorder %s23, 0
      %p65 = por %p63, %p64
      %p66 = scmp.ne.s32.totalorder %s54, %s55
      %p67 = scmp.eq.s32.totalorder %s24, 1
      %p68 = por %p66, %p67
      %p70 = scmp.ne.s32.totalorder %s55, %s69
      %p71 = scmp.eq.s32.totalorder %s24, 0
      %p72 = por %p70, %p71
      %s74 = sadd.s32 %s73, 1
      %p77 = scmp.eq.s32.totalorder %s18, 1
      %p78 = scmp.ne.s32.totalorder %s73, %s75
      %p79 = scmp.eq.s32.totalorder %s18, 0
      %p80 = por %p78, %p79
      %p81 = scmp.ne.s32.totalorder %s73, %s75
      %p82 = scmp.eq.s32.totalorder %s23, 1
      %p83 = por %p81, %p82
      %p84 = scmp.ne.s32.totalorder %s75, %s76
      %p85 = scmp.eq.s32.totalorder %s23, 0
      %p86 = por %p84, %p85
      %p87 = scmp.ne.s32.totalorder %s75, %s76
      %p88 = scmp.eq.s32.totalorder %s24, 1
      %p89 = por %p87, %p88
      %p91 = scmp.ne.s32.totalorder %s76, %s90
      %p92 = scmp.eq.s32.totalorder %s24, 0
      %p93 = por %p91, %p92
      %s95 = sadd.s32 %s94, 1
      %p98 = scmp.eq.s32.totalorder %s18, 1
      %p99 = scmp.ne.s32.totalorder %s94, %s96
      %p100 = scmp.eq.s32.totalorder %s18, 0
      %p101 = por %p99, %p100
      %p102 = scmp.ne.s32.totalorder %s94, %s96
      %p103 = scmp.eq.s32.totalorder %s23, 1
      %p104 = por %p102, %p103
      %p105 = scmp.ne.s32.totalorder %s96, %s97
      %p106 = scmp.eq.s32.totalorder %s23, 0
      %p107 = por %p105, %p106
      %p108 = scmp.ne.s32.totalorder %s96, %s97
      %p109 = scmp.eq.s32.totalorder %s24, 1
      %p110 = por %p108, %p109
      %p112 = scmp.ne.s32.totalorder %s97, %s111
      %p113 = scmp.eq.s32.totalorder %s24, 0
      %p114 = por %p112, %p113
      %s115 = ssub.s32 %s18, %s25
      %p116 = scmp.eq.s32.totalorder %s115, 0
      %s118 = sadd.s32 %s117, 1
      %s119 = scalar_select %p116, %s117, %s118
      %p122 = pneg %p116
      %p123 = scmp.eq.s32.totalorder %s18, 1
      %p124 = por %p122, %p123
      %p125 = scmp.ne.s32.totalorder %s117, %s120
      %p126 = scmp.eq.s32.totalorder %s18, 0
      %p127 = por %p125, %p126
      %p128 = scmp.ne.s32.totalorder %s117, %s120
      %p129 = scmp.eq.s32.totalorder %s23, 1
      %p130 = por %p128, %p129
      %p131 = scmp.ne.s32.totalorder %s120, %s121
      %p132 = scmp.eq.s32.totalorder %s23, 0
      %p133 = por %p131, %p132
      %p134 = scmp.ne.s32.totalorder %s120, %s121
      %p135 = scmp.eq.s32.totalorder %s24, 1
      %p136 = por %p134, %p135
      %p138 = scmp.ne.s32.totalorder %s121, %s137
      %p139 = scmp.eq.s32.totalorder %s24, 0
      %p140 = por %p138, %p139
      %p141 = scmp.le.s32.totalorder 1, %s18
      %p142 = scmp.lt.s32.totalorder %s18, 3
      %p143 = pnand %p141, %p142
      %p144 = pneg %p143
      // Predicated region
      $region9: #{tpu_custom_call.1} parent=5 // pred_check
        _
      $region10: #{tpu_custom_call.1} parent=5 // pred_check_branch
        %146 = sbr.rel (%p143) target = $region12
      $region11: #{tpu_custom_call.1} parent=5 // pred_region
        %s147 = ssub.s32 %s18, 1
        // Predicated region
        $region13: #{tpu_custom_call.1} parent=11 // pred_check
          %p148 = pneg %p65
        $region14: #{tpu_custom_call.1} parent=11 // pred_check_branch
          %150 = sbr.rel (%p148) target = $region16
        $region15: #{tpu_custom_call.1} parent=11 // pred_region
          %s152 = ssub.s32 131072, 131072
          %153 = vsyncadd [#allocation6], %s152
          %s154 = sshll.u32 [#allocation5], 4
          %s155 = int_to_ptr.vmem [resolvable:$true] %s154
          %160 = dma.hbm_to_vmem [thread:$0]  %s1, 131072, %s155, [#allocation6], 512, 512, 32
        $region16: #{tpu_custom_call.1} parent=11 // pred_fallthru
          _
        // Predicated region
        $region17: #{tpu_custom_call.1} parent=11 // pred_check
          %p161 = pneg %p86
        $region18: #{tpu_custom_call.1} parent=11 // pred_check_branch
          %163 = sbr.rel (%p161) target = $region20
        $region19: #{tpu_custom_call.1} parent=11 // pred_region
          %s165 = ssub.s32 3840, 3840
          %166 = vsyncadd [#allocation6], %s165
          %s167 = sshll.u32 [#allocation7], 4
          %s168 = int_to_ptr.vmem [resolvable:$true] %s167
          %173 = dma.hbm_to_vmem [thread:$0]  %s2, 3840, %s168, [#allocation6], 192, 192, 12
        $region20: #{tpu_custom_call.1} parent=11 // pred_fallthru
          _
        // Predicated region
        $region21: #{tpu_custom_call.1} parent=11 // pred_check
          %p174 = pneg %p107
        $region22: #{tpu_custom_call.1} parent=11 // pred_check_branch
          %176 = sbr.rel (%p174) target = $region24
        $region23: #{tpu_custom_call.1} parent=11 // pred_region
          %s178 = ssub.s32 128, 128
          %179 = vsyncadd [#allocation9], %s178
          %s181 = sshll.u32 [#allocation8], 4
          %s182 = int_to_ptr.vmem [resolvable:$true] %s181
          %184 = dma.hbm_to_vmem [thread:$0]  %s3, 128, %s182, [#allocation9]
        $region24: #{tpu_custom_call.1} parent=11 // pred_fallthru
          _
      $region12: #{tpu_custom_call.1} parent=5 // pred_fallthru
        _
      %p185 = scmp.lt.s32.totalorder %s18, 2
      // Predicated region
      $region25: #{tpu_custom_call.1} parent=5 // pred_check
        %p186 = pneg %p185
      $region26: #{tpu_custom_call.1} parent=5 // pred_check_branch
        %188 = sbr.rel (%p186) target = $region28
      $region27: #{tpu_custom_call.1} parent=5 // pred_region
        // Predicated region
        $region29: #{tpu_custom_call.1} parent=27 // pred_check
          %p189 = pneg %p38
        $region30: #{tpu_custom_call.1} parent=27 // pred_check_branch
          %191 = sbr.rel (%p189) target = $region32
        $region31: #{tpu_custom_call.1} parent=27 // pred_region
          %s192 = sand.u32 %s28, 1
          %s193 = scalar_lea.sflag [#allocation3], %s192
          %s194 = sand.u32 %s28, 1
          %s195 = smul.addr %s194, 1024
          %s196 = scalar_lea.vmem [#allocation2], %s195
          %s198 = ssub.s32 16384, 16384
          %199 = vsyncadd %s193, %s198
          %s200 = smul.addr %s18, 128
          %s201 = smul.addr %s200, 128
          %s202 = scalar_lea.hbm %s0, %s201
          %s203 = sshll.u32 %s196, 4
          %s204 = int_to_ptr.vmem [resolvable:$true] %s203
          %209 = dma.hbm_to_vmem [thread:$0]  %s202, 16384, %s204, %s193, 2048, 2048, 128
        $region32: #{tpu_custom_call.1} parent=27 // pred_fallthru
          _
      $region28: #{tpu_custom_call.1} parent=5 // pred_fallthru
        _
      %p210 = scmp.le.s32.totalorder 1, %s18
      %p211 = scmp.lt.s32.totalorder %s18, 3
      %p212 = pnand %p210, %p211
      %p213 = pneg %p212
      // Predicated region
      $region33: #{tpu_custom_call.1} parent=5 // pred_check
        _
      $region34: #{tpu_custom_call.1} parent=5 // pred_check_branch
        %215 = sbr.rel (%p212) target = $region36
      $region35: #{tpu_custom_call.1} parent=5 // pred_region
        %s216 = ssub.s32 %s18, 1
        %s217 = sand.u32 %s31, 1
        %s218 = scalar_lea.sflag [#allocation3], %s217
        %s219 = sand.u32 %s31, 1
        %s220 = smul.addr %s219, 1024
        %s221 = scalar_lea.vmem [#allocation2], %s220
        // Predicated region
        $region37: #{tpu_custom_call.1} parent=35 // pred_check
          %p222 = pneg %p44
        $region38: #{tpu_custom_call.1} parent=35 // pred_check_branch
          %224 = sbr.rel (%p222) target = $region40
        $region39: #{tpu_custom_call.1} parent=35 // pred_region
          %225 = dma.done %s218, 16384
        $region40: #{tpu_custom_call.1} parent=35 // pred_fallthru
          _
        // Predicated region
        $region41: #{tpu_custom_call.1} parent=35 // pred_check
          %p226 = pneg %p65
        $region42: #{tpu_custom_call.1} parent=35 // pred_check_branch
          %228 = sbr.rel (%p226) target = $region44
        $region43: #{tpu_custom_call.1} parent=35 // pred_region
          %229 = dma.done [#allocation6], 131072
        $region44: #{tpu_custom_call.1} parent=35 // pred_fallthru
          _
        // Predicated region
        $region45: #{tpu_custom_call.1} parent=35 // pred_check
          %p230 = pneg %p86
        $region46: #{tpu_custom_call.1} parent=35 // pred_check_branch
          %232 = sbr.rel (%p230) target = $region48
        $region47: #{tpu_custom_call.1} parent=35 // pred_region
          %233 = dma.done [#allocation6], 3840
        $region48: #{tpu_custom_call.1} parent=35 // pred_fallthru
          _
        // Predicated region
        $region49: #{tpu_custom_call.1} parent=35 // pred_check
          %p234 = pneg %p107
        $region50: #{tpu_custom_call.1} parent=35 // pred_check_branch
          %236 = sbr.rel (%p234) target = $region52
        $region51: #{tpu_custom_call.1} parent=35 // pred_region
          %237 = dma.done [#allocation9], 128
        $region52: #{tpu_custom_call.1} parent=35 // pred_fallthru
          _
        %s238 = sand.u32 %s31, 1
        %s239 = scalar_lea.sflag [#allocation3], %s238
        %s240 = sand.u32 %s31, 1
        %s241 = smul.addr %s240, 1024
        %s242 = scalar_lea.vmem [#allocation2], %s241
        %p243 = pneg %p44
        %p244 = pneg %p41
        %p245 = pneg %p65
        %p246 = pneg %p62
        %p247 = pneg %p86
        %p248 = pneg %p83
        %p249 = pneg %p107
        %p250 = pneg %p104
        %p251 = pneg %p133
        %p252 = pneg %p130
        %s253 = sand.u32 %s120, 1
        %s254 = scalar_lea.sflag [#allocation4], %s253
        %s255 = sand.u32 %s120, 1
        %s256 = smul.addr %s255, 64
        %s257 = scalar_lea.vmem [#allocation10], %s256
        %v259 = vld [vmem:[%s221] sm:$0xff]
        %v260 = vld [vmem:[%s221 + $0x8] sm:$0xff]
        %v261 = vld [vmem:[%s221 + $0x10] sm:$0xff]
        %v262 = vld [vmem:[%s221 + $0x18] sm:$0xff]
        %v263 = vld [vmem:[%s221 + $0x20] sm:$0xff]
        %v264 = vld [vmem:[%s221 + $0x28] sm:$0xff]
        %v265 = vld [vmem:[%s221 + $0x30] sm:$0xff]
        %v266 = vld [vmem:[%s221 + $0x38] sm:$0xff]
        %v267 = vld [vmem:[%s221 + $0x40] sm:$0xff]
        %v268 = vld [vmem:[%s221 + $0x48] sm:$0xff]
        %v269 = vld [vmem:[%s221 + $0x50] sm:$0xff]
        %v270 = vld [vmem:[%s221 + $0x58] sm:$0xff]
        %v271 = vld [vmem:[%s221 + $0x60] sm:$0xff]
        %v272 = vld [vmem:[%s221 + $0x68] sm:$0xff]
        %v273 = vld [vmem:[%s221 + $0x70] sm:$0xff]
        %v274 = vld [vmem:[%s221 + $0x78] sm:$0xff]
        %v275 = vld [vmem:[%s221 + $0x80] sm:$0xff]
        %v276 = vld [vmem:[%s221 + $0x88] sm:$0xff]
        %v277 = vld [vmem:[%s221 + $0x90] sm:$0xff]
        %v278 = vld [vmem:[%s221 + $0x98] sm:$0xff]
        %v279 = vld [vmem:[%s221 + $0xa0] sm:$0xff]
        %v280 = vld [vmem:[%s221 + $0xa8] sm:$0xff]
        %v281 = vld [vmem:[%s221 + $0xb0] sm:$0xff]
        %v282 = vld [vmem:[%s221 + $0xb8] sm:$0xff]
        %v283 = vld [vmem:[%s221 + $0xc0] sm:$0xff]
        %v284 = vld [vmem:[%s221 + $0xc8] sm:$0xff]
        %v285 = vld [vmem:[%s221 + $0xd0] sm:$0xff]
        %v286 = vld [vmem:[%s221 + $0xd8] sm:$0xff]
        %v287 = vld [vmem:[%s221 + $0xe0] sm:$0xff]
        %v288 = vld [vmem:[%s221 + $0xe8] sm:$0xff]
        %v289 = vld [vmem:[%s221 + $0xf0] sm:$0xff]
        %v290 = vld [vmem:[%s221 + $0xf8] sm:$0xff]
        %v291 = vld [vmem:[%s221 + $0x100] sm:$0xff]
        %v292 = vld [vmem:[%s221 + $0x108] sm:$0xff]
        %v293 = vld [vmem:[%s221 + $0x110] sm:$0xff]
        %v294 = vld [vmem:[%s221 + $0x118] sm:$0xff]
        %v295 = vld [vmem:[%s221 + $0x120] sm:$0xff]
        %v296 = vld [vmem:[%s221 + $0x128] sm:$0xff]
        %v297 = vld [vmem:[%s221 + $0x130] sm:$0xff]
        %v298 = vld [vmem:[%s221 + $0x138] sm:$0xff]
        %v299 = vld [vmem:[%s221 + $0x140] sm:$0xff]
        %v300 = vld [vmem:[%s221 + $0x148] sm:$0xff]
        %v301 = vld [vmem:[%s221 + $0x150] sm:$0xff]
        %v302 = vld [vmem:[%s221 + $0x158] sm:$0xff]
        %v303 = vld [vmem:[%s221 + $0x160] sm:$0xff]
        %v304 = vld [vmem:[%s221 + $0x168] sm:$0xff]
        %v305 = vld [vmem:[%s221 + $0x170] sm:$0xff]
        %v306 = vld [vmem:[%s221 + $0x178] sm:$0xff]
        %v307 = vld [vmem:[%s221 + $0x180] sm:$0xff]
        %v308 = vld [vmem:[%s221 + $0x188] sm:$0xff]
        %v309 = vld [vmem:[%s221 + $0x190] sm:$0xff]
        %v310 = vld [vmem:[%s221 + $0x198] sm:$0xff]
        %v311 = vld [vmem:[%s221 + $0x1a0] sm:$0xff]
        %v312 = vld [vmem:[%s221 + $0x1a8] sm:$0xff]
        %v313 = vld [vmem:[%s221 + $0x1b0] sm:$0xff]
        %v314 = vld [vmem:[%s221 + $0x1b8] sm:$0xff]
        %v315 = vld [vmem:[%s221 + $0x1c0] sm:$0xff]
        %v316 = vld [vmem:[%s221 + $0x1c8] sm:$0xff]
        %v317 = vld [vmem:[%s221 + $0x1d0] sm:$0xff]
        %v318 = vld [vmem:[%s221 + $0x1d8] sm:$0xff]
        %v319 = vld [vmem:[%s221 + $0x1e0] sm:$0xff]
        %v320 = vld [vmem:[%s221 + $0x1e8] sm:$0xff]
        %v321 = vld [vmem:[%s221 + $0x1f0] sm:$0xff]
        %v322 = vld [vmem:[%s221 + $0x1f8] sm:$0xff]
        %v323 = vld [vmem:[%s221 + $0x200] sm:$0xff]
        %v324 = vld [vmem:[%s221 + $0x208] sm:$0xff]
        %v325 = vld [vmem:[%s221 + $0x210] sm:$0xff]
        %v326 = vld [vmem:[%s221 + $0x218] sm:$0xff]
        %v327 = vld [vmem:[%s221 + $0x220] sm:$0xff]
        %v328 = vld [vmem:[%s221 + $0x228] sm:$0xff]
        %v329 = vld [vmem:[%s221 + $0x230] sm:$0xff]
        %v330 = vld [vmem:[%s221 + $0x238] sm:$0xff]
        %v331 = vld [vmem:[%s221 + $0x240] sm:$0xff]
        %v332 = vld [vmem:[%s221 + $0x248] sm:$0xff]
        %v333 = vld [vmem:[%s221 + $0x250] sm:$0xff]
        %v334 = vld [vmem:[%s221 + $0x258] sm:$0xff]
        %v335 = vld [vmem:[%s221 + $0x260] sm:$0xff]
        %v336 = vld [vmem:[%s221 + $0x268] sm:$0xff]
        %v337 = vld [vmem:[%s221 + $0x270] sm:$0xff]
        %v338 = vld [vmem:[%s221 + $0x278] sm:$0xff]
        %v339 = vld [vmem:[%s221 + $0x280] sm:$0xff]
        %v340 = vld [vmem:[%s221 + $0x288] sm:$0xff]
        %v341 = vld [vmem:[%s221 + $0x290] sm:$0xff]
        %v342 = vld [vmem:[%s221 + $0x298] sm:$0xff]
        %v343 = vld [vmem:[%s221 + $0x2a0] sm:$0xff]
        %v344 = vld [vmem:[%s221 + $0x2a8] sm:$0xff]
        %v345 = vld [vmem:[%s221 + $0x2b0] sm:$0xff]
        %v346 = vld [vmem:[%s221 + $0x2b8] sm:$0xff]
        %v347 = vld [vmem:[%s221 + $0x2c0] sm:$0xff]
        %v348 = vld [vmem:[%s221 + $0x2c8] sm:$0xff]
        %v349 = vld [vmem:[%s221 + $0x2d0] sm:$0xff]
        %v350 = vld [vmem:[%s221 + $0x2d8] sm:$0xff]
        %v351 = vld [vmem:[%s221 + $0x2e0] sm:$0xff]
        %v352 = vld [vmem:[%s221 + $0x2e8] sm:$0xff]
        %v353 = vld [vmem:[%s221 + $0x2f0] sm:$0xff]
        %v354 = vld [vmem:[%s221 + $0x2f8] sm:$0xff]
        %v355 = vld [vmem:[%s221 + $0x300] sm:$0xff]
        %v356 = vld [vmem:[%s221 + $0x308] sm:$0xff]
        %v357 = vld [vmem:[%s221 + $0x310] sm:$0xff]
        %v358 = vld [vmem:[%s221 + $0x318] sm:$0xff]
        %v359 = vld [vmem:[%s221 + $0x320] sm:$0xff]
        %v360 = vld [vmem:[%s221 + $0x328] sm:$0xff]
        %v361 = vld [vmem:[%s221 + $0x330] sm:$0xff]
        %v362 = vld [vmem:[%s221 + $0x338] sm:$0xff]
        %v363 = vld [vmem:[%s221 + $0x340] sm:$0xff]
        %v364 = vld [vmem:[%s221 + $0x348] sm:$0xff]
        %v365 = vld [vmem:[%s221 + $0x350] sm:$0xff]
        %v366 = vld [vmem:[%s221 + $0x358] sm:$0xff]
        %v367 = vld [vmem:[%s221 + $0x360] sm:$0xff]
        %v368 = vld [vmem:[%s221 + $0x368] sm:$0xff]
        %v369 = vld [vmem:[%s221 + $0x370] sm:$0xff]
        %v370 = vld [vmem:[%s221 + $0x378] sm:$0xff]
        %v371 = vld [vmem:[%s221 + $0x380] sm:$0xff]
        %v372 = vld [vmem:[%s221 + $0x388] sm:$0xff]
        %v373 = vld [vmem:[%s221 + $0x390] sm:$0xff]
        %v374 = vld [vmem:[%s221 + $0x398] sm:$0xff]
        %v375 = vld [vmem:[%s221 + $0x3a0] sm:$0xff]
        %v376 = vld [vmem:[%s221 + $0x3a8] sm:$0xff]
        %v377 = vld [vmem:[%s221 + $0x3b0] sm:$0xff]
        %v378 = vld [vmem:[%s221 + $0x3b8] sm:$0xff]
        %v379 = vld [vmem:[%s221 + $0x3c0] sm:$0xff]
        %v380 = vld [vmem:[%s221 + $0x3c8] sm:$0xff]
        %v381 = vld [vmem:[%s221 + $0x3d0] sm:$0xff]
        %v382 = vld [vmem:[%s221 + $0x3d8] sm:$0xff]
        %v383 = vld [vmem:[%s221 + $0x3e0] sm:$0xff]
        %v384 = vld [vmem:[%s221 + $0x3e8] sm:$0xff]
        %v385 = vld [vmem:[%s221 + $0x3f0] sm:$0xff]
        %v386 = vld [vmem:[%s221 + $0x3f8] sm:$0xff]
        %v387 = vpack.c.bf16 %v275, %v259
        %v388 = vpack.c.bf16 %v276, %v260
        %v389 = vpack.c.bf16 %v277, %v261
        %v390 = vpack.c.bf16 %v278, %v262
        %v391 = vpack.c.bf16 %v279, %v263
        %v392 = vpack.c.bf16 %v280, %v264
        %v393 = vpack.c.bf16 %v281, %v265
        %v394 = vpack.c.bf16 %v282, %v266
        %v395 = vpack.c.bf16 %v283, %v267
        %v396 = vpack.c.bf16 %v284, %v268
        %v397 = vpack.c.bf16 %v285, %v269
        %v398 = vpack.c.bf16 %v286, %v270
        %v399 = vpack.c.bf16 %v287, %v271
        %v400 = vpack.c.bf16 %v288, %v272
        %v401 = vpack.c.bf16 %v289, %v273
        %v402 = vpack.c.bf16 %v290, %v274
        %v403 = vpack.c.bf16 %v307, %v291
        %v404 = vpack.c.bf16 %v308, %v292
        %v405 = vpack.c.bf16 %v309, %v293
        %v406 = vpack.c.bf16 %v310, %v294
        %v407 = vpack.c.bf16 %v311, %v295
        %v408 = vpack.c.bf16 %v312, %v296
        %v409 = vpack.c.bf16 %v313, %v297
        %v410 = vpack.c.bf16 %v314, %v298
        %v411 = vpack.c.bf16 %v315, %v299
        %v412 = vpack.c.bf16 %v316, %v300
        %v413 = vpack.c.bf16 %v317, %v301
        %v414 = vpack.c.bf16 %v318, %v302
        %v415 = vpack.c.bf16 %v319, %v303
        %v416 = vpack.c.bf16 %v320, %v304
        %v417 = vpack.c.bf16 %v321, %v305
        %v418 = vpack.c.bf16 %v322, %v306
        %v419 = vpack.c.bf16 %v339, %v323
        %v420 = vpack.c.bf16 %v340, %v324
        %v421 = vpack.c.bf16 %v341, %v325
        %v422 = vpack.c.bf16 %v342, %v326
        %v423 = vpack.c.bf16 %v343, %v327
        %v424 = vpack.c.bf16 %v344, %v328
        %v425 = vpack.c.bf16 %v345, %v329
        %v426 = vpack.c.bf16 %v346, %v330
        %v427 = vpack.c.bf16 %v347, %v331
        %v428 = vpack.c.bf16 %v348, %v332
        %v429 = vpack.c.bf16 %v349, %v333
        %v430 = vpack.c.bf16 %v350, %v334
        %v431 = vpack.c.bf16 %v351, %v335
        %v432 = vpack.c.bf16 %v352, %v336
        %v433 = vpack.c.bf16 %v353, %v337
        %v434 = vpack.c.bf16 %v354, %v338
        %v435 = vpack.c.bf16 %v371, %v355
        %v436 = vpack.c.bf16 %v372, %v356
        %v437 = vpack.c.bf16 %v373, %v357
        %v438 = vpack.c.bf16 %v374, %v358
        %v439 = vpack.c.bf16 %v375, %v359
        %v440 = vpack.c.bf16 %v376, %v360
        %v441 = vpack.c.bf16 %v377, %v361
        %v442 = vpack.c.bf16 %v378, %v362
        %v443 = vpack.c.bf16 %v379, %v363
        %v444 = vpack.c.bf16 %v380, %v364
        %v445 = vpack.c.bf16 %v381, %v365
        %v446 = vpack.c.bf16 %v382, %v366
        %v447 = vpack.c.bf16 %v383, %v367
        %v448 = vpack.c.bf16 %v384, %v368
        %v449 = vpack.c.bf16 %v385, %v369
        %v450 = vpack.c.bf16 %v386, %v370
        %v451 = vld [vmem:[#allocation5] sm:$0xff]
        %v452 = vld [vmem:[#allocation5 + $0x8] sm:$0xff]
        %v453 = vld [vmem:[#allocation5 + $0x10] sm:$0xff]
        %v454 = vld [vmem:[#allocation5 + $0x18] sm:$0xff]
        %v455 = vld [vmem:[#allocation5 + $0x20] sm:$0xff]
        %v456 = vld [vmem:[#allocation5 + $0x28] sm:$0xff]
        %v457 = vld [vmem:[#allocation5 + $0x30] sm:$0xff]
        %v458 = vld [vmem:[#allocation5 + $0x38] sm:$0xff]
        %v459 = vld [vmem:[#allocation5 + $0x40] sm:$0xff]
        %v460 = vld [vmem:[#allocation5 + $0x48] sm:$0xff]
        %v461 = vld [vmem:[#allocation5 + $0x50] sm:$0xff]
        %v462 = vld [vmem:[#allocation5 + $0x58] sm:$0xff]
        %v463 = vld [vmem:[#allocation5 + $0x60] sm:$0xff]
        %v464 = vld [vmem:[#allocation5 + $0x68] sm:$0xff]
        %v465 = vld [vmem:[#allocation5 + $0x70] sm:$0xff]
        %v466 = vld [vmem:[#allocation5 + $0x78] sm:$0xff]
        %v467 = vld [vmem:[#allocation5 + $0x80] sm:$0xff]
        %v468 = vld [vmem:[#allocation5 + $0x88] sm:$0xff]
        %v469 = vld [vmem:[#allocation5 + $0x90] sm:$0xff]
        %v470 = vld [vmem:[#allocation5 + $0x98] sm:$0xff]
        %v471 = vld [vmem:[#allocation5 + $0xa0] sm:$0xff]
        %v472 = vld [vmem:[#allocation5 + $0xa8] sm:$0xff]
        %v473 = vld [vmem:[#allocation5 + $0xb0] sm:$0xff]
        %v474 = vld [vmem:[#allocation5 + $0xb8] sm:$0xff]
        %v475 = vld [vmem:[#allocation5 + $0xc0] sm:$0xff]
        %v476 = vld [vmem:[#allocation5 + $0xc8] sm:$0xff]
        %v477 = vld [vmem:[#allocation5 + $0xd0] sm:$0xff]
        %v478 = vld [vmem:[#allocation5 + $0xd8] sm:$0xff]
        %v479 = vld [vmem:[#allocation5 + $0xe0] sm:$0xff]
        %v480 = vld [vmem:[#allocation5 + $0xe8] sm:$0xff]
        %v481 = vld [vmem:[#allocation5 + $0xf0] sm:$0xff]
        %v482 = vld [vmem:[#allocation5 + $0xf8] sm:$0xff]
        %v483 = vld [vmem:[#allocation5 + $0x100] sm:$0xff]
        %v484 = vld [vmem:[#allocation5 + $0x108] sm:$0xff]
        %v485 = vld [vmem:[#allocation5 + $0x110] sm:$0xff]
        %v486 = vld [vmem:[#allocation5 + $0x118] sm:$0xff]
        %v487 = vld [vmem:[#allocation5 + $0x120] sm:$0xff]
        %v488 = vld [vmem:[#allocation5 + $0x128] sm:$0xff]
        %v489 = vld [vmem:[#allocation5 + $0x130] sm:$0xff]
        %v490 = vld [vmem:[#allocation5 + $0x138] sm:$0xff]
        %v491 = vld [vmem:[#allocation5 + $0x140] sm:$0xff]
        %v492 = vld [vmem:[#allocation5 + $0x148] sm:$0xff]
        %v493 = vld [vmem:[#allocation5 + $0x150] sm:$0xff]
        %v494 = vld [vmem:[#allocation5 + $0x158] sm:$0xff]
        %v495 = vld [vmem:[#allocation5 + $0x160] sm:$0xff]
        %v496 = vld [vmem:[#allocation5 + $0x168] sm:$0xff]
        %v497 = vld [vmem:[#allocation5 + $0x170] sm:$0xff]
        %v498 = vld [vmem:[#allocation5 + $0x178] sm:$0xff]
        %v499 = vld [vmem:[#allocation5 + $0x180] sm:$0xff]
        %v500 = vld [vmem:[#allocation5 + $0x188] sm:$0xff]
        %v501 = vld [vmem:[#allocation5 + $0x190] sm:$0xff]
        %v502 = vld [vmem:[#allocation5 + $0x198] sm:$0xff]
        %v503 = vld [vmem:[#allocation5 + $0x1a0] sm:$0xff]
        %v504 = vld [vmem:[#allocation5 + $0x1a8] sm:$0xff]
        %v505 = vld [vmem:[#allocation5 + $0x1b0] sm:$0xff]
        %v506 = vld [vmem:[#allocation5 + $0x1b8] sm:$0xff]
        %v507 = vld [vmem:[#allocation5 + $0x1c0] sm:$0xff]
        %v508 = vld [vmem:[#allocation5 + $0x1c8] sm:$0xff]
        %v509 = vld [vmem:[#allocation5 + $0x1d0] sm:$0xff]
        %v510 = vld [vmem:[#allocation5 + $0x1d8] sm:$0xff]
        %v511 = vld [vmem:[#allocation5 + $0x1e0] sm:$0xff]
        %v512 = vld [vmem:[#allocation5 + $0x1e8] sm:$0xff]
        %v513 = vld [vmem:[#allocation5 + $0x1f0] sm:$0xff]
        %v514 = vld [vmem:[#allocation5 + $0x1f8] sm:$0xff]
        %v515 = vld [vmem:[#allocation5 + $0x200] sm:$0xff]
        %v516 = vld [vmem:[#allocation5 + $0x208] sm:$0xff]
        %v517 = vld [vmem:[#allocation5 + $0x210] sm:$0xff]
        %v518 = vld [vmem:[#allocation5 + $0x218] sm:$0xff]
        %v519 = vld [vmem:[#allocation5 + $0x220] sm:$0xff]
        %v520 = vld [vmem:[#allocation5 + $0x228] sm:$0xff]
        %v521 = vld [vmem:[#allocation5 + $0x230] sm:$0xff]
        %v522 = vld [vmem:[#allocation5 + $0x238] sm:$0xff]
        %v523 = vld [vmem:[#allocation5 + $0x240] sm:$0xff]
        %v524 = vld [vmem:[#allocation5 + $0x248] sm:$0xff]
        %v525 = vld [vmem:[#allocation5 + $0x250] sm:$0xff]
        %v526 = vld [vmem:[#allocation5 + $0x258] sm:$0xff]
        %v527 = vld [vmem:[#allocation5 + $0x260] sm:$0xff]
        %v528 = vld [vmem:[#allocation5 + $0x268] sm:$0xff]
        %v529 = vld [vmem:[#allocation5 + $0x270] sm:$0xff]
        %v530 = vld [vmem:[#allocation5 + $0x278] sm:$0xff]
        %v531 = vld [vmem:[#allocation5 + $0x280] sm:$0xff]
        %v532 = vld [vmem:[#allocation5 + $0x288] sm:$0xff]
        %v533 = vld [vmem:[#allocation5 + $0x290] sm:$0xff]
        %v534 = vld [vmem:[#allocation5 + $0x298] sm:$0xff]
        %v535 = vld [vmem:[#allocation5 + $0x2a0] sm:$0xff]
        %v536 = vld [vmem:[#allocation5 + $0x2a8] sm:$0xff]
        %v537 = vld [vmem:[#allocation5 + $0x2b0] sm:$0xff]
        %v538 = vld [vmem:[#allocation5 + $0x2b8] sm:$0xff]
        %v539 = vld [vmem:[#allocation5 + $0x2c0] sm:$0xff]
        %v540 = vld [vmem:[#allocation5 + $0x2c8] sm:$0xff]
        %v541 = vld [vmem:[#allocation5 + $0x2d0] sm:$0xff]
        %v542 = vld [vmem:[#allocation5 + $0x2d8] sm:$0xff]
        %v543 = vld [vmem:[#allocation5 + $0x2e0] sm:$0xff]
        %v544 = vld [vmem:[#allocation5 + $0x2e8] sm:$0xff]
        %v545 = vld [vmem:[#allocation5 + $0x2f0] sm:$0xff]
        %v546 = vld [vmem:[#allocation5 + $0x2f8] sm:$0xff]
        %v547 = vld [vmem:[#allocation5 + $0x300] sm:$0xff]
        %v548 = vld [vmem:[#allocation5 + $0x308] sm:$0xff]
        %v549 = vld [vmem:[#allocation5 + $0x310] sm:$0xff]
        %v550 = vld [vmem:[#allocation5 + $0x318] sm:$0xff]
        %v551 = vld [vmem:[#allocation5 + $0x320] sm:$0xff]
        %v552 = vld [vmem:[#allocation5 + $0x328] sm:$0xff]
        %v553 = vld [vmem:[#allocation5 + $0x330] sm:$0xff]
        %v554 = vld [vmem:[#allocation5 + $0x338] sm:$0xff]
        %v555 = vld [vmem:[#allocation5 + $0x340] sm:$0xff]
        %v556 = vld [vmem:[#allocation5 + $0x348] sm:$0xff]
        %v557 = vld [vmem:[#allocation5 + $0x350] sm:$0xff]
        %v558 = vld [vmem:[#allocation5 + $0x358] sm:$0xff]
        %v559 = vld [vmem:[#allocation5 + $0x360] sm:$0xff]
        %v560 = vld [vmem:[#allocation5 + $0x368] sm:$0xff]
        %v561 = vld [vmem:[#allocation5 + $0x370] sm:$0xff]
        %v562 = vld [vmem:[#allocation5 + $0x378] sm:$0xff]
        %v563 = vld [vmem:[#allocation5 + $0x380] sm:$0xff]
        %v564 = vld [vmem:[#allocation5 + $0x388] sm:$0xff]
        %v565 = vld [vmem:[#allocation5 + $0x390] sm:$0xff]
        %v566 = vld [vmem:[#allocation5 + $0x398] sm:$0xff]
        %v567 = vld [vmem:[#allocation5 + $0x3a0] sm:$0xff]
        %v568 = vld [vmem:[#allocation5 + $0x3a8] sm:$0xff]
        %v569 = vld [vmem:[#allocation5 + $0x3b0] sm:$0xff]
        %v570 = vld [vmem:[#allocation5 + $0x3b8] sm:$0xff]
        %v571 = vld [vmem:[#allocation5 + $0x3c0] sm:$0xff]
        %v572 = vld [vmem:[#allocation5 + $0x3c8] sm:$0xff]
        %v573 = vld [vmem:[#allocation5 + $0x3d0] sm:$0xff]
        %v574 = vld [vmem:[#allocation5 + $0x3d8] sm:$0xff]
        %v575 = vld [vmem:[#allocation5 + $0x3e0] sm:$0xff]
        %v576 = vld [vmem:[#allocation5 + $0x3e8] sm:$0xff]
        %v577 = vld [vmem:[#allocation5 + $0x3f0] sm:$0xff]
        %v578 = vld [vmem:[#allocation5 + $0x3f8] sm:$0xff]
        %v579 = vld [vmem:[#allocation5 + $0x400] sm:$0xff]
        %v580 = vld [vmem:[#allocation5 + $0x408] sm:$0xff]
        %v581 = vld [vmem:[#allocation5 + $0x410] sm:$0xff]
        %v582 = vld [vmem:[#allocation5 + $0x418] sm:$0xff]
        %v583 = vld [vmem:[#allocation5 + $0x420] sm:$0xff]
        %v584 = vld [vmem:[#allocation5 + $0x428] sm:$0xff]
        %v585 = vld [vmem:[#allocation5 + $0x430] sm:$0xff]
        %v586 = vld [vmem:[#allocation5 + $0x438] sm:$0xff]
        %v587 = vld [vmem:[#allocation5 + $0x440] sm:$0xff]
        %v588 = vld [vmem:[#allocation5 + $0x448] sm:$0xff]
        %v589 = vld [vmem:[#allocation5 + $0x450] sm:$0xff]
        %v590 = vld [vmem:[#allocation5 + $0x458] sm:$0xff]
        %v591 = vld [vmem:[#allocation5 + $0x460] sm:$0xff]
        %v592 = vld [vmem:[#allocation5 + $0x468] sm:$0xff]
        %v593 = vld [vmem:[#allocation5 + $0x470] sm:$0xff]
        %v594 = vld [vmem:[#allocation5 + $0x478] sm:$0xff]
        %v595 = vld [vmem:[#allocation5 + $0x480] sm:$0xff]
        %v596 = vld [vmem:[#allocation5 + $0x488] sm:$0xff]
        %v597 = vld [vmem:[#allocation5 + $0x490] sm:$0xff]
        %v598 = vld [vmem:[#allocation5 + $0x498] sm:$0xff]
        %v599 = vld [vmem:[#allocation5 + $0x4a0] sm:$0xff]
        %v600 = vld [vmem:[#allocation5 + $0x4a8] sm:$0xff]
        %v601 = vld [vmem:[#allocation5 + $0x4b0] sm:$0xff]
        %v602 = vld [vmem:[#allocation5 + $0x4b8] sm:$0xff]
        %v603 = vld [vmem:[#allocation5 + $0x4c0] sm:$0xff]
        %v604 = vld [vmem:[#allocation5 + $0x4c8] sm:$0xff]
        %v605 = vld [vmem:[#allocation5 + $0x4d0] sm:$0xff]
        %v606 = vld [vmem:[#allocation5 + $0x4d8] sm:$0xff]
        %v607 = vld [vmem:[#allocation5 + $0x4e0] sm:$0xff]
        %v608 = vld [vmem:[#allocation5 + $0x4e8] sm:$0xff]
        %v609 = vld [vmem:[#allocation5 + $0x4f0] sm:$0xff]
        %v610 = vld [vmem:[#allocation5 + $0x4f8] sm:$0xff]
        %v611 = vld [vmem:[#allocation5 + $0x500] sm:$0xff]
        %v612 = vld [vmem:[#allocation5 + $0x508] sm:$0xff]
        %v613 = vld [vmem:[#allocation5 + $0x510] sm:$0xff]
        %v614 = vld [vmem:[#allocation5 + $0x518] sm:$0xff]
        %v615 = vld [vmem:[#allocation5 + $0x520] sm:$0xff]
        %v616 = vld [vmem:[#allocation5 + $0x528] sm:$0xff]
        %v617 = vld [vmem:[#allocation5 + $0x530] sm:$0xff]
        %v618 = vld [vmem:[#allocation5 + $0x538] sm:$0xff]
        %v619 = vld [vmem:[#allocation5 + $0x540] sm:$0xff]
        %v620 = vld [vmem:[#allocation5 + $0x548] sm:$0xff]
        %v621 = vld [vmem:[#allocation5 + $0x550] sm:$0xff]
        %v622 = vld [vmem:[#allocation5 + $0x558] sm:$0xff]
        %v623 = vld [vmem:[#allocation5 + $0x560] sm:$0xff]
        %v624 = vld [vmem:[#allocation5 + $0x568] sm:$0xff]
        %v625 = vld [vmem:[#allocation5 + $0x570] sm:$0xff]
        %v626 = vld [vmem:[#allocation5 + $0x578] sm:$0xff]
        %v627 = vld [vmem:[#allocation5 + $0x580] sm:$0xff]
        %v628 = vld [vmem:[#allocation5 + $0x588] sm:$0xff]
        %v629 = vld [vmem:[#allocation5 + $0x590] sm:$0xff]
        %v630 = vld [vmem:[#allocation5 + $0x598] sm:$0xff]
        %v631 = vld [vmem:[#allocation5 + $0x5a0] sm:$0xff]
        %v632 = vld [vmem:[#allocation5 + $0x5a8] sm:$0xff]
        %v633 = vld [vmem:[#allocation5 + $0x5b0] sm:$0xff]
        %v634 = vld [vmem:[#allocation5 + $0x5b8] sm:$0xff]
        %v635 = vld [vmem:[#allocation5 + $0x5c0] sm:$0xff]
        %v636 = vld [vmem:[#allocation5 + $0x5c8] sm:$0xff]
        %v637 = vld [vmem:[#allocation5 + $0x5d0] sm:$0xff]
        %v638 = vld [vmem:[#allocation5 + $0x5d8] sm:$0xff]
        %v639 = vld [vmem:[#allocation5 + $0x5e0] sm:$0xff]
        %v640 = vld [vmem:[#allocation5 + $0x5e8] sm:$0xff]
        %v641 = vld [vmem:[#allocation5 + $0x5f0] sm:$0xff]
        %v642 = vld [vmem:[#allocation5 + $0x5f8] sm:$0xff]
        %v643 = vld [vmem:[#allocation5 + $0x600] sm:$0xff]
        %v644 = vld [vmem:[#allocation5 + $0x608] sm:$0xff]
        %v645 = vld [vmem:[#allocation5 + $0x610] sm:$0xff]
        %v646 = vld [vmem:[#allocation5 + $0x618] sm:$0xff]
        %v647 = vld [vmem:[#allocation5 + $0x620] sm:$0xff]
        %v648 = vld [vmem:[#allocation5 + $0x628] sm:$0xff]
        %v649 = vld [vmem:[#allocation5 + $0x630] sm:$0xff]
        %v650 = vld [vmem:[#allocation5 + $0x638] sm:$0xff]
        %v651 = vld [vmem:[#allocation5 + $0x640] sm:$0xff]
        %v652 = vld [vmem:[#allocation5 + $0x648] sm:$0xff]
        %v653 = vld [vmem:[#allocation5 + $0x650] sm:$0xff]
        %v654 = vld [vmem:[#allocation5 + $0x658] sm:$0xff]
        %v655 = vld [vmem:[#allocation5 + $0x660] sm:$0xff]
        %v656 = vld [vmem:[#allocation5 + $0x668] sm:$0xff]
        %v657 = vld [vmem:[#allocation5 + $0x670] sm:$0xff]
        %v658 = vld [vmem:[#allocation5 + $0x678] sm:$0xff]
        %v659 = vld [vmem:[#allocation5 + $0x680] sm:$0xff]
        %v660 = vld [vmem:[#allocation5 + $0x688] sm:$0xff]
        %v661 = vld [vmem:[#allocation5 + $0x690] sm:$0xff]
        %v662 = vld [vmem:[#allocation5 + $0x698] sm:$0xff]
        %v663 = vld [vmem:[#allocation5 + $0x6a0] sm:$0xff]
        %v664 = vld [vmem:[#allocation5 + $0x6a8] sm:$0xff]
        %v665 = vld [vmem:[#allocation5 + $0x6b0] sm:$0xff]
        %v666 = vld [vmem:[#allocation5 + $0x6b8] sm:$0xff]
        %v667 = vld [vmem:[#allocation5 + $0x6c0] sm:$0xff]
        %v668 = vld [vmem:[#allocation5 + $0x6c8] sm:$0xff]
        %v669 = vld [vmem:[#allocation5 + $0x6d0] sm:$0xff]
        %v670 = vld [vmem:[#allocation5 + $0x6d8] sm:$0xff]
        %v671 = vld [vmem:[#allocation5 + $0x6e0] sm:$0xff]
        %v672 = vld [vmem:[#allocation5 + $0x6e8] sm:$0xff]
        %v673 = vld [vmem:[#allocation5 + $0x6f0] sm:$0xff]
        %v674 = vld [vmem:[#allocation5 + $0x6f8] sm:$0xff]
        %v675 = vld [vmem:[#allocation5 + $0x700] sm:$0xff]
        %v676 = vld [vmem:[#allocation5 + $0x708] sm:$0xff]
        %v677 = vld [vmem:[#allocation5 + $0x710] sm:$0xff]
        %v678 = vld [vmem:[#allocation5 + $0x718] sm:$0xff]
        %v679 = vld [vmem:[#allocation5 + $0x720] sm:$0xff]
        %v680 = vld [vmem:[#allocation5 + $0x728] sm:$0xff]
        %v681 = vld [vmem:[#allocation5 + $0x730] sm:$0xff]
        %v682 = vld [vmem:[#allocation5 + $0x738] sm:$0xff]
        %v683 = vld [vmem:[#allocation5 + $0x740] sm:$0xff]
        %v684 = vld [vmem:[#allocation5 + $0x748] sm:$0xff]
        %v685 = vld [vmem:[#allocation5 + $0x750] sm:$0xff]
        %v686 = vld [vmem:[#allocation5 + $0x758] sm:$0xff]
        %v687 = vld [vmem:[#allocation5 + $0x760] sm:$0xff]
        %v688 = vld [vmem:[#allocation5 + $0x768] sm:$0xff]
        %v689 = vld [vmem:[#allocation5 + $0x770] sm:$0xff]
        %v690 = vld [vmem:[#allocation5 + $0x778] sm:$0xff]
        %v691 = vld [vmem:[#allocation5 + $0x780] sm:$0xff]
        %v692 = vld [vmem:[#allocation5 + $0x788] sm:$0xff]
        %v693 = vld [vmem:[#allocation5 + $0x790] sm:$0xff]
        %v694 = vld [vmem:[#allocation5 + $0x798] sm:$0xff]
        %v695 = vld [vmem:[#allocation5 + $0x7a0] sm:$0xff]
        %v696 = vld [vmem:[#allocation5 + $0x7a8] sm:$0xff]
        %v697 = vld [vmem:[#allocation5 + $0x7b0] sm:$0xff]
        %v698 = vld [vmem:[#allocation5 + $0x7b8] sm:$0xff]
        %v699 = vld [vmem:[#allocation5 + $0x7c0] sm:$0xff]
        %v700 = vld [vmem:[#allocation5 + $0x7c8] sm:$0xff]
        %v701 = vld [vmem:[#allocation5 + $0x7d0] sm:$0xff]
        %v702 = vld [vmem:[#allocation5 + $0x7d8] sm:$0xff]
        %v703 = vld [vmem:[#allocation5 + $0x7e0] sm:$0xff]
        %v704 = vld [vmem:[#allocation5 + $0x7e8] sm:$0xff]
        %v705 = vld [vmem:[#allocation5 + $0x7f0] sm:$0xff]
        %v706 = vld [vmem:[#allocation5 + $0x7f8] sm:$0xff]
        %v707 = vld [vmem:[#allocation5 + $0x800] sm:$0xff]
        %v708 = vld [vmem:[#allocation5 + $0x808] sm:$0xff]
        %v709 = vld [vmem:[#allocation5 + $0x810] sm:$0xff]
        %v710 = vld [vmem:[#allocation5 + $0x818] sm:$0xff]
        %v711 = vld [vmem:[#allocation5 + $0x820] sm:$0xff]
        %v712 = vld [vmem:[#allocation5 + $0x828] sm:$0xff]
        %v713 = vld [vmem:[#allocation5 + $0x830] sm:$0xff]
        %v714 = vld [vmem:[#allocation5 + $0x838] sm:$0xff]
        %v715 = vld [vmem:[#allocation5 + $0x840] sm:$0xff]
        %v716 = vld [vmem:[#allocation5 + $0x848] sm:$0xff]
        %v717 = vld [vmem:[#allocation5 + $0x850] sm:$0xff]
        %v718 = vld [vmem:[#allocation5 + $0x858] sm:$0xff]
        %v719 = vld [vmem:[#allocation5 + $0x860] sm:$0xff]
        %v720 = vld [vmem:[#allocation5 + $0x868] sm:$0xff]
        %v721 = vld [vmem:[#allocation5 + $0x870] sm:$0xff]
        %v722 = vld [vmem:[#allocation5 + $0x878] sm:$0xff]
        %v723 = vld [vmem:[#allocation5 + $0x880] sm:$0xff]
        %v724 = vld [vmem:[#allocation5 + $0x888] sm:$0xff]
        %v725 = vld [vmem:[#allocation5 + $0x890] sm:$0xff]
        %v726 = vld [vmem:[#allocation5 + $0x898] sm:$0xff]
        %v727 = vld [vmem:[#allocation5 + $0x8a0] sm:$0xff]
        %v728 = vld [vmem:[#allocation5 + $0x8a8] sm:$0xff]
        %v729 = vld [vmem:[#allocation5 + $0x8b0] sm:$0xff]
        %v730 = vld [vmem:[#allocation5 + $0x8b8] sm:$0xff]
        %v731 = vld [vmem:[#allocation5 + $0x8c0] sm:$0xff]
        %v732 = vld [vmem:[#allocation5 + $0x8c8] sm:$0xff]
        %v733 = vld [vmem:[#allocation5 + $0x8d0] sm:$0xff]
        %v734 = vld [vmem:[#allocation5 + $0x8d8] sm:$0xff]
        %v735 = vld [vmem:[#allocation5 + $0x8e0] sm:$0xff]
        %v736 = vld [vmem:[#allocation5 + $0x8e8] sm:$0xff]
        %v737 = vld [vmem:[#allocation5 + $0x8f0] sm:$0xff]
        %v738 = vld [vmem:[#allocation5 + $0x8f8] sm:$0xff]
        %v739 = vld [vmem:[#allocation5 + $0x900] sm:$0xff]
        %v740 = vld [vmem:[#allocation5 + $0x908] sm:$0xff]
        %v741 = vld [vmem:[#allocation5 + $0x910] sm:$0xff]
        %v742 = vld [vmem:[#allocation5 + $0x918] sm:$0xff]
        %v743 = vld [vmem:[#allocation5 + $0x920] sm:$0xff]
        %v744 = vld [vmem:[#allocation5 + $0x928] sm:$0xff]
        %v745 = vld [vmem:[#allocation5 + $0x930] sm:$0xff]
        %v746 = vld [vmem:[#allocation5 + $0x938] sm:$0xff]
        %v747 = vld [vmem:[#allocation5 + $0x940] sm:$0xff]
        %v748 = vld [vmem:[#allocation5 + $0x948] sm:$0xff]
        %v749 = vld [vmem:[#allocation5 + $0x950] sm:$0xff]
        %v750 = vld [vmem:[#allocation5 + $0x958] sm:$0xff]
        %v751 = vld [vmem:[#allocation5 + $0x960] sm:$0xff]
        %v752 = vld [vmem:[#allocation5 + $0x968] sm:$0xff]
        %v753 = vld [vmem:[#allocation5 + $0x970] sm:$0xff]
        %v754 = vld [vmem:[#allocation5 + $0x978] sm:$0xff]
        %v755 = vld [vmem:[#allocation5 + $0x980] sm:$0xff]
        %v756 = vld [vmem:[#allocation5 + $0x988] sm:$0xff]
        %v757 = vld [vmem:[#allocation5 + $0x990] sm:$0xff]
        %v758 = vld [vmem:[#allocation5 + $0x998] sm:$0xff]
        %v759 = vld [vmem:[#allocation5 + $0x9a0] sm:$0xff]
        %v760 = vld [vmem:[#allocation5 + $0x9a8] sm:$0xff]
        %v761 = vld [vmem:[#allocation5 + $0x9b0] sm:$0xff]
        %v762 = vld [vmem:[#allocation5 + $0x9b8] sm:$0xff]
        %v763 = vld [vmem:[#allocation5 + $0x9c0] sm:$0xff]
        %v764 = vld [vmem:[#allocation5 + $0x9c8] sm:$0xff]
        %v765 = vld [vmem:[#allocation5 + $0x9d0] sm:$0xff]
        %v766 = vld [vmem:[#allocation5 + $0x9d8] sm:$0xff]
        %v767 = vld [vmem:[#allocation5 + $0x9e0] sm:$0xff]
        %v768 = vld [vmem:[#allocation5 + $0x9e8] sm:$0xff]
        %v769 = vld [vmem:[#allocation5 + $0x9f0] sm:$0xff]
        %v770 = vld [vmem:[#allocation5 + $0x9f8] sm:$0xff]
        %v771 = vld [vmem:[#allocation5 + $0xa00] sm:$0xff]
        %v772 = vld [vmem:[#allocation5 + $0xa08] sm:$0xff]
        %v773 = vld [vmem:[#allocation5 + $0xa10] sm:$0xff]
        %v774 = vld [vmem:[#allocation5 + $0xa18] sm:$0xff]
        %v775 = vld [vmem:[#allocation5 + $0xa20] sm:$0xff]
        %v776 = vld [vmem:[#allocation5 + $0xa28] sm:$0xff]
        %v777 = vld [vmem:[#allocation5 + $0xa30] sm:$0xff]
        %v778 = vld [vmem:[#allocation5 + $0xa38] sm:$0xff]
        %v779 = vld [vmem:[#allocation5 + $0xa40] sm:$0xff]
        %v780 = vld [vmem:[#allocation5 + $0xa48] sm:$0xff]
        %v781 = vld [vmem:[#allocation5 + $0xa50] sm:$0xff]
        %v782 = vld [vmem:[#allocation5 + $0xa58] sm:$0xff]
        %v783 = vld [vmem:[#allocation5 + $0xa60] sm:$0xff]
        %v784 = vld [vmem:[#allocation5 + $0xa68] sm:$0xff]
        %v785 = vld [vmem:[#allocation5 + $0xa70] sm:$0xff]
        %v786 = vld [vmem:[#allocation5 + $0xa78] sm:$0xff]
        %v787 = vld [vmem:[#allocation5 + $0xa80] sm:$0xff]
        %v788 = vld [vmem:[#allocation5 + $0xa88] sm:$0xff]
        %v789 = vld [vmem:[#allocation5 + $0xa90] sm:$0xff]
        %v790 = vld [vmem:[#allocation5 + $0xa98] sm:$0xff]
        %v791 = vld [vmem:[#allocation5 + $0xaa0] sm:$0xff]
        %v792 = vld [vmem:[#allocation5 + $0xaa8] sm:$0xff]
        %v793 = vld [vmem:[#allocation5 + $0xab0] sm:$0xff]
        %v794 = vld [vmem:[#allocation5 + $0xab8] sm:$0xff]
        %v795 = vld [vmem:[#allocation5 + $0xac0] sm:$0xff]
        %v796 = vld [vmem:[#allocation5 + $0xac8] sm:$0xff]
        %v797 = vld [vmem:[#allocation5 + $0xad0] sm:$0xff]
        %v798 = vld [vmem:[#allocation5 + $0xad8] sm:$0xff]
        %v799 = vld [vmem:[#allocation5 + $0xae0] sm:$0xff]
        %v800 = vld [vmem:[#allocation5 + $0xae8] sm:$0xff]
        %v801 = vld [vmem:[#allocation5 + $0xaf0] sm:$0xff]
        %v802 = vld [vmem:[#allocation5 + $0xaf8] sm:$0xff]
        %v803 = vld [vmem:[#allocation5 + $0xb00] sm:$0xff]
        %v804 = vld [vmem:[#allocation5 + $0xb08] sm:$0xff]
        %v805 = vld [vmem:[#allocation5 + $0xb10] sm:$0xff]
        %v806 = vld [vmem:[#allocation5 + $0xb18] sm:$0xff]
        %v807 = vld [vmem:[#allocation5 + $0xb20] sm:$0xff]
        %v808 = vld [vmem:[#allocation5 + $0xb28] sm:$0xff]
        %v809 = vld [vmem:[#allocation5 + $0xb30] sm:$0xff]
        %v810 = vld [vmem:[#allocation5 + $0xb38] sm:$0xff]
        %v811 = vld [vmem:[#allocation5 + $0xb40] sm:$0xff]
        %v812 = vld [vmem:[#allocation5 + $0xb48] sm:$0xff]
        %v813 = vld [vmem:[#allocation5 + $0xb50] sm:$0xff]
        %v814 = vld [vmem:[#allocation5 + $0xb58] sm:$0xff]
        %v815 = vld [vmem:[#allocation5 + $0xb60] sm:$0xff]
        %v816 = vld [vmem:[#allocation5 + $0xb68] sm:$0xff]
        %v817 = vld [vmem:[#allocation5 + $0xb70] sm:$0xff]
        %v818 = vld [vmem:[#allocation5 + $0xb78] sm:$0xff]
        %v819 = vld [vmem:[#allocation5 + $0xb80] sm:$0xff]
        %v820 = vld [vmem:[#allocation5 + $0xb88] sm:$0xff]
        %v821 = vld [vmem:[#allocation5 + $0xb90] sm:$0xff]
        %v822 = vld [vmem:[#allocation5 + $0xb98] sm:$0xff]
        %v823 = vld [vmem:[#allocation5 + $0xba0] sm:$0xff]
        %v824 = vld [vmem:[#allocation5 + $0xba8] sm:$0xff]
        %v825 = vld [vmem:[#allocation5 + $0xbb0] sm:$0xff]
        %v826 = vld [vmem:[#allocation5 + $0xbb8] sm:$0xff]
        %v827 = vld [vmem:[#allocation5 + $0xbc0] sm:$0xff]
        %v828 = vld [vmem:[#allocation5 + $0xbc8] sm:$0xff]
        %v829 = vld [vmem:[#allocation5 + $0xbd0] sm:$0xff]
        %v830 = vld [vmem:[#allocation5 + $0xbd8] sm:$0xff]
        %v831 = vld [vmem:[#allocation5 + $0xbe0] sm:$0xff]
        %v832 = vld [vmem:[#allocation5 + $0xbe8] sm:$0xff]
        %v833 = vld [vmem:[#allocation5 + $0xbf0] sm:$0xff]
        %v834 = vld [vmem:[#allocation5 + $0xbf8] sm:$0xff]
        %v835 = vld [vmem:[#allocation5 + $0xc00] sm:$0xff]
        %v836 = vld [vmem:[#allocation5 + $0xc08] sm:$0xff]
        %v837 = vld [vmem:[#allocation5 + $0xc10] sm:$0xff]
        %v838 = vld [vmem:[#allocation5 + $0xc18] sm:$0xff]
        %v839 = vld [vmem:[#allocation5 + $0xc20] sm:$0xff]
        %v840 = vld [vmem:[#allocation5 + $0xc28] sm:$0xff]
        %v841 = vld [vmem:[#allocation5 + $0xc30] sm:$0xff]
        %v842 = vld [vmem:[#allocation5 + $0xc38] sm:$0xff]
        %v843 = vld [vmem:[#allocation5 + $0xc40] sm:$0xff]
        %v844 = vld [vmem:[#allocation5 + $0xc48] sm:$0xff]
        %v845 = vld [vmem:[#allocation5 + $0xc50] sm:$0xff]
        %v846 = vld [vmem:[#allocation5 + $0xc58] sm:$0xff]
        %v847 = vld [vmem:[#allocation5 + $0xc60] sm:$0xff]
        %v848 = vld [vmem:[#allocation5 + $0xc68] sm:$0xff]
        %v849 = vld [vmem:[#allocation5 + $0xc70] sm:$0xff]
        %v850 = vld [vmem:[#allocation5 + $0xc78] sm:$0xff]
        %v851 = vld [vmem:[#allocation5 + $0xc80] sm:$0xff]
        %v852 = vld [vmem:[#allocation5 + $0xc88] sm:$0xff]
        %v853 = vld [vmem:[#allocation5 + $0xc90] sm:$0xff]
        %v854 = vld [vmem:[#allocation5 + $0xc98] sm:$0xff]
        %v855 = vld [vmem:[#allocation5 + $0xca0] sm:$0xff]
        %v856 = vld [vmem:[#allocation5 + $0xca8] sm:$0xff]
        %v857 = vld [vmem:[#allocation5 + $0xcb0] sm:$0xff]
        %v858 = vld [vmem:[#allocation5 + $0xcb8] sm:$0xff]
        %v859 = vld [vmem:[#allocation5 + $0xcc0] sm:$0xff]
        %v860 = vld [vmem:[#allocation5 + $0xcc8] sm:$0xff]
        %v861 = vld [vmem:[#allocation5 + $0xcd0] sm:$0xff]
        %v862 = vld [vmem:[#allocation5 + $0xcd8] sm:$0xff]
        %v863 = vld [vmem:[#allocation5 + $0xce0] sm:$0xff]
        %v864 = vld [vmem:[#allocation5 + $0xce8] sm:$0xff]
        %v865 = vld [vmem:[#allocation5 + $0xcf0] sm:$0xff]
        %v866 = vld [vmem:[#allocation5 + $0xcf8] sm:$0xff]
        %v867 = vld [vmem:[#allocation5 + $0xd00] sm:$0xff]
        %v868 = vld [vmem:[#allocation5 + $0xd08] sm:$0xff]
        %v869 = vld [vmem:[#allocation5 + $0xd10] sm:$0xff]
        %v870 = vld [vmem:[#allocation5 + $0xd18] sm:$0xff]
        %v871 = vld [vmem:[#allocation5 + $0xd20] sm:$0xff]
        %v872 = vld [vmem:[#allocation5 + $0xd28] sm:$0xff]
        %v873 = vld [vmem:[#allocation5 + $0xd30] sm:$0xff]
        %v874 = vld [vmem:[#allocation5 + $0xd38] sm:$0xff]
        %v875 = vld [vmem:[#allocation5 + $0xd40] sm:$0xff]
        %v876 = vld [vmem:[#allocation5 + $0xd48] sm:$0xff]
        %v877 = vld [vmem:[#allocation5 + $0xd50] sm:$0xff]
        %v878 = vld [vmem:[#allocation5 + $0xd58] sm:$0xff]
        %v879 = vld [vmem:[#allocation5 + $0xd60] sm:$0xff]
        %v880 = vld [vmem:[#allocation5 + $0xd68] sm:$0xff]
        %v881 = vld [vmem:[#allocation5 + $0xd70] sm:$0xff]
        %v882 = vld [vmem:[#allocation5 + $0xd78] sm:$0xff]
        %v883 = vld [vmem:[#allocation5 + $0xd80] sm:$0xff]
        %v884 = vld [vmem:[#allocation5 + $0xd88] sm:$0xff]
        %v885 = vld [vmem:[#allocation5 + $0xd90] sm:$0xff]
        %v886 = vld [vmem:[#allocation5 + $0xd98] sm:$0xff]
        %v887 = vld [vmem:[#allocation5 + $0xda0] sm:$0xff]
        %v888 = vld [vmem:[#allocation5 + $0xda8] sm:$0xff]
        %v889 = vld [vmem:[#allocation5 + $0xdb0] sm:$0xff]
        %v890 = vld [vmem:[#allocation5 + $0xdb8] sm:$0xff]
        %v891 = vld [vmem:[#allocation5 + $0xdc0] sm:$0xff]
        %v892 = vld [vmem:[#allocation5 + $0xdc8] sm:$0xff]
        %v893 = vld [vmem:[#allocation5 + $0xdd0] sm:$0xff]
        %v894 = vld [vmem:[#allocation5 + $0xdd8] sm:$0xff]
        %v895 = vld [vmem:[#allocation5 + $0xde0] sm:$0xff]
        %v896 = vld [vmem:[#allocation5 + $0xde8] sm:$0xff]
        %v897 = vld [vmem:[#allocation5 + $0xdf0] sm:$0xff]
        %v898 = vld [vmem:[#allocation5 + $0xdf8] sm:$0xff]
        %v899 = vld [vmem:[#allocation5 + $0xe00] sm:$0xff]
        %v900 = vld [vmem:[#allocation5 + $0xe08] sm:$0xff]
        %v901 = vld [vmem:[#allocation5 + $0xe10] sm:$0xff]
        %v902 = vld [vmem:[#allocation5 + $0xe18] sm:$0xff]
        %v903 = vld [vmem:[#allocation5 + $0xe20] sm:$0xff]
        %v904 = vld [vmem:[#allocation5 + $0xe28] sm:$0xff]
        %v905 = vld [vmem:[#allocation5 + $0xe30] sm:$0xff]
        %v906 = vld [vmem:[#allocation5 + $0xe38] sm:$0xff]
        %v907 = vld [vmem:[#allocation5 + $0xe40] sm:$0xff]
        %v908 = vld [vmem:[#allocation5 + $0xe48] sm:$0xff]
        %v909 = vld [vmem:[#allocation5 + $0xe50] sm:$0xff]
        %v910 = vld [vmem:[#allocation5 + $0xe58] sm:$0xff]
        %v911 = vld [vmem:[#allocation5 + $0xe60] sm:$0xff]
        %v912 = vld [vmem:[#allocation5 + $0xe68] sm:$0xff]
        %v913 = vld [vmem:[#allocation5 + $0xe70] sm:$0xff]
        %v914 = vld [vmem:[#allocation5 + $0xe78] sm:$0xff]
        %v915 = vld [vmem:[#allocation5 + $0xe80] sm:$0xff]
        %v916 = vld [vmem:[#allocation5 + $0xe88] sm:$0xff]
        %v917 = vld [vmem:[#allocation5 + $0xe90] sm:$0xff]
        %v918 = vld [vmem:[#allocation5 + $0xe98] sm:$0xff]
        %v919 = vld [vmem:[#allocation5 + $0xea0] sm:$0xff]
        %v920 = vld [vmem:[#allocation5 + $0xea8] sm:$0xff]
        %v921 = vld [vmem:[#allocation5 + $0xeb0] sm:$0xff]
        %v922 = vld [vmem:[#allocation5 + $0xeb8] sm:$0xff]
        %v923 = vld [vmem:[#allocation5 + $0xec0] sm:$0xff]
        %v924 = vld [vmem:[#allocation5 + $0xec8] sm:$0xff]
        %v925 = vld [vmem:[#allocation5 + $0xed0] sm:$0xff]
        %v926 = vld [vmem:[#allocation5 + $0xed8] sm:$0xff]
        %v927 = vld [vmem:[#allocation5 + $0xee0] sm:$0xff]
        %v928 = vld [vmem:[#allocation5 + $0xee8] sm:$0xff]
        %v929 = vld [vmem:[#allocation5 + $0xef0] sm:$0xff]
        %v930 = vld [vmem:[#allocation5 + $0xef8] sm:$0xff]
        %v931 = vld [vmem:[#allocation5 + $0xf00] sm:$0xff]
        %v932 = vld [vmem:[#allocation5 + $0xf08] sm:$0xff]
        %v933 = vld [vmem:[#allocation5 + $0xf10] sm:$0xff]
        %v934 = vld [vmem:[#allocation5 + $0xf18] sm:$0xff]
        %v935 = vld [vmem:[#allocation5 + $0xf20] sm:$0xff]
        %v936 = vld [vmem:[#allocation5 + $0xf28] sm:$0xff]
        %v937 = vld [vmem:[#allocation5 + $0xf30] sm:$0xff]
        %v938 = vld [vmem:[#allocation5 + $0xf38] sm:$0xff]
        %v939 = vld [vmem:[#allocation5 + $0xf40] sm:$0xff]
        %v940 = vld [vmem:[#allocation5 + $0xf48] sm:$0xff]
        %v941 = vld [vmem:[#allocation5 + $0xf50] sm:$0xff]
        %v942 = vld [vmem:[#allocation5 + $0xf58] sm:$0xff]
        %v943 = vld [vmem:[#allocation5 + $0xf60] sm:$0xff]
        %v944 = vld [vmem:[#allocation5 + $0xf68] sm:$0xff]
        %v945 = vld [vmem:[#allocation5 + $0xf70] sm:$0xff]
        %v946 = vld [vmem:[#allocation5 + $0xf78] sm:$0xff]
        %v947 = vld [vmem:[#allocation5 + $0xf80] sm:$0xff]
        %v948 = vld [vmem:[#allocation5 + $0xf88] sm:$0xff]
        %v949 = vld [vmem:[#allocation5 + $0xf90] sm:$0xff]
        %v950 = vld [vmem:[#allocation5 + $0xf98] sm:$0xff]
        %v951 = vld [vmem:[#allocation5 + $0xfa0] sm:$0xff]
        %v952 = vld [vmem:[#allocation5 + $0xfa8] sm:$0xff]
        %v953 = vld [vmem:[#allocation5 + $0xfb0] sm:$0xff]
        %v954 = vld [vmem:[#allocation5 + $0xfb8] sm:$0xff]
        %v955 = vld [vmem:[#allocation5 + $0xfc0] sm:$0xff]
        %v956 = vld [vmem:[#allocation5 + $0xfc8] sm:$0xff]
        %v957 = vld [vmem:[#allocation5 + $0xfd0] sm:$0xff]
        %v958 = vld [vmem:[#allocation5 + $0xfd8] sm:$0xff]
        %v959 = vld [vmem:[#allocation5 + $0xfe0] sm:$0xff]
        %v960 = vld [vmem:[#allocation5 + $0xfe8] sm:$0xff]
        %v961 = vld [vmem:[#allocation5 + $0xff0] sm:$0xff]
        %v962 = vld [vmem:[#allocation5 + $0xff8] sm:$0xff]
        %v963 = vld [vmem:[#allocation5 + $0x1000] sm:$0xff]
        %v964 = vld [vmem:[#allocation5 + $0x1008] sm:$0xff]
        %v965 = vld [vmem:[#allocation5 + $0x1010] sm:$0xff]
        %v966 = vld [vmem:[#allocation5 + $0x1018] sm:$0xff]
        %v967 = vld [vmem:[#allocation5 + $0x1020] sm:$0xff]
        %v968 = vld [vmem:[#allocation5 + $0x1028] sm:$0xff]
        %v969 = vld [vmem:[#allocation5 + $0x1030] sm:$0xff]
        %v970 = vld [vmem:[#allocation5 + $0x1038] sm:$0xff]
        %v971 = vld [vmem:[#allocation5 + $0x1040] sm:$0xff]
        %v972 = vld [vmem:[#allocation5 + $0x1048] sm:$0xff]
        %v973 = vld [vmem:[#allocation5 + $0x1050] sm:$0xff]
        %v974 = vld [vmem:[#allocation5 + $0x1058] sm:$0xff]
        %v975 = vld [vmem:[#allocation5 + $0x1060] sm:$0xff]
        %v976 = vld [vmem:[#allocation5 + $0x1068] sm:$0xff]
        %v977 = vld [vmem:[#allocation5 + $0x1070] sm:$0xff]
        %v978 = vld [vmem:[#allocation5 + $0x1078] sm:$0xff]
        %v979 = vld [vmem:[#allocation5 + $0x1080] sm:$0xff]
        %v980 = vld [vmem:[#allocation5 + $0x1088] sm:$0xff]
        %v981 = vld [vmem:[#allocation5 + $0x1090] sm:$0xff]
        %v982 = vld [vmem:[#allocation5 + $0x1098] sm:$0xff]
        %v983 = vld [vmem:[#allocation5 + $0x10a0] sm:$0xff]
        %v984 = vld [vmem:[#allocation5 + $0x10a8] sm:$0xff]
        %v985 = vld [vmem:[#allocation5 + $0x10b0] sm:$0xff]
        %v986 = vld [vmem:[#allocation5 + $0x10b8] sm:$0xff]
        %v987 = vld [vmem:[#allocation5 + $0x10c0] sm:$0xff]
        %v988 = vld [vmem:[#allocation5 + $0x10c8] sm:$0xff]
        %v989 = vld [vmem:[#allocation5 + $0x10d0] sm:$0xff]
        %v990 = vld [vmem:[#allocation5 + $0x10d8] sm:$0xff]
        %v991 = vld [vmem:[#allocation5 + $0x10e0] sm:$0xff]
        %v992 = vld [vmem:[#allocation5 + $0x10e8] sm:$0xff]
        %v993 = vld [vmem:[#allocation5 + $0x10f0] sm:$0xff]
        %v994 = vld [vmem:[#allocation5 + $0x10f8] sm:$0xff]
        %v995 = vld [vmem:[#allocation5 + $0x1100] sm:$0xff]
        %v996 = vld [vmem:[#allocation5 + $0x1108] sm:$0xff]
        %v997 = vld [vmem:[#allocation5 + $0x1110] sm:$0xff]
        %v998 = vld [vmem:[#allocation5 + $0x1118] sm:$0xff]
        %v999 = vld [vmem:[#allocation5 + $0x1120] sm:$0xff]
        %v1000 = vld [vmem:[#allocation5 + $0x1128] sm:$0xff]
        %v1001 = vld [vmem:[#allocation5 + $0x1130] sm:$0xff]
        %v1002 = vld [vmem:[#allocation5 + $0x1138] sm:$0xff]
        %v1003 = vld [vmem:[#allocation5 + $0x1140] sm:$0xff]
        %v1004 = vld [vmem:[#allocation5 + $0x1148] sm:$0xff]
        %v1005 = vld [vmem:[#allocation5 + $0x1150] sm:$0xff]
        %v1006 = vld [vmem:[#allocation5 + $0x1158] sm:$0xff]
        %v1007 = vld [vmem:[#allocation5 + $0x1160] sm:$0xff]
        %v1008 = vld [vmem:[#allocation5 + $0x1168] sm:$0xff]
        %v1009 = vld [vmem:[#allocation5 + $0x1170] sm:$0xff]
        %v1010 = vld [vmem:[#allocation5 + $0x1178] sm:$0xff]
        %v1011 = vld [vmem:[#allocation5 + $0x1180] sm:$0xff]
        %v1012 = vld [vmem:[#allocation5 + $0x1188] sm:$0xff]
        %v1013 = vld [vmem:[#allocation5 + $0x1190] sm:$0xff]
        %v1014 = vld [vmem:[#allocation5 + $0x1198] sm:$0xff]
        %v1015 = vld [vmem:[#allocation5 + $0x11a0] sm:$0xff]
        %v1016 = vld [vmem:[#allocation5 + $0x11a8] sm:$0xff]
        %v1017 = vld [vmem:[#allocation5 + $0x11b0] sm:$0xff]
        %v1018 = vld [vmem:[#allocation5 + $0x11b8] sm:$0xff]
        %v1019 = vld [vmem:[#allocation5 + $0x11c0] sm:$0xff]
        %v1020 = vld [vmem:[#allocation5 + $0x11c8] sm:$0xff]
        %v1021 = vld [vmem:[#allocation5 + $0x11d0] sm:$0xff]
        %v1022 = vld [vmem:[#allocation5 + $0x11d8] sm:$0xff]
        %v1023 = vld [vmem:[#allocation5 + $0x11e0] sm:$0xff]
        %v1024 = vld [vmem:[#allocation5 + $0x11e8] sm:$0xff]
        %v1025 = vld [vmem:[#allocation5 + $0x11f0] sm:$0xff]
        %v1026 = vld [vmem:[#allocation5 + $0x11f8] sm:$0xff]
        %v1027 = vld [vmem:[#allocation5 + $0x1200] sm:$0xff]
        %v1028 = vld [vmem:[#allocation5 + $0x1208] sm:$0xff]
        %v1029 = vld [vmem:[#allocation5 + $0x1210] sm:$0xff]
        %v1030 = vld [vmem:[#allocation5 + $0x1218] sm:$0xff]
        %v1031 = vld [vmem:[#allocation5 + $0x1220] sm:$0xff]
        %v1032 = vld [vmem:[#allocation5 + $0x1228] sm:$0xff]
        %v1033 = vld [vmem:[#allocation5 + $0x1230] sm:$0xff]
        %v1034 = vld [vmem:[#allocation5 + $0x1238] sm:$0xff]
        %v1035 = vld [vmem:[#allocation5 + $0x1240] sm:$0xff]
        %v1036 = vld [vmem:[#allocation5 + $0x1248] sm:$0xff]
        %v1037 = vld [vmem:[#allocation5 + $0x1250] sm:$0xff]
        %v1038 = vld [vmem:[#allocation5 + $0x1258] sm:$0xff]
        %v1039 = vld [vmem:[#allocation5 + $0x1260] sm:$0xff]
        %v1040 = vld [vmem:[#allocation5 + $0x1268] sm:$0xff]
        %v1041 = vld [vmem:[#allocation5 + $0x1270] sm:$0xff]
        %v1042 = vld [vmem:[#allocation5 + $0x1278] sm:$0xff]
        %v1043 = vld [vmem:[#allocation5 + $0x1280] sm:$0xff]
        %v1044 = vld [vmem:[#allocation5 + $0x1288] sm:$0xff]
        %v1045 = vld [vmem:[#allocation5 + $0x1290] sm:$0xff]
        %v1046 = vld [vmem:[#allocation5 + $0x1298] sm:$0xff]
        %v1047 = vld [vmem:[#allocation5 + $0x12a0] sm:$0xff]
        %v1048 = vld [vmem:[#allocation5 + $0x12a8] sm:$0xff]
        %v1049 = vld [vmem:[#allocation5 + $0x12b0] sm:$0xff]
        %v1050 = vld [vmem:[#allocation5 + $0x12b8] sm:$0xff]
        %v1051 = vld [vmem:[#allocation5 + $0x12c0] sm:$0xff]
        %v1052 = vld [vmem:[#allocation5 + $0x12c8] sm:$0xff]
        %v1053 = vld [vmem:[#allocation5 + $0x12d0] sm:$0xff]
        %v1054 = vld [vmem:[#allocation5 + $0x12d8] sm:$0xff]
        %v1055 = vld [vmem:[#allocation5 + $0x12e0] sm:$0xff]
        %v1056 = vld [vmem:[#allocation5 + $0x12e8] sm:$0xff]
        %v1057 = vld [vmem:[#allocation5 + $0x12f0] sm:$0xff]
        %v1058 = vld [vmem:[#allocation5 + $0x12f8] sm:$0xff]
        %v1059 = vld [vmem:[#allocation5 + $0x1300] sm:$0xff]
        %v1060 = vld [vmem:[#allocation5 + $0x1308] sm:$0xff]
        %v1061 = vld [vmem:[#allocation5 + $0x1310] sm:$0xff]
        %v1062 = vld [vmem:[#allocation5 + $0x1318] sm:$0xff]
        %v1063 = vld [vmem:[#allocation5 + $0x1320] sm:$0xff]
        %v1064 = vld [vmem:[#allocation5 + $0x1328] sm:$0xff]
        %v1065 = vld [vmem:[#allocation5 + $0x1330] sm:$0xff]
        %v1066 = vld [vmem:[#allocation5 + $0x1338] sm:$0xff]
        %v1067 = vld [vmem:[#allocation5 + $0x1340] sm:$0xff]
        %v1068 = vld [vmem:[#allocation5 + $0x1348] sm:$0xff]
        %v1069 = vld [vmem:[#allocation5 + $0x1350] sm:$0xff]
        %v1070 = vld [vmem:[#allocation5 + $0x1358] sm:$0xff]
        %v1071 = vld [vmem:[#allocation5 + $0x1360] sm:$0xff]
        %v1072 = vld [vmem:[#allocation5 + $0x1368] sm:$0xff]
        %v1073 = vld [vmem:[#allocation5 + $0x1370] sm:$0xff]
        %v1074 = vld [vmem:[#allocation5 + $0x1378] sm:$0xff]
        %v1075 = vld [vmem:[#allocation5 + $0x1380] sm:$0xff]
        %v1076 = vld [vmem:[#allocation5 + $0x1388] sm:$0xff]
        %v1077 = vld [vmem:[#allocation5 + $0x1390] sm:$0xff]
        %v1078 = vld [vmem:[#allocation5 + $0x1398] sm:$0xff]
        %v1079 = vld [vmem:[#allocation5 + $0x13a0] sm:$0xff]
        %v1080 = vld [vmem:[#allocation5 + $0x13a8] sm:$0xff]
        %v1081 = vld [vmem:[#allocation5 + $0x13b0] sm:$0xff]
        %v1082 = vld [vmem:[#allocation5 + $0x13b8] sm:$0xff]
        %v1083 = vld [vmem:[#allocation5 + $0x13c0] sm:$0xff]
        %v1084 = vld [vmem:[#allocation5 + $0x13c8] sm:$0xff]
        %v1085 = vld [vmem:[#allocation5 + $0x13d0] sm:$0xff]
        %v1086 = vld [vmem:[#allocation5 + $0x13d8] sm:$0xff]
        %v1087 = vld [vmem:[#allocation5 + $0x13e0] sm:$0xff]
        %v1088 = vld [vmem:[#allocation5 + $0x13e8] sm:$0xff]
        %v1089 = vld [vmem:[#allocation5 + $0x13f0] sm:$0xff]
        %v1090 = vld [vmem:[#allocation5 + $0x13f8] sm:$0xff]
        %v1091 = vld [vmem:[#allocation5 + $0x1400] sm:$0xff]
        %v1092 = vld [vmem:[#allocation5 + $0x1408] sm:$0xff]
        %v1093 = vld [vmem:[#allocation5 + $0x1410] sm:$0xff]
        %v1094 = vld [vmem:[#allocation5 + $0x1418] sm:$0xff]
        %v1095 = vld [vmem:[#allocation5 + $0x1420] sm:$0xff]
        %v1096 = vld [vmem:[#allocation5 + $0x1428] sm:$0xff]
        %v1097 = vld [vmem:[#allocation5 + $0x1430] sm:$0xff]
        %v1098 = vld [vmem:[#allocation5 + $0x1438] sm:$0xff]
        %v1099 = vld [vmem:[#allocation5 + $0x1440] sm:$0xff]
        %v1100 = vld [vmem:[#allocation5 + $0x1448] sm:$0xff]
        %v1101 = vld [vmem:[#allocation5 + $0x1450] sm:$0xff]
        %v1102 = vld [vmem:[#allocation5 + $0x1458] sm:$0xff]
        %v1103 = vld [vmem:[#allocation5 + $0x1460] sm:$0xff]
        %v1104 = vld [vmem:[#allocation5 + $0x1468] sm:$0xff]
        %v1105 = vld [vmem:[#allocation5 + $0x1470] sm:$0xff]
        %v1106 = vld [vmem:[#allocation5 + $0x1478] sm:$0xff]
        %v1107 = vld [vmem:[#allocation5 + $0x1480] sm:$0xff]
        %v1108 = vld [vmem:[#allocation5 + $0x1488] sm:$0xff]
        %v1109 = vld [vmem:[#allocation5 + $0x1490] sm:$0xff]
        %v1110 = vld [vmem:[#allocation5 + $0x1498] sm:$0xff]
        %v1111 = vld [vmem:[#allocation5 + $0x14a0] sm:$0xff]
        %v1112 = vld [vmem:[#allocation5 + $0x14a8] sm:$0xff]
        %v1113 = vld [vmem:[#allocation5 + $0x14b0] sm:$0xff]
        %v1114 = vld [vmem:[#allocation5 + $0x14b8] sm:$0xff]
        %v1115 = vld [vmem:[#allocation5 + $0x14c0] sm:$0xff]
        %v1116 = vld [vmem:[#allocation5 + $0x14c8] sm:$0xff]
        %v1117 = vld [vmem:[#allocation5 + $0x14d0] sm:$0xff]
        %v1118 = vld [vmem:[#allocation5 + $0x14d8] sm:$0xff]
        %v1119 = vld [vmem:[#allocation5 + $0x14e0] sm:$0xff]
        %v1120 = vld [vmem:[#allocation5 + $0x14e8] sm:$0xff]
        %v1121 = vld [vmem:[#allocation5 + $0x14f0] sm:$0xff]
        %v1122 = vld [vmem:[#allocation5 + $0x14f8] sm:$0xff]
        %v1123 = vld [vmem:[#allocation5 + $0x1500] sm:$0xff]
        %v1124 = vld [vmem:[#allocation5 + $0x1508] sm:$0xff]
        %v1125 = vld [vmem:[#allocation5 + $0x1510] sm:$0xff]
        %v1126 = vld [vmem:[#allocation5 + $0x1518] sm:$0xff]
        %v1127 = vld [vmem:[#allocation5 + $0x1520] sm:$0xff]
        %v1128 = vld [vmem:[#allocation5 + $0x1528] sm:$0xff]
        %v1129 = vld [vmem:[#allocation5 + $0x1530] sm:$0xff]
        %v1130 = vld [vmem:[#allocation5 + $0x1538] sm:$0xff]
        %v1131 = vld [vmem:[#allocation5 + $0x1540] sm:$0xff]
        %v1132 = vld [vmem:[#allocation5 + $0x1548] sm:$0xff]
        %v1133 = vld [vmem:[#allocation5 + $0x1550] sm:$0xff]
        %v1134 = vld [vmem:[#allocation5 + $0x1558] sm:$0xff]
        %v1135 = vld [vmem:[#allocation5 + $0x1560] sm:$0xff]
        %v1136 = vld [vmem:[#allocation5 + $0x1568] sm:$0xff]
        %v1137 = vld [vmem:[#allocation5 + $0x1570] sm:$0xff]
        %v1138 = vld [vmem:[#allocation5 + $0x1578] sm:$0xff]
        %v1139 = vld [vmem:[#allocation5 + $0x1580] sm:$0xff]
        %v1140 = vld [vmem:[#allocation5 + $0x1588] sm:$0xff]
        %v1141 = vld [vmem:[#allocation5 + $0x1590] sm:$0xff]
        %v1142 = vld [vmem:[#allocation5 + $0x1598] sm:$0xff]
        %v1143 = vld [vmem:[#allocation5 + $0x15a0] sm:$0xff]
        %v1144 = vld [vmem:[#allocation5 + $0x15a8] sm:$0xff]
        %v1145 = vld [vmem:[#allocation5 + $0x15b0] sm:$0xff]
        %v1146 = vld [vmem:[#allocation5 + $0x15b8] sm:$0xff]
        %v1147 = vld [vmem:[#allocation5 + $0x15c0] sm:$0xff]
        %v1148 = vld [vmem:[#allocation5 + $0x15c8] sm:$0xff]
        %v1149 = vld [vmem:[#allocation5 + $0x15d0] sm:$0xff]
        %v1150 = vld [vmem:[#allocation5 + $0x15d8] sm:$0xff]
        %v1151 = vld [vmem:[#allocation5 + $0x15e0] sm:$0xff]
        %v1152 = vld [vmem:[#allocation5 + $0x15e8] sm:$0xff]
        %v1153 = vld [vmem:[#allocation5 + $0x15f0] sm:$0xff]
        %v1154 = vld [vmem:[#allocation5 + $0x15f8] sm:$0xff]
        %v1155 = vld [vmem:[#allocation5 + $0x1600] sm:$0xff]
        %v1156 = vld [vmem:[#allocation5 + $0x1608] sm:$0xff]
        %v1157 = vld [vmem:[#allocation5 + $0x1610] sm:$0xff]
        %v1158 = vld [vmem:[#allocation5 + $0x1618] sm:$0xff]
        %v1159 = vld [vmem:[#allocation5 + $0x1620] sm:$0xff]
        %v1160 = vld [vmem:[#allocation5 + $0x1628] sm:$0xff]
        %v1161 = vld [vmem:[#allocation5 + $0x1630] sm:$0xff]
        %v1162 = vld [vmem:[#allocation5 + $0x1638] sm:$0xff]
        %v1163 = vld [vmem:[#allocation5 + $0x1640] sm:$0xff]
        %v1164 = vld [vmem:[#allocation5 + $0x1648] sm:$0xff]
        %v1165 = vld [vmem:[#allocation5 + $0x1650] sm:$0xff]
        %v1166 = vld [vmem:[#allocation5 + $0x1658] sm:$0xff]
        %v1167 = vld [vmem:[#allocation5 + $0x1660] sm:$0xff]
        %v1168 = vld [vmem:[#allocation5 + $0x1668] sm:$0xff]
        %v1169 = vld [vmem:[#allocation5 + $0x1670] sm:$0xff]
        %v1170 = vld [vmem:[#allocation5 + $0x1678] sm:$0xff]
        %v1171 = vld [vmem:[#allocation5 + $0x1680] sm:$0xff]
        %v1172 = vld [vmem:[#allocation5 + $0x1688] sm:$0xff]
        %v1173 = vld [vmem:[#allocation5 + $0x1690] sm:$0xff]
        %v1174 = vld [vmem:[#allocation5 + $0x1698] sm:$0xff]
        %v1175 = vld [vmem:[#allocation5 + $0x16a0] sm:$0xff]
        %v1176 = vld [vmem:[#allocation5 + $0x16a8] sm:$0xff]
        %v1177 = vld [vmem:[#allocation5 + $0x16b0] sm:$0xff]
        %v1178 = vld [vmem:[#allocation5 + $0x16b8] sm:$0xff]
        %v1179 = vld [vmem:[#allocation5 + $0x16c0] sm:$0xff]
        %v1180 = vld [vmem:[#allocation5 + $0x16c8] sm:$0xff]
        %v1181 = vld [vmem:[#allocation5 + $0x16d0] sm:$0xff]
        %v1182 = vld [vmem:[#allocation5 + $0x16d8] sm:$0xff]
        %v1183 = vld [vmem:[#allocation5 + $0x16e0] sm:$0xff]
        %v1184 = vld [vmem:[#allocation5 + $0x16e8] sm:$0xff]
        %v1185 = vld [vmem:[#allocation5 + $0x16f0] sm:$0xff]
        %v1186 = vld [vmem:[#allocation5 + $0x16f8] sm:$0xff]
        %v1187 = vld [vmem:[#allocation5 + $0x1700] sm:$0xff]
        %v1188 = vld [vmem:[#allocation5 + $0x1708] sm:$0xff]
        %v1189 = vld [vmem:[#allocation5 + $0x1710] sm:$0xff]
        %v1190 = vld [vmem:[#allocation5 + $0x1718] sm:$0xff]
        %v1191 = vld [vmem:[#allocation5 + $0x1720] sm:$0xff]
        %v1192 = vld [vmem:[#allocation5 + $0x1728] sm:$0xff]
        %v1193 = vld [vmem:[#allocation5 + $0x1730] sm:$0xff]
        %v1194 = vld [vmem:[#allocation5 + $0x1738] sm:$0xff]
        %v1195 = vld [vmem:[#allocation5 + $0x1740] sm:$0xff]
        %v1196 = vld [vmem:[#allocation5 + $0x1748] sm:$0xff]
        %v1197 = vld [vmem:[#allocation5 + $0x1750] sm:$0xff]
        %v1198 = vld [vmem:[#allocation5 + $0x1758] sm:$0xff]
        %v1199 = vld [vmem:[#allocation5 + $0x1760] sm:$0xff]
        %v1200 = vld [vmem:[#allocation5 + $0x1768] sm:$0xff]
        %v1201 = vld [vmem:[#allocation5 + $0x1770] sm:$0xff]
        %v1202 = vld [vmem:[#allocation5 + $0x1778] sm:$0xff]
        %v1203 = vld [vmem:[#allocation5 + $0x1780] sm:$0xff]
        %v1204 = vld [vmem:[#allocation5 + $0x1788] sm:$0xff]
        %v1205 = vld [vmem:[#allocation5 + $0x1790] sm:$0xff]
        %v1206 = vld [vmem:[#allocation5 + $0x1798] sm:$0xff]
        %v1207 = vld [vmem:[#allocation5 + $0x17a0] sm:$0xff]
        %v1208 = vld [vmem:[#allocation5 + $0x17a8] sm:$0xff]
        %v1209 = vld [vmem:[#allocation5 + $0x17b0] sm:$0xff]
        %v1210 = vld [vmem:[#allocation5 + $0x17b8] sm:$0xff]
        %v1211 = vld [vmem:[#allocation5 + $0x17c0] sm:$0xff]
        %v1212 = vld [vmem:[#allocation5 + $0x17c8] sm:$0xff]
        %v1213 = vld [vmem:[#allocation5 + $0x17d0] sm:$0xff]
        %v1214 = vld [vmem:[#allocation5 + $0x17d8] sm:$0xff]
        %v1215 = vld [vmem:[#allocation5 + $0x17e0] sm:$0xff]
        %v1216 = vld [vmem:[#allocation5 + $0x17e8] sm:$0xff]
        %v1217 = vld [vmem:[#allocation5 + $0x17f0] sm:$0xff]
        %v1218 = vld [vmem:[#allocation5 + $0x17f8] sm:$0xff]
        %v1219 = vld [vmem:[#allocation5 + $0x1800] sm:$0xff]
        %v1220 = vld [vmem:[#allocation5 + $0x1808] sm:$0xff]
        %v1221 = vld [vmem:[#allocation5 + $0x1810] sm:$0xff]
        %v1222 = vld [vmem:[#allocation5 + $0x1818] sm:$0xff]
        %v1223 = vld [vmem:[#allocation5 + $0x1820] sm:$0xff]
        %v1224 = vld [vmem:[#allocation5 + $0x1828] sm:$0xff]
        %v1225 = vld [vmem:[#allocation5 + $0x1830] sm:$0xff]
        %v1226 = vld [vmem:[#allocation5 + $0x1838] sm:$0xff]
        %v1227 = vld [vmem:[#allocation5 + $0x1840] sm:$0xff]
        %v1228 = vld [vmem:[#allocation5 + $0x1848] sm:$0xff]
        %v1229 = vld [vmem:[#allocation5 + $0x1850] sm:$0xff]
        %v1230 = vld [vmem:[#allocation5 + $0x1858] sm:$0xff]
        %v1231 = vld [vmem:[#allocation5 + $0x1860] sm:$0xff]
        %v1232 = vld [vmem:[#allocation5 + $0x1868] sm:$0xff]
        %v1233 = vld [vmem:[#allocation5 + $0x1870] sm:$0xff]
        %v1234 = vld [vmem:[#allocation5 + $0x1878] sm:$0xff]
        %v1235 = vld [vmem:[#allocation5 + $0x1880] sm:$0xff]
        %v1236 = vld [vmem:[#allocation5 + $0x1888] sm:$0xff]
        %v1237 = vld [vmem:[#allocation5 + $0x1890] sm:$0xff]
        %v1238 = vld [vmem:[#allocation5 + $0x1898] sm:$0xff]
        %v1239 = vld [vmem:[#allocation5 + $0x18a0] sm:$0xff]
        %v1240 = vld [vmem:[#allocation5 + $0x18a8] sm:$0xff]
        %v1241 = vld [vmem:[#allocation5 + $0x18b0] sm:$0xff]
        %v1242 = vld [vmem:[#allocation5 + $0x18b8] sm:$0xff]
        %v1243 = vld [vmem:[#allocation5 + $0x18c0] sm:$0xff]
        %v1244 = vld [vmem:[#allocation5 + $0x18c8] sm:$0xff]
        %v1245 = vld [vmem:[#allocation5 + $0x18d0] sm:$0xff]
        %v1246 = vld [vmem:[#allocation5 + $0x18d8] sm:$0xff]
        %v1247 = vld [vmem:[#allocation5 + $0x18e0] sm:$0xff]
        %v1248 = vld [vmem:[#allocation5 + $0x18e8] sm:$0xff]
        %v1249 = vld [vmem:[#allocation5 + $0x18f0] sm:$0xff]
        %v1250 = vld [vmem:[#allocation5 + $0x18f8] sm:$0xff]
        %v1251 = vld [vmem:[#allocation5 + $0x1900] sm:$0xff]
        %v1252 = vld [vmem:[#allocation5 + $0x1908] sm:$0xff]
        %v1253 = vld [vmem:[#allocation5 + $0x1910] sm:$0xff]
        %v1254 = vld [vmem:[#allocation5 + $0x1918] sm:$0xff]
        %v1255 = vld [vmem:[#allocation5 + $0x1920] sm:$0xff]
        %v1256 = vld [vmem:[#allocation5 + $0x1928] sm:$0xff]
        %v1257 = vld [vmem:[#allocation5 + $0x1930] sm:$0xff]
        %v1258 = vld [vmem:[#allocation5 + $0x1938] sm:$0xff]
        %v1259 = vld [vmem:[#allocation5 + $0x1940] sm:$0xff]
        %v1260 = vld [vmem:[#allocation5 + $0x1948] sm:$0xff]
        %v1261 = vld [vmem:[#allocation5 + $0x1950] sm:$0xff]
        %v1262 = vld [vmem:[#allocation5 + $0x1958] sm:$0xff]
        %v1263 = vld [vmem:[#allocation5 + $0x1960] sm:$0xff]
        %v1264 = vld [vmem:[#allocation5 + $0x1968] sm:$0xff]
        %v1265 = vld [vmem:[#allocation5 + $0x1970] sm:$0xff]
        %v1266 = vld [vmem:[#allocation5 + $0x1978] sm:$0xff]
        %v1267 = vld [vmem:[#allocation5 + $0x1980] sm:$0xff]
        %v1268 = vld [vmem:[#allocation5 + $0x1988] sm:$0xff]
        %v1269 = vld [vmem:[#allocation5 + $0x1990] sm:$0xff]
        %v1270 = vld [vmem:[#allocation5 + $0x1998] sm:$0xff]
        %v1271 = vld [vmem:[#allocation5 + $0x19a0] sm:$0xff]
        %v1272 = vld [vmem:[#allocation5 + $0x19a8] sm:$0xff]
        %v1273 = vld [vmem:[#allocation5 + $0x19b0] sm:$0xff]
        %v1274 = vld [vmem:[#allocation5 + $0x19b8] sm:$0xff]
        %v1275 = vld [vmem:[#allocation5 + $0x19c0] sm:$0xff]
        %v1276 = vld [vmem:[#allocation5 + $0x19c8] sm:$0xff]
        %v1277 = vld [vmem:[#allocation5 + $0x19d0] sm:$0xff]
        %v1278 = vld [vmem:[#allocation5 + $0x19d8] sm:$0xff]
        %v1279 = vld [vmem:[#allocation5 + $0x19e0] sm:$0xff]
        %v1280 = vld [vmem:[#allocation5 + $0x19e8] sm:$0xff]
        %v1281 = vld [vmem:[#allocation5 + $0x19f0] sm:$0xff]
        %v1282 = vld [vmem:[#allocation5 + $0x19f8] sm:$0xff]
        %v1283 = vld [vmem:[#allocation5 + $0x1a00] sm:$0xff]
        %v1284 = vld [vmem:[#allocation5 + $0x1a08] sm:$0xff]
        %v1285 = vld [vmem:[#allocation5 + $0x1a10] sm:$0xff]
        %v1286 = vld [vmem:[#allocation5 + $0x1a18] sm:$0xff]
        %v1287 = vld [vmem:[#allocation5 + $0x1a20] sm:$0xff]
        %v1288 = vld [vmem:[#allocation5 + $0x1a28] sm:$0xff]
        %v1289 = vld [vmem:[#allocation5 + $0x1a30] sm:$0xff]
        %v1290 = vld [vmem:[#allocation5 + $0x1a38] sm:$0xff]
        %v1291 = vld [vmem:[#allocation5 + $0x1a40] sm:$0xff]
        %v1292 = vld [vmem:[#allocation5 + $0x1a48] sm:$0xff]
        %v1293 = vld [vmem:[#allocation5 + $0x1a50] sm:$0xff]
        %v1294 = vld [vmem:[#allocation5 + $0x1a58] sm:$0xff]
        %v1295 = vld [vmem:[#allocation5 + $0x1a60] sm:$0xff]
        %v1296 = vld [vmem:[#allocation5 + $0x1a68] sm:$0xff]
        %v1297 = vld [vmem:[#allocation5 + $0x1a70] sm:$0xff]
        %v1298 = vld [vmem:[#allocation5 + $0x1a78] sm:$0xff]
        %v1299 = vld [vmem:[#allocation5 + $0x1a80] sm:$0xff]
        %v1300 = vld [vmem:[#allocation5 + $0x1a88] sm:$0xff]
        %v1301 = vld [vmem:[#allocation5 + $0x1a90] sm:$0xff]
        %v1302 = vld [vmem:[#allocation5 + $0x1a98] sm:$0xff]
        %v1303 = vld [vmem:[#allocation5 + $0x1aa0] sm:$0xff]
        %v1304 = vld [vmem:[#allocation5 + $0x1aa8] sm:$0xff]
        %v1305 = vld [vmem:[#allocation5 + $0x1ab0] sm:$0xff]
        %v1306 = vld [vmem:[#allocation5 + $0x1ab8] sm:$0xff]
        %v1307 = vld [vmem:[#allocation5 + $0x1ac0] sm:$0xff]
        %v1308 = vld [vmem:[#allocation5 + $0x1ac8] sm:$0xff]
        %v1309 = vld [vmem:[#allocation5 + $0x1ad0] sm:$0xff]
        %v1310 = vld [vmem:[#allocation5 + $0x1ad8] sm:$0xff]
        %v1311 = vld [vmem:[#allocation5 + $0x1ae0] sm:$0xff]
        %v1312 = vld [vmem:[#allocation5 + $0x1ae8] sm:$0xff]
        %v1313 = vld [vmem:[#allocation5 + $0x1af0] sm:$0xff]
        %v1314 = vld [vmem:[#allocation5 + $0x1af8] sm:$0xff]
        %v1315 = vld [vmem:[#allocation5 + $0x1b00] sm:$0xff]
        %v1316 = vld [vmem:[#allocation5 + $0x1b08] sm:$0xff]
        %v1317 = vld [vmem:[#allocation5 + $0x1b10] sm:$0xff]
        %v1318 = vld [vmem:[#allocation5 + $0x1b18] sm:$0xff]
        %v1319 = vld [vmem:[#allocation5 + $0x1b20] sm:$0xff]
        %v1320 = vld [vmem:[#allocation5 + $0x1b28] sm:$0xff]
        %v1321 = vld [vmem:[#allocation5 + $0x1b30] sm:$0xff]
        %v1322 = vld [vmem:[#allocation5 + $0x1b38] sm:$0xff]
        %v1323 = vld [vmem:[#allocation5 + $0x1b40] sm:$0xff]
        %v1324 = vld [vmem:[#allocation5 + $0x1b48] sm:$0xff]
        %v1325 = vld [vmem:[#allocation5 + $0x1b50] sm:$0xff]
        %v1326 = vld [vmem:[#allocation5 + $0x1b58] sm:$0xff]
        %v1327 = vld [vmem:[#allocation5 + $0x1b60] sm:$0xff]
        %v1328 = vld [vmem:[#allocation5 + $0x1b68] sm:$0xff]
        %v1329 = vld [vmem:[#allocation5 + $0x1b70] sm:$0xff]
        %v1330 = vld [vmem:[#allocation5 + $0x1b78] sm:$0xff]
        %v1331 = vld [vmem:[#allocation5 + $0x1b80] sm:$0xff]
        %v1332 = vld [vmem:[#allocation5 + $0x1b88] sm:$0xff]
        %v1333 = vld [vmem:[#allocation5 + $0x1b90] sm:$0xff]
        %v1334 = vld [vmem:[#allocation5 + $0x1b98] sm:$0xff]
        %v1335 = vld [vmem:[#allocation5 + $0x1ba0] sm:$0xff]
        %v1336 = vld [vmem:[#allocation5 + $0x1ba8] sm:$0xff]
        %v1337 = vld [vmem:[#allocation5 + $0x1bb0] sm:$0xff]
        %v1338 = vld [vmem:[#allocation5 + $0x1bb8] sm:$0xff]
        %v1339 = vld [vmem:[#allocation5 + $0x1bc0] sm:$0xff]
        %v1340 = vld [vmem:[#allocation5 + $0x1bc8] sm:$0xff]
        %v1341 = vld [vmem:[#allocation5 + $0x1bd0] sm:$0xff]
        %v1342 = vld [vmem:[#allocation5 + $0x1bd8] sm:$0xff]
        %v1343 = vld [vmem:[#allocation5 + $0x1be0] sm:$0xff]
        %v1344 = vld [vmem:[#allocation5 + $0x1be8] sm:$0xff]
        %v1345 = vld [vmem:[#allocation5 + $0x1bf0] sm:$0xff]
        %v1346 = vld [vmem:[#allocation5 + $0x1bf8] sm:$0xff]
        %v1347 = vld [vmem:[#allocation5 + $0x1c00] sm:$0xff]
        %v1348 = vld [vmem:[#allocation5 + $0x1c08] sm:$0xff]
        %v1349 = vld [vmem:[#allocation5 + $0x1c10] sm:$0xff]
        %v1350 = vld [vmem:[#allocation5 + $0x1c18] sm:$0xff]
        %v1351 = vld [vmem:[#allocation5 + $0x1c20] sm:$0xff]
        %v1352 = vld [vmem:[#allocation5 + $0x1c28] sm:$0xff]
        %v1353 = vld [vmem:[#allocation5 + $0x1c30] sm:$0xff]
        %v1354 = vld [vmem:[#allocation5 + $0x1c38] sm:$0xff]
        %v1355 = vld [vmem:[#allocation5 + $0x1c40] sm:$0xff]
        %v1356 = vld [vmem:[#allocation5 + $0x1c48] sm:$0xff]
        %v1357 = vld [vmem:[#allocation5 + $0x1c50] sm:$0xff]
        %v1358 = vld [vmem:[#allocation5 + $0x1c58] sm:$0xff]
        %v1359 = vld [vmem:[#allocation5 + $0x1c60] sm:$0xff]
        %v1360 = vld [vmem:[#allocation5 + $0x1c68] sm:$0xff]
        %v1361 = vld [vmem:[#allocation5 + $0x1c70] sm:$0xff]
        %v1362 = vld [vmem:[#allocation5 + $0x1c78] sm:$0xff]
        %v1363 = vld [vmem:[#allocation5 + $0x1c80] sm:$0xff]
        %v1364 = vld [vmem:[#allocation5 + $0x1c88] sm:$0xff]
        %v1365 = vld [vmem:[#allocation5 + $0x1c90] sm:$0xff]
        %v1366 = vld [vmem:[#allocation5 + $0x1c98] sm:$0xff]
        %v1367 = vld [vmem:[#allocation5 + $0x1ca0] sm:$0xff]
        %v1368 = vld [vmem:[#allocation5 + $0x1ca8] sm:$0xff]
        %v1369 = vld [vmem:[#allocation5 + $0x1cb0] sm:$0xff]
        %v1370 = vld [vmem:[#allocation5 + $0x1cb8] sm:$0xff]
        %v1371 = vld [vmem:[#allocation5 + $0x1cc0] sm:$0xff]
        %v1372 = vld [vmem:[#allocation5 + $0x1cc8] sm:$0xff]
        %v1373 = vld [vmem:[#allocation5 + $0x1cd0] sm:$0xff]
        %v1374 = vld [vmem:[#allocation5 + $0x1cd8] sm:$0xff]
        %v1375 = vld [vmem:[#allocation5 + $0x1ce0] sm:$0xff]
        %v1376 = vld [vmem:[#allocation5 + $0x1ce8] sm:$0xff]
        %v1377 = vld [vmem:[#allocation5 + $0x1cf0] sm:$0xff]
        %v1378 = vld [vmem:[#allocation5 + $0x1cf8] sm:$0xff]
        %v1379 = vld [vmem:[#allocation5 + $0x1d00] sm:$0xff]
        %v1380 = vld [vmem:[#allocation5 + $0x1d08] sm:$0xff]
        %v1381 = vld [vmem:[#allocation5 + $0x1d10] sm:$0xff]
        %v1382 = vld [vmem:[#allocation5 + $0x1d18] sm:$0xff]
        %v1383 = vld [vmem:[#allocation5 + $0x1d20] sm:$0xff]
        %v1384 = vld [vmem:[#allocation5 + $0x1d28] sm:$0xff]
        %v1385 = vld [vmem:[#allocation5 + $0x1d30] sm:$0xff]
        %v1386 = vld [vmem:[#allocation5 + $0x1d38] sm:$0xff]
        %v1387 = vld [vmem:[#allocation5 + $0x1d40] sm:$0xff]
        %v1388 = vld [vmem:[#allocation5 + $0x1d48] sm:$0xff]
        %v1389 = vld [vmem:[#allocation5 + $0x1d50] sm:$0xff]
        %v1390 = vld [vmem:[#allocation5 + $0x1d58] sm:$0xff]
        %v1391 = vld [vmem:[#allocation5 + $0x1d60] sm:$0xff]
        %v1392 = vld [vmem:[#allocation5 + $0x1d68] sm:$0xff]
        %v1393 = vld [vmem:[#allocation5 + $0x1d70] sm:$0xff]
        %v1394 = vld [vmem:[#allocation5 + $0x1d78] sm:$0xff]
        %v1395 = vld [vmem:[#allocation5 + $0x1d80] sm:$0xff]
        %v1396 = vld [vmem:[#allocation5 + $0x1d88] sm:$0xff]
        %v1397 = vld [vmem:[#allocation5 + $0x1d90] sm:$0xff]
        %v1398 = vld [vmem:[#allocation5 + $0x1d98] sm:$0xff]
        %v1399 = vld [vmem:[#allocation5 + $0x1da0] sm:$0xff]
        %v1400 = vld [vmem:[#allocation5 + $0x1da8] sm:$0xff]
        %v1401 = vld [vmem:[#allocation5 + $0x1db0] sm:$0xff]
        %v1402 = vld [vmem:[#allocation5 + $0x1db8] sm:$0xff]
        %v1403 = vld [vmem:[#allocation5 + $0x1dc0] sm:$0xff]
        %v1404 = vld [vmem:[#allocation5 + $0x1dc8] sm:$0xff]
        %v1405 = vld [vmem:[#allocation5 + $0x1dd0] sm:$0xff]
        %v1406 = vld [vmem:[#allocation5 + $0x1dd8] sm:$0xff]
        %v1407 = vld [vmem:[#allocation5 + $0x1de0] sm:$0xff]
        %v1408 = vld [vmem:[#allocation5 + $0x1de8] sm:$0xff]
        %v1409 = vld [vmem:[#allocation5 + $0x1df0] sm:$0xff]
        %v1410 = vld [vmem:[#allocation5 + $0x1df8] sm:$0xff]
        %v1411 = vld [vmem:[#allocation5 + $0x1e00] sm:$0xff]
        %v1412 = vld [vmem:[#allocation5 + $0x1e08] sm:$0xff]
        %v1413 = vld [vmem:[#allocation5 + $0x1e10] sm:$0xff]
        %v1414 = vld [vmem:[#allocation5 + $0x1e18] sm:$0xff]
        %v1415 = vld [vmem:[#allocation5 + $0x1e20] sm:$0xff]
        %v1416 = vld [vmem:[#allocation5 + $0x1e28] sm:$0xff]
        %v1417 = vld [vmem:[#allocation5 + $0x1e30] sm:$0xff]
        %v1418 = vld [vmem:[#allocation5 + $0x1e38] sm:$0xff]
        %v1419 = vld [vmem:[#allocation5 + $0x1e40] sm:$0xff]
        %v1420 = vld [vmem:[#allocation5 + $0x1e48] sm:$0xff]
        %v1421 = vld [vmem:[#allocation5 + $0x1e50] sm:$0xff]
        %v1422 = vld [vmem:[#allocation5 + $0x1e58] sm:$0xff]
        %v1423 = vld [vmem:[#allocation5 + $0x1e60] sm:$0xff]
        %v1424 = vld [vmem:[#allocation5 + $0x1e68] sm:$0xff]
        %v1425 = vld [vmem:[#allocation5 + $0x1e70] sm:$0xff]
        %v1426 = vld [vmem:[#allocation5 + $0x1e78] sm:$0xff]
        %v1427 = vld [vmem:[#allocation5 + $0x1e80] sm:$0xff]
        %v1428 = vld [vmem:[#allocation5 + $0x1e88] sm:$0xff]
        %v1429 = vld [vmem:[#allocation5 + $0x1e90] sm:$0xff]
        %v1430 = vld [vmem:[#allocation5 + $0x1e98] sm:$0xff]
        %v1431 = vld [vmem:[#allocation5 + $0x1ea0] sm:$0xff]
        %v1432 = vld [vmem:[#allocation5 + $0x1ea8] sm:$0xff]
        %v1433 = vld [vmem:[#allocation5 + $0x1eb0] sm:$0xff]
        %v1434 = vld [vmem:[#allocation5 + $0x1eb8] sm:$0xff]
        %v1435 = vld [vmem:[#allocation5 + $0x1ec0] sm:$0xff]
        %v1436 = vld [vmem:[#allocation5 + $0x1ec8] sm:$0xff]
        %v1437 = vld [vmem:[#allocation5 + $0x1ed0] sm:$0xff]
        %v1438 = vld [vmem:[#allocation5 + $0x1ed8] sm:$0xff]
        %v1439 = vld [vmem:[#allocation5 + $0x1ee0] sm:$0xff]
        %v1440 = vld [vmem:[#allocation5 + $0x1ee8] sm:$0xff]
        %v1441 = vld [vmem:[#allocation5 + $0x1ef0] sm:$0xff]
        %v1442 = vld [vmem:[#allocation5 + $0x1ef8] sm:$0xff]
        %v1443 = vld [vmem:[#allocation5 + $0x1f00] sm:$0xff]
        %v1444 = vld [vmem:[#allocation5 + $0x1f08] sm:$0xff]
        %v1445 = vld [vmem:[#allocation5 + $0x1f10] sm:$0xff]
        %v1446 = vld [vmem:[#allocation5 + $0x1f18] sm:$0xff]
        %v1447 = vld [vmem:[#allocation5 + $0x1f20] sm:$0xff]
        %v1448 = vld [vmem:[#allocation5 + $0x1f28] sm:$0xff]
        %v1449 = vld [vmem:[#allocation5 + $0x1f30] sm:$0xff]
        %v1450 = vld [vmem:[#allocation5 + $0x1f38] sm:$0xff]
        %v1451 = vld [vmem:[#allocation5 + $0x1f40] sm:$0xff]
        %v1452 = vld [vmem:[#allocation5 + $0x1f48] sm:$0xff]
        %v1453 = vld [vmem:[#allocation5 + $0x1f50] sm:$0xff]
        %v1454 = vld [vmem:[#allocation5 + $0x1f58] sm:$0xff]
        %v1455 = vld [vmem:[#allocation5 + $0x1f60] sm:$0xff]
        %v1456 = vld [vmem:[#allocation5 + $0x1f68] sm:$0xff]
        %v1457 = vld [vmem:[#allocation5 + $0x1f70] sm:$0xff]
        %v1458 = vld [vmem:[#allocation5 + $0x1f78] sm:$0xff]
        %v1459 = vld [vmem:[#allocation5 + $0x1f80] sm:$0xff]
        %v1460 = vld [vmem:[#allocation5 + $0x1f88] sm:$0xff]
        %v1461 = vld [vmem:[#allocation5 + $0x1f90] sm:$0xff]
        %v1462 = vld [vmem:[#allocation5 + $0x1f98] sm:$0xff]
        %v1463 = vld [vmem:[#allocation5 + $0x1fa0] sm:$0xff]
        %v1464 = vld [vmem:[#allocation5 + $0x1fa8] sm:$0xff]
        %v1465 = vld [vmem:[#allocation5 + $0x1fb0] sm:$0xff]
        %v1466 = vld [vmem:[#allocation5 + $0x1fb8] sm:$0xff]
        %v1467 = vld [vmem:[#allocation5 + $0x1fc0] sm:$0xff]
        %v1468 = vld [vmem:[#allocation5 + $0x1fc8] sm:$0xff]
        %v1469 = vld [vmem:[#allocation5 + $0x1fd0] sm:$0xff]
        %v1470 = vld [vmem:[#allocation5 + $0x1fd8] sm:$0xff]
        %v1471 = vld [vmem:[#allocation5 + $0x1fe0] sm:$0xff]
        %v1472 = vld [vmem:[#allocation5 + $0x1fe8] sm:$0xff]
        %v1473 = vld [vmem:[#allocation5 + $0x1ff0] sm:$0xff]
        %v1474 = vld [vmem:[#allocation5 + $0x1ff8] sm:$0xff]
        %v2499 = vunpack.c.l.b16 %v451
        %v2500 = vunpack.c.h.b16 %v451
        %v2501 = vunpack.c.l.b16 %v452
        %v2502 = vunpack.c.h.b16 %v452
        %v2503 = vunpack.c.l.b16 %v453
        %v2504 = vunpack.c.h.b16 %v453
        %v2505 = vunpack.c.l.b16 %v454
        %v2506 = vunpack.c.h.b16 %v454
        %v2507 = vunpack.c.l.b16 %v455
        %v2508 = vunpack.c.h.b16 %v455
        %v2509 = vunpack.c.l.b16 %v456
        %v2510 = vunpack.c.h.b16 %v456
        %v2511 = vunpack.c.l.b16 %v457
        %v2512 = vunpack.c.h.b16 %v457
        %v2513 = vunpack.c.l.b16 %v458
        %v2514 = vunpack.c.h.b16 %v458
        %v2515 = vunpack.c.l.b16 %v459
        %v2516 = vunpack.c.h.b16 %v459
        %v2517 = vunpack.c.l.b16 %v460
        %v2518 = vunpack.c.h.b16 %v460
        %v2519 = vunpack.c.l.b16 %v461
        %v2520 = vunpack.c.h.b16 %v461
        %v2521 = vunpack.c.l.b16 %v462
        %v2522 = vunpack.c.h.b16 %v462
        %v2523 = vunpack.c.l.b16 %v463
        %v2524 = vunpack.c.h.b16 %v463
        %v2525 = vunpack.c.l.b16 %v464
        %v2526 = vunpack.c.h.b16 %v464
        %v2527 = vunpack.c.l.b16 %v465
        %v2528 = vunpack.c.h.b16 %v465
        %v2529 = vunpack.c.l.b16 %v466
        %v2530 = vunpack.c.h.b16 %v466
        %v2531 = vunpack.c.l.b16 %v467
        %v2532 = vunpack.c.h.b16 %v467
        %v2533 = vunpack.c.l.b16 %v468
        %v2534 = vunpack.c.h.b16 %v468
        %v2535 = vunpack.c.l.b16 %v469
        %v2536 = vunpack.c.h.b16 %v469
        %v2537 = vunpack.c.l.b16 %v470
        %v2538 = vunpack.c.h.b16 %v470
        %v2539 = vunpack.c.l.b16 %v471
        %v2540 = vunpack.c.h.b16 %v471
        %v2541 = vunpack.c.l.b16 %v472
        %v2542 = vunpack.c.h.b16 %v472
        %v2543 = vunpack.c.l.b16 %v473
        %v2544 = vunpack.c.h.b16 %v473
        %v2545 = vunpack.c.l.b16 %v474
        %v2546 = vunpack.c.h.b16 %v474
        %v2547 = vunpack.c.l.b16 %v475
        %v2548 = vunpack.c.h.b16 %v475
        %v2549 = vunpack.c.l.b16 %v476
        %v2550 = vunpack.c.h.b16 %v476
        %v2551 = vunpack.c.l.b16 %v477
        %v2552 = vunpack.c.h.b16 %v477
        %v2553 = vunpack.c.l.b16 %v478
        %v2554 = vunpack.c.h.b16 %v478
        %v2555 = vunpack.c.l.b16 %v479
        %v2556 = vunpack.c.h.b16 %v479
        %v2557 = vunpack.c.l.b16 %v480
        %v2558 = vunpack.c.h.b16 %v480
        %v2559 = vunpack.c.l.b16 %v481
        %v2560 = vunpack.c.h.b16 %v481
        %v2561 = vunpack.c.l.b16 %v482
        %v2562 = vunpack.c.h.b16 %v482
        %v2563 = vunpack.c.l.b16 %v483
        %v2564 = vunpack.c.h.b16 %v483
        %v2565 = vunpack.c.l.b16 %v484
        %v2566 = vunpack.c.h.b16 %v484
        %v2567 = vunpack.c.l.b16 %v485
        %v2568 = vunpack.c.h.b16 %v485
        %v2569 = vunpack.c.l.b16 %v486
        %v2570 = vunpack.c.h.b16 %v486
        %v2571 = vunpack.c.l.b16 %v487
        %v2572 = vunpack.c.h.b16 %v487
        %v2573 = vunpack.c.l.b16 %v488
        %v2574 = vunpack.c.h.b16 %v488
        %v2575 = vunpack.c.l.b16 %v489
        %v2576 = vunpack.c.h.b16 %v489
        %v2577 = vunpack.c.l.b16 %v490
        %v2578 = vunpack.c.h.b16 %v490
        %v2579 = vunpack.c.l.b16 %v491
        %v2580 = vunpack.c.h.b16 %v491
        %v2581 = vunpack.c.l.b16 %v492
        %v2582 = vunpack.c.h.b16 %v492
        %v2583 = vunpack.c.l.b16 %v493
        %v2584 = vunpack.c.h.b16 %v493
        %v2585 = vunpack.c.l.b16 %v494
        %v2586 = vunpack.c.h.b16 %v494
        %v2587 = vunpack.c.l.b16 %v495
        %v2588 = vunpack.c.h.b16 %v495
        %v2589 = vunpack.c.l.b16 %v496
        %v2590 = vunpack.c.h.b16 %v496
        %v2591 = vunpack.c.l.b16 %v497
        %v2592 = vunpack.c.h.b16 %v497
        %v2593 = vunpack.c.l.b16 %v498
        %v2594 = vunpack.c.h.b16 %v498
        %v2595 = vunpack.c.l.b16 %v499
        %v2596 = vunpack.c.h.b16 %v499
        %v2597 = vunpack.c.l.b16 %v500
        %v2598 = vunpack.c.h.b16 %v500
        %v2599 = vunpack.c.l.b16 %v501
        %v2600 = vunpack.c.h.b16 %v501
        %v2601 = vunpack.c.l.b16 %v502
        %v2602 = vunpack.c.h.b16 %v502
        %v2603 = vunpack.c.l.b16 %v503
        %v2604 = vunpack.c.h.b16 %v503
        %v2605 = vunpack.c.l.b16 %v504
        %v2606 = vunpack.c.h.b16 %v504
        %v2607 = vunpack.c.l.b16 %v505
        %v2608 = vunpack.c.h.b16 %v505
        %v2609 = vunpack.c.l.b16 %v506
        %v2610 = vunpack.c.h.b16 %v506
        %v2611 = vunpack.c.l.b16 %v507
        %v2612 = vunpack.c.h.b16 %v507
        %v2613 = vunpack.c.l.b16 %v508
        %v2614 = vunpack.c.h.b16 %v508
        %v2615 = vunpack.c.l.b16 %v509
        %v2616 = vunpack.c.h.b16 %v509
        %v2617 = vunpack.c.l.b16 %v510
        %v2618 = vunpack.c.h.b16 %v510
        %v2619 = vunpack.c.l.b16 %v511
        %v2620 = vunpack.c.h.b16 %v511
        %v2621 = vunpack.c.l.b16 %v512
        %v2622 = vunpack.c.h.b16 %v512
        %v2623 = vunpack.c.l.b16 %v513
        %v2624 = vunpack.c.h.b16 %v513
        %v2625 = vunpack.c.l.b16 %v514
        %v2626 = vunpack.c.h.b16 %v514
        %v2627 = vunpack.c.l.b16 %v515
        %v2628 = vunpack.c.h.b16 %v515
        %v2629 = vunpack.c.l.b16 %v516
        %v2630 = vunpack.c.h.b16 %v516
        %v2631 = vunpack.c.l.b16 %v517
        %v2632 = vunpack.c.h.b16 %v517
        %v2633 = vunpack.c.l.b16 %v518
        %v2634 = vunpack.c.h.b16 %v518
        %v2635 = vunpack.c.l.b16 %v519
        %v2636 = vunpack.c.h.b16 %v519
        %v2637 = vunpack.c.l.b16 %v520
        %v2638 = vunpack.c.h.b16 %v520
        %v2639 = vunpack.c.l.b16 %v521
        %v2640 = vunpack.c.h.b16 %v521
        %v2641 = vunpack.c.l.b16 %v522
        %v2642 = vunpack.c.h.b16 %v522
        %v2643 = vunpack.c.l.b16 %v523
        %v2644 = vunpack.c.h.b16 %v523
        %v2645 = vunpack.c.l.b16 %v524
        %v2646 = vunpack.c.h.b16 %v524
        %v2647 = vunpack.c.l.b16 %v525
        %v2648 = vunpack.c.h.b16 %v525
        %v2649 = vunpack.c.l.b16 %v526
        %v2650 = vunpack.c.h.b16 %v526
        %v2651 = vunpack.c.l.b16 %v527
        %v2652 = vunpack.c.h.b16 %v527
        %v2653 = vunpack.c.l.b16 %v528
        %v2654 = vunpack.c.h.b16 %v528
        %v2655 = vunpack.c.l.b16 %v529
        %v2656 = vunpack.c.h.b16 %v529
        %v2657 = vunpack.c.l.b16 %v530
        %v2658 = vunpack.c.h.b16 %v530
        %v2659 = vunpack.c.l.b16 %v531
        %v2660 = vunpack.c.h.b16 %v531
        %v2661 = vunpack.c.l.b16 %v532
        %v2662 = vunpack.c.h.b16 %v532
        %v2663 = vunpack.c.l.b16 %v533
        %v2664 = vunpack.c.h.b16 %v533
        %v2665 = vunpack.c.l.b16 %v534
        %v2666 = vunpack.c.h.b16 %v534
        %v2667 = vunpack.c.l.b16 %v535
        %v2668 = vunpack.c.h.b16 %v535
        %v2669 = vunpack.c.l.b16 %v536
        %v2670 = vunpack.c.h.b16 %v536
        %v2671 = vunpack.c.l.b16 %v537
        %v2672 = vunpack.c.h.b16 %v537
        %v2673 = vunpack.c.l.b16 %v538
        %v2674 = vunpack.c.h.b16 %v538
        %v2675 = vunpack.c.l.b16 %v539
        %v2676 = vunpack.c.h.b16 %v539
        %v2677 = vunpack.c.l.b16 %v540
        %v2678 = vunpack.c.h.b16 %v540
        %v2679 = vunpack.c.l.b16 %v541
        %v2680 = vunpack.c.h.b16 %v541
        %v2681 = vunpack.c.l.b16 %v542
        %v2682 = vunpack.c.h.b16 %v542
        %v2683 = vunpack.c.l.b16 %v543
        %v2684 = vunpack.c.h.b16 %v543
        %v2685 = vunpack.c.l.b16 %v544
        %v2686 = vunpack.c.h.b16 %v544
        %v2687 = vunpack.c.l.b16 %v545
        %v2688 = vunpack.c.h.b16 %v545
        %v2689 = vunpack.c.l.b16 %v546
        %v2690 = vunpack.c.h.b16 %v546
        %v2691 = vunpack.c.l.b16 %v547
        %v2692 = vunpack.c.h.b16 %v547
        %v2693 = vunpack.c.l.b16 %v548
        %v2694 = vunpack.c.h.b16 %v548
        %v2695 = vunpack.c.l.b16 %v549
        %v2696 = vunpack.c.h.b16 %v549
        %v2697 = vunpack.c.l.b16 %v550
        %v2698 = vunpack.c.h.b16 %v550
        %v2699 = vunpack.c.l.b16 %v551
        %v2700 = vunpack.c.h.b16 %v551
        %v2701 = vunpack.c.l.b16 %v552
        %v2702 = vunpack.c.h.b16 %v552
        %v2703 = vunpack.c.l.b16 %v553
        %v2704 = vunpack.c.h.b16 %v553
        %v2705 = vunpack.c.l.b16 %v554
        %v2706 = vunpack.c.h.b16 %v554
        %v2707 = vunpack.c.l.b16 %v555
        %v2708 = vunpack.c.h.b16 %v555
        %v2709 = vunpack.c.l.b16 %v556
        %v2710 = vunpack.c.h.b16 %v556
        %v2711 = vunpack.c.l.b16 %v557
        %v2712 = vunpack.c.h.b16 %v557
        %v2713 = vunpack.c.l.b16 %v558
        %v2714 = vunpack.c.h.b16 %v558
        %v2715 = vunpack.c.l.b16 %v559
        %v2716 = vunpack.c.h.b16 %v559
        %v2717 = vunpack.c.l.b16 %v560
        %v2718 = vunpack.c.h.b16 %v560
        %v2719 = vunpack.c.l.b16 %v561
        %v2720 = vunpack.c.h.b16 %v561
        %v2721 = vunpack.c.l.b16 %v562
        %v2722 = vunpack.c.h.b16 %v562
        %v2723 = vunpack.c.l.b16 %v563
        %v2724 = vunpack.c.h.b16 %v563
        %v2725 = vunpack.c.l.b16 %v564
        %v2726 = vunpack.c.h.b16 %v564
        %v2727 = vunpack.c.l.b16 %v565
        %v2728 = vunpack.c.h.b16 %v565
        %v2729 = vunpack.c.l.b16 %v566
        %v2730 = vunpack.c.h.b16 %v566
        %v2731 = vunpack.c.l.b16 %v567
        %v2732 = vunpack.c.h.b16 %v567
        %v2733 = vunpack.c.l.b16 %v568
        %v2734 = vunpack.c.h.b16 %v568
        %v2735 = vunpack.c.l.b16 %v569
        %v2736 = vunpack.c.h.b16 %v569
        %v2737 = vunpack.c.l.b16 %v570
        %v2738 = vunpack.c.h.b16 %v570
        %v2739 = vunpack.c.l.b16 %v571
        %v2740 = vunpack.c.h.b16 %v571
        %v2741 = vunpack.c.l.b16 %v572
        %v2742 = vunpack.c.h.b16 %v572
        %v2743 = vunpack.c.l.b16 %v573
        %v2744 = vunpack.c.h.b16 %v573
        %v2745 = vunpack.c.l.b16 %v574
        %v2746 = vunpack.c.h.b16 %v574
        %v2747 = vunpack.c.l.b16 %v575
        %v2748 = vunpack.c.h.b16 %v575
        %v2749 = vunpack.c.l.b16 %v576
        %v2750 = vunpack.c.h.b16 %v576
        %v2751 = vunpack.c.l.b16 %v577
        %v2752 = vunpack.c.h.b16 %v577
        %v2753 = vunpack.c.l.b16 %v578
        %v2754 = vunpack.c.h.b16 %v578
        %v2755 = vunpack.c.l.b16 %v579
        %v2756 = vunpack.c.h.b16 %v579
        %v2757 = vunpack.c.l.b16 %v580
        %v2758 = vunpack.c.h.b16 %v580
        %v2759 = vunpack.c.l.b16 %v581
        %v2760 = vunpack.c.h.b16 %v581
        %v2761 = vunpack.c.l.b16 %v582
        %v2762 = vunpack.c.h.b16 %v582
        %v2763 = vunpack.c.l.b16 %v583
        %v2764 = vunpack.c.h.b16 %v583
        %v2765 = vunpack.c.l.b16 %v584
        %v2766 = vunpack.c.h.b16 %v584
        %v2767 = vunpack.c.l.b16 %v585
        %v2768 = vunpack.c.h.b16 %v585
        %v2769 = vunpack.c.l.b16 %v586
        %v2770 = vunpack.c.h.b16 %v586
        %v2771 = vunpack.c.l.b16 %v587
        %v2772 = vunpack.c.h.b16 %v587
        %v2773 = vunpack.c.l.b16 %v588
        %v2774 = vunpack.c.h.b16 %v588
        %v2775 = vunpack.c.l.b16 %v589
        %v2776 = vunpack.c.h.b16 %v589
        %v2777 = vunpack.c.l.b16 %v590
        %v2778 = vunpack.c.h.b16 %v590
        %v2779 = vunpack.c.l.b16 %v591
        %v2780 = vunpack.c.h.b16 %v591
        %v2781 = vunpack.c.l.b16 %v592
        %v2782 = vunpack.c.h.b16 %v592
        %v2783 = vunpack.c.l.b16 %v593
        %v2784 = vunpack.c.h.b16 %v593
        %v2785 = vunpack.c.l.b16 %v594
        %v2786 = vunpack.c.h.b16 %v594
        %v2787 = vunpack.c.l.b16 %v595
        %v2788 = vunpack.c.h.b16 %v595
        %v2789 = vunpack.c.l.b16 %v596
        %v2790 = vunpack.c.h.b16 %v596
        %v2791 = vunpack.c.l.b16 %v597
        %v2792 = vunpack.c.h.b16 %v597
        %v2793 = vunpack.c.l.b16 %v598
        %v2794 = vunpack.c.h.b16 %v598
        %v2795 = vunpack.c.l.b16 %v599
        %v2796 = vunpack.c.h.b16 %v599
        %v2797 = vunpack.c.l.b16 %v600
        %v2798 = vunpack.c.h.b16 %v600
        %v2799 = vunpack.c.l.b16 %v601
        %v2800 = vunpack.c.h.b16 %v601
        %v2801 = vunpack.c.l.b16 %v602
        %v2802 = vunpack.c.h.b16 %v602
        %v2803 = vunpack.c.l.b16 %v603
        %v2804 = vunpack.c.h.b16 %v603
        %v2805 = vunpack.c.l.b16 %v604
        %v2806 = vunpack.c.h.b16 %v604
        %v2807 = vunpack.c.l.b16 %v605
        %v2808 = vunpack.c.h.b16 %v605
        %v2809 = vunpack.c.l.b16 %v606
        %v2810 = vunpack.c.h.b16 %v606
        %v2811 = vunpack.c.l.b16 %v607
        %v2812 = vunpack.c.h.b16 %v607
        %v2813 = vunpack.c.l.b16 %v608
        %v2814 = vunpack.c.h.b16 %v608
        %v2815 = vunpack.c.l.b16 %v609
        %v2816 = vunpack.c.h.b16 %v609
        %v2817 = vunpack.c.l.b16 %v610
        %v2818 = vunpack.c.h.b16 %v610
        %v2819 = vunpack.c.l.b16 %v611
        %v2820 = vunpack.c.h.b16 %v611
        %v2821 = vunpack.c.l.b16 %v612
        %v2822 = vunpack.c.h.b16 %v612
        %v2823 = vunpack.c.l.b16 %v613
        %v2824 = vunpack.c.h.b16 %v613
        %v2825 = vunpack.c.l.b16 %v614
        %v2826 = vunpack.c.h.b16 %v614
        %v2827 = vunpack.c.l.b16 %v615
        %v2828 = vunpack.c.h.b16 %v615
        %v2829 = vunpack.c.l.b16 %v616
        %v2830 = vunpack.c.h.b16 %v616
        %v2831 = vunpack.c.l.b16 %v617
        %v2832 = vunpack.c.h.b16 %v617
        %v2833 = vunpack.c.l.b16 %v618
        %v2834 = vunpack.c.h.b16 %v618
        %v2835 = vunpack.c.l.b16 %v619
        %v2836 = vunpack.c.h.b16 %v619
        %v2837 = vunpack.c.l.b16 %v620
        %v2838 = vunpack.c.h.b16 %v620
        %v2839 = vunpack.c.l.b16 %v621
        %v2840 = vunpack.c.h.b16 %v621
        %v2841 = vunpack.c.l.b16 %v622
        %v2842 = vunpack.c.h.b16 %v622
        %v2843 = vunpack.c.l.b16 %v623
        %v2844 = vunpack.c.h.b16 %v623
        %v2845 = vunpack.c.l.b16 %v624
        %v2846 = vunpack.c.h.b16 %v624
        %v2847 = vunpack.c.l.b16 %v625
        %v2848 = vunpack.c.h.b16 %v625
        %v2849 = vunpack.c.l.b16 %v626
        %v2850 = vunpack.c.h.b16 %v626
        %v2851 = vunpack.c.l.b16 %v627
        %v2852 = vunpack.c.h.b16 %v627
        %v2853 = vunpack.c.l.b16 %v628
        %v2854 = vunpack.c.h.b16 %v628
        %v2855 = vunpack.c.l.b16 %v629
        %v2856 = vunpack.c.h.b16 %v629
        %v2857 = vunpack.c.l.b16 %v630
        %v2858 = vunpack.c.h.b16 %v630
        %v2859 = vunpack.c.l.b16 %v631
        %v2860 = vunpack.c.h.b16 %v631
        %v2861 = vunpack.c.l.b16 %v632
        %v2862 = vunpack.c.h.b16 %v632
        %v2863 = vunpack.c.l.b16 %v633
        %v2864 = vunpack.c.h.b16 %v633
        %v2865 = vunpack.c.l.b16 %v634
        %v2866 = vunpack.c.h.b16 %v634
        %v2867 = vunpack.c.l.b16 %v635
        %v2868 = vunpack.c.h.b16 %v635
        %v2869 = vunpack.c.l.b16 %v636
        %v2870 = vunpack.c.h.b16 %v636
        %v2871 = vunpack.c.l.b16 %v637
        %v2872 = vunpack.c.h.b16 %v637
        %v2873 = vunpack.c.l.b16 %v638
        %v2874 = vunpack.c.h.b16 %v638
        %v2875 = vunpack.c.l.b16 %v639
        %v2876 = vunpack.c.h.b16 %v639
        %v2877 = vunpack.c.l.b16 %v640
        %v2878 = vunpack.c.h.b16 %v640
        %v2879 = vunpack.c.l.b16 %v641
        %v2880 = vunpack.c.h.b16 %v641
        %v2881 = vunpack.c.l.b16 %v642
        %v2882 = vunpack.c.h.b16 %v642
        %v2883 = vunpack.c.l.b16 %v643
        %v2884 = vunpack.c.h.b16 %v643
        %v2885 = vunpack.c.l.b16 %v644
        %v2886 = vunpack.c.h.b16 %v644
        %v2887 = vunpack.c.l.b16 %v645
        %v2888 = vunpack.c.h.b16 %v645
        %v2889 = vunpack.c.l.b16 %v646
        %v2890 = vunpack.c.h.b16 %v646
        %v2891 = vunpack.c.l.b16 %v647
        %v2892 = vunpack.c.h.b16 %v647
        %v2893 = vunpack.c.l.b16 %v648
        %v2894 = vunpack.c.h.b16 %v648
        %v2895 = vunpack.c.l.b16 %v649
        %v2896 = vunpack.c.h.b16 %v649
        %v2897 = vunpack.c.l.b16 %v650
        %v2898 = vunpack.c.h.b16 %v650
        %v2899 = vunpack.c.l.b16 %v651
        %v2900 = vunpack.c.h.b16 %v651
        %v2901 = vunpack.c.l.b16 %v652
        %v2902 = vunpack.c.h.b16 %v652
        %v2903 = vunpack.c.l.b16 %v653
        %v2904 = vunpack.c.h.b16 %v653
        %v2905 = vunpack.c.l.b16 %v654
        %v2906 = vunpack.c.h.b16 %v654
        %v2907 = vunpack.c.l.b16 %v655
        %v2908 = vunpack.c.h.b16 %v655
        %v2909 = vunpack.c.l.b16 %v656
        %v2910 = vunpack.c.h.b16 %v656
        %v2911 = vunpack.c.l.b16 %v657
        %v2912 = vunpack.c.h.b16 %v657
        %v2913 = vunpack.c.l.b16 %v658
        %v2914 = vunpack.c.h.b16 %v658
        %v2915 = vunpack.c.l.b16 %v659
        %v2916 = vunpack.c.h.b16 %v659
        %v2917 = vunpack.c.l.b16 %v660
        %v2918 = vunpack.c.h.b16 %v660
        %v2919 = vunpack.c.l.b16 %v661
        %v2920 = vunpack.c.h.b16 %v661
        %v2921 = vunpack.c.l.b16 %v662
        %v2922 = vunpack.c.h.b16 %v662
        %v2923 = vunpack.c.l.b16 %v663
        %v2924 = vunpack.c.h.b16 %v663
        %v2925 = vunpack.c.l.b16 %v664
        %v2926 = vunpack.c.h.b16 %v664
        %v2927 = vunpack.c.l.b16 %v665
        %v2928 = vunpack.c.h.b16 %v665
        %v2929 = vunpack.c.l.b16 %v666
        %v2930 = vunpack.c.h.b16 %v666
        %v2931 = vunpack.c.l.b16 %v667
        %v2932 = vunpack.c.h.b16 %v667
        %v2933 = vunpack.c.l.b16 %v668
        %v2934 = vunpack.c.h.b16 %v668
        %v2935 = vunpack.c.l.b16 %v669
        %v2936 = vunpack.c.h.b16 %v669
        %v2937 = vunpack.c.l.b16 %v670
        %v2938 = vunpack.c.h.b16 %v670
        %v2939 = vunpack.c.l.b16 %v671
        %v2940 = vunpack.c.h.b16 %v671
        %v2941 = vunpack.c.l.b16 %v672
        %v2942 = vunpack.c.h.b16 %v672
        %v2943 = vunpack.c.l.b16 %v673
        %v2944 = vunpack.c.h.b16 %v673
        %v2945 = vunpack.c.l.b16 %v674
        %v2946 = vunpack.c.h.b16 %v674
        %v2947 = vunpack.c.l.b16 %v675
        %v2948 = vunpack.c.h.b16 %v675
        %v2949 = vunpack.c.l.b16 %v676
        %v2950 = vunpack.c.h.b16 %v676
        %v2951 = vunpack.c.l.b16 %v677
        %v2952 = vunpack.c.h.b16 %v677
        %v2953 = vunpack.c.l.b16 %v678
        %v2954 = vunpack.c.h.b16 %v678
        %v2955 = vunpack.c.l.b16 %v679
        %v2956 = vunpack.c.h.b16 %v679
        %v2957 = vunpack.c.l.b16 %v680
        %v2958 = vunpack.c.h.b16 %v680
        %v2959 = vunpack.c.l.b16 %v681
        %v2960 = vunpack.c.h.b16 %v681
        %v2961 = vunpack.c.l.b16 %v682
        %v2962 = vunpack.c.h.b16 %v682
        %v2963 = vunpack.c.l.b16 %v683
        %v2964 = vunpack.c.h.b16 %v683
        %v2965 = vunpack.c.l.b16 %v684
        %v2966 = vunpack.c.h.b16 %v684
        %v2967 = vunpack.c.l.b16 %v685
        %v2968 = vunpack.c.h.b16 %v685
        %v2969 = vunpack.c.l.b16 %v686
        %v2970 = vunpack.c.h.b16 %v686
        %v2971 = vunpack.c.l.b16 %v687
        %v2972 = vunpack.c.h.b16 %v687
        %v2973 = vunpack.c.l.b16 %v688
        %v2974 = vunpack.c.h.b16 %v688
        %v2975 = vunpack.c.l.b16 %v689
        %v2976 = vunpack.c.h.b16 %v689
        %v2977 = vunpack.c.l.b16 %v690
        %v2978 = vunpack.c.h.b16 %v690
        %v2979 = vunpack.c.l.b16 %v691
        %v2980 = vunpack.c.h.b16 %v691
        %v2981 = vunpack.c.l.b16 %v692
        %v2982 = vunpack.c.h.b16 %v692
        %v2983 = vunpack.c.l.b16 %v693
        %v2984 = vunpack.c.h.b16 %v693
        %v2985 = vunpack.c.l.b16 %v694
        %v2986 = vunpack.c.h.b16 %v694
        %v2987 = vunpack.c.l.b16 %v695
        %v2988 = vunpack.c.h.b16 %v695
        %v2989 = vunpack.c.l.b16 %v696
        %v2990 = vunpack.c.h.b16 %v696
        %v2991 = vunpack.c.l.b16 %v697
        %v2992 = vunpack.c.h.b16 %v697
        %v2993 = vunpack.c.l.b16 %v698
        %v2994 = vunpack.c.h.b16 %v698
        %v2995 = vunpack.c.l.b16 %v699
        %v2996 = vunpack.c.h.b16 %v699
        %v2997 = vunpack.c.l.b16 %v700
        %v2998 = vunpack.c.h.b16 %v700
        %v2999 = vunpack.c.l.b16 %v701
        %v3000 = vunpack.c.h.b16 %v701
        %v3001 = vunpack.c.l.b16 %v702
        %v3002 = vunpack.c.h.b16 %v702
        %v3003 = vunpack.c.l.b16 %v703
        %v3004 = vunpack.c.h.b16 %v703
        %v3005 = vunpack.c.l.b16 %v704
        %v3006 = vunpack.c.h.b16 %v704
        %v3007 = vunpack.c.l.b16 %v705
        %v3008 = vunpack.c.h.b16 %v705
        %v3009 = vunpack.c.l.b16 %v706
        %v3010 = vunpack.c.h.b16 %v706
        %v3011 = vunpack.c.l.b16 %v707
        %v3012 = vunpack.c.h.b16 %v707
        %v3013 = vunpack.c.l.b16 %v708
        %v3014 = vunpack.c.h.b16 %v708
        %v3015 = vunpack.c.l.b16 %v709
        %v3016 = vunpack.c.h.b16 %v709
        %v3017 = vunpack.c.l.b16 %v710
        %v3018 = vunpack.c.h.b16 %v710
        %v3019 = vunpack.c.l.b16 %v711
        %v3020 = vunpack.c.h.b16 %v711
        %v3021 = vunpack.c.l.b16 %v712
        %v3022 = vunpack.c.h.b16 %v712
        %v3023 = vunpack.c.l.b16 %v713
        %v3024 = vunpack.c.h.b16 %v713
        %v3025 = vunpack.c.l.b16 %v714
        %v3026 = vunpack.c.h.b16 %v714
        %v3027 = vunpack.c.l.b16 %v715
        %v3028 = vunpack.c.h.b16 %v715
        %v3029 = vunpack.c.l.b16 %v716
        %v3030 = vunpack.c.h.b16 %v716
        %v3031 = vunpack.c.l.b16 %v717
        %v3032 = vunpack.c.h.b16 %v717
        %v3033 = vunpack.c.l.b16 %v718
        %v3034 = vunpack.c.h.b16 %v718
        %v3035 = vunpack.c.l.b16 %v719
        %v3036 = vunpack.c.h.b16 %v719
        %v3037 = vunpack.c.l.b16 %v720
        %v3038 = vunpack.c.h.b16 %v720
        %v3039 = vunpack.c.l.b16 %v721
        %v3040 = vunpack.c.h.b16 %v721
        %v3041 = vunpack.c.l.b16 %v722
        %v3042 = vunpack.c.h.b16 %v722
        %v3043 = vunpack.c.l.b16 %v723
        %v3044 = vunpack.c.h.b16 %v723
        %v3045 = vunpack.c.l.b16 %v724
        %v3046 = vunpack.c.h.b16 %v724
        %v3047 = vunpack.c.l.b16 %v725
        %v3048 = vunpack.c.h.b16 %v725
        %v3049 = vunpack.c.l.b16 %v726
        %v3050 = vunpack.c.h.b16 %v726
        %v3051 = vunpack.c.l.b16 %v727
        %v3052 = vunpack.c.h.b16 %v727
        %v3053 = vunpack.c.l.b16 %v728
        %v3054 = vunpack.c.h.b16 %v728
        %v3055 = vunpack.c.l.b16 %v729
        %v3056 = vunpack.c.h.b16 %v729
        %v3057 = vunpack.c.l.b16 %v730
        %v3058 = vunpack.c.h.b16 %v730
        %v3059 = vunpack.c.l.b16 %v731
        %v3060 = vunpack.c.h.b16 %v731
        %v3061 = vunpack.c.l.b16 %v732
        %v3062 = vunpack.c.h.b16 %v732
        %v3063 = vunpack.c.l.b16 %v733
        %v3064 = vunpack.c.h.b16 %v733
        %v3065 = vunpack.c.l.b16 %v734
        %v3066 = vunpack.c.h.b16 %v734
        %v3067 = vunpack.c.l.b16 %v735
        %v3068 = vunpack.c.h.b16 %v735
        %v3069 = vunpack.c.l.b16 %v736
        %v3070 = vunpack.c.h.b16 %v736
        %v3071 = vunpack.c.l.b16 %v737
        %v3072 = vunpack.c.h.b16 %v737
        %v3073 = vunpack.c.l.b16 %v738
        %v3074 = vunpack.c.h.b16 %v738
        %v3075 = vunpack.c.l.b16 %v739
        %v3076 = vunpack.c.h.b16 %v739
        %v3077 = vunpack.c.l.b16 %v740
        %v3078 = vunpack.c.h.b16 %v740
        %v3079 = vunpack.c.l.b16 %v741
        %v3080 = vunpack.c.h.b16 %v741
        %v3081 = vunpack.c.l.b16 %v742
        %v3082 = vunpack.c.h.b16 %v742
        %v3083 = vunpack.c.l.b16 %v743
        %v3084 = vunpack.c.h.b16 %v743
        %v3085 = vunpack.c.l.b16 %v744
        %v3086 = vunpack.c.h.b16 %v744
        %v3087 = vunpack.c.l.b16 %v745
        %v3088 = vunpack.c.h.b16 %v745
        %v3089 = vunpack.c.l.b16 %v746
        %v3090 = vunpack.c.h.b16 %v746
        %v3091 = vunpack.c.l.b16 %v747
        %v3092 = vunpack.c.h.b16 %v747
        %v3093 = vunpack.c.l.b16 %v748
        %v3094 = vunpack.c.h.b16 %v748
        %v3095 = vunpack.c.l.b16 %v749
        %v3096 = vunpack.c.h.b16 %v749
        %v3097 = vunpack.c.l.b16 %v750
        %v3098 = vunpack.c.h.b16 %v750
        %v3099 = vunpack.c.l.b16 %v751
        %v3100 = vunpack.c.h.b16 %v751
        %v3101 = vunpack.c.l.b16 %v752
        %v3102 = vunpack.c.h.b16 %v752
        %v3103 = vunpack.c.l.b16 %v753
        %v3104 = vunpack.c.h.b16 %v753
        %v3105 = vunpack.c.l.b16 %v754
        %v3106 = vunpack.c.h.b16 %v754
        %v3107 = vunpack.c.l.b16 %v755
        %v3108 = vunpack.c.h.b16 %v755
        %v3109 = vunpack.c.l.b16 %v756
        %v3110 = vunpack.c.h.b16 %v756
        %v3111 = vunpack.c.l.b16 %v757
        %v3112 = vunpack.c.h.b16 %v757
        %v3113 = vunpack.c.l.b16 %v758
        %v3114 = vunpack.c.h.b16 %v758
        %v3115 = vunpack.c.l.b16 %v759
        %v3116 = vunpack.c.h.b16 %v759
        %v3117 = vunpack.c.l.b16 %v760
        %v3118 = vunpack.c.h.b16 %v760
        %v3119 = vunpack.c.l.b16 %v761
        %v3120 = vunpack.c.h.b16 %v761
        %v3121 = vunpack.c.l.b16 %v762
        %v3122 = vunpack.c.h.b16 %v762
        %v3123 = vunpack.c.l.b16 %v763
        %v3124 = vunpack.c.h.b16 %v763
        %v3125 = vunpack.c.l.b16 %v764
        %v3126 = vunpack.c.h.b16 %v764
        %v3127 = vunpack.c.l.b16 %v765
        %v3128 = vunpack.c.h.b16 %v765
        %v3129 = vunpack.c.l.b16 %v766
        %v3130 = vunpack.c.h.b16 %v766
        %v3131 = vunpack.c.l.b16 %v767
        %v3132 = vunpack.c.h.b16 %v767
        %v3133 = vunpack.c.l.b16 %v768
        %v3134 = vunpack.c.h.b16 %v768
        %v3135 = vunpack.c.l.b16 %v769
        %v3136 = vunpack.c.h.b16 %v769
        %v3137 = vunpack.c.l.b16 %v770
        %v3138 = vunpack.c.h.b16 %v770
        %v3139 = vunpack.c.l.b16 %v771
        %v3140 = vunpack.c.h.b16 %v771
        %v3141 = vunpack.c.l.b16 %v772
        %v3142 = vunpack.c.h.b16 %v772
        %v3143 = vunpack.c.l.b16 %v773
        %v3144 = vunpack.c.h.b16 %v773
        %v3145 = vunpack.c.l.b16 %v774
        %v3146 = vunpack.c.h.b16 %v774
        %v3147 = vunpack.c.l.b16 %v775
        %v3148 = vunpack.c.h.b16 %v775
        %v3149 = vunpack.c.l.b16 %v776
        %v3150 = vunpack.c.h.b16 %v776
        %v3151 = vunpack.c.l.b16 %v777
        %v3152 = vunpack.c.h.b16 %v777
        %v3153 = vunpack.c.l.b16 %v778
        %v3154 = vunpack.c.h.b16 %v778
        %v3155 = vunpack.c.l.b16 %v779
        %v3156 = vunpack.c.h.b16 %v779
        %v3157 = vunpack.c.l.b16 %v780
        %v3158 = vunpack.c.h.b16 %v780
        %v3159 = vunpack.c.l.b16 %v781
        %v3160 = vunpack.c.h.b16 %v781
        %v3161 = vunpack.c.l.b16 %v782
        %v3162 = vunpack.c.h.b16 %v782
        %v3163 = vunpack.c.l.b16 %v783
        %v3164 = vunpack.c.h.b16 %v783
        %v3165 = vunpack.c.l.b16 %v784
        %v3166 = vunpack.c.h.b16 %v784
        %v3167 = vunpack.c.l.b16 %v785
        %v3168 = vunpack.c.h.b16 %v785
        %v3169 = vunpack.c.l.b16 %v786
        %v3170 = vunpack.c.h.b16 %v786
        %v3171 = vunpack.c.l.b16 %v787
        %v3172 = vunpack.c.h.b16 %v787
        %v3173 = vunpack.c.l.b16 %v788
        %v3174 = vunpack.c.h.b16 %v788
        %v3175 = vunpack.c.l.b16 %v789
        %v3176 = vunpack.c.h.b16 %v789
        %v3177 = vunpack.c.l.b16 %v790
        %v3178 = vunpack.c.h.b16 %v790
        %v3179 = vunpack.c.l.b16 %v791
        %v3180 = vunpack.c.h.b16 %v791
        %v3181 = vunpack.c.l.b16 %v792
        %v3182 = vunpack.c.h.b16 %v792
        %v3183 = vunpack.c.l.b16 %v793
        %v3184 = vunpack.c.h.b16 %v793
        %v3185 = vunpack.c.l.b16 %v794
        %v3186 = vunpack.c.h.b16 %v794
        %v3187 = vunpack.c.l.b16 %v795
        %v3188 = vunpack.c.h.b16 %v795
        %v3189 = vunpack.c.l.b16 %v796
        %v3190 = vunpack.c.h.b16 %v796
        %v3191 = vunpack.c.l.b16 %v797
        %v3192 = vunpack.c.h.b16 %v797
        %v3193 = vunpack.c.l.b16 %v798
        %v3194 = vunpack.c.h.b16 %v798
        %v3195 = vunpack.c.l.b16 %v799
        %v3196 = vunpack.c.h.b16 %v799
        %v3197 = vunpack.c.l.b16 %v800
        %v3198 = vunpack.c.h.b16 %v800
        %v3199 = vunpack.c.l.b16 %v801
        %v3200 = vunpack.c.h.b16 %v801
        %v3201 = vunpack.c.l.b16 %v802
        %v3202 = vunpack.c.h.b16 %v802
        %v3203 = vunpack.c.l.b16 %v803
        %v3204 = vunpack.c.h.b16 %v803
        %v3205 = vunpack.c.l.b16 %v804
        %v3206 = vunpack.c.h.b16 %v804
        %v3207 = vunpack.c.l.b16 %v805
        %v3208 = vunpack.c.h.b16 %v805
        %v3209 = vunpack.c.l.b16 %v806
        %v3210 = vunpack.c.h.b16 %v806
        %v3211 = vunpack.c.l.b16 %v807
        %v3212 = vunpack.c.h.b16 %v807
        %v3213 = vunpack.c.l.b16 %v808
        %v3214 = vunpack.c.h.b16 %v808
        %v3215 = vunpack.c.l.b16 %v809
        %v3216 = vunpack.c.h.b16 %v809
        %v3217 = vunpack.c.l.b16 %v810
        %v3218 = vunpack.c.h.b16 %v810
        %v3219 = vunpack.c.l.b16 %v811
        %v3220 = vunpack.c.h.b16 %v811
        %v3221 = vunpack.c.l.b16 %v812
        %v3222 = vunpack.c.h.b16 %v812
        %v3223 = vunpack.c.l.b16 %v813
        %v3224 = vunpack.c.h.b16 %v813
        %v3225 = vunpack.c.l.b16 %v814
        %v3226 = vunpack.c.h.b16 %v814
        %v3227 = vunpack.c.l.b16 %v815
        %v3228 = vunpack.c.h.b16 %v815
        %v3229 = vunpack.c.l.b16 %v816
        %v3230 = vunpack.c.h.b16 %v816
        %v3231 = vunpack.c.l.b16 %v817
        %v3232 = vunpack.c.h.b16 %v817
        %v3233 = vunpack.c.l.b16 %v818
        %v3234 = vunpack.c.h.b16 %v818
        %v3235 = vunpack.c.l.b16 %v819
        %v3236 = vunpack.c.h.b16 %v819
        %v3237 = vunpack.c.l.b16 %v820
        %v3238 = vunpack.c.h.b16 %v820
        %v3239 = vunpack.c.l.b16 %v821
        %v3240 = vunpack.c.h.b16 %v821
        %v3241 = vunpack.c.l.b16 %v822
        %v3242 = vunpack.c.h.b16 %v822
        %v3243 = vunpack.c.l.b16 %v823
        %v3244 = vunpack.c.h.b16 %v823
        %v3245 = vunpack.c.l.b16 %v824
        %v3246 = vunpack.c.h.b16 %v824
        %v3247 = vunpack.c.l.b16 %v825
        %v3248 = vunpack.c.h.b16 %v825
        %v3249 = vunpack.c.l.b16 %v826
        %v3250 = vunpack.c.h.b16 %v826
        %v3251 = vunpack.c.l.b16 %v827
        %v3252 = vunpack.c.h.b16 %v827
        %v3253 = vunpack.c.l.b16 %v828
        %v3254 = vunpack.c.h.b16 %v828
        %v3255 = vunpack.c.l.b16 %v829
        %v3256 = vunpack.c.h.b16 %v829
        %v3257 = vunpack.c.l.b16 %v830
        %v3258 = vunpack.c.h.b16 %v830
        %v3259 = vunpack.c.l.b16 %v831
        %v3260 = vunpack.c.h.b16 %v831
        %v3261 = vunpack.c.l.b16 %v832
        %v3262 = vunpack.c.h.b16 %v832
        %v3263 = vunpack.c.l.b16 %v833
        %v3264 = vunpack.c.h.b16 %v833
        %v3265 = vunpack.c.l.b16 %v834
        %v3266 = vunpack.c.h.b16 %v834
        %v3267 = vunpack.c.l.b16 %v835
        %v3268 = vunpack.c.h.b16 %v835
        %v3269 = vunpack.c.l.b16 %v836
        %v3270 = vunpack.c.h.b16 %v836
        %v3271 = vunpack.c.l.b16 %v837
        %v3272 = vunpack.c.h.b16 %v837
        %v3273 = vunpack.c.l.b16 %v838
        %v3274 = vunpack.c.h.b16 %v838
        %v3275 = vunpack.c.l.b16 %v839
        %v3276 = vunpack.c.h.b16 %v839
        %v3277 = vunpack.c.l.b16 %v840
        %v3278 = vunpack.c.h.b16 %v840
        %v3279 = vunpack.c.l.b16 %v841
        %v3280 = vunpack.c.h.b16 %v841
        %v3281 = vunpack.c.l.b16 %v842
        %v3282 = vunpack.c.h.b16 %v842
        %v3283 = vunpack.c.l.b16 %v843
        %v3284 = vunpack.c.h.b16 %v843
        %v3285 = vunpack.c.l.b16 %v844
        %v3286 = vunpack.c.h.b16 %v844
        %v3287 = vunpack.c.l.b16 %v845
        %v3288 = vunpack.c.h.b16 %v845
        %v3289 = vunpack.c.l.b16 %v846
        %v3290 = vunpack.c.h.b16 %v846
        %v3291 = vunpack.c.l.b16 %v847
        %v3292 = vunpack.c.h.b16 %v847
        %v3293 = vunpack.c.l.b16 %v848
        %v3294 = vunpack.c.h.b16 %v848
        %v3295 = vunpack.c.l.b16 %v849
        %v3296 = vunpack.c.h.b16 %v849
        %v3297 = vunpack.c.l.b16 %v850
        %v3298 = vunpack.c.h.b16 %v850
        %v3299 = vunpack.c.l.b16 %v851
        %v3300 = vunpack.c.h.b16 %v851
        %v3301 = vunpack.c.l.b16 %v852
        %v3302 = vunpack.c.h.b16 %v852
        %v3303 = vunpack.c.l.b16 %v853
        %v3304 = vunpack.c.h.b16 %v853
        %v3305 = vunpack.c.l.b16 %v854
        %v3306 = vunpack.c.h.b16 %v854
        %v3307 = vunpack.c.l.b16 %v855
        %v3308 = vunpack.c.h.b16 %v855
        %v3309 = vunpack.c.l.b16 %v856
        %v3310 = vunpack.c.h.b16 %v856
        %v3311 = vunpack.c.l.b16 %v857
        %v3312 = vunpack.c.h.b16 %v857
        %v3313 = vunpack.c.l.b16 %v858
        %v3314 = vunpack.c.h.b16 %v858
        %v3315 = vunpack.c.l.b16 %v859
        %v3316 = vunpack.c.h.b16 %v859
        %v3317 = vunpack.c.l.b16 %v860
        %v3318 = vunpack.c.h.b16 %v860
        %v3319 = vunpack.c.l.b16 %v861
        %v3320 = vunpack.c.h.b16 %v861
        %v3321 = vunpack.c.l.b16 %v862
        %v3322 = vunpack.c.h.b16 %v862
        %v3323 = vunpack.c.l.b16 %v863
        %v3324 = vunpack.c.h.b16 %v863
        %v3325 = vunpack.c.l.b16 %v864
        %v3326 = vunpack.c.h.b16 %v864
        %v3327 = vunpack.c.l.b16 %v865
        %v3328 = vunpack.c.h.b16 %v865
        %v3329 = vunpack.c.l.b16 %v866
        %v3330 = vunpack.c.h.b16 %v866
        %v3331 = vunpack.c.l.b16 %v867
        %v3332 = vunpack.c.h.b16 %v867
        %v3333 = vunpack.c.l.b16 %v868
        %v3334 = vunpack.c.h.b16 %v868
        %v3335 = vunpack.c.l.b16 %v869
        %v3336 = vunpack.c.h.b16 %v869
        %v3337 = vunpack.c.l.b16 %v870
        %v3338 = vunpack.c.h.b16 %v870
        %v3339 = vunpack.c.l.b16 %v871
        %v3340 = vunpack.c.h.b16 %v871
        %v3341 = vunpack.c.l.b16 %v872
        %v3342 = vunpack.c.h.b16 %v872
        %v3343 = vunpack.c.l.b16 %v873
        %v3344 = vunpack.c.h.b16 %v873
        %v3345 = vunpack.c.l.b16 %v874
        %v3346 = vunpack.c.h.b16 %v874
        %v3347 = vunpack.c.l.b16 %v875
        %v3348 = vunpack.c.h.b16 %v875
        %v3349 = vunpack.c.l.b16 %v876
        %v3350 = vunpack.c.h.b16 %v876
        %v3351 = vunpack.c.l.b16 %v877
        %v3352 = vunpack.c.h.b16 %v877
        %v3353 = vunpack.c.l.b16 %v878
        %v3354 = vunpack.c.h.b16 %v878
        %v3355 = vunpack.c.l.b16 %v879
        %v3356 = vunpack.c.h.b16 %v879
        %v3357 = vunpack.c.l.b16 %v880
        %v3358 = vunpack.c.h.b16 %v880
        %v3359 = vunpack.c.l.b16 %v881
        %v3360 = vunpack.c.h.b16 %v881
        %v3361 = vunpack.c.l.b16 %v882
        %v3362 = vunpack.c.h.b16 %v882
        %v3363 = vunpack.c.l.b16 %v883
        %v3364 = vunpack.c.h.b16 %v883
        %v3365 = vunpack.c.l.b16 %v884
        %v3366 = vunpack.c.h.b16 %v884
        %v3367 = vunpack.c.l.b16 %v885
        %v3368 = vunpack.c.h.b16 %v885
        %v3369 = vunpack.c.l.b16 %v886
        %v3370 = vunpack.c.h.b16 %v886
        %v3371 = vunpack.c.l.b16 %v887
        %v3372 = vunpack.c.h.b16 %v887
        %v3373 = vunpack.c.l.b16 %v888
        %v3374 = vunpack.c.h.b16 %v888
        %v3375 = vunpack.c.l.b16 %v889
        %v3376 = vunpack.c.h.b16 %v889
        %v3377 = vunpack.c.l.b16 %v890
        %v3378 = vunpack.c.h.b16 %v890
        %v3379 = vunpack.c.l.b16 %v891
        %v3380 = vunpack.c.h.b16 %v891
        %v3381 = vunpack.c.l.b16 %v892
        %v3382 = vunpack.c.h.b16 %v892
        %v3383 = vunpack.c.l.b16 %v893
        %v3384 = vunpack.c.h.b16 %v893
        %v3385 = vunpack.c.l.b16 %v894
        %v3386 = vunpack.c.h.b16 %v894
        %v3387 = vunpack.c.l.b16 %v895
        %v3388 = vunpack.c.h.b16 %v895
        %v3389 = vunpack.c.l.b16 %v896
        %v3390 = vunpack.c.h.b16 %v896
        %v3391 = vunpack.c.l.b16 %v897
        %v3392 = vunpack.c.h.b16 %v897
        %v3393 = vunpack.c.l.b16 %v898
        %v3394 = vunpack.c.h.b16 %v898
        %v3395 = vunpack.c.l.b16 %v899
        %v3396 = vunpack.c.h.b16 %v899
        %v3397 = vunpack.c.l.b16 %v900
        %v3398 = vunpack.c.h.b16 %v900
        %v3399 = vunpack.c.l.b16 %v901
        %v3400 = vunpack.c.h.b16 %v901
        %v3401 = vunpack.c.l.b16 %v902
        %v3402 = vunpack.c.h.b16 %v902
        %v3403 = vunpack.c.l.b16 %v903
        %v3404 = vunpack.c.h.b16 %v903
        %v3405 = vunpack.c.l.b16 %v904
        %v3406 = vunpack.c.h.b16 %v904
        %v3407 = vunpack.c.l.b16 %v905
        %v3408 = vunpack.c.h.b16 %v905
        %v3409 = vunpack.c.l.b16 %v906
        %v3410 = vunpack.c.h.b16 %v906
        %v3411 = vunpack.c.l.b16 %v907
        %v3412 = vunpack.c.h.b16 %v907
        %v3413 = vunpack.c.l.b16 %v908
        %v3414 = vunpack.c.h.b16 %v908
        %v3415 = vunpack.c.l.b16 %v909
        %v3416 = vunpack.c.h.b16 %v909
        %v3417 = vunpack.c.l.b16 %v910
        %v3418 = vunpack.c.h.b16 %v910
        %v3419 = vunpack.c.l.b16 %v911
        %v3420 = vunpack.c.h.b16 %v911
        %v3421 = vunpack.c.l.b16 %v912
        %v3422 = vunpack.c.h.b16 %v912
        %v3423 = vunpack.c.l.b16 %v913
        %v3424 = vunpack.c.h.b16 %v913
        %v3425 = vunpack.c.l.b16 %v914
        %v3426 = vunpack.c.h.b16 %v914
        %v3427 = vunpack.c.l.b16 %v915
        %v3428 = vunpack.c.h.b16 %v915
        %v3429 = vunpack.c.l.b16 %v916
        %v3430 = vunpack.c.h.b16 %v916
        %v3431 = vunpack.c.l.b16 %v917
        %v3432 = vunpack.c.h.b16 %v917
        %v3433 = vunpack.c.l.b16 %v918
        %v3434 = vunpack.c.h.b16 %v918
        %v3435 = vunpack.c.l.b16 %v919
        %v3436 = vunpack.c.h.b16 %v919
        %v3437 = vunpack.c.l.b16 %v920
        %v3438 = vunpack.c.h.b16 %v920
        %v3439 = vunpack.c.l.b16 %v921
        %v3440 = vunpack.c.h.b16 %v921
        %v3441 = vunpack.c.l.b16 %v922
        %v3442 = vunpack.c.h.b16 %v922
        %v3443 = vunpack.c.l.b16 %v923
        %v3444 = vunpack.c.h.b16 %v923
        %v3445 = vunpack.c.l.b16 %v924
        %v3446 = vunpack.c.h.b16 %v924
        %v3447 = vunpack.c.l.b16 %v925
        %v3448 = vunpack.c.h.b16 %v925
        %v3449 = vunpack.c.l.b16 %v926
        %v3450 = vunpack.c.h.b16 %v926
        %v3451 = vunpack.c.l.b16 %v927
        %v3452 = vunpack.c.h.b16 %v927
        %v3453 = vunpack.c.l.b16 %v928
        %v3454 = vunpack.c.h.b16 %v928
        %v3455 = vunpack.c.l.b16 %v929
        %v3456 = vunpack.c.h.b16 %v929
        %v3457 = vunpack.c.l.b16 %v930
        %v3458 = vunpack.c.h.b16 %v930
        %v3459 = vunpack.c.l.b16 %v931
        %v3460 = vunpack.c.h.b16 %v931
        %v3461 = vunpack.c.l.b16 %v932
        %v3462 = vunpack.c.h.b16 %v932
        %v3463 = vunpack.c.l.b16 %v933
        %v3464 = vunpack.c.h.b16 %v933
        %v3465 = vunpack.c.l.b16 %v934
        %v3466 = vunpack.c.h.b16 %v934
        %v3467 = vunpack.c.l.b16 %v935
        %v3468 = vunpack.c.h.b16 %v935
        %v3469 = vunpack.c.l.b16 %v936
        %v3470 = vunpack.c.h.b16 %v936
        %v3471 = vunpack.c.l.b16 %v937
        %v3472 = vunpack.c.h.b16 %v937
        %v3473 = vunpack.c.l.b16 %v938
        %v3474 = vunpack.c.h.b16 %v938
        %v3475 = vunpack.c.l.b16 %v939
        %v3476 = vunpack.c.h.b16 %v939
        %v3477 = vunpack.c.l.b16 %v940
        %v3478 = vunpack.c.h.b16 %v940
        %v3479 = vunpack.c.l.b16 %v941
        %v3480 = vunpack.c.h.b16 %v941
        %v3481 = vunpack.c.l.b16 %v942
        %v3482 = vunpack.c.h.b16 %v942
        %v3483 = vunpack.c.l.b16 %v943
        %v3484 = vunpack.c.h.b16 %v943
        %v3485 = vunpack.c.l.b16 %v944
        %v3486 = vunpack.c.h.b16 %v944
        %v3487 = vunpack.c.l.b16 %v945
        %v3488 = vunpack.c.h.b16 %v945
        %v3489 = vunpack.c.l.b16 %v946
        %v3490 = vunpack.c.h.b16 %v946
        %v3491 = vunpack.c.l.b16 %v947
        %v3492 = vunpack.c.h.b16 %v947
        %v3493 = vunpack.c.l.b16 %v948
        %v3494 = vunpack.c.h.b16 %v948
        %v3495 = vunpack.c.l.b16 %v949
        %v3496 = vunpack.c.h.b16 %v949
        %v3497 = vunpack.c.l.b16 %v950
        %v3498 = vunpack.c.h.b16 %v950
        %v3499 = vunpack.c.l.b16 %v951
        %v3500 = vunpack.c.h.b16 %v951
        %v3501 = vunpack.c.l.b16 %v952
        %v3502 = vunpack.c.h.b16 %v952
        %v3503 = vunpack.c.l.b16 %v953
        %v3504 = vunpack.c.h.b16 %v953
        %v3505 = vunpack.c.l.b16 %v954
        %v3506 = vunpack.c.h.b16 %v954
        %v3507 = vunpack.c.l.b16 %v955
        %v3508 = vunpack.c.h.b16 %v955
        %v3509 = vunpack.c.l.b16 %v956
        %v3510 = vunpack.c.h.b16 %v956
        %v3511 = vunpack.c.l.b16 %v957
        %v3512 = vunpack.c.h.b16 %v957
        %v3513 = vunpack.c.l.b16 %v958
        %v3514 = vunpack.c.h.b16 %v958
        %v3515 = vunpack.c.l.b16 %v959
        %v3516 = vunpack.c.h.b16 %v959
        %v3517 = vunpack.c.l.b16 %v960
        %v3518 = vunpack.c.h.b16 %v960
        %v3519 = vunpack.c.l.b16 %v961
        %v3520 = vunpack.c.h.b16 %v961
        %v3521 = vunpack.c.l.b16 %v962
        %v3522 = vunpack.c.h.b16 %v962
        %v3523 = vunpack.c.l.b16 %v963
        %v3524 = vunpack.c.h.b16 %v963
        %v3525 = vunpack.c.l.b16 %v964
        %v3526 = vunpack.c.h.b16 %v964
        %v3527 = vunpack.c.l.b16 %v965
        %v3528 = vunpack.c.h.b16 %v965
        %v3529 = vunpack.c.l.b16 %v966
        %v3530 = vunpack.c.h.b16 %v966
        %v3531 = vunpack.c.l.b16 %v967
        %v3532 = vunpack.c.h.b16 %v967
        %v3533 = vunpack.c.l.b16 %v968
        %v3534 = vunpack.c.h.b16 %v968
        %v3535 = vunpack.c.l.b16 %v969
        %v3536 = vunpack.c.h.b16 %v969
        %v3537 = vunpack.c.l.b16 %v970
        %v3538 = vunpack.c.h.b16 %v970
        %v3539 = vunpack.c.l.b16 %v971
        %v3540 = vunpack.c.h.b16 %v971
        %v3541 = vunpack.c.l.b16 %v972
        %v3542 = vunpack.c.h.b16 %v972
        %v3543 = vunpack.c.l.b16 %v973
        %v3544 = vunpack.c.h.b16 %v973
        %v3545 = vunpack.c.l.b16 %v974
        %v3546 = vunpack.c.h.b16 %v974
        %v3547 = vunpack.c.l.b16 %v975
        %v3548 = vunpack.c.h.b16 %v975
        %v3549 = vunpack.c.l.b16 %v976
        %v3550 = vunpack.c.h.b16 %v976
        %v3551 = vunpack.c.l.b16 %v977
        %v3552 = vunpack.c.h.b16 %v977
        %v3553 = vunpack.c.l.b16 %v978
        %v3554 = vunpack.c.h.b16 %v978
        %v3555 = vunpack.c.l.b16 %v979
        %v3556 = vunpack.c.h.b16 %v979
        %v3557 = vunpack.c.l.b16 %v980
        %v3558 = vunpack.c.h.b16 %v980
        %v3559 = vunpack.c.l.b16 %v981
        %v3560 = vunpack.c.h.b16 %v981
        %v3561 = vunpack.c.l.b16 %v982
        %v3562 = vunpack.c.h.b16 %v982
        %v3563 = vunpack.c.l.b16 %v983
        %v3564 = vunpack.c.h.b16 %v983
        %v3565 = vunpack.c.l.b16 %v984
        %v3566 = vunpack.c.h.b16 %v984
        %v3567 = vunpack.c.l.b16 %v985
        %v3568 = vunpack.c.h.b16 %v985
        %v3569 = vunpack.c.l.b16 %v986
        %v3570 = vunpack.c.h.b16 %v986
        %v3571 = vunpack.c.l.b16 %v987
        %v3572 = vunpack.c.h.b16 %v987
        %v3573 = vunpack.c.l.b16 %v988
        %v3574 = vunpack.c.h.b16 %v988
        %v3575 = vunpack.c.l.b16 %v989
        %v3576 = vunpack.c.h.b16 %v989
        %v3577 = vunpack.c.l.b16 %v990
        %v3578 = vunpack.c.h.b16 %v990
        %v3579 = vunpack.c.l.b16 %v991
        %v3580 = vunpack.c.h.b16 %v991
        %v3581 = vunpack.c.l.b16 %v992
        %v3582 = vunpack.c.h.b16 %v992
        %v3583 = vunpack.c.l.b16 %v993
        %v3584 = vunpack.c.h.b16 %v993
        %v3585 = vunpack.c.l.b16 %v994
        %v3586 = vunpack.c.h.b16 %v994
        %v3587 = vunpack.c.l.b16 %v995
        %v3588 = vunpack.c.h.b16 %v995
        %v3589 = vunpack.c.l.b16 %v996
        %v3590 = vunpack.c.h.b16 %v996
        %v3591 = vunpack.c.l.b16 %v997
        %v3592 = vunpack.c.h.b16 %v997
        %v3593 = vunpack.c.l.b16 %v998
        %v3594 = vunpack.c.h.b16 %v998
        %v3595 = vunpack.c.l.b16 %v999
        %v3596 = vunpack.c.h.b16 %v999
        %v3597 = vunpack.c.l.b16 %v1000
        %v3598 = vunpack.c.h.b16 %v1000
        %v3599 = vunpack.c.l.b16 %v1001
        %v3600 = vunpack.c.h.b16 %v1001
        %v3601 = vunpack.c.l.b16 %v1002
        %v3602 = vunpack.c.h.b16 %v1002
        %v3603 = vunpack.c.l.b16 %v1003
        %v3604 = vunpack.c.h.b16 %v1003
        %v3605 = vunpack.c.l.b16 %v1004
        %v3606 = vunpack.c.h.b16 %v1004
        %v3607 = vunpack.c.l.b16 %v1005
        %v3608 = vunpack.c.h.b16 %v1005
        %v3609 = vunpack.c.l.b16 %v1006
        %v3610 = vunpack.c.h.b16 %v1006
        %v3611 = vunpack.c.l.b16 %v1007
        %v3612 = vunpack.c.h.b16 %v1007
        %v3613 = vunpack.c.l.b16 %v1008
        %v3614 = vunpack.c.h.b16 %v1008
        %v3615 = vunpack.c.l.b16 %v1009
        %v3616 = vunpack.c.h.b16 %v1009
        %v3617 = vunpack.c.l.b16 %v1010
        %v3618 = vunpack.c.h.b16 %v1010
        %v3619 = vunpack.c.l.b16 %v1011
        %v3620 = vunpack.c.h.b16 %v1011
        %v3621 = vunpack.c.l.b16 %v1012
        %v3622 = vunpack.c.h.b16 %v1012
        %v3623 = vunpack.c.l.b16 %v1013
        %v3624 = vunpack.c.h.b16 %v1013
        %v3625 = vunpack.c.l.b16 %v1014
        %v3626 = vunpack.c.h.b16 %v1014
        %v3627 = vunpack.c.l.b16 %v1015
        %v3628 = vunpack.c.h.b16 %v1015
        %v3629 = vunpack.c.l.b16 %v1016
        %v3630 = vunpack.c.h.b16 %v1016
        %v3631 = vunpack.c.l.b16 %v1017
        %v3632 = vunpack.c.h.b16 %v1017
        %v3633 = vunpack.c.l.b16 %v1018
        %v3634 = vunpack.c.h.b16 %v1018
        %v3635 = vunpack.c.l.b16 %v1019
        %v3636 = vunpack.c.h.b16 %v1019
        %v3637 = vunpack.c.l.b16 %v1020
        %v3638 = vunpack.c.h.b16 %v1020
        %v3639 = vunpack.c.l.b16 %v1021
        %v3640 = vunpack.c.h.b16 %v1021
        %v3641 = vunpack.c.l.b16 %v1022
        %v3642 = vunpack.c.h.b16 %v1022
        %v3643 = vunpack.c.l.b16 %v1023
        %v3644 = vunpack.c.h.b16 %v1023
        %v3645 = vunpack.c.l.b16 %v1024
        %v3646 = vunpack.c.h.b16 %v1024
        %v3647 = vunpack.c.l.b16 %v1025
        %v3648 = vunpack.c.h.b16 %v1025
        %v3649 = vunpack.c.l.b16 %v1026
        %v3650 = vunpack.c.h.b16 %v1026
        %v3651 = vunpack.c.l.b16 %v1027
        %v3652 = vunpack.c.h.b16 %v1027
        %v3653 = vunpack.c.l.b16 %v1028
        %v3654 = vunpack.c.h.b16 %v1028
        %v3655 = vunpack.c.l.b16 %v1029
        %v3656 = vunpack.c.h.b16 %v1029
        %v3657 = vunpack.c.l.b16 %v1030
        %v3658 = vunpack.c.h.b16 %v1030
        %v3659 = vunpack.c.l.b16 %v1031
        %v3660 = vunpack.c.h.b16 %v1031
        %v3661 = vunpack.c.l.b16 %v1032
        %v3662 = vunpack.c.h.b16 %v1032
        %v3663 = vunpack.c.l.b16 %v1033
        %v3664 = vunpack.c.h.b16 %v1033
        %v3665 = vunpack.c.l.b16 %v1034
        %v3666 = vunpack.c.h.b16 %v1034
        %v3667 = vunpack.c.l.b16 %v1035
        %v3668 = vunpack.c.h.b16 %v1035
        %v3669 = vunpack.c.l.b16 %v1036
        %v3670 = vunpack.c.h.b16 %v1036
        %v3671 = vunpack.c.l.b16 %v1037
        %v3672 = vunpack.c.h.b16 %v1037
        %v3673 = vunpack.c.l.b16 %v1038
        %v3674 = vunpack.c.h.b16 %v1038
        %v3675 = vunpack.c.l.b16 %v1039
        %v3676 = vunpack.c.h.b16 %v1039
        %v3677 = vunpack.c.l.b16 %v1040
        %v3678 = vunpack.c.h.b16 %v1040
        %v3679 = vunpack.c.l.b16 %v1041
        %v3680 = vunpack.c.h.b16 %v1041
        %v3681 = vunpack.c.l.b16 %v1042
        %v3682 = vunpack.c.h.b16 %v1042
        %v3683 = vunpack.c.l.b16 %v1043
        %v3684 = vunpack.c.h.b16 %v1043
        %v3685 = vunpack.c.l.b16 %v1044
        %v3686 = vunpack.c.h.b16 %v1044
        %v3687 = vunpack.c.l.b16 %v1045
        %v3688 = vunpack.c.h.b16 %v1045
        %v3689 = vunpack.c.l.b16 %v1046
        %v3690 = vunpack.c.h.b16 %v1046
        %v3691 = vunpack.c.l.b16 %v1047
        %v3692 = vunpack.c.h.b16 %v1047
        %v3693 = vunpack.c.l.b16 %v1048
        %v3694 = vunpack.c.h.b16 %v1048
        %v3695 = vunpack.c.l.b16 %v1049
        %v3696 = vunpack.c.h.b16 %v1049
        %v3697 = vunpack.c.l.b16 %v1050
        %v3698 = vunpack.c.h.b16 %v1050
        %v3699 = vunpack.c.l.b16 %v1051
        %v3700 = vunpack.c.h.b16 %v1051
        %v3701 = vunpack.c.l.b16 %v1052
        %v3702 = vunpack.c.h.b16 %v1052
        %v3703 = vunpack.c.l.b16 %v1053
        %v3704 = vunpack.c.h.b16 %v1053
        %v3705 = vunpack.c.l.b16 %v1054
        %v3706 = vunpack.c.h.b16 %v1054
        %v3707 = vunpack.c.l.b16 %v1055
        %v3708 = vunpack.c.h.b16 %v1055
        %v3709 = vunpack.c.l.b16 %v1056
        %v3710 = vunpack.c.h.b16 %v1056
        %v3711 = vunpack.c.l.b16 %v1057
        %v3712 = vunpack.c.h.b16 %v1057
        %v3713 = vunpack.c.l.b16 %v1058
        %v3714 = vunpack.c.h.b16 %v1058
        %v3715 = vunpack.c.l.b16 %v1059
        %v3716 = vunpack.c.h.b16 %v1059
        %v3717 = vunpack.c.l.b16 %v1060
        %v3718 = vunpack.c.h.b16 %v1060
        %v3719 = vunpack.c.l.b16 %v1061
        %v3720 = vunpack.c.h.b16 %v1061
        %v3721 = vunpack.c.l.b16 %v1062
        %v3722 = vunpack.c.h.b16 %v1062
        %v3723 = vunpack.c.l.b16 %v1063
        %v3724 = vunpack.c.h.b16 %v1063
        %v3725 = vunpack.c.l.b16 %v1064
        %v3726 = vunpack.c.h.b16 %v1064
        %v3727 = vunpack.c.l.b16 %v1065
        %v3728 = vunpack.c.h.b16 %v1065
        %v3729 = vunpack.c.l.b16 %v1066
        %v3730 = vunpack.c.h.b16 %v1066
        %v3731 = vunpack.c.l.b16 %v1067
        %v3732 = vunpack.c.h.b16 %v1067
        %v3733 = vunpack.c.l.b16 %v1068
        %v3734 = vunpack.c.h.b16 %v1068
        %v3735 = vunpack.c.l.b16 %v1069
        %v3736 = vunpack.c.h.b16 %v1069
        %v3737 = vunpack.c.l.b16 %v1070
        %v3738 = vunpack.c.h.b16 %v1070
        %v3739 = vunpack.c.l.b16 %v1071
        %v3740 = vunpack.c.h.b16 %v1071
        %v3741 = vunpack.c.l.b16 %v1072
        %v3742 = vunpack.c.h.b16 %v1072
        %v3743 = vunpack.c.l.b16 %v1073
        %v3744 = vunpack.c.h.b16 %v1073
        %v3745 = vunpack.c.l.b16 %v1074
        %v3746 = vunpack.c.h.b16 %v1074
        %v3747 = vunpack.c.l.b16 %v1075
        %v3748 = vunpack.c.h.b16 %v1075
        %v3749 = vunpack.c.l.b16 %v1076
        %v3750 = vunpack.c.h.b16 %v1076
        %v3751 = vunpack.c.l.b16 %v1077
        %v3752 = vunpack.c.h.b16 %v1077
        %v3753 = vunpack.c.l.b16 %v1078
        %v3754 = vunpack.c.h.b16 %v1078
        %v3755 = vunpack.c.l.b16 %v1079
        %v3756 = vunpack.c.h.b16 %v1079
        %v3757 = vunpack.c.l.b16 %v1080
        %v3758 = vunpack.c.h.b16 %v1080
        %v3759 = vunpack.c.l.b16 %v1081
        %v3760 = vunpack.c.h.b16 %v1081
        %v3761 = vunpack.c.l.b16 %v1082
        %v3762 = vunpack.c.h.b16 %v1082
        %v3763 = vunpack.c.l.b16 %v1083
        %v3764 = vunpack.c.h.b16 %v1083
        %v3765 = vunpack.c.l.b16 %v1084
        %v3766 = vunpack.c.h.b16 %v1084
        %v3767 = vunpack.c.l.b16 %v1085
        %v3768 = vunpack.c.h.b16 %v1085
        %v3769 = vunpack.c.l.b16 %v1086
        %v3770 = vunpack.c.h.b16 %v1086
        %v3771 = vunpack.c.l.b16 %v1087
        %v3772 = vunpack.c.h.b16 %v1087
        %v3773 = vunpack.c.l.b16 %v1088
        %v3774 = vunpack.c.h.b16 %v1088
        %v3775 = vunpack.c.l.b16 %v1089
        %v3776 = vunpack.c.h.b16 %v1089
        %v3777 = vunpack.c.l.b16 %v1090
        %v3778 = vunpack.c.h.b16 %v1090
        %v3779 = vunpack.c.l.b16 %v1091
        %v3780 = vunpack.c.h.b16 %v1091
        %v3781 = vunpack.c.l.b16 %v1092
        %v3782 = vunpack.c.h.b16 %v1092
        %v3783 = vunpack.c.l.b16 %v1093
        %v3784 = vunpack.c.h.b16 %v1093
        %v3785 = vunpack.c.l.b16 %v1094
        %v3786 = vunpack.c.h.b16 %v1094
        %v3787 = vunpack.c.l.b16 %v1095
        %v3788 = vunpack.c.h.b16 %v1095
        %v3789 = vunpack.c.l.b16 %v1096
        %v3790 = vunpack.c.h.b16 %v1096
        %v3791 = vunpack.c.l.b16 %v1097
        %v3792 = vunpack.c.h.b16 %v1097
        %v3793 = vunpack.c.l.b16 %v1098
        %v3794 = vunpack.c.h.b16 %v1098
        %v3795 = vunpack.c.l.b16 %v1099
        %v3796 = vunpack.c.h.b16 %v1099
        %v3797 = vunpack.c.l.b16 %v1100
        %v3798 = vunpack.c.h.b16 %v1100
        %v3799 = vunpack.c.l.b16 %v1101
        %v3800 = vunpack.c.h.b16 %v1101
        %v3801 = vunpack.c.l.b16 %v1102
        %v3802 = vunpack.c.h.b16 %v1102
        %v3803 = vunpack.c.l.b16 %v1103
        %v3804 = vunpack.c.h.b16 %v1103
        %v3805 = vunpack.c.l.b16 %v1104
        %v3806 = vunpack.c.h.b16 %v1104
        %v3807 = vunpack.c.l.b16 %v1105
        %v3808 = vunpack.c.h.b16 %v1105
        %v3809 = vunpack.c.l.b16 %v1106
        %v3810 = vunpack.c.h.b16 %v1106
        %v3811 = vunpack.c.l.b16 %v1107
        %v3812 = vunpack.c.h.b16 %v1107
        %v3813 = vunpack.c.l.b16 %v1108
        %v3814 = vunpack.c.h.b16 %v1108
        %v3815 = vunpack.c.l.b16 %v1109
        %v3816 = vunpack.c.h.b16 %v1109
        %v3817 = vunpack.c.l.b16 %v1110
        %v3818 = vunpack.c.h.b16 %v1110
        %v3819 = vunpack.c.l.b16 %v1111
        %v3820 = vunpack.c.h.b16 %v1111
        %v3821 = vunpack.c.l.b16 %v1112
        %v3822 = vunpack.c.h.b16 %v1112
        %v3823 = vunpack.c.l.b16 %v1113
        %v3824 = vunpack.c.h.b16 %v1113
        %v3825 = vunpack.c.l.b16 %v1114
        %v3826 = vunpack.c.h.b16 %v1114
        %v3827 = vunpack.c.l.b16 %v1115
        %v3828 = vunpack.c.h.b16 %v1115
        %v3829 = vunpack.c.l.b16 %v1116
        %v3830 = vunpack.c.h.b16 %v1116
        %v3831 = vunpack.c.l.b16 %v1117
        %v3832 = vunpack.c.h.b16 %v1117
        %v3833 = vunpack.c.l.b16 %v1118
        %v3834 = vunpack.c.h.b16 %v1118
        %v3835 = vunpack.c.l.b16 %v1119
        %v3836 = vunpack.c.h.b16 %v1119
        %v3837 = vunpack.c.l.b16 %v1120
        %v3838 = vunpack.c.h.b16 %v1120
        %v3839 = vunpack.c.l.b16 %v1121
        %v3840 = vunpack.c.h.b16 %v1121
        %v3841 = vunpack.c.l.b16 %v1122
        %v3842 = vunpack.c.h.b16 %v1122
        %v3843 = vunpack.c.l.b16 %v1123
        %v3844 = vunpack.c.h.b16 %v1123
        %v3845 = vunpack.c.l.b16 %v1124
        %v3846 = vunpack.c.h.b16 %v1124
        %v3847 = vunpack.c.l.b16 %v1125
        %v3848 = vunpack.c.h.b16 %v1125
        %v3849 = vunpack.c.l.b16 %v1126
        %v3850 = vunpack.c.h.b16 %v1126
        %v3851 = vunpack.c.l.b16 %v1127
        %v3852 = vunpack.c.h.b16 %v1127
        %v3853 = vunpack.c.l.b16 %v1128
        %v3854 = vunpack.c.h.b16 %v1128
        %v3855 = vunpack.c.l.b16 %v1129
        %v3856 = vunpack.c.h.b16 %v1129
        %v3857 = vunpack.c.l.b16 %v1130
        %v3858 = vunpack.c.h.b16 %v1130
        %v3859 = vunpack.c.l.b16 %v1131
        %v3860 = vunpack.c.h.b16 %v1131
        %v3861 = vunpack.c.l.b16 %v1132
        %v3862 = vunpack.c.h.b16 %v1132
        %v3863 = vunpack.c.l.b16 %v1133
        %v3864 = vunpack.c.h.b16 %v1133
        %v3865 = vunpack.c.l.b16 %v1134
        %v3866 = vunpack.c.h.b16 %v1134
        %v3867 = vunpack.c.l.b16 %v1135
        %v3868 = vunpack.c.h.b16 %v1135
        %v3869 = vunpack.c.l.b16 %v1136
        %v3870 = vunpack.c.h.b16 %v1136
        %v3871 = vunpack.c.l.b16 %v1137
        %v3872 = vunpack.c.h.b16 %v1137
        %v3873 = vunpack.c.l.b16 %v1138
        %v3874 = vunpack.c.h.b16 %v1138
        %v3875 = vunpack.c.l.b16 %v1139
        %v3876 = vunpack.c.h.b16 %v1139
        %v3877 = vunpack.c.l.b16 %v1140
        %v3878 = vunpack.c.h.b16 %v1140
        %v3879 = vunpack.c.l.b16 %v1141
        %v3880 = vunpack.c.h.b16 %v1141
        %v3881 = vunpack.c.l.b16 %v1142
        %v3882 = vunpack.c.h.b16 %v1142
        %v3883 = vunpack.c.l.b16 %v1143
        %v3884 = vunpack.c.h.b16 %v1143
        %v3885 = vunpack.c.l.b16 %v1144
        %v3886 = vunpack.c.h.b16 %v1144
        %v3887 = vunpack.c.l.b16 %v1145
        %v3888 = vunpack.c.h.b16 %v1145
        %v3889 = vunpack.c.l.b16 %v1146
        %v3890 = vunpack.c.h.b16 %v1146
        %v3891 = vunpack.c.l.b16 %v1147
        %v3892 = vunpack.c.h.b16 %v1147
        %v3893 = vunpack.c.l.b16 %v1148
        %v3894 = vunpack.c.h.b16 %v1148
        %v3895 = vunpack.c.l.b16 %v1149
        %v3896 = vunpack.c.h.b16 %v1149
        %v3897 = vunpack.c.l.b16 %v1150
        %v3898 = vunpack.c.h.b16 %v1150
        %v3899 = vunpack.c.l.b16 %v1151
        %v3900 = vunpack.c.h.b16 %v1151
        %v3901 = vunpack.c.l.b16 %v1152
        %v3902 = vunpack.c.h.b16 %v1152
        %v3903 = vunpack.c.l.b16 %v1153
        %v3904 = vunpack.c.h.b16 %v1153
        %v3905 = vunpack.c.l.b16 %v1154
        %v3906 = vunpack.c.h.b16 %v1154
        %v3907 = vunpack.c.l.b16 %v1155
        %v3908 = vunpack.c.h.b16 %v1155
        %v3909 = vunpack.c.l.b16 %v1156
        %v3910 = vunpack.c.h.b16 %v1156
        %v3911 = vunpack.c.l.b16 %v1157
        %v3912 = vunpack.c.h.b16 %v1157
        %v3913 = vunpack.c.l.b16 %v1158
        %v3914 = vunpack.c.h.b16 %v1158
        %v3915 = vunpack.c.l.b16 %v1159
        %v3916 = vunpack.c.h.b16 %v1159
        %v3917 = vunpack.c.l.b16 %v1160
        %v3918 = vunpack.c.h.b16 %v1160
        %v3919 = vunpack.c.l.b16 %v1161
        %v3920 = vunpack.c.h.b16 %v1161
        %v3921 = vunpack.c.l.b16 %v1162
        %v3922 = vunpack.c.h.b16 %v1162
        %v3923 = vunpack.c.l.b16 %v1163
        %v3924 = vunpack.c.h.b16 %v1163
        %v3925 = vunpack.c.l.b16 %v1164
        %v3926 = vunpack.c.h.b16 %v1164
        %v3927 = vunpack.c.l.b16 %v1165
        %v3928 = vunpack.c.h.b16 %v1165
        %v3929 = vunpack.c.l.b16 %v1166
        %v3930 = vunpack.c.h.b16 %v1166
        %v3931 = vunpack.c.l.b16 %v1167
        %v3932 = vunpack.c.h.b16 %v1167
        %v3933 = vunpack.c.l.b16 %v1168
        %v3934 = vunpack.c.h.b16 %v1168
        %v3935 = vunpack.c.l.b16 %v1169
        %v3936 = vunpack.c.h.b16 %v1169
        %v3937 = vunpack.c.l.b16 %v1170
        %v3938 = vunpack.c.h.b16 %v1170
        %v3939 = vunpack.c.l.b16 %v1171
        %v3940 = vunpack.c.h.b16 %v1171
        %v3941 = vunpack.c.l.b16 %v1172
        %v3942 = vunpack.c.h.b16 %v1172
        %v3943 = vunpack.c.l.b16 %v1173
        %v3944 = vunpack.c.h.b16 %v1173
        %v3945 = vunpack.c.l.b16 %v1174
        %v3946 = vunpack.c.h.b16 %v1174
        %v3947 = vunpack.c.l.b16 %v1175
        %v3948 = vunpack.c.h.b16 %v1175
        %v3949 = vunpack.c.l.b16 %v1176
        %v3950 = vunpack.c.h.b16 %v1176
        %v3951 = vunpack.c.l.b16 %v1177
        %v3952 = vunpack.c.h.b16 %v1177
        %v3953 = vunpack.c.l.b16 %v1178
        %v3954 = vunpack.c.h.b16 %v1178
        %v3955 = vunpack.c.l.b16 %v1179
        %v3956 = vunpack.c.h.b16 %v1179
        %v3957 = vunpack.c.l.b16 %v1180
        %v3958 = vunpack.c.h.b16 %v1180
        %v3959 = vunpack.c.l.b16 %v1181
        %v3960 = vunpack.c.h.b16 %v1181
        %v3961 = vunpack.c.l.b16 %v1182
        %v3962 = vunpack.c.h.b16 %v1182
        %v3963 = vunpack.c.l.b16 %v1183
        %v3964 = vunpack.c.h.b16 %v1183
        %v3965 = vunpack.c.l.b16 %v1184
        %v3966 = vunpack.c.h.b16 %v1184
        %v3967 = vunpack.c.l.b16 %v1185
        %v3968 = vunpack.c.h.b16 %v1185
        %v3969 = vunpack.c.l.b16 %v1186
        %v3970 = vunpack.c.h.b16 %v1186
        %v3971 = vunpack.c.l.b16 %v1187
        %v3972 = vunpack.c.h.b16 %v1187
        %v3973 = vunpack.c.l.b16 %v1188
        %v3974 = vunpack.c.h.b16 %v1188
        %v3975 = vunpack.c.l.b16 %v1189
        %v3976 = vunpack.c.h.b16 %v1189
        %v3977 = vunpack.c.l.b16 %v1190
        %v3978 = vunpack.c.h.b16 %v1190
        %v3979 = vunpack.c.l.b16 %v1191
        %v3980 = vunpack.c.h.b16 %v1191
        %v3981 = vunpack.c.l.b16 %v1192
        %v3982 = vunpack.c.h.b16 %v1192
        %v3983 = vunpack.c.l.b16 %v1193
        %v3984 = vunpack.c.h.b16 %v1193
        %v3985 = vunpack.c.l.b16 %v1194
        %v3986 = vunpack.c.h.b16 %v1194
        %v3987 = vunpack.c.l.b16 %v1195
        %v3988 = vunpack.c.h.b16 %v1195
        %v3989 = vunpack.c.l.b16 %v1196
        %v3990 = vunpack.c.h.b16 %v1196
        %v3991 = vunpack.c.l.b16 %v1197
        %v3992 = vunpack.c.h.b16 %v1197
        %v3993 = vunpack.c.l.b16 %v1198
        %v3994 = vunpack.c.h.b16 %v1198
        %v3995 = vunpack.c.l.b16 %v1199
        %v3996 = vunpack.c.h.b16 %v1199
        %v3997 = vunpack.c.l.b16 %v1200
        %v3998 = vunpack.c.h.b16 %v1200
        %v3999 = vunpack.c.l.b16 %v1201
        %v4000 = vunpack.c.h.b16 %v1201
        %v4001 = vunpack.c.l.b16 %v1202
        %v4002 = vunpack.c.h.b16 %v1202
        %v4003 = vunpack.c.l.b16 %v1203
        %v4004 = vunpack.c.h.b16 %v1203
        %v4005 = vunpack.c.l.b16 %v1204
        %v4006 = vunpack.c.h.b16 %v1204
        %v4007 = vunpack.c.l.b16 %v1205
        %v4008 = vunpack.c.h.b16 %v1205
        %v4009 = vunpack.c.l.b16 %v1206
        %v4010 = vunpack.c.h.b16 %v1206
        %v4011 = vunpack.c.l.b16 %v1207
        %v4012 = vunpack.c.h.b16 %v1207
        %v4013 = vunpack.c.l.b16 %v1208
        %v4014 = vunpack.c.h.b16 %v1208
        %v4015 = vunpack.c.l.b16 %v1209
        %v4016 = vunpack.c.h.b16 %v1209
        %v4017 = vunpack.c.l.b16 %v1210
        %v4018 = vunpack.c.h.b16 %v1210
        %v4019 = vunpack.c.l.b16 %v1211
        %v4020 = vunpack.c.h.b16 %v1211
        %v4021 = vunpack.c.l.b16 %v1212
        %v4022 = vunpack.c.h.b16 %v1212
        %v4023 = vunpack.c.l.b16 %v1213
        %v4024 = vunpack.c.h.b16 %v1213
        %v4025 = vunpack.c.l.b16 %v1214
        %v4026 = vunpack.c.h.b16 %v1214
        %v4027 = vunpack.c.l.b16 %v1215
        %v4028 = vunpack.c.h.b16 %v1215
        %v4029 = vunpack.c.l.b16 %v1216
        %v4030 = vunpack.c.h.b16 %v1216
        %v4031 = vunpack.c.l.b16 %v1217
        %v4032 = vunpack.c.h.b16 %v1217
        %v4033 = vunpack.c.l.b16 %v1218
        %v4034 = vunpack.c.h.b16 %v1218
        %v4035 = vunpack.c.l.b16 %v1219
        %v4036 = vunpack.c.h.b16 %v1219
        %v4037 = vunpack.c.l.b16 %v1220
        %v4038 = vunpack.c.h.b16 %v1220
        %v4039 = vunpack.c.l.b16 %v1221
        %v4040 = vunpack.c.h.b16 %v1221
        %v4041 = vunpack.c.l.b16 %v1222
        %v4042 = vunpack.c.h.b16 %v1222
        %v4043 = vunpack.c.l.b16 %v1223
        %v4044 = vunpack.c.h.b16 %v1223
        %v4045 = vunpack.c.l.b16 %v1224
        %v4046 = vunpack.c.h.b16 %v1224
        %v4047 = vunpack.c.l.b16 %v1225
        %v4048 = vunpack.c.h.b16 %v1225
        %v4049 = vunpack.c.l.b16 %v1226
        %v4050 = vunpack.c.h.b16 %v1226
        %v4051 = vunpack.c.l.b16 %v1227
        %v4052 = vunpack.c.h.b16 %v1227
        %v4053 = vunpack.c.l.b16 %v1228
        %v4054 = vunpack.c.h.b16 %v1228
        %v4055 = vunpack.c.l.b16 %v1229
        %v4056 = vunpack.c.h.b16 %v1229
        %v4057 = vunpack.c.l.b16 %v1230
        %v4058 = vunpack.c.h.b16 %v1230
        %v4059 = vunpack.c.l.b16 %v1231
        %v4060 = vunpack.c.h.b16 %v1231
        %v4061 = vunpack.c.l.b16 %v1232
        %v4062 = vunpack.c.h.b16 %v1232
        %v4063 = vunpack.c.l.b16 %v1233
        %v4064 = vunpack.c.h.b16 %v1233
        %v4065 = vunpack.c.l.b16 %v1234
        %v4066 = vunpack.c.h.b16 %v1234
        %v4067 = vunpack.c.l.b16 %v1235
        %v4068 = vunpack.c.h.b16 %v1235
        %v4069 = vunpack.c.l.b16 %v1236
        %v4070 = vunpack.c.h.b16 %v1236
        %v4071 = vunpack.c.l.b16 %v1237
        %v4072 = vunpack.c.h.b16 %v1237
        %v4073 = vunpack.c.l.b16 %v1238
        %v4074 = vunpack.c.h.b16 %v1238
        %v4075 = vunpack.c.l.b16 %v1239
        %v4076 = vunpack.c.h.b16 %v1239
        %v4077 = vunpack.c.l.b16 %v1240
        %v4078 = vunpack.c.h.b16 %v1240
        %v4079 = vunpack.c.l.b16 %v1241
        %v4080 = vunpack.c.h.b16 %v1241
        %v4081 = vunpack.c.l.b16 %v1242
        %v4082 = vunpack.c.h.b16 %v1242
        %v4083 = vunpack.c.l.b16 %v1243
        %v4084 = vunpack.c.h.b16 %v1243
        %v4085 = vunpack.c.l.b16 %v1244
        %v4086 = vunpack.c.h.b16 %v1244
        %v4087 = vunpack.c.l.b16 %v1245
        %v4088 = vunpack.c.h.b16 %v1245
        %v4089 = vunpack.c.l.b16 %v1246
        %v4090 = vunpack.c.h.b16 %v1246
        %v4091 = vunpack.c.l.b16 %v1247
        %v4092 = vunpack.c.h.b16 %v1247
        %v4093 = vunpack.c.l.b16 %v1248
        %v4094 = vunpack.c.h.b16 %v1248
        %v4095 = vunpack.c.l.b16 %v1249
        %v4096 = vunpack.c.h.b16 %v1249
        %v4097 = vunpack.c.l.b16 %v1250
        %v4098 = vunpack.c.h.b16 %v1250
        %v4099 = vunpack.c.l.b16 %v1251
        %v4100 = vunpack.c.h.b16 %v1251
        %v4101 = vunpack.c.l.b16 %v1252
        %v4102 = vunpack.c.h.b16 %v1252
        %v4103 = vunpack.c.l.b16 %v1253
        %v4104 = vunpack.c.h.b16 %v1253
        %v4105 = vunpack.c.l.b16 %v1254
        %v4106 = vunpack.c.h.b16 %v1254
        %v4107 = vunpack.c.l.b16 %v1255
        %v4108 = vunpack.c.h.b16 %v1255
        %v4109 = vunpack.c.l.b16 %v1256
        %v4110 = vunpack.c.h.b16 %v1256
        %v4111 = vunpack.c.l.b16 %v1257
        %v4112 = vunpack.c.h.b16 %v1257
        %v4113 = vunpack.c.l.b16 %v1258
        %v4114 = vunpack.c.h.b16 %v1258
        %v4115 = vunpack.c.l.b16 %v1259
        %v4116 = vunpack.c.h.b16 %v1259
        %v4117 = vunpack.c.l.b16 %v1260
        %v4118 = vunpack.c.h.b16 %v1260
        %v4119 = vunpack.c.l.b16 %v1261
        %v4120 = vunpack.c.h.b16 %v1261
        %v4121 = vunpack.c.l.b16 %v1262
        %v4122 = vunpack.c.h.b16 %v1262
        %v4123 = vunpack.c.l.b16 %v1263
        %v4124 = vunpack.c.h.b16 %v1263
        %v4125 = vunpack.c.l.b16 %v1264
        %v4126 = vunpack.c.h.b16 %v1264
        %v4127 = vunpack.c.l.b16 %v1265
        %v4128 = vunpack.c.h.b16 %v1265
        %v4129 = vunpack.c.l.b16 %v1266
        %v4130 = vunpack.c.h.b16 %v1266
        %v4131 = vunpack.c.l.b16 %v1267
        %v4132 = vunpack.c.h.b16 %v1267
        %v4133 = vunpack.c.l.b16 %v1268
        %v4134 = vunpack.c.h.b16 %v1268
        %v4135 = vunpack.c.l.b16 %v1269
        %v4136 = vunpack.c.h.b16 %v1269
        %v4137 = vunpack.c.l.b16 %v1270
        %v4138 = vunpack.c.h.b16 %v1270
        %v4139 = vunpack.c.l.b16 %v1271
        %v4140 = vunpack.c.h.b16 %v1271
        %v4141 = vunpack.c.l.b16 %v1272
        %v4142 = vunpack.c.h.b16 %v1272
        %v4143 = vunpack.c.l.b16 %v1273
        %v4144 = vunpack.c.h.b16 %v1273
        %v4145 = vunpack.c.l.b16 %v1274
        %v4146 = vunpack.c.h.b16 %v1274
        %v4147 = vunpack.c.l.b16 %v1275
        %v4148 = vunpack.c.h.b16 %v1275
        %v4149 = vunpack.c.l.b16 %v1276
        %v4150 = vunpack.c.h.b16 %v1276
        %v4151 = vunpack.c.l.b16 %v1277
        %v4152 = vunpack.c.h.b16 %v1277
        %v4153 = vunpack.c.l.b16 %v1278
        %v4154 = vunpack.c.h.b16 %v1278
        %v4155 = vunpack.c.l.b16 %v1279
        %v4156 = vunpack.c.h.b16 %v1279
        %v4157 = vunpack.c.l.b16 %v1280
        %v4158 = vunpack.c.h.b16 %v1280
        %v4159 = vunpack.c.l.b16 %v1281
        %v4160 = vunpack.c.h.b16 %v1281
        %v4161 = vunpack.c.l.b16 %v1282
        %v4162 = vunpack.c.h.b16 %v1282
        %v4163 = vunpack.c.l.b16 %v1283
        %v4164 = vunpack.c.h.b16 %v1283
        %v4165 = vunpack.c.l.b16 %v1284
        %v4166 = vunpack.c.h.b16 %v1284
        %v4167 = vunpack.c.l.b16 %v1285
        %v4168 = vunpack.c.h.b16 %v1285
        %v4169 = vunpack.c.l.b16 %v1286
        %v4170 = vunpack.c.h.b16 %v1286
        %v4171 = vunpack.c.l.b16 %v1287
        %v4172 = vunpack.c.h.b16 %v1287
        %v4173 = vunpack.c.l.b16 %v1288
        %v4174 = vunpack.c.h.b16 %v1288
        %v4175 = vunpack.c.l.b16 %v1289
        %v4176 = vunpack.c.h.b16 %v1289
        %v4177 = vunpack.c.l.b16 %v1290
        %v4178 = vunpack.c.h.b16 %v1290
        %v4179 = vunpack.c.l.b16 %v1291
        %v4180 = vunpack.c.h.b16 %v1291
        %v4181 = vunpack.c.l.b16 %v1292
        %v4182 = vunpack.c.h.b16 %v1292
        %v4183 = vunpack.c.l.b16 %v1293
        %v4184 = vunpack.c.h.b16 %v1293
        %v4185 = vunpack.c.l.b16 %v1294
        %v4186 = vunpack.c.h.b16 %v1294
        %v4187 = vunpack.c.l.b16 %v1295
        %v4188 = vunpack.c.h.b16 %v1295
        %v4189 = vunpack.c.l.b16 %v1296
        %v4190 = vunpack.c.h.b16 %v1296
        %v4191 = vunpack.c.l.b16 %v1297
        %v4192 = vunpack.c.h.b16 %v1297
        %v4193 = vunpack.c.l.b16 %v1298
        %v4194 = vunpack.c.h.b16 %v1298
        %v4195 = vunpack.c.l.b16 %v1299
        %v4196 = vunpack.c.h.b16 %v1299
        %v4197 = vunpack.c.l.b16 %v1300
        %v4198 = vunpack.c.h.b16 %v1300
        %v4199 = vunpack.c.l.b16 %v1301
        %v4200 = vunpack.c.h.b16 %v1301
        %v4201 = vunpack.c.l.b16 %v1302
        %v4202 = vunpack.c.h.b16 %v1302
        %v4203 = vunpack.c.l.b16 %v1303
        %v4204 = vunpack.c.h.b16 %v1303
        %v4205 = vunpack.c.l.b16 %v1304
        %v4206 = vunpack.c.h.b16 %v1304
        %v4207 = vunpack.c.l.b16 %v1305
        %v4208 = vunpack.c.h.b16 %v1305
        %v4209 = vunpack.c.l.b16 %v1306
        %v4210 = vunpack.c.h.b16 %v1306
        %v4211 = vunpack.c.l.b16 %v1307
        %v4212 = vunpack.c.h.b16 %v1307
        %v4213 = vunpack.c.l.b16 %v1308
        %v4214 = vunpack.c.h.b16 %v1308
        %v4215 = vunpack.c.l.b16 %v1309
        %v4216 = vunpack.c.h.b16 %v1309
        %v4217 = vunpack.c.l.b16 %v1310
        %v4218 = vunpack.c.h.b16 %v1310
        %v4219 = vunpack.c.l.b16 %v1311
        %v4220 = vunpack.c.h.b16 %v1311
        %v4221 = vunpack.c.l.b16 %v1312
        %v4222 = vunpack.c.h.b16 %v1312
        %v4223 = vunpack.c.l.b16 %v1313
        %v4224 = vunpack.c.h.b16 %v1313
        %v4225 = vunpack.c.l.b16 %v1314
        %v4226 = vunpack.c.h.b16 %v1314
        %v4227 = vunpack.c.l.b16 %v1315
        %v4228 = vunpack.c.h.b16 %v1315
        %v4229 = vunpack.c.l.b16 %v1316
        %v4230 = vunpack.c.h.b16 %v1316
        %v4231 = vunpack.c.l.b16 %v1317
        %v4232 = vunpack.c.h.b16 %v1317
        %v4233 = vunpack.c.l.b16 %v1318
        %v4234 = vunpack.c.h.b16 %v1318
        %v4235 = vunpack.c.l.b16 %v1319
        %v4236 = vunpack.c.h.b16 %v1319
        %v4237 = vunpack.c.l.b16 %v1320
        %v4238 = vunpack.c.h.b16 %v1320
        %v4239 = vunpack.c.l.b16 %v1321
        %v4240 = vunpack.c.h.b16 %v1321
        %v4241 = vunpack.c.l.b16 %v1322
        %v4242 = vunpack.c.h.b16 %v1322
        %v4243 = vunpack.c.l.b16 %v1323
        %v4244 = vunpack.c.h.b16 %v1323
        %v4245 = vunpack.c.l.b16 %v1324
        %v4246 = vunpack.c.h.b16 %v1324
        %v4247 = vunpack.c.l.b16 %v1325
        %v4248 = vunpack.c.h.b16 %v1325
        %v4249 = vunpack.c.l.b16 %v1326
        %v4250 = vunpack.c.h.b16 %v1326
        %v4251 = vunpack.c.l.b16 %v1327
        %v4252 = vunpack.c.h.b16 %v1327
        %v4253 = vunpack.c.l.b16 %v1328
        %v4254 = vunpack.c.h.b16 %v1328
        %v4255 = vunpack.c.l.b16 %v1329
        %v4256 = vunpack.c.h.b16 %v1329
        %v4257 = vunpack.c.l.b16 %v1330
        %v4258 = vunpack.c.h.b16 %v1330
        %v4259 = vunpack.c.l.b16 %v1331
        %v4260 = vunpack.c.h.b16 %v1331
        %v4261 = vunpack.c.l.b16 %v1332
        %v4262 = vunpack.c.h.b16 %v1332
        %v4263 = vunpack.c.l.b16 %v1333
        %v4264 = vunpack.c.h.b16 %v1333
        %v4265 = vunpack.c.l.b16 %v1334
        %v4266 = vunpack.c.h.b16 %v1334
        %v4267 = vunpack.c.l.b16 %v1335
        %v4268 = vunpack.c.h.b16 %v1335
        %v4269 = vunpack.c.l.b16 %v1336
        %v4270 = vunpack.c.h.b16 %v1336
        %v4271 = vunpack.c.l.b16 %v1337
        %v4272 = vunpack.c.h.b16 %v1337
        %v4273 = vunpack.c.l.b16 %v1338
        %v4274 = vunpack.c.h.b16 %v1338
        %v4275 = vunpack.c.l.b16 %v1339
        %v4276 = vunpack.c.h.b16 %v1339
        %v4277 = vunpack.c.l.b16 %v1340
        %v4278 = vunpack.c.h.b16 %v1340
        %v4279 = vunpack.c.l.b16 %v1341
        %v4280 = vunpack.c.h.b16 %v1341
        %v4281 = vunpack.c.l.b16 %v1342
        %v4282 = vunpack.c.h.b16 %v1342
        %v4283 = vunpack.c.l.b16 %v1343
        %v4284 = vunpack.c.h.b16 %v1343
        %v4285 = vunpack.c.l.b16 %v1344
        %v4286 = vunpack.c.h.b16 %v1344
        %v4287 = vunpack.c.l.b16 %v1345
        %v4288 = vunpack.c.h.b16 %v1345
        %v4289 = vunpack.c.l.b16 %v1346
        %v4290 = vunpack.c.h.b16 %v1346
        %v4291 = vunpack.c.l.b16 %v1347
        %v4292 = vunpack.c.h.b16 %v1347
        %v4293 = vunpack.c.l.b16 %v1348
        %v4294 = vunpack.c.h.b16 %v1348
        %v4295 = vunpack.c.l.b16 %v1349
        %v4296 = vunpack.c.h.b16 %v1349
        %v4297 = vunpack.c.l.b16 %v1350
        %v4298 = vunpack.c.h.b16 %v1350
        %v4299 = vunpack.c.l.b16 %v1351
        %v4300 = vunpack.c.h.b16 %v1351
        %v4301 = vunpack.c.l.b16 %v1352
        %v4302 = vunpack.c.h.b16 %v1352
        %v4303 = vunpack.c.l.b16 %v1353
        %v4304 = vunpack.c.h.b16 %v1353
        %v4305 = vunpack.c.l.b16 %v1354
        %v4306 = vunpack.c.h.b16 %v1354
        %v4307 = vunpack.c.l.b16 %v1355
        %v4308 = vunpack.c.h.b16 %v1355
        %v4309 = vunpack.c.l.b16 %v1356
        %v4310 = vunpack.c.h.b16 %v1356
        %v4311 = vunpack.c.l.b16 %v1357
        %v4312 = vunpack.c.h.b16 %v1357
        %v4313 = vunpack.c.l.b16 %v1358
        %v4314 = vunpack.c.h.b16 %v1358
        %v4315 = vunpack.c.l.b16 %v1359
        %v4316 = vunpack.c.h.b16 %v1359
        %v4317 = vunpack.c.l.b16 %v1360
        %v4318 = vunpack.c.h.b16 %v1360
        %v4319 = vunpack.c.l.b16 %v1361
        %v4320 = vunpack.c.h.b16 %v1361
        %v4321 = vunpack.c.l.b16 %v1362
        %v4322 = vunpack.c.h.b16 %v1362
        %v4323 = vunpack.c.l.b16 %v1363
        %v4324 = vunpack.c.h.b16 %v1363
        %v4325 = vunpack.c.l.b16 %v1364
        %v4326 = vunpack.c.h.b16 %v1364
        %v4327 = vunpack.c.l.b16 %v1365
        %v4328 = vunpack.c.h.b16 %v1365
        %v4329 = vunpack.c.l.b16 %v1366
        %v4330 = vunpack.c.h.b16 %v1366
        %v4331 = vunpack.c.l.b16 %v1367
        %v4332 = vunpack.c.h.b16 %v1367
        %v4333 = vunpack.c.l.b16 %v1368
        %v4334 = vunpack.c.h.b16 %v1368
        %v4335 = vunpack.c.l.b16 %v1369
        %v4336 = vunpack.c.h.b16 %v1369
        %v4337 = vunpack.c.l.b16 %v1370
        %v4338 = vunpack.c.h.b16 %v1370
        %v4339 = vunpack.c.l.b16 %v1371
        %v4340 = vunpack.c.h.b16 %v1371
        %v4341 = vunpack.c.l.b16 %v1372
        %v4342 = vunpack.c.h.b16 %v1372
        %v4343 = vunpack.c.l.b16 %v1373
        %v4344 = vunpack.c.h.b16 %v1373
        %v4345 = vunpack.c.l.b16 %v1374
        %v4346 = vunpack.c.h.b16 %v1374
        %v4347 = vunpack.c.l.b16 %v1375
        %v4348 = vunpack.c.h.b16 %v1375
        %v4349 = vunpack.c.l.b16 %v1376
        %v4350 = vunpack.c.h.b16 %v1376
        %v4351 = vunpack.c.l.b16 %v1377
        %v4352 = vunpack.c.h.b16 %v1377
        %v4353 = vunpack.c.l.b16 %v1378
        %v4354 = vunpack.c.h.b16 %v1378
        %v4355 = vunpack.c.l.b16 %v1379
        %v4356 = vunpack.c.h.b16 %v1379
        %v4357 = vunpack.c.l.b16 %v1380
        %v4358 = vunpack.c.h.b16 %v1380
        %v4359 = vunpack.c.l.b16 %v1381
        %v4360 = vunpack.c.h.b16 %v1381
        %v4361 = vunpack.c.l.b16 %v1382
        %v4362 = vunpack.c.h.b16 %v1382
        %v4363 = vunpack.c.l.b16 %v1383
        %v4364 = vunpack.c.h.b16 %v1383
        %v4365 = vunpack.c.l.b16 %v1384
        %v4366 = vunpack.c.h.b16 %v1384
        %v4367 = vunpack.c.l.b16 %v1385
        %v4368 = vunpack.c.h.b16 %v1385
        %v4369 = vunpack.c.l.b16 %v1386
        %v4370 = vunpack.c.h.b16 %v1386
        %v4371 = vunpack.c.l.b16 %v1387
        %v4372 = vunpack.c.h.b16 %v1387
        %v4373 = vunpack.c.l.b16 %v1388
        %v4374 = vunpack.c.h.b16 %v1388
        %v4375 = vunpack.c.l.b16 %v1389
        %v4376 = vunpack.c.h.b16 %v1389
        %v4377 = vunpack.c.l.b16 %v1390
        %v4378 = vunpack.c.h.b16 %v1390
        %v4379 = vunpack.c.l.b16 %v1391
        %v4380 = vunpack.c.h.b16 %v1391
        %v4381 = vunpack.c.l.b16 %v1392
        %v4382 = vunpack.c.h.b16 %v1392
        %v4383 = vunpack.c.l.b16 %v1393
        %v4384 = vunpack.c.h.b16 %v1393
        %v4385 = vunpack.c.l.b16 %v1394
        %v4386 = vunpack.c.h.b16 %v1394
        %v4387 = vunpack.c.l.b16 %v1395
        %v4388 = vunpack.c.h.b16 %v1395
        %v4389 = vunpack.c.l.b16 %v1396
        %v4390 = vunpack.c.h.b16 %v1396
        %v4391 = vunpack.c.l.b16 %v1397
        %v4392 = vunpack.c.h.b16 %v1397
        %v4393 = vunpack.c.l.b16 %v1398
        %v4394 = vunpack.c.h.b16 %v1398
        %v4395 = vunpack.c.l.b16 %v1399
        %v4396 = vunpack.c.h.b16 %v1399
        %v4397 = vunpack.c.l.b16 %v1400
        %v4398 = vunpack.c.h.b16 %v1400
        %v4399 = vunpack.c.l.b16 %v1401
        %v4400 = vunpack.c.h.b16 %v1401
        %v4401 = vunpack.c.l.b16 %v1402
        %v4402 = vunpack.c.h.b16 %v1402
        %v4403 = vunpack.c.l.b16 %v1403
        %v4404 = vunpack.c.h.b16 %v1403
        %v4405 = vunpack.c.l.b16 %v1404
        %v4406 = vunpack.c.h.b16 %v1404
        %v4407 = vunpack.c.l.b16 %v1405
        %v4408 = vunpack.c.h.b16 %v1405
        %v4409 = vunpack.c.l.b16 %v1406
        %v4410 = vunpack.c.h.b16 %v1406
        %v4411 = vunpack.c.l.b16 %v1407
        %v4412 = vunpack.c.h.b16 %v1407
        %v4413 = vunpack.c.l.b16 %v1408
        %v4414 = vunpack.c.h.b16 %v1408
        %v4415 = vunpack.c.l.b16 %v1409
        %v4416 = vunpack.c.h.b16 %v1409
        %v4417 = vunpack.c.l.b16 %v1410
        %v4418 = vunpack.c.h.b16 %v1410
        %v4419 = vunpack.c.l.b16 %v1411
        %v4420 = vunpack.c.h.b16 %v1411
        %v4421 = vunpack.c.l.b16 %v1412
        %v4422 = vunpack.c.h.b16 %v1412
        %v4423 = vunpack.c.l.b16 %v1413
        %v4424 = vunpack.c.h.b16 %v1413
        %v4425 = vunpack.c.l.b16 %v1414
        %v4426 = vunpack.c.h.b16 %v1414
        %v4427 = vunpack.c.l.b16 %v1415
        %v4428 = vunpack.c.h.b16 %v1415
        %v4429 = vunpack.c.l.b16 %v1416
        %v4430 = vunpack.c.h.b16 %v1416
        %v4431 = vunpack.c.l.b16 %v1417
        %v4432 = vunpack.c.h.b16 %v1417
        %v4433 = vunpack.c.l.b16 %v1418
        %v4434 = vunpack.c.h.b16 %v1418
        %v4435 = vunpack.c.l.b16 %v1419
        %v4436 = vunpack.c.h.b16 %v1419
        %v4437 = vunpack.c.l.b16 %v1420
        %v4438 = vunpack.c.h.b16 %v1420
        %v4439 = vunpack.c.l.b16 %v1421
        %v4440 = vunpack.c.h.b16 %v1421
        %v4441 = vunpack.c.l.b16 %v1422
        %v4442 = vunpack.c.h.b16 %v1422
        %v4443 = vunpack.c.l.b16 %v1423
        %v4444 = vunpack.c.h.b16 %v1423
        %v4445 = vunpack.c.l.b16 %v1424
        %v4446 = vunpack.c.h.b16 %v1424
        %v4447 = vunpack.c.l.b16 %v1425
        %v4448 = vunpack.c.h.b16 %v1425
        %v4449 = vunpack.c.l.b16 %v1426
        %v4450 = vunpack.c.h.b16 %v1426
        %v4451 = vunpack.c.l.b16 %v1427
        %v4452 = vunpack.c.h.b16 %v1427
        %v4453 = vunpack.c.l.b16 %v1428
        %v4454 = vunpack.c.h.b16 %v1428
        %v4455 = vunpack.c.l.b16 %v1429
        %v4456 = vunpack.c.h.b16 %v1429
        %v4457 = vunpack.c.l.b16 %v1430
        %v4458 = vunpack.c.h.b16 %v1430
        %v4459 = vunpack.c.l.b16 %v1431
        %v4460 = vunpack.c.h.b16 %v1431
        %v4461 = vunpack.c.l.b16 %v1432
        %v4462 = vunpack.c.h.b16 %v1432
        %v4463 = vunpack.c.l.b16 %v1433
        %v4464 = vunpack.c.h.b16 %v1433
        %v4465 = vunpack.c.l.b16 %v1434
        %v4466 = vunpack.c.h.b16 %v1434
        %v4467 = vunpack.c.l.b16 %v1435
        %v4468 = vunpack.c.h.b16 %v1435
        %v4469 = vunpack.c.l.b16 %v1436
        %v4470 = vunpack.c.h.b16 %v1436
        %v4471 = vunpack.c.l.b16 %v1437
        %v4472 = vunpack.c.h.b16 %v1437
        %v4473 = vunpack.c.l.b16 %v1438
        %v4474 = vunpack.c.h.b16 %v1438
        %v4475 = vunpack.c.l.b16 %v1439
        %v4476 = vunpack.c.h.b16 %v1439
        %v4477 = vunpack.c.l.b16 %v1440
        %v4478 = vunpack.c.h.b16 %v1440
        %v4479 = vunpack.c.l.b16 %v1441
        %v4480 = vunpack.c.h.b16 %v1441
        %v4481 = vunpack.c.l.b16 %v1442
        %v4482 = vunpack.c.h.b16 %v1442
        %v4483 = vunpack.c.l.b16 %v1443
        %v4484 = vunpack.c.h.b16 %v1443
        %v4485 = vunpack.c.l.b16 %v1444
        %v4486 = vunpack.c.h.b16 %v1444
        %v4487 = vunpack.c.l.b16 %v1445
        %v4488 = vunpack.c.h.b16 %v1445
        %v4489 = vunpack.c.l.b16 %v1446
        %v4490 = vunpack.c.h.b16 %v1446
        %v4491 = vunpack.c.l.b16 %v1447
        %v4492 = vunpack.c.h.b16 %v1447
        %v4493 = vunpack.c.l.b16 %v1448
        %v4494 = vunpack.c.h.b16 %v1448
        %v4495 = vunpack.c.l.b16 %v1449
        %v4496 = vunpack.c.h.b16 %v1449
        %v4497 = vunpack.c.l.b16 %v1450
        %v4498 = vunpack.c.h.b16 %v1450
        %v4499 = vunpack.c.l.b16 %v1451
        %v4500 = vunpack.c.h.b16 %v1451
        %v4501 = vunpack.c.l.b16 %v1452
        %v4502 = vunpack.c.h.b16 %v1452
        %v4503 = vunpack.c.l.b16 %v1453
        %v4504 = vunpack.c.h.b16 %v1453
        %v4505 = vunpack.c.l.b16 %v1454
        %v4506 = vunpack.c.h.b16 %v1454
        %v4507 = vunpack.c.l.b16 %v1455
        %v4508 = vunpack.c.h.b16 %v1455
        %v4509 = vunpack.c.l.b16 %v1456
        %v4510 = vunpack.c.h.b16 %v1456
        %v4511 = vunpack.c.l.b16 %v1457
        %v4512 = vunpack.c.h.b16 %v1457
        %v4513 = vunpack.c.l.b16 %v1458
        %v4514 = vunpack.c.h.b16 %v1458
        %v4515 = vunpack.c.l.b16 %v1459
        %v4516 = vunpack.c.h.b16 %v1459
        %v4517 = vunpack.c.l.b16 %v1460
        %v4518 = vunpack.c.h.b16 %v1460
        %v4519 = vunpack.c.l.b16 %v1461
        %v4520 = vunpack.c.h.b16 %v1461
        %v4521 = vunpack.c.l.b16 %v1462
        %v4522 = vunpack.c.h.b16 %v1462
        %v4523 = vunpack.c.l.b16 %v1463
        %v4524 = vunpack.c.h.b16 %v1463
        %v4525 = vunpack.c.l.b16 %v1464
        %v4526 = vunpack.c.h.b16 %v1464
        %v4527 = vunpack.c.l.b16 %v1465
        %v4528 = vunpack.c.h.b16 %v1465
        %v4529 = vunpack.c.l.b16 %v1466
        %v4530 = vunpack.c.h.b16 %v1466
        %v4531 = vunpack.c.l.b16 %v1467
        %v4532 = vunpack.c.h.b16 %v1467
        %v4533 = vunpack.c.l.b16 %v1468
        %v4534 = vunpack.c.h.b16 %v1468
        %v4535 = vunpack.c.l.b16 %v1469
        %v4536 = vunpack.c.h.b16 %v1469
        %v4537 = vunpack.c.l.b16 %v1470
        %v4538 = vunpack.c.h.b16 %v1470
        %v4539 = vunpack.c.l.b16 %v1471
        %v4540 = vunpack.c.h.b16 %v1471
        %v4541 = vunpack.c.l.b16 %v1472
        %v4542 = vunpack.c.h.b16 %v1472
        %v4543 = vunpack.c.l.b16 %v1473
        %v4544 = vunpack.c.h.b16 %v1473
        %v4545 = vunpack.c.l.b16 %v1474
        %v4546 = vunpack.c.h.b16 %v1474
        %v4547 = vpack.c.b16 %v2507, %v2499
        %v4548 = vpack.c.b16 %v2508, %v2500
        %v4549 = vpack.c.b16 %v2509, %v2501
        %v4550 = vpack.c.b16 %v2510, %v2502
        %v4551 = vpack.c.b16 %v2511, %v2503
        %v4552 = vpack.c.b16 %v2512, %v2504
        %v4553 = vpack.c.b16 %v2513, %v2505
        %v4554 = vpack.c.b16 %v2514, %v2506
        %v4555 = vpack.c.b16 %v2523, %v2515
        %v4556 = vpack.c.b16 %v2524, %v2516
        %v4557 = vpack.c.b16 %v2525, %v2517
        %v4558 = vpack.c.b16 %v2526, %v2518
        %v4559 = vpack.c.b16 %v2527, %v2519
        %v4560 = vpack.c.b16 %v2528, %v2520
        %v4561 = vpack.c.b16 %v2529, %v2521
        %v4562 = vpack.c.b16 %v2530, %v2522
        %v4563 = vpack.c.b16 %v2539, %v2531
        %v4564 = vpack.c.b16 %v2540, %v2532
        %v4565 = vpack.c.b16 %v2541, %v2533
        %v4566 = vpack.c.b16 %v2542, %v2534
        %v4567 = vpack.c.b16 %v2543, %v2535
        %v4568 = vpack.c.b16 %v2544, %v2536
        %v4569 = vpack.c.b16 %v2545, %v2537
        %v4570 = vpack.c.b16 %v2546, %v2538
        %v4571 = vpack.c.b16 %v2555, %v2547
        %v4572 = vpack.c.b16 %v2556, %v2548
        %v4573 = vpack.c.b16 %v2557, %v2549
        %v4574 = vpack.c.b16 %v2558, %v2550
        %v4575 = vpack.c.b16 %v2559, %v2551
        %v4576 = vpack.c.b16 %v2560, %v2552
        %v4577 = vpack.c.b16 %v2561, %v2553
        %v4578 = vpack.c.b16 %v2562, %v2554
        %v4579 = vpack.c.b16 %v2571, %v2563
        %v4580 = vpack.c.b16 %v2572, %v2564
        %v4581 = vpack.c.b16 %v2573, %v2565
        %v4582 = vpack.c.b16 %v2574, %v2566
        %v4583 = vpack.c.b16 %v2575, %v2567
        %v4584 = vpack.c.b16 %v2576, %v2568
        %v4585 = vpack.c.b16 %v2577, %v2569
        %v4586 = vpack.c.b16 %v2578, %v2570
        %v4587 = vpack.c.b16 %v2587, %v2579
        %v4588 = vpack.c.b16 %v2588, %v2580
        %v4589 = vpack.c.b16 %v2589, %v2581
        %v4590 = vpack.c.b16 %v2590, %v2582
        %v4591 = vpack.c.b16 %v2591, %v2583
        %v4592 = vpack.c.b16 %v2592, %v2584
        %v4593 = vpack.c.b16 %v2593, %v2585
        %v4594 = vpack.c.b16 %v2594, %v2586
        %v4595 = vpack.c.b16 %v2603, %v2595
        %v4596 = vpack.c.b16 %v2604, %v2596
        %v4597 = vpack.c.b16 %v2605, %v2597
        %v4598 = vpack.c.b16 %v2606, %v2598
        %v4599 = vpack.c.b16 %v2607, %v2599
        %v4600 = vpack.c.b16 %v2608, %v2600
        %v4601 = vpack.c.b16 %v2609, %v2601
        %v4602 = vpack.c.b16 %v2610, %v2602
        %v4603 = vpack.c.b16 %v2619, %v2611
        %v4604 = vpack.c.b16 %v2620, %v2612
        %v4605 = vpack.c.b16 %v2621, %v2613
        %v4606 = vpack.c.b16 %v2622, %v2614
        %v4607 = vpack.c.b16 %v2623, %v2615
        %v4608 = vpack.c.b16 %v2624, %v2616
        %v4609 = vpack.c.b16 %v2625, %v2617
        %v4610 = vpack.c.b16 %v2626, %v2618
        %v4611 = vpack.c.b16 %v2635, %v2627
        %v4612 = vpack.c.b16 %v2636, %v2628
        %v4613 = vpack.c.b16 %v2637, %v2629
        %v4614 = vpack.c.b16 %v2638, %v2630
        %v4615 = vpack.c.b16 %v2639, %v2631
        %v4616 = vpack.c.b16 %v2640, %v2632
        %v4617 = vpack.c.b16 %v2641, %v2633
        %v4618 = vpack.c.b16 %v2642, %v2634
        %v4619 = vpack.c.b16 %v2651, %v2643
        %v4620 = vpack.c.b16 %v2652, %v2644
        %v4621 = vpack.c.b16 %v2653, %v2645
        %v4622 = vpack.c.b16 %v2654, %v2646
        %v4623 = vpack.c.b16 %v2655, %v2647
        %v4624 = vpack.c.b16 %v2656, %v2648
        %v4625 = vpack.c.b16 %v2657, %v2649
        %v4626 = vpack.c.b16 %v2658, %v2650
        %v4627 = vpack.c.b16 %v2667, %v2659
        %v4628 = vpack.c.b16 %v2668, %v2660
        %v4629 = vpack.c.b16 %v2669, %v2661
        %v4630 = vpack.c.b16 %v2670, %v2662
        %v4631 = vpack.c.b16 %v2671, %v2663
        %v4632 = vpack.c.b16 %v2672, %v2664
        %v4633 = vpack.c.b16 %v2673, %v2665
        %v4634 = vpack.c.b16 %v2674, %v2666
        %v4635 = vpack.c.b16 %v2683, %v2675
        %v4636 = vpack.c.b16 %v2684, %v2676
        %v4637 = vpack.c.b16 %v2685, %v2677
        %v4638 = vpack.c.b16 %v2686, %v2678
        %v4639 = vpack.c.b16 %v2687, %v2679
        %v4640 = vpack.c.b16 %v2688, %v2680
        %v4641 = vpack.c.b16 %v2689, %v2681
        %v4642 = vpack.c.b16 %v2690, %v2682
        %v4643 = vpack.c.b16 %v2699, %v2691
        %v4644 = vpack.c.b16 %v2700, %v2692
        %v4645 = vpack.c.b16 %v2701, %v2693
        %v4646 = vpack.c.b16 %v2702, %v2694
        %v4647 = vpack.c.b16 %v2703, %v2695
        %v4648 = vpack.c.b16 %v2704, %v2696
        %v4649 = vpack.c.b16 %v2705, %v2697
        %v4650 = vpack.c.b16 %v2706, %v2698
        %v4651 = vpack.c.b16 %v2715, %v2707
        %v4652 = vpack.c.b16 %v2716, %v2708
        %v4653 = vpack.c.b16 %v2717, %v2709
        %v4654 = vpack.c.b16 %v2718, %v2710
        %v4655 = vpack.c.b16 %v2719, %v2711
        %v4656 = vpack.c.b16 %v2720, %v2712
        %v4657 = vpack.c.b16 %v2721, %v2713
        %v4658 = vpack.c.b16 %v2722, %v2714
        %v4659 = vpack.c.b16 %v2731, %v2723
        %v4660 = vpack.c.b16 %v2732, %v2724
        %v4661 = vpack.c.b16 %v2733, %v2725
        %v4662 = vpack.c.b16 %v2734, %v2726
        %v4663 = vpack.c.b16 %v2735, %v2727
        %v4664 = vpack.c.b16 %v2736, %v2728
        %v4665 = vpack.c.b16 %v2737, %v2729
        %v4666 = vpack.c.b16 %v2738, %v2730
        %v4667 = vpack.c.b16 %v2747, %v2739
        %v4668 = vpack.c.b16 %v2748, %v2740
        %v4669 = vpack.c.b16 %v2749, %v2741
        %v4670 = vpack.c.b16 %v2750, %v2742
        %v4671 = vpack.c.b16 %v2751, %v2743
        %v4672 = vpack.c.b16 %v2752, %v2744
        %v4673 = vpack.c.b16 %v2753, %v2745
        %v4674 = vpack.c.b16 %v2754, %v2746
        %v4675 = vpack.c.b16 %v2763, %v2755
        %v4676 = vpack.c.b16 %v2764, %v2756
        %v4677 = vpack.c.b16 %v2765, %v2757
        %v4678 = vpack.c.b16 %v2766, %v2758
        %v4679 = vpack.c.b16 %v2767, %v2759
        %v4680 = vpack.c.b16 %v2768, %v2760
        %v4681 = vpack.c.b16 %v2769, %v2761
        %v4682 = vpack.c.b16 %v2770, %v2762
        %v4683 = vpack.c.b16 %v2779, %v2771
        %v4684 = vpack.c.b16 %v2780, %v2772
        %v4685 = vpack.c.b16 %v2781, %v2773
        %v4686 = vpack.c.b16 %v2782, %v2774
        %v4687 = vpack.c.b16 %v2783, %v2775
        %v4688 = vpack.c.b16 %v2784, %v2776
        %v4689 = vpack.c.b16 %v2785, %v2777
        %v4690 = vpack.c.b16 %v2786, %v2778
        %v4691 = vpack.c.b16 %v2795, %v2787
        %v4692 = vpack.c.b16 %v2796, %v2788
        %v4693 = vpack.c.b16 %v2797, %v2789
        %v4694 = vpack.c.b16 %v2798, %v2790
        %v4695 = vpack.c.b16 %v2799, %v2791
        %v4696 = vpack.c.b16 %v2800, %v2792
        %v4697 = vpack.c.b16 %v2801, %v2793
        %v4698 = vpack.c.b16 %v2802, %v2794
        %v4699 = vpack.c.b16 %v2811, %v2803
        %v4700 = vpack.c.b16 %v2812, %v2804
        %v4701 = vpack.c.b16 %v2813, %v2805
        %v4702 = vpack.c.b16 %v2814, %v2806
        %v4703 = vpack.c.b16 %v2815, %v2807
        %v4704 = vpack.c.b16 %v2816, %v2808
        %v4705 = vpack.c.b16 %v2817, %v2809
        %v4706 = vpack.c.b16 %v2818, %v2810
        %v4707 = vpack.c.b16 %v2827, %v2819
        %v4708 = vpack.c.b16 %v2828, %v2820
        %v4709 = vpack.c.b16 %v2829, %v2821
        %v4710 = vpack.c.b16 %v2830, %v2822
        %v4711 = vpack.c.b16 %v2831, %v2823
        %v4712 = vpack.c.b16 %v2832, %v2824
        %v4713 = vpack.c.b16 %v2833, %v2825
        %v4714 = vpack.c.b16 %v2834, %v2826
        %v4715 = vpack.c.b16 %v2843, %v2835
        %v4716 = vpack.c.b16 %v2844, %v2836
        %v4717 = vpack.c.b16 %v2845, %v2837
        %v4718 = vpack.c.b16 %v2846, %v2838
        %v4719 = vpack.c.b16 %v2847, %v2839
        %v4720 = vpack.c.b16 %v2848, %v2840
        %v4721 = vpack.c.b16 %v2849, %v2841
        %v4722 = vpack.c.b16 %v2850, %v2842
        %v4723 = vpack.c.b16 %v2859, %v2851
        %v4724 = vpack.c.b16 %v2860, %v2852
        %v4725 = vpack.c.b16 %v2861, %v2853
        %v4726 = vpack.c.b16 %v2862, %v2854
        %v4727 = vpack.c.b16 %v2863, %v2855
        %v4728 = vpack.c.b16 %v2864, %v2856
        %v4729 = vpack.c.b16 %v2865, %v2857
        %v4730 = vpack.c.b16 %v2866, %v2858
        %v4731 = vpack.c.b16 %v2875, %v2867
        %v4732 = vpack.c.b16 %v2876, %v2868
        %v4733 = vpack.c.b16 %v2877, %v2869
        %v4734 = vpack.c.b16 %v2878, %v2870
        %v4735 = vpack.c.b16 %v2879, %v2871
        %v4736 = vpack.c.b16 %v2880, %v2872
        %v4737 = vpack.c.b16 %v2881, %v2873
        %v4738 = vpack.c.b16 %v2882, %v2874
        %v4739 = vpack.c.b16 %v2891, %v2883
        %v4740 = vpack.c.b16 %v2892, %v2884
        %v4741 = vpack.c.b16 %v2893, %v2885
        %v4742 = vpack.c.b16 %v2894, %v2886
        %v4743 = vpack.c.b16 %v2895, %v2887
        %v4744 = vpack.c.b16 %v2896, %v2888
        %v4745 = vpack.c.b16 %v2897, %v2889
        %v4746 = vpack.c.b16 %v2898, %v2890
        %v4747 = vpack.c.b16 %v2907, %v2899
        %v4748 = vpack.c.b16 %v2908, %v2900
        %v4749 = vpack.c.b16 %v2909, %v2901
        %v4750 = vpack.c.b16 %v2910, %v2902
        %v4751 = vpack.c.b16 %v2911, %v2903
        %v4752 = vpack.c.b16 %v2912, %v2904
        %v4753 = vpack.c.b16 %v2913, %v2905
        %v4754 = vpack.c.b16 %v2914, %v2906
        %v4755 = vpack.c.b16 %v2923, %v2915
        %v4756 = vpack.c.b16 %v2924, %v2916
        %v4757 = vpack.c.b16 %v2925, %v2917
        %v4758 = vpack.c.b16 %v2926, %v2918
        %v4759 = vpack.c.b16 %v2927, %v2919
        %v4760 = vpack.c.b16 %v2928, %v2920
        %v4761 = vpack.c.b16 %v2929, %v2921
        %v4762 = vpack.c.b16 %v2930, %v2922
        %v4763 = vpack.c.b16 %v2939, %v2931
        %v4764 = vpack.c.b16 %v2940, %v2932
        %v4765 = vpack.c.b16 %v2941, %v2933
        %v4766 = vpack.c.b16 %v2942, %v2934
        %v4767 = vpack.c.b16 %v2943, %v2935
        %v4768 = vpack.c.b16 %v2944, %v2936
        %v4769 = vpack.c.b16 %v2945, %v2937
        %v4770 = vpack.c.b16 %v2946, %v2938
        %v4771 = vpack.c.b16 %v2955, %v2947
        %v4772 = vpack.c.b16 %v2956, %v2948
        %v4773 = vpack.c.b16 %v2957, %v2949
        %v4774 = vpack.c.b16 %v2958, %v2950
        %v4775 = vpack.c.b16 %v2959, %v2951
        %v4776 = vpack.c.b16 %v2960, %v2952
        %v4777 = vpack.c.b16 %v2961, %v2953
        %v4778 = vpack.c.b16 %v2962, %v2954
        %v4779 = vpack.c.b16 %v2971, %v2963
        %v4780 = vpack.c.b16 %v2972, %v2964
        %v4781 = vpack.c.b16 %v2973, %v2965
        %v4782 = vpack.c.b16 %v2974, %v2966
        %v4783 = vpack.c.b16 %v2975, %v2967
        %v4784 = vpack.c.b16 %v2976, %v2968
        %v4785 = vpack.c.b16 %v2977, %v2969
        %v4786 = vpack.c.b16 %v2978, %v2970
        %v4787 = vpack.c.b16 %v2987, %v2979
        %v4788 = vpack.c.b16 %v2988, %v2980
        %v4789 = vpack.c.b16 %v2989, %v2981
        %v4790 = vpack.c.b16 %v2990, %v2982
        %v4791 = vpack.c.b16 %v2991, %v2983
        %v4792 = vpack.c.b16 %v2992, %v2984
        %v4793 = vpack.c.b16 %v2993, %v2985
        %v4794 = vpack.c.b16 %v2994, %v2986
        %v4795 = vpack.c.b16 %v3003, %v2995
        %v4796 = vpack.c.b16 %v3004, %v2996
        %v4797 = vpack.c.b16 %v3005, %v2997
        %v4798 = vpack.c.b16 %v3006, %v2998
        %v4799 = vpack.c.b16 %v3007, %v2999
        %v4800 = vpack.c.b16 %v3008, %v3000
        %v4801 = vpack.c.b16 %v3009, %v3001
        %v4802 = vpack.c.b16 %v3010, %v3002
        %v4803 = vpack.c.b16 %v3019, %v3011
        %v4804 = vpack.c.b16 %v3020, %v3012
        %v4805 = vpack.c.b16 %v3021, %v3013
        %v4806 = vpack.c.b16 %v3022, %v3014
        %v4807 = vpack.c.b16 %v3023, %v3015
        %v4808 = vpack.c.b16 %v3024, %v3016
        %v4809 = vpack.c.b16 %v3025, %v3017
        %v4810 = vpack.c.b16 %v3026, %v3018
        %v4811 = vpack.c.b16 %v3035, %v3027
        %v4812 = vpack.c.b16 %v3036, %v3028
        %v4813 = vpack.c.b16 %v3037, %v3029
        %v4814 = vpack.c.b16 %v3038, %v3030
        %v4815 = vpack.c.b16 %v3039, %v3031
        %v4816 = vpack.c.b16 %v3040, %v3032
        %v4817 = vpack.c.b16 %v3041, %v3033
        %v4818 = vpack.c.b16 %v3042, %v3034
        %v4819 = vpack.c.b16 %v3051, %v3043
        %v4820 = vpack.c.b16 %v3052, %v3044
        %v4821 = vpack.c.b16 %v3053, %v3045
        %v4822 = vpack.c.b16 %v3054, %v3046
        %v4823 = vpack.c.b16 %v3055, %v3047
        %v4824 = vpack.c.b16 %v3056, %v3048
        %v4825 = vpack.c.b16 %v3057, %v3049
        %v4826 = vpack.c.b16 %v3058, %v3050
        %v4827 = vpack.c.b16 %v3067, %v3059
        %v4828 = vpack.c.b16 %v3068, %v3060
        %v4829 = vpack.c.b16 %v3069, %v3061
        %v4830 = vpack.c.b16 %v3070, %v3062
        %v4831 = vpack.c.b16 %v3071, %v3063
        %v4832 = vpack.c.b16 %v3072, %v3064
        %v4833 = vpack.c.b16 %v3073, %v3065
        %v4834 = vpack.c.b16 %v3074, %v3066
        %v4835 = vpack.c.b16 %v3083, %v3075
        %v4836 = vpack.c.b16 %v3084, %v3076
        %v4837 = vpack.c.b16 %v3085, %v3077
        %v4838 = vpack.c.b16 %v3086, %v3078
        %v4839 = vpack.c.b16 %v3087, %v3079
        %v4840 = vpack.c.b16 %v3088, %v3080
        %v4841 = vpack.c.b16 %v3089, %v3081
        %v4842 = vpack.c.b16 %v3090, %v3082
        %v4843 = vpack.c.b16 %v3099, %v3091
        %v4844 = vpack.c.b16 %v3100, %v3092
        %v4845 = vpack.c.b16 %v3101, %v3093
        %v4846 = vpack.c.b16 %v3102, %v3094
        %v4847 = vpack.c.b16 %v3103, %v3095
        %v4848 = vpack.c.b16 %v3104, %v3096
        %v4849 = vpack.c.b16 %v3105, %v3097
        %v4850 = vpack.c.b16 %v3106, %v3098
        %v4851 = vpack.c.b16 %v3115, %v3107
        %v4852 = vpack.c.b16 %v3116, %v3108
        %v4853 = vpack.c.b16 %v3117, %v3109
        %v4854 = vpack.c.b16 %v3118, %v3110
        %v4855 = vpack.c.b16 %v3119, %v3111
        %v4856 = vpack.c.b16 %v3120, %v3112
        %v4857 = vpack.c.b16 %v3121, %v3113
        %v4858 = vpack.c.b16 %v3122, %v3114
        %v4859 = vpack.c.b16 %v3131, %v3123
        %v4860 = vpack.c.b16 %v3132, %v3124
        %v4861 = vpack.c.b16 %v3133, %v3125
        %v4862 = vpack.c.b16 %v3134, %v3126
        %v4863 = vpack.c.b16 %v3135, %v3127
        %v4864 = vpack.c.b16 %v3136, %v3128
        %v4865 = vpack.c.b16 %v3137, %v3129
        %v4866 = vpack.c.b16 %v3138, %v3130
        %v4867 = vpack.c.b16 %v3147, %v3139
        %v4868 = vpack.c.b16 %v3148, %v3140
        %v4869 = vpack.c.b16 %v3149, %v3141
        %v4870 = vpack.c.b16 %v3150, %v3142
        %v4871 = vpack.c.b16 %v3151, %v3143
        %v4872 = vpack.c.b16 %v3152, %v3144
        %v4873 = vpack.c.b16 %v3153, %v3145
        %v4874 = vpack.c.b16 %v3154, %v3146
        %v4875 = vpack.c.b16 %v3163, %v3155
        %v4876 = vpack.c.b16 %v3164, %v3156
        %v4877 = vpack.c.b16 %v3165, %v3157
        %v4878 = vpack.c.b16 %v3166, %v3158
        %v4879 = vpack.c.b16 %v3167, %v3159
        %v4880 = vpack.c.b16 %v3168, %v3160
        %v4881 = vpack.c.b16 %v3169, %v3161
        %v4882 = vpack.c.b16 %v3170, %v3162
        %v4883 = vpack.c.b16 %v3179, %v3171
        %v4884 = vpack.c.b16 %v3180, %v3172
        %v4885 = vpack.c.b16 %v3181, %v3173
        %v4886 = vpack.c.b16 %v3182, %v3174
        %v4887 = vpack.c.b16 %v3183, %v3175
        %v4888 = vpack.c.b16 %v3184, %v3176
        %v4889 = vpack.c.b16 %v3185, %v3177
        %v4890 = vpack.c.b16 %v3186, %v3178
        %v4891 = vpack.c.b16 %v3195, %v3187
        %v4892 = vpack.c.b16 %v3196, %v3188
        %v4893 = vpack.c.b16 %v3197, %v3189
        %v4894 = vpack.c.b16 %v3198, %v3190
        %v4895 = vpack.c.b16 %v3199, %v3191
        %v4896 = vpack.c.b16 %v3200, %v3192
        %v4897 = vpack.c.b16 %v3201, %v3193
        %v4898 = vpack.c.b16 %v3202, %v3194
        %v4899 = vpack.c.b16 %v3211, %v3203
        %v4900 = vpack.c.b16 %v3212, %v3204
        %v4901 = vpack.c.b16 %v3213, %v3205
        %v4902 = vpack.c.b16 %v3214, %v3206
        %v4903 = vpack.c.b16 %v3215, %v3207
        %v4904 = vpack.c.b16 %v3216, %v3208
        %v4905 = vpack.c.b16 %v3217, %v3209
        %v4906 = vpack.c.b16 %v3218, %v3210
        %v4907 = vpack.c.b16 %v3227, %v3219
        %v4908 = vpack.c.b16 %v3228, %v3220
        %v4909 = vpack.c.b16 %v3229, %v3221
        %v4910 = vpack.c.b16 %v3230, %v3222
        %v4911 = vpack.c.b16 %v3231, %v3223
        %v4912 = vpack.c.b16 %v3232, %v3224
        %v4913 = vpack.c.b16 %v3233, %v3225
        %v4914 = vpack.c.b16 %v3234, %v3226
        %v4915 = vpack.c.b16 %v3243, %v3235
        %v4916 = vpack.c.b16 %v3244, %v3236
        %v4917 = vpack.c.b16 %v3245, %v3237
        %v4918 = vpack.c.b16 %v3246, %v3238
        %v4919 = vpack.c.b16 %v3247, %v3239
        %v4920 = vpack.c.b16 %v3248, %v3240
        %v4921 = vpack.c.b16 %v3249, %v3241
        %v4922 = vpack.c.b16 %v3250, %v3242
        %v4923 = vpack.c.b16 %v3259, %v3251
        %v4924 = vpack.c.b16 %v3260, %v3252
        %v4925 = vpack.c.b16 %v3261, %v3253
        %v4926 = vpack.c.b16 %v3262, %v3254
        %v4927 = vpack.c.b16 %v3263, %v3255
        %v4928 = vpack.c.b16 %v3264, %v3256
        %v4929 = vpack.c.b16 %v3265, %v3257
        %v4930 = vpack.c.b16 %v3266, %v3258
        %v4931 = vpack.c.b16 %v3275, %v3267
        %v4932 = vpack.c.b16 %v3276, %v3268
        %v4933 = vpack.c.b16 %v3277, %v3269
        %v4934 = vpack.c.b16 %v3278, %v3270
        %v4935 = vpack.c.b16 %v3279, %v3271
        %v4936 = vpack.c.b16 %v3280, %v3272
        %v4937 = vpack.c.b16 %v3281, %v3273
        %v4938 = vpack.c.b16 %v3282, %v3274
        %v4939 = vpack.c.b16 %v3291, %v3283
        %v4940 = vpack.c.b16 %v3292, %v3284
        %v4941 = vpack.c.b16 %v3293, %v3285
        %v4942 = vpack.c.b16 %v3294, %v3286
        %v4943 = vpack.c.b16 %v3295, %v3287
        %v4944 = vpack.c.b16 %v3296, %v3288
        %v4945 = vpack.c.b16 %v3297, %v3289
        %v4946 = vpack.c.b16 %v3298, %v3290
        %v4947 = vpack.c.b16 %v3307, %v3299
        %v4948 = vpack.c.b16 %v3308, %v3300
        %v4949 = vpack.c.b16 %v3309, %v3301
        %v4950 = vpack.c.b16 %v3310, %v3302
        %v4951 = vpack.c.b16 %v3311, %v3303
        %v4952 = vpack.c.b16 %v3312, %v3304
        %v4953 = vpack.c.b16 %v3313, %v3305
        %v4954 = vpack.c.b16 %v3314, %v3306
        %v4955 = vpack.c.b16 %v3323, %v3315
        %v4956 = vpack.c.b16 %v3324, %v3316
        %v4957 = vpack.c.b16 %v3325, %v3317
        %v4958 = vpack.c.b16 %v3326, %v3318
        %v4959 = vpack.c.b16 %v3327, %v3319
        %v4960 = vpack.c.b16 %v3328, %v3320
        %v4961 = vpack.c.b16 %v3329, %v3321
        %v4962 = vpack.c.b16 %v3330, %v3322
        %v4963 = vpack.c.b16 %v3339, %v3331
        %v4964 = vpack.c.b16 %v3340, %v3332
        %v4965 = vpack.c.b16 %v3341, %v3333
        %v4966 = vpack.c.b16 %v3342, %v3334
        %v4967 = vpack.c.b16 %v3343, %v3335
        %v4968 = vpack.c.b16 %v3344, %v3336
        %v4969 = vpack.c.b16 %v3345, %v3337
        %v4970 = vpack.c.b16 %v3346, %v3338
        %v4971 = vpack.c.b16 %v3355, %v3347
        %v4972 = vpack.c.b16 %v3356, %v3348
        %v4973 = vpack.c.b16 %v3357, %v3349
        %v4974 = vpack.c.b16 %v3358, %v3350
        %v4975 = vpack.c.b16 %v3359, %v3351
        %v4976 = vpack.c.b16 %v3360, %v3352
        %v4977 = vpack.c.b16 %v3361, %v3353
        %v4978 = vpack.c.b16 %v3362, %v3354
        %v4979 = vpack.c.b16 %v3371, %v3363
        %v4980 = vpack.c.b16 %v3372, %v3364
        %v4981 = vpack.c.b16 %v3373, %v3365
        %v4982 = vpack.c.b16 %v3374, %v3366
        %v4983 = vpack.c.b16 %v3375, %v3367
        %v4984 = vpack.c.b16 %v3376, %v3368
        %v4985 = vpack.c.b16 %v3377, %v3369
        %v4986 = vpack.c.b16 %v3378, %v3370
        %v4987 = vpack.c.b16 %v3387, %v3379
        %v4988 = vpack.c.b16 %v3388, %v3380
        %v4989 = vpack.c.b16 %v3389, %v3381
        %v4990 = vpack.c.b16 %v3390, %v3382
        %v4991 = vpack.c.b16 %v3391, %v3383
        %v4992 = vpack.c.b16 %v3392, %v3384
        %v4993 = vpack.c.b16 %v3393, %v3385
        %v4994 = vpack.c.b16 %v3394, %v3386
        %v4995 = vpack.c.b16 %v3403, %v3395
        %v4996 = vpack.c.b16 %v3404, %v3396
        %v4997 = vpack.c.b16 %v3405, %v3397
        %v4998 = vpack.c.b16 %v3406, %v3398
        %v4999 = vpack.c.b16 %v3407, %v3399
        %v5000 = vpack.c.b16 %v3408, %v3400
        %v5001 = vpack.c.b16 %v3409, %v3401
        %v5002 = vpack.c.b16 %v3410, %v3402
        %v5003 = vpack.c.b16 %v3419, %v3411
        %v5004 = vpack.c.b16 %v3420, %v3412
        %v5005 = vpack.c.b16 %v3421, %v3413
        %v5006 = vpack.c.b16 %v3422, %v3414
        %v5007 = vpack.c.b16 %v3423, %v3415
        %v5008 = vpack.c.b16 %v3424, %v3416
        %v5009 = vpack.c.b16 %v3425, %v3417
        %v5010 = vpack.c.b16 %v3426, %v3418
        %v5011 = vpack.c.b16 %v3435, %v3427
        %v5012 = vpack.c.b16 %v3436, %v3428
        %v5013 = vpack.c.b16 %v3437, %v3429
        %v5014 = vpack.c.b16 %v3438, %v3430
        %v5015 = vpack.c.b16 %v3439, %v3431
        %v5016 = vpack.c.b16 %v3440, %v3432
        %v5017 = vpack.c.b16 %v3441, %v3433
        %v5018 = vpack.c.b16 %v3442, %v3434
        %v5019 = vpack.c.b16 %v3451, %v3443
        %v5020 = vpack.c.b16 %v3452, %v3444
        %v5021 = vpack.c.b16 %v3453, %v3445
        %v5022 = vpack.c.b16 %v3454, %v3446
        %v5023 = vpack.c.b16 %v3455, %v3447
        %v5024 = vpack.c.b16 %v3456, %v3448
        %v5025 = vpack.c.b16 %v3457, %v3449
        %v5026 = vpack.c.b16 %v3458, %v3450
        %v5027 = vpack.c.b16 %v3467, %v3459
        %v5028 = vpack.c.b16 %v3468, %v3460
        %v5029 = vpack.c.b16 %v3469, %v3461
        %v5030 = vpack.c.b16 %v3470, %v3462
        %v5031 = vpack.c.b16 %v3471, %v3463
        %v5032 = vpack.c.b16 %v3472, %v3464
        %v5033 = vpack.c.b16 %v3473, %v3465
        %v5034 = vpack.c.b16 %v3474, %v3466
        %v5035 = vpack.c.b16 %v3483, %v3475
        %v5036 = vpack.c.b16 %v3484, %v3476
        %v5037 = vpack.c.b16 %v3485, %v3477
        %v5038 = vpack.c.b16 %v3486, %v3478
        %v5039 = vpack.c.b16 %v3487, %v3479
        %v5040 = vpack.c.b16 %v3488, %v3480
        %v5041 = vpack.c.b16 %v3489, %v3481
        %v5042 = vpack.c.b16 %v3490, %v3482
        %v5043 = vpack.c.b16 %v3499, %v3491
        %v5044 = vpack.c.b16 %v3500, %v3492
        %v5045 = vpack.c.b16 %v3501, %v3493
        %v5046 = vpack.c.b16 %v3502, %v3494
        %v5047 = vpack.c.b16 %v3503, %v3495
        %v5048 = vpack.c.b16 %v3504, %v3496
        %v5049 = vpack.c.b16 %v3505, %v3497
        %v5050 = vpack.c.b16 %v3506, %v3498
        %v5051 = vpack.c.b16 %v3515, %v3507
        %v5052 = vpack.c.b16 %v3516, %v3508
        %v5053 = vpack.c.b16 %v3517, %v3509
        %v5054 = vpack.c.b16 %v3518, %v3510
        %v5055 = vpack.c.b16 %v3519, %v3511
        %v5056 = vpack.c.b16 %v3520, %v3512
        %v5057 = vpack.c.b16 %v3521, %v3513
        %v5058 = vpack.c.b16 %v3522, %v3514
        %v5059 = vpack.c.b16 %v3531, %v3523
        %v5060 = vpack.c.b16 %v3532, %v3524
        %v5061 = vpack.c.b16 %v3533, %v3525
        %v5062 = vpack.c.b16 %v3534, %v3526
        %v5063 = vpack.c.b16 %v3535, %v3527
        %v5064 = vpack.c.b16 %v3536, %v3528
        %v5065 = vpack.c.b16 %v3537, %v3529
        %v5066 = vpack.c.b16 %v3538, %v3530
        %v5067 = vpack.c.b16 %v3547, %v3539
        %v5068 = vpack.c.b16 %v3548, %v3540
        %v5069 = vpack.c.b16 %v3549, %v3541
        %v5070 = vpack.c.b16 %v3550, %v3542
        %v5071 = vpack.c.b16 %v3551, %v3543
        %v5072 = vpack.c.b16 %v3552, %v3544
        %v5073 = vpack.c.b16 %v3553, %v3545
        %v5074 = vpack.c.b16 %v3554, %v3546
        %v5075 = vpack.c.b16 %v3563, %v3555
        %v5076 = vpack.c.b16 %v3564, %v3556
        %v5077 = vpack.c.b16 %v3565, %v3557
        %v5078 = vpack.c.b16 %v3566, %v3558
        %v5079 = vpack.c.b16 %v3567, %v3559
        %v5080 = vpack.c.b16 %v3568, %v3560
        %v5081 = vpack.c.b16 %v3569, %v3561
        %v5082 = vpack.c.b16 %v3570, %v3562
        %v5083 = vpack.c.b16 %v3579, %v3571
        %v5084 = vpack.c.b16 %v3580, %v3572
        %v5085 = vpack.c.b16 %v3581, %v3573
        %v5086 = vpack.c.b16 %v3582, %v3574
        %v5087 = vpack.c.b16 %v3583, %v3575
        %v5088 = vpack.c.b16 %v3584, %v3576
        %v5089 = vpack.c.b16 %v3585, %v3577
        %v5090 = vpack.c.b16 %v3586, %v3578
        %v5091 = vpack.c.b16 %v3595, %v3587
        %v5092 = vpack.c.b16 %v3596, %v3588
        %v5093 = vpack.c.b16 %v3597, %v3589
        %v5094 = vpack.c.b16 %v3598, %v3590
        %v5095 = vpack.c.b16 %v3599, %v3591
        %v5096 = vpack.c.b16 %v3600, %v3592
        %v5097 = vpack.c.b16 %v3601, %v3593
        %v5098 = vpack.c.b16 %v3602, %v3594
        %v5099 = vpack.c.b16 %v3611, %v3603
        %v5100 = vpack.c.b16 %v3612, %v3604
        %v5101 = vpack.c.b16 %v3613, %v3605
        %v5102 = vpack.c.b16 %v3614, %v3606
        %v5103 = vpack.c.b16 %v3615, %v3607
        %v5104 = vpack.c.b16 %v3616, %v3608
        %v5105 = vpack.c.b16 %v3617, %v3609
        %v5106 = vpack.c.b16 %v3618, %v3610
        %v5107 = vpack.c.b16 %v3627, %v3619
        %v5108 = vpack.c.b16 %v3628, %v3620
        %v5109 = vpack.c.b16 %v3629, %v3621
        %v5110 = vpack.c.b16 %v3630, %v3622
        %v5111 = vpack.c.b16 %v3631, %v3623
        %v5112 = vpack.c.b16 %v3632, %v3624
        %v5113 = vpack.c.b16 %v3633, %v3625
        %v5114 = vpack.c.b16 %v3634, %v3626
        %v5115 = vpack.c.b16 %v3643, %v3635
        %v5116 = vpack.c.b16 %v3644, %v3636
        %v5117 = vpack.c.b16 %v3645, %v3637
        %v5118 = vpack.c.b16 %v3646, %v3638
        %v5119 = vpack.c.b16 %v3647, %v3639
        %v5120 = vpack.c.b16 %v3648, %v3640
        %v5121 = vpack.c.b16 %v3649, %v3641
        %v5122 = vpack.c.b16 %v3650, %v3642
        %v5123 = vpack.c.b16 %v3659, %v3651
        %v5124 = vpack.c.b16 %v3660, %v3652
        %v5125 = vpack.c.b16 %v3661, %v3653
        %v5126 = vpack.c.b16 %v3662, %v3654
        %v5127 = vpack.c.b16 %v3663, %v3655
        %v5128 = vpack.c.b16 %v3664, %v3656
        %v5129 = vpack.c.b16 %v3665, %v3657
        %v5130 = vpack.c.b16 %v3666, %v3658
        %v5131 = vpack.c.b16 %v3675, %v3667
        %v5132 = vpack.c.b16 %v3676, %v3668
        %v5133 = vpack.c.b16 %v3677, %v3669
        %v5134 = vpack.c.b16 %v3678, %v3670
        %v5135 = vpack.c.b16 %v3679, %v3671
        %v5136 = vpack.c.b16 %v3680, %v3672
        %v5137 = vpack.c.b16 %v3681, %v3673
        %v5138 = vpack.c.b16 %v3682, %v3674
        %v5139 = vpack.c.b16 %v3691, %v3683
        %v5140 = vpack.c.b16 %v3692, %v3684
        %v5141 = vpack.c.b16 %v3693, %v3685
        %v5142 = vpack.c.b16 %v3694, %v3686
        %v5143 = vpack.c.b16 %v3695, %v3687
        %v5144 = vpack.c.b16 %v3696, %v3688
        %v5145 = vpack.c.b16 %v3697, %v3689
        %v5146 = vpack.c.b16 %v3698, %v3690
        %v5147 = vpack.c.b16 %v3707, %v3699
        %v5148 = vpack.c.b16 %v3708, %v3700
        %v5149 = vpack.c.b16 %v3709, %v3701
        %v5150 = vpack.c.b16 %v3710, %v3702
        %v5151 = vpack.c.b16 %v3711, %v3703
        %v5152 = vpack.c.b16 %v3712, %v3704
        %v5153 = vpack.c.b16 %v3713, %v3705
        %v5154 = vpack.c.b16 %v3714, %v3706
        %v5155 = vpack.c.b16 %v3723, %v3715
        %v5156 = vpack.c.b16 %v3724, %v3716
        %v5157 = vpack.c.b16 %v3725, %v3717
        %v5158 = vpack.c.b16 %v3726, %v3718
        %v5159 = vpack.c.b16 %v3727, %v3719
        %v5160 = vpack.c.b16 %v3728, %v3720
        %v5161 = vpack.c.b16 %v3729, %v3721
        %v5162 = vpack.c.b16 %v3730, %v3722
        %v5163 = vpack.c.b16 %v3739, %v3731
        %v5164 = vpack.c.b16 %v3740, %v3732
        %v5165 = vpack.c.b16 %v3741, %v3733
        %v5166 = vpack.c.b16 %v3742, %v3734
        %v5167 = vpack.c.b16 %v3743, %v3735
        %v5168 = vpack.c.b16 %v3744, %v3736
        %v5169 = vpack.c.b16 %v3745, %v3737
        %v5170 = vpack.c.b16 %v3746, %v3738
        %v5171 = vpack.c.b16 %v3755, %v3747
        %v5172 = vpack.c.b16 %v3756, %v3748
        %v5173 = vpack.c.b16 %v3757, %v3749
        %v5174 = vpack.c.b16 %v3758, %v3750
        %v5175 = vpack.c.b16 %v3759, %v3751
        %v5176 = vpack.c.b16 %v3760, %v3752
        %v5177 = vpack.c.b16 %v3761, %v3753
        %v5178 = vpack.c.b16 %v3762, %v3754
        %v5179 = vpack.c.b16 %v3771, %v3763
        %v5180 = vpack.c.b16 %v3772, %v3764
        %v5181 = vpack.c.b16 %v3773, %v3765
        %v5182 = vpack.c.b16 %v3774, %v3766
        %v5183 = vpack.c.b16 %v3775, %v3767
        %v5184 = vpack.c.b16 %v3776, %v3768
        %v5185 = vpack.c.b16 %v3777, %v3769
        %v5186 = vpack.c.b16 %v3778, %v3770
        %v5187 = vpack.c.b16 %v3787, %v3779
        %v5188 = vpack.c.b16 %v3788, %v3780
        %v5189 = vpack.c.b16 %v3789, %v3781
        %v5190 = vpack.c.b16 %v3790, %v3782
        %v5191 = vpack.c.b16 %v3791, %v3783
        %v5192 = vpack.c.b16 %v3792, %v3784
        %v5193 = vpack.c.b16 %v3793, %v3785
        %v5194 = vpack.c.b16 %v3794, %v3786
        %v5195 = vpack.c.b16 %v3803, %v3795
        %v5196 = vpack.c.b16 %v3804, %v3796
        %v5197 = vpack.c.b16 %v3805, %v3797
        %v5198 = vpack.c.b16 %v3806, %v3798
        %v5199 = vpack.c.b16 %v3807, %v3799
        %v5200 = vpack.c.b16 %v3808, %v3800
        %v5201 = vpack.c.b16 %v3809, %v3801
        %v5202 = vpack.c.b16 %v3810, %v3802
        %v5203 = vpack.c.b16 %v3819, %v3811
        %v5204 = vpack.c.b16 %v3820, %v3812
        %v5205 = vpack.c.b16 %v3821, %v3813
        %v5206 = vpack.c.b16 %v3822, %v3814
        %v5207 = vpack.c.b16 %v3823, %v3815
        %v5208 = vpack.c.b16 %v3824, %v3816
        %v5209 = vpack.c.b16 %v3825, %v3817
        %v5210 = vpack.c.b16 %v3826, %v3818
        %v5211 = vpack.c.b16 %v3835, %v3827
        %v5212 = vpack.c.b16 %v3836, %v3828
        %v5213 = vpack.c.b16 %v3837, %v3829
        %v5214 = vpack.c.b16 %v3838, %v3830
        %v5215 = vpack.c.b16 %v3839, %v3831
        %v5216 = vpack.c.b16 %v3840, %v3832
        %v5217 = vpack.c.b16 %v3841, %v3833
        %v5218 = vpack.c.b16 %v3842, %v3834
        %v5219 = vpack.c.b16 %v3851, %v3843
        %v5220 = vpack.c.b16 %v3852, %v3844
        %v5221 = vpack.c.b16 %v3853, %v3845
        %v5222 = vpack.c.b16 %v3854, %v3846
        %v5223 = vpack.c.b16 %v3855, %v3847
        %v5224 = vpack.c.b16 %v3856, %v3848
        %v5225 = vpack.c.b16 %v3857, %v3849
        %v5226 = vpack.c.b16 %v3858, %v3850
        %v5227 = vpack.c.b16 %v3867, %v3859
        %v5228 = vpack.c.b16 %v3868, %v3860
        %v5229 = vpack.c.b16 %v3869, %v3861
        %v5230 = vpack.c.b16 %v3870, %v3862
        %v5231 = vpack.c.b16 %v3871, %v3863
        %v5232 = vpack.c.b16 %v3872, %v3864
        %v5233 = vpack.c.b16 %v3873, %v3865
        %v5234 = vpack.c.b16 %v3874, %v3866
        %v5235 = vpack.c.b16 %v3883, %v3875
        %v5236 = vpack.c.b16 %v3884, %v3876
        %v5237 = vpack.c.b16 %v3885, %v3877
        %v5238 = vpack.c.b16 %v3886, %v3878
        %v5239 = vpack.c.b16 %v3887, %v3879
        %v5240 = vpack.c.b16 %v3888, %v3880
        %v5241 = vpack.c.b16 %v3889, %v3881
        %v5242 = vpack.c.b16 %v3890, %v3882
        %v5243 = vpack.c.b16 %v3899, %v3891
        %v5244 = vpack.c.b16 %v3900, %v3892
        %v5245 = vpack.c.b16 %v3901, %v3893
        %v5246 = vpack.c.b16 %v3902, %v3894
        %v5247 = vpack.c.b16 %v3903, %v3895
        %v5248 = vpack.c.b16 %v3904, %v3896
        %v5249 = vpack.c.b16 %v3905, %v3897
        %v5250 = vpack.c.b16 %v3906, %v3898
        %v5251 = vpack.c.b16 %v3915, %v3907
        %v5252 = vpack.c.b16 %v3916, %v3908
        %v5253 = vpack.c.b16 %v3917, %v3909
        %v5254 = vpack.c.b16 %v3918, %v3910
        %v5255 = vpack.c.b16 %v3919, %v3911
        %v5256 = vpack.c.b16 %v3920, %v3912
        %v5257 = vpack.c.b16 %v3921, %v3913
        %v5258 = vpack.c.b16 %v3922, %v3914
        %v5259 = vpack.c.b16 %v3931, %v3923
        %v5260 = vpack.c.b16 %v3932, %v3924
        %v5261 = vpack.c.b16 %v3933, %v3925
        %v5262 = vpack.c.b16 %v3934, %v3926
        %v5263 = vpack.c.b16 %v3935, %v3927
        %v5264 = vpack.c.b16 %v3936, %v3928
        %v5265 = vpack.c.b16 %v3937, %v3929
        %v5266 = vpack.c.b16 %v3938, %v3930
        %v5267 = vpack.c.b16 %v3947, %v3939
        %v5268 = vpack.c.b16 %v3948, %v3940
        %v5269 = vpack.c.b16 %v3949, %v3941
        %v5270 = vpack.c.b16 %v3950, %v3942
        %v5271 = vpack.c.b16 %v3951, %v3943
        %v5272 = vpack.c.b16 %v3952, %v3944
        %v5273 = vpack.c.b16 %v3953, %v3945
        %v5274 = vpack.c.b16 %v3954, %v3946
        %v5275 = vpack.c.b16 %v3963, %v3955
        %v5276 = vpack.c.b16 %v3964, %v3956
        %v5277 = vpack.c.b16 %v3965, %v3957
        %v5278 = vpack.c.b16 %v3966, %v3958
        %v5279 = vpack.c.b16 %v3967, %v3959
        %v5280 = vpack.c.b16 %v3968, %v3960
        %v5281 = vpack.c.b16 %v3969, %v3961
        %v5282 = vpack.c.b16 %v3970, %v3962
        %v5283 = vpack.c.b16 %v3979, %v3971
        %v5284 = vpack.c.b16 %v3980, %v3972
        %v5285 = vpack.c.b16 %v3981, %v3973
        %v5286 = vpack.c.b16 %v3982, %v3974
        %v5287 = vpack.c.b16 %v3983, %v3975
        %v5288 = vpack.c.b16 %v3984, %v3976
        %v5289 = vpack.c.b16 %v3985, %v3977
        %v5290 = vpack.c.b16 %v3986, %v3978
        %v5291 = vpack.c.b16 %v3995, %v3987
        %v5292 = vpack.c.b16 %v3996, %v3988
        %v5293 = vpack.c.b16 %v3997, %v3989
        %v5294 = vpack.c.b16 %v3998, %v3990
        %v5295 = vpack.c.b16 %v3999, %v3991
        %v5296 = vpack.c.b16 %v4000, %v3992
        %v5297 = vpack.c.b16 %v4001, %v3993
        %v5298 = vpack.c.b16 %v4002, %v3994
        %v5299 = vpack.c.b16 %v4011, %v4003
        %v5300 = vpack.c.b16 %v4012, %v4004
        %v5301 = vpack.c.b16 %v4013, %v4005
        %v5302 = vpack.c.b16 %v4014, %v4006
        %v5303 = vpack.c.b16 %v4015, %v4007
        %v5304 = vpack.c.b16 %v4016, %v4008
        %v5305 = vpack.c.b16 %v4017, %v4009
        %v5306 = vpack.c.b16 %v4018, %v4010
        %v5307 = vpack.c.b16 %v4027, %v4019
        %v5308 = vpack.c.b16 %v4028, %v4020
        %v5309 = vpack.c.b16 %v4029, %v4021
        %v5310 = vpack.c.b16 %v4030, %v4022
        %v5311 = vpack.c.b16 %v4031, %v4023
        %v5312 = vpack.c.b16 %v4032, %v4024
        %v5313 = vpack.c.b16 %v4033, %v4025
        %v5314 = vpack.c.b16 %v4034, %v4026
        %v5315 = vpack.c.b16 %v4043, %v4035
        %v5316 = vpack.c.b16 %v4044, %v4036
        %v5317 = vpack.c.b16 %v4045, %v4037
        %v5318 = vpack.c.b16 %v4046, %v4038
        %v5319 = vpack.c.b16 %v4047, %v4039
        %v5320 = vpack.c.b16 %v4048, %v4040
        %v5321 = vpack.c.b16 %v4049, %v4041
        %v5322 = vpack.c.b16 %v4050, %v4042
        %v5323 = vpack.c.b16 %v4059, %v4051
        %v5324 = vpack.c.b16 %v4060, %v4052
        %v5325 = vpack.c.b16 %v4061, %v4053
        %v5326 = vpack.c.b16 %v4062, %v4054
        %v5327 = vpack.c.b16 %v4063, %v4055
        %v5328 = vpack.c.b16 %v4064, %v4056
        %v5329 = vpack.c.b16 %v4065, %v4057
        %v5330 = vpack.c.b16 %v4066, %v4058
        %v5331 = vpack.c.b16 %v4075, %v4067
        %v5332 = vpack.c.b16 %v4076, %v4068
        %v5333 = vpack.c.b16 %v4077, %v4069
        %v5334 = vpack.c.b16 %v4078, %v4070
        %v5335 = vpack.c.b16 %v4079, %v4071
        %v5336 = vpack.c.b16 %v4080, %v4072
        %v5337 = vpack.c.b16 %v4081, %v4073
        %v5338 = vpack.c.b16 %v4082, %v4074
        %v5339 = vpack.c.b16 %v4091, %v4083
        %v5340 = vpack.c.b16 %v4092, %v4084
        %v5341 = vpack.c.b16 %v4093, %v4085
        %v5342 = vpack.c.b16 %v4094, %v4086
        %v5343 = vpack.c.b16 %v4095, %v4087
        %v5344 = vpack.c.b16 %v4096, %v4088
        %v5345 = vpack.c.b16 %v4097, %v4089
        %v5346 = vpack.c.b16 %v4098, %v4090
        %v5347 = vpack.c.b16 %v4107, %v4099
        %v5348 = vpack.c.b16 %v4108, %v4100
        %v5349 = vpack.c.b16 %v4109, %v4101
        %v5350 = vpack.c.b16 %v4110, %v4102
        %v5351 = vpack.c.b16 %v4111, %v4103
        %v5352 = vpack.c.b16 %v4112, %v4104
        %v5353 = vpack.c.b16 %v4113, %v4105
        %v5354 = vpack.c.b16 %v4114, %v4106
        %v5355 = vpack.c.b16 %v4123, %v4115
        %v5356 = vpack.c.b16 %v4124, %v4116
        %v5357 = vpack.c.b16 %v4125, %v4117
        %v5358 = vpack.c.b16 %v4126, %v4118
        %v5359 = vpack.c.b16 %v4127, %v4119
        %v5360 = vpack.c.b16 %v4128, %v4120
        %v5361 = vpack.c.b16 %v4129, %v4121
        %v5362 = vpack.c.b16 %v4130, %v4122
        %v5363 = vpack.c.b16 %v4139, %v4131
        %v5364 = vpack.c.b16 %v4140, %v4132
        %v5365 = vpack.c.b16 %v4141, %v4133
        %v5366 = vpack.c.b16 %v4142, %v4134
        %v5367 = vpack.c.b16 %v4143, %v4135
        %v5368 = vpack.c.b16 %v4144, %v4136
        %v5369 = vpack.c.b16 %v4145, %v4137
        %v5370 = vpack.c.b16 %v4146, %v4138
        %v5371 = vpack.c.b16 %v4155, %v4147
        %v5372 = vpack.c.b16 %v4156, %v4148
        %v5373 = vpack.c.b16 %v4157, %v4149
        %v5374 = vpack.c.b16 %v4158, %v4150
        %v5375 = vpack.c.b16 %v4159, %v4151
        %v5376 = vpack.c.b16 %v4160, %v4152
        %v5377 = vpack.c.b16 %v4161, %v4153
        %v5378 = vpack.c.b16 %v4162, %v4154
        %v5379 = vpack.c.b16 %v4171, %v4163
        %v5380 = vpack.c.b16 %v4172, %v4164
        %v5381 = vpack.c.b16 %v4173, %v4165
        %v5382 = vpack.c.b16 %v4174, %v4166
        %v5383 = vpack.c.b16 %v4175, %v4167
        %v5384 = vpack.c.b16 %v4176, %v4168
        %v5385 = vpack.c.b16 %v4177, %v4169
        %v5386 = vpack.c.b16 %v4178, %v4170
        %v5387 = vpack.c.b16 %v4187, %v4179
        %v5388 = vpack.c.b16 %v4188, %v4180
        %v5389 = vpack.c.b16 %v4189, %v4181
        %v5390 = vpack.c.b16 %v4190, %v4182
        %v5391 = vpack.c.b16 %v4191, %v4183
        %v5392 = vpack.c.b16 %v4192, %v4184
        %v5393 = vpack.c.b16 %v4193, %v4185
        %v5394 = vpack.c.b16 %v4194, %v4186
        %v5395 = vpack.c.b16 %v4203, %v4195
        %v5396 = vpack.c.b16 %v4204, %v4196
        %v5397 = vpack.c.b16 %v4205, %v4197
        %v5398 = vpack.c.b16 %v4206, %v4198
        %v5399 = vpack.c.b16 %v4207, %v4199
        %v5400 = vpack.c.b16 %v4208, %v4200
        %v5401 = vpack.c.b16 %v4209, %v4201
        %v5402 = vpack.c.b16 %v4210, %v4202
        %v5403 = vpack.c.b16 %v4219, %v4211
        %v5404 = vpack.c.b16 %v4220, %v4212
        %v5405 = vpack.c.b16 %v4221, %v4213
        %v5406 = vpack.c.b16 %v4222, %v4214
        %v5407 = vpack.c.b16 %v4223, %v4215
        %v5408 = vpack.c.b16 %v4224, %v4216
        %v5409 = vpack.c.b16 %v4225, %v4217
        %v5410 = vpack.c.b16 %v4226, %v4218
        %v5411 = vpack.c.b16 %v4235, %v4227
        %v5412 = vpack.c.b16 %v4236, %v4228
        %v5413 = vpack.c.b16 %v4237, %v4229
        %v5414 = vpack.c.b16 %v4238, %v4230
        %v5415 = vpack.c.b16 %v4239, %v4231
        %v5416 = vpack.c.b16 %v4240, %v4232
        %v5417 = vpack.c.b16 %v4241, %v4233
        %v5418 = vpack.c.b16 %v4242, %v4234
        %v5419 = vpack.c.b16 %v4251, %v4243
        %v5420 = vpack.c.b16 %v4252, %v4244
        %v5421 = vpack.c.b16 %v4253, %v4245
        %v5422 = vpack.c.b16 %v4254, %v4246
        %v5423 = vpack.c.b16 %v4255, %v4247
        %v5424 = vpack.c.b16 %v4256, %v4248
        %v5425 = vpack.c.b16 %v4257, %v4249
        %v5426 = vpack.c.b16 %v4258, %v4250
        %v5427 = vpack.c.b16 %v4267, %v4259
        %v5428 = vpack.c.b16 %v4268, %v4260
        %v5429 = vpack.c.b16 %v4269, %v4261
        %v5430 = vpack.c.b16 %v4270, %v4262
        %v5431 = vpack.c.b16 %v4271, %v4263
        %v5432 = vpack.c.b16 %v4272, %v4264
        %v5433 = vpack.c.b16 %v4273, %v4265
        %v5434 = vpack.c.b16 %v4274, %v4266
        %v5435 = vpack.c.b16 %v4283, %v4275
        %v5436 = vpack.c.b16 %v4284, %v4276
        %v5437 = vpack.c.b16 %v4285, %v4277
        %v5438 = vpack.c.b16 %v4286, %v4278
        %v5439 = vpack.c.b16 %v4287, %v4279
        %v5440 = vpack.c.b16 %v4288, %v4280
        %v5441 = vpack.c.b16 %v4289, %v4281
        %v5442 = vpack.c.b16 %v4290, %v4282
        %v5443 = vpack.c.b16 %v4299, %v4291
        %v5444 = vpack.c.b16 %v4300, %v4292
        %v5445 = vpack.c.b16 %v4301, %v4293
        %v5446 = vpack.c.b16 %v4302, %v4294
        %v5447 = vpack.c.b16 %v4303, %v4295
        %v5448 = vpack.c.b16 %v4304, %v4296
        %v5449 = vpack.c.b16 %v4305, %v4297
        %v5450 = vpack.c.b16 %v4306, %v4298
        %v5451 = vpack.c.b16 %v4315, %v4307
        %v5452 = vpack.c.b16 %v4316, %v4308
        %v5453 = vpack.c.b16 %v4317, %v4309
        %v5454 = vpack.c.b16 %v4318, %v4310
        %v5455 = vpack.c.b16 %v4319, %v4311
        %v5456 = vpack.c.b16 %v4320, %v4312
        %v5457 = vpack.c.b16 %v4321, %v4313
        %v5458 = vpack.c.b16 %v4322, %v4314
        %v5459 = vpack.c.b16 %v4331, %v4323
        %v5460 = vpack.c.b16 %v4332, %v4324
        %v5461 = vpack.c.b16 %v4333, %v4325
        %v5462 = vpack.c.b16 %v4334, %v4326
        %v5463 = vpack.c.b16 %v4335, %v4327
        %v5464 = vpack.c.b16 %v4336, %v4328
        %v5465 = vpack.c.b16 %v4337, %v4329
        %v5466 = vpack.c.b16 %v4338, %v4330
        %v5467 = vpack.c.b16 %v4347, %v4339
        %v5468 = vpack.c.b16 %v4348, %v4340
        %v5469 = vpack.c.b16 %v4349, %v4341
        %v5470 = vpack.c.b16 %v4350, %v4342
        %v5471 = vpack.c.b16 %v4351, %v4343
        %v5472 = vpack.c.b16 %v4352, %v4344
        %v5473 = vpack.c.b16 %v4353, %v4345
        %v5474 = vpack.c.b16 %v4354, %v4346
        %v5475 = vpack.c.b16 %v4363, %v4355
        %v5476 = vpack.c.b16 %v4364, %v4356
        %v5477 = vpack.c.b16 %v4365, %v4357
        %v5478 = vpack.c.b16 %v4366, %v4358
        %v5479 = vpack.c.b16 %v4367, %v4359
        %v5480 = vpack.c.b16 %v4368, %v4360
        %v5481 = vpack.c.b16 %v4369, %v4361
        %v5482 = vpack.c.b16 %v4370, %v4362
        %v5483 = vpack.c.b16 %v4379, %v4371
        %v5484 = vpack.c.b16 %v4380, %v4372
        %v5485 = vpack.c.b16 %v4381, %v4373
        %v5486 = vpack.c.b16 %v4382, %v4374
        %v5487 = vpack.c.b16 %v4383, %v4375
        %v5488 = vpack.c.b16 %v4384, %v4376
        %v5489 = vpack.c.b16 %v4385, %v4377
        %v5490 = vpack.c.b16 %v4386, %v4378
        %v5491 = vpack.c.b16 %v4395, %v4387
        %v5492 = vpack.c.b16 %v4396, %v4388
        %v5493 = vpack.c.b16 %v4397, %v4389
        %v5494 = vpack.c.b16 %v4398, %v4390
        %v5495 = vpack.c.b16 %v4399, %v4391
        %v5496 = vpack.c.b16 %v4400, %v4392
        %v5497 = vpack.c.b16 %v4401, %v4393
        %v5498 = vpack.c.b16 %v4402, %v4394
        %v5499 = vpack.c.b16 %v4411, %v4403
        %v5500 = vpack.c.b16 %v4412, %v4404
        %v5501 = vpack.c.b16 %v4413, %v4405
        %v5502 = vpack.c.b16 %v4414, %v4406
        %v5503 = vpack.c.b16 %v4415, %v4407
        %v5504 = vpack.c.b16 %v4416, %v4408
        %v5505 = vpack.c.b16 %v4417, %v4409
        %v5506 = vpack.c.b16 %v4418, %v4410
        %v5507 = vpack.c.b16 %v4427, %v4419
        %v5508 = vpack.c.b16 %v4428, %v4420
        %v5509 = vpack.c.b16 %v4429, %v4421
        %v5510 = vpack.c.b16 %v4430, %v4422
        %v5511 = vpack.c.b16 %v4431, %v4423
        %v5512 = vpack.c.b16 %v4432, %v4424
        %v5513 = vpack.c.b16 %v4433, %v4425
        %v5514 = vpack.c.b16 %v4434, %v4426
        %v5515 = vpack.c.b16 %v4443, %v4435
        %v5516 = vpack.c.b16 %v4444, %v4436
        %v5517 = vpack.c.b16 %v4445, %v4437
        %v5518 = vpack.c.b16 %v4446, %v4438
        %v5519 = vpack.c.b16 %v4447, %v4439
        %v5520 = vpack.c.b16 %v4448, %v4440
        %v5521 = vpack.c.b16 %v4449, %v4441
        %v5522 = vpack.c.b16 %v4450, %v4442
        %v5523 = vpack.c.b16 %v4459, %v4451
        %v5524 = vpack.c.b16 %v4460, %v4452
        %v5525 = vpack.c.b16 %v4461, %v4453
        %v5526 = vpack.c.b16 %v4462, %v4454
        %v5527 = vpack.c.b16 %v4463, %v4455
        %v5528 = vpack.c.b16 %v4464, %v4456
        %v5529 = vpack.c.b16 %v4465, %v4457
        %v5530 = vpack.c.b16 %v4466, %v4458
        %v5531 = vpack.c.b16 %v4475, %v4467
        %v5532 = vpack.c.b16 %v4476, %v4468
        %v5533 = vpack.c.b16 %v4477, %v4469
        %v5534 = vpack.c.b16 %v4478, %v4470
        %v5535 = vpack.c.b16 %v4479, %v4471
        %v5536 = vpack.c.b16 %v4480, %v4472
        %v5537 = vpack.c.b16 %v4481, %v4473
        %v5538 = vpack.c.b16 %v4482, %v4474
        %v5539 = vpack.c.b16 %v4491, %v4483
        %v5540 = vpack.c.b16 %v4492, %v4484
        %v5541 = vpack.c.b16 %v4493, %v4485
        %v5542 = vpack.c.b16 %v4494, %v4486
        %v5543 = vpack.c.b16 %v4495, %v4487
        %v5544 = vpack.c.b16 %v4496, %v4488
        %v5545 = vpack.c.b16 %v4497, %v4489
        %v5546 = vpack.c.b16 %v4498, %v4490
        %v5547 = vpack.c.b16 %v4507, %v4499
        %v5548 = vpack.c.b16 %v4508, %v4500
        %v5549 = vpack.c.b16 %v4509, %v4501
        %v5550 = vpack.c.b16 %v4510, %v4502
        %v5551 = vpack.c.b16 %v4511, %v4503
        %v5552 = vpack.c.b16 %v4512, %v4504
        %v5553 = vpack.c.b16 %v4513, %v4505
        %v5554 = vpack.c.b16 %v4514, %v4506
        %v5555 = vpack.c.b16 %v4523, %v4515
        %v5556 = vpack.c.b16 %v4524, %v4516
        %v5557 = vpack.c.b16 %v4525, %v4517
        %v5558 = vpack.c.b16 %v4526, %v4518
        %v5559 = vpack.c.b16 %v4527, %v4519
        %v5560 = vpack.c.b16 %v4528, %v4520
        %v5561 = vpack.c.b16 %v4529, %v4521
        %v5562 = vpack.c.b16 %v4530, %v4522
        %v5563 = vpack.c.b16 %v4539, %v4531
        %v5564 = vpack.c.b16 %v4540, %v4532
        %v5565 = vpack.c.b16 %v4541, %v4533
        %v5566 = vpack.c.b16 %v4542, %v4534
        %v5567 = vpack.c.b16 %v4543, %v4535
        %v5568 = vpack.c.b16 %v4544, %v4536
        %v5569 = vpack.c.b16 %v4545, %v4537
        %v5570 = vpack.c.b16 %v4546, %v4538
        %6595 = vmatprep.subr.bf16.mxu0 %v4548
        %6596 = vmatpush1.bf16.msra.mxu0 %v4547
        %6597 = vmatprep.subr.bf16.mxu0 %v4556
        %6598 = vmatpush1.bf16.msra.mxu0 %v4555
        %6599 = vmatprep.subr.bf16.mxu0 %v4564
        %6600 = vmatpush1.bf16.msra.mxu0 %v4563
        %6601 = vmatprep.subr.bf16.mxu0 %v4572
        %6602 = vmatpush1.bf16.msra.mxu0 %v4571
        %6603 = vmatprep.subr.bf16.mxu0 %v4580
        %6604 = vmatpush1.bf16.msra.mxu0 %v4579
        %6605 = vmatprep.subr.bf16.mxu0 %v4588
        %6606 = vmatpush1.bf16.msra.mxu0 %v4587
        %6607 = vmatprep.subr.bf16.mxu0 %v4596
        %6608 = vmatpush1.bf16.msra.mxu0 %v4595
        %6609 = vmatprep.subr.bf16.mxu0 %v4604
        %6610 = vmatpush1.bf16.msra.mxu0 %v4603
        %6611 = vmatprep.subr.bf16.mxu0 %v4612
        %6612 = vmatpush1.bf16.msra.mxu0 %v4611
        %6613 = vmatprep.subr.bf16.mxu0 %v4620
        %6614 = vmatpush1.bf16.msra.mxu0 %v4619
        %6615 = vmatprep.subr.bf16.mxu0 %v4628
        %6616 = vmatpush1.bf16.msra.mxu0 %v4627
        %6617 = vmatprep.subr.bf16.mxu0 %v4636
        %6618 = vmatpush1.bf16.msra.mxu0 %v4635
        %6619 = vmatprep.subr.bf16.mxu0 %v4644
        %6620 = vmatpush1.bf16.msra.mxu0 %v4643
        %6621 = vmatprep.subr.bf16.mxu0 %v4652
        %6622 = vmatpush1.bf16.msra.mxu0 %v4651
        %6623 = vmatprep.subr.bf16.mxu0 %v4660
        %6624 = vmatpush1.bf16.msra.mxu0 %v4659
        %6625 = vmatprep.subr.bf16.mxu0 %v4668
        %6626 = vmatpush1.bf16.msra.mxu0 %v4667
        %6627 = vmatprep.mubr.bf16.mxu0 %v388
        %6628 = vmatmul.mubr.bf16.gmra.mrb[0].mxu0 %v387
        %v6629 = vpop.f32.mrb[0].mxu0
        %v6630 = vadd.f32 0.0, %v6629
        %v6631 = vpop.f32.mrb[0].mxu0
        %v6632 = vadd.f32 0.0, %v6631
        %v6633 = vpop.f32.mrb[0].mxu0
        %v6634 = vadd.f32 0.0, %v6633
        %v6635 = vpop.f32.mrb[0].mxu0
        %v6636 = vadd.f32 0.0, %v6635
        %6637 = vmatprep.mubr.bf16.mxu0 %v404
        %6638 = vmatmul.mubr.bf16.gmra.mrb[0].mxu0 %v403
        %v6639 = vpop.f32.mrb[0].mxu0
        %v6640 = vadd.f32 0.0, %v6639
        %v6641 = vpop.f32.mrb[0].mxu0
        %v6642 = vadd.f32 0.0, %v6641
        %v6643 = vpop.f32.mrb[0].mxu0
        %v6644 = vadd.f32 0.0, %v6643
        %v6645 = vpop.f32.mrb[0].mxu0
        %v6646 = vadd.f32 0.0, %v6645
        %6647 = vmatprep.mubr.bf16.mxu0 %v420
        %6648 = vmatmul.mubr.bf16.gmra.mrb[0].mxu0 %v419
        %v6649 = vpop.f32.mrb[0].mxu0
        %v6650 = vadd.f32 0.0, %v6649
        %v6651 = vpop.f32.mrb[0].mxu0
        %v6652 = vadd.f32 0.0, %v6651
        %v6653 = vpop.f32.mrb[0].mxu0
        %v6654 = vadd.f32 0.0, %v6653
        %v6655 = vpop.f32.mrb[0].mxu0
        %v6656 = vadd.f32 0.0, %v6655
        %6657 = vmatprep.mubr.bf16.mxu0 %v436
        %6658 = vmatmul.mubr.bf16.gmra.mrb[0].mxu0 %v435
        %v6659 = vpop.f32.mrb[0].mxu0
        %v6660 = vadd.f32 0.0, %v6659
        %v6661 = vpop.f32.mrb[0].mxu0
        %v6662 = vadd.f32 0.0, %v6661
        %v6663 = vpop.f32.mrb[0].mxu0
        %v6664 = vadd.f32 0.0, %v6663
        %v6665 = vpop.f32.mrb[0].mxu0
        %v6666 = vadd.f32 0.0, %v6665
        %6667 = vdwg.mxu0
        %6668 = vmatprep.subr.bf16.mxu0 %v4676
        %6669 = vmatpush1.bf16.msra.mxu0 %v4675
        %6670 = vmatprep.subr.bf16.mxu0 %v4684
        %6671 = vmatpush1.bf16.msra.mxu0 %v4683
        %6672 = vmatprep.subr.bf16.mxu0 %v4692
        %6673 = vmatpush1.bf16.msra.mxu0 %v4691
        %6674 = vmatprep.subr.bf16.mxu0 %v4700
        %6675 = vmatpush1.bf16.msra.mxu0 %v4699
        %6676 = vmatprep.subr.bf16.mxu0 %v4708
        %6677 = vmatpush1.bf16.msra.mxu0 %v4707
        %6678 = vmatprep.subr.bf16.mxu0 %v4716
        %6679 = vmatpush1.bf16.msra.mxu0 %v4715
        %6680 = vmatprep.subr.bf16.mxu0 %v4724
        %6681 = vmatpush1.bf16.msra.mxu0 %v4723
        %6682 = vmatprep.subr.bf16.mxu0 %v4732
        %6683 = vmatpush1.bf16.msra.mxu0 %v4731
        %6684 = vmatprep.subr.bf16.mxu0 %v4740
        %6685 = vmatpush1.bf16.msra.mxu0 %v4739
        %6686 = vmatprep.subr.bf16.mxu0 %v4748
        %6687 = vmatpush1.bf16.msra.mxu0 %v4747
        %6688 = vmatprep.subr.bf16.mxu0 %v4756
        %6689 = vmatpush1.bf16.msra.mxu0 %v4755
        %6690 = vmatprep.subr.bf16.mxu0 %v4764
        %6691 = vmatpush1.bf16.msra.mxu0 %v4763
        %6692 = vmatprep.subr.bf16.mxu0 %v4772
        %6693 = vmatpush1.bf16.msra.mxu0 %v4771
        %6694 = vmatprep.subr.bf16.mxu0 %v4780
        %6695 = vmatpush1.bf16.msra.mxu0 %v4779
        %6696 = vmatprep.subr.bf16.mxu0 %v4788
        %6697 = vmatpush1.bf16.msra.mxu0 %v4787
        %6698 = vmatprep.subr.bf16.mxu0 %v4796
        %6699 = vmatpush1.bf16.msra.mxu0 %v4795
        %6700 = vmatprep.mubr.bf16.mxu0 %v390
        %6701 = vmatmul.mubr.bf16.gmra.mrb[0].mxu0 %v389
        %v6702 = vpop.f32.mrb[0].mxu0
        %v6703 = vadd.f32 %v6630, %v6702
        %v6704 = vpop.f32.mrb[0].mxu0
        %v6705 = vadd.f32 %v6632, %v6704
        %v6706 = vpop.f32.mrb[0].mxu0
        %v6707 = vadd.f32 %v6634, %v6706
        %v6708 = vpop.f32.mrb[0].mxu0
        %v6709 = vadd.f32 %v6636, %v6708
        %6710 = vmatprep.mubr.bf16.mxu0 %v406
        %6711 = vmatmul.mubr.bf16.gmra.mrb[0].mxu0 %v405
        %v6712 = vpop.f32.mrb[0].mxu0
        %v6713 = vadd.f32 %v6640, %v6712
        %v6714 = vpop.f32.mrb[0].mxu0
        %v6715 = vadd.f32 %v6642, %v6714
        %v6716 = vpop.f32.mrb[0].mxu0
        %v6717 = vadd.f32 %v6644, %v6716
        %v6718 = vpop.f32.mrb[0].mxu0
        %v6719 = vadd.f32 %v6646, %v6718
        %6720 = vmatprep.mubr.bf16.mxu0 %v422
        %6721 = vmatmul.mubr.bf16.gmra.mrb[0].mxu0 %v421
        %v6722 = vpop.f32.mrb[0].mxu0
        %v6723 = vadd.f32 %v6650, %v6722
        %v6724 = vpop.f32.mrb[0].mxu0
        %v6725 = vadd.f32 %v6652, %v6724
        %v6726 = vpop.f32.mrb[0].mxu0
        %v6727 = vadd.f32 %v6654, %v6726
        %v6728 = vpop.f32.mrb[0].mxu0
        %v6729 = vadd.f32 %v6656, %v6728
        %6730 = vmatprep.mubr.bf16.mxu0 %v438
        %6731 = vmatmul.mubr.bf16.gmra.mrb[0].mxu0 %v437
        %v6732 = vpop.f32.mrb[0].mxu0
        %v6733 = vadd.f32 %v6660, %v6732
        %v6734 = vpop.f32.mrb[0].mxu0
        %v6735 = vadd.f32 %v6662, %v6734
        %v6736 = vpop.f32.mrb[0].mxu0
        %v6737 = vadd.f32 %v6664, %v6736
        %v6738 = vpop.f32.mrb[0].mxu0
        %v6739 = vadd.f32 %v6666, %v6738
        %6740 = vdwg.mxu0
        %6741 = vmatprep.subr.bf16.mxu0 %v4804
        %6742 = vmatpush1.bf16.msra.mxu0 %v4803
        %6743 = vmatprep.subr.bf16.mxu0 %v4812
        %6744 = vmatpush1.bf16.msra.mxu0 %v4811
        %6745 = vmatprep.subr.bf16.mxu0 %v4820
        %6746 = vmatpush1.bf16.msra.mxu0 %v4819
        %6747 = vmatprep.subr.bf16.mxu0 %v4828
        %6748 = vmatpush1.bf16.msra.mxu0 %v4827
        %6749 = vmatprep.subr.bf16.mxu0 %v4836
        %6750 = vmatpush1.bf16.msra.mxu0 %v4835
        %6751 = vmatprep.subr.bf16.mxu0 %v4844
        %6752 = vmatpush1.bf16.msra.mxu0 %v4843
        %6753 = vmatprep.subr.bf16.mxu0 %v4852
        %6754 = vmatpush1.bf16.msra.mxu0 %v4851
        %6755 = vmatprep.subr.bf16.mxu0 %v4860
        %6756 = vmatpush1.bf16.msra.mxu0 %v4859
        %6757 = vmatprep.subr.bf16.mxu0 %v4868
        %6758 = vmatpush1.bf16.msra.mxu0 %v4867
        %6759 = vmatprep.subr.bf16.mxu0 %v4876
        %6760 = vmatpush1.bf16.msra.mxu0 %v4875
        %6761 = vmatprep.subr.bf16.mxu0 %v4884
        %6762 = vmatpush1.bf16.msra.mxu0 %v4883
        %6763 = vmatprep.subr.bf16.mxu0 %v4892
        %6764 = vmatpush1.bf16.msra.mxu0 %v4891
        %6765 = vmatprep.subr.bf16.mxu0 %v4900
        %6766 = vmatpush1.bf16.msra.mxu0 %v4899
        %6767 = vmatprep.subr.bf16.mxu0 %v4908
        %6768 = vmatpush1.bf16.msra.mxu0 %v4907
        %6769 = vmatprep.subr.bf16.mxu0 %v4916
        %6770 = vmatpush1.bf16.msra.mxu0 %v4915
        %6771 = vmatprep.subr.bf16.mxu0 %v4924
        %6772 = vmatpush1.bf16.msra.mxu0 %v4923
        %6773 = vmatprep.mubr.bf16.mxu0 %v392
        %6774 = vmatmul.mubr.bf16.gmra.mrb[0].mxu0 %v391
        %v6775 = vpop.f32.mrb[0].mxu0
        %v6776 = vadd.f32 %v6703, %v6775
        %v6777 = vpop.f32.mrb[0].mxu0
        %v6778 = vadd.f32 %v6705, %v6777
        %v6779 = vpop.f32.mrb[0].mxu0
        %v6780 = vadd.f32 %v6707, %v6779
        %v6781 = vpop.f32.mrb[0].mxu0
        %v6782 = vadd.f32 %v6709, %v6781
        %6783 = vmatprep.mubr.bf16.mxu0 %v408
        %6784 = vmatmul.mubr.bf16.gmra.mrb[0].mxu0 %v407
        %v6785 = vpop.f32.mrb[0].mxu0
        %v6786 = vadd.f32 %v6713, %v6785
        %v6787 = vpop.f32.mrb[0].mxu0
        %v6788 = vadd.f32 %v6715, %v6787
        %v6789 = vpop.f32.mrb[0].mxu0
        %v6790 = vadd.f32 %v6717, %v6789
        %v6791 = vpop.f32.mrb[0].mxu0
        %v6792 = vadd.f32 %v6719, %v6791
        %6793 = vmatprep.mubr.bf16.mxu0 %v424
        %6794 = vmatmul.mubr.bf16.gmra.mrb[0].mxu0 %v423
        %v6795 = vpop.f32.mrb[0].mxu0
        %v6796 = vadd.f32 %v6723, %v6795
        %v6797 = vpop.f32.mrb[0].mxu0
        %v6798 = vadd.f32 %v6725, %v6797
        %v6799 = vpop.f32.mrb[0].mxu0
        %v6800 = vadd.f32 %v6727, %v6799
        %v6801 = vpop.f32.mrb[0].mxu0
        %v6802 = vadd.f32 %v6729, %v6801
        %6803 = vmatprep.mubr.bf16.mxu0 %v440
        %6804 = vmatmul.mubr.bf16.gmra.mrb[0].mxu0 %v439
        %v6805 = vpop.f32.mrb[0].mxu0
        %v6806 = vadd.f32 %v6733, %v6805
        %v6807 = vpop.f32.mrb[0].mxu0
        %v6808 = vadd.f32 %v6735, %v6807
        %v6809 = vpop.f32.mrb[0].mxu0
        %v6810 = vadd.f32 %v6737, %v6809
        %v6811 = vpop.f32.mrb[0].mxu0
        %v6812 = vadd.f32 %v6739, %v6811
        %6813 = vdwg.mxu0
        %6814 = vmatprep.subr.bf16.mxu0 %v4932
        %6815 = vmatpush1.bf16.msra.mxu0 %v4931
        %6816 = vmatprep.subr.bf16.mxu0 %v4940
        %6817 = vmatpush1.bf16.msra.mxu0 %v4939
        %6818 = vmatprep.subr.bf16.mxu0 %v4948
        %6819 = vmatpush1.bf16.msra.mxu0 %v4947
        %6820 = vmatprep.subr.bf16.mxu0 %v4956
        %6821 = vmatpush1.bf16.msra.mxu0 %v4955
        %6822 = vmatprep.subr.bf16.mxu0 %v4964
        %6823 = vmatpush1.bf16.msra.mxu0 %v4963
        %6824 = vmatprep.subr.bf16.mxu0 %v4972
        %6825 = vmatpush1.bf16.msra.mxu0 %v4971
        %6826 = vmatprep.subr.bf16.mxu0 %v4980
        %6827 = vmatpush1.bf16.msra.mxu0 %v4979
        %6828 = vmatprep.subr.bf16.mxu0 %v4988
        %6829 = vmatpush1.bf16.msra.mxu0 %v4987
        %6830 = vmatprep.subr.bf16.mxu0 %v4996
        %6831 = vmatpush1.bf16.msra.mxu0 %v4995
        %6832 = vmatprep.subr.bf16.mxu0 %v5004
        %6833 = vmatpush1.bf16.msra.mxu0 %v5003
        %6834 = vmatprep.subr.bf16.mxu0 %v5012
        %6835 = vmatpush1.bf16.msra.mxu0 %v5011
        %6836 = vmatprep.subr.bf16.mxu0 %v5020
        %6837 = vmatpush1.bf16.msra.mxu0 %v5019
        %6838 = vmatprep.subr.bf16.mxu0 %v5028
        %6839 = vmatpush1.bf16.msra.mxu0 %v5027
        %6840 = vmatprep.subr.bf16.mxu0 %v5036
        %6841 = vmatpush1.bf16.msra.mxu0 %v5035
        %6842 = vmatprep.subr.bf16.mxu0 %v5044
        %6843 = vmatpush1.bf16.msra.mxu0 %v5043
        %6844 = vmatprep.subr.bf16.mxu0 %v5052
        %6845 = vmatpush1.bf16.msra.mxu0 %v5051
        %6846 = vmatprep.mubr.bf16.mxu0 %v394
        %6847 = vmatmul.mubr.bf16.gmra.mrb[0].mxu0 %v393
        %v6848 = vpop.f32.mrb[0].mxu0
        %v6849 = vadd.f32 %v6776, %v6848
        %v6850 = vpop.f32.mrb[0].mxu0
        %v6851 = vadd.f32 %v6778, %v6850
        %v6852 = vpop.f32.mrb[0].mxu0
        %v6853 = vadd.f32 %v6780, %v6852
        %v6854 = vpop.f32.mrb[0].mxu0
        %v6855 = vadd.f32 %v6782, %v6854
        %6856 = vmatprep.mubr.bf16.mxu0 %v410
        %6857 = vmatmul.mubr.bf16.gmra.mrb[0].mxu0 %v409
        %v6858 = vpop.f32.mrb[0].mxu0
        %v6859 = vadd.f32 %v6786, %v6858
        %v6860 = vpop.f32.mrb[0].mxu0
        %v6861 = vadd.f32 %v6788, %v6860
        %v6862 = vpop.f32.mrb[0].mxu0
        %v6863 = vadd.f32 %v6790, %v6862
        %v6864 = vpop.f32.mrb[0].mxu0
        %v6865 = vadd.f32 %v6792, %v6864
        %6866 = vmatprep.mubr.bf16.mxu0 %v426
        %6867 = vmatmul.mubr.bf16.gmra.mrb[0].mxu0 %v425
        %v6868 = vpop.f32.mrb[0].mxu0
        %v6869 = vadd.f32 %v6796, %v6868
        %v6870 = vpop.f32.mrb[0].mxu0
        %v6871 = vadd.f32 %v6798, %v6870
        %v6872 = vpop.f32.mrb[0].mxu0
        %v6873 = vadd.f32 %v6800, %v6872
        %v6874 = vpop.f32.mrb[0].mxu0
        %v6875 = vadd.f32 %v6802, %v6874
        %6876 = vmatprep.mubr.bf16.mxu0 %v442
        %6877 = vmatmul.mubr.bf16.gmra.mrb[0].mxu0 %v441
        %v6878 = vpop.f32.mrb[0].mxu0
        %v6879 = vadd.f32 %v6806, %v6878
        %v6880 = vpop.f32.mrb[0].mxu0
        %v6881 = vadd.f32 %v6808, %v6880
        %v6882 = vpop.f32.mrb[0].mxu0
        %v6883 = vadd.f32 %v6810, %v6882
        %v6884 = vpop.f32.mrb[0].mxu0
        %v6885 = vadd.f32 %v6812, %v6884
        %6886 = vdwg.mxu0
        %6887 = vmatprep.subr.bf16.mxu0 %v5060
        %6888 = vmatpush1.bf16.msra.mxu0 %v5059
        %6889 = vmatprep.subr.bf16.mxu0 %v5068
        %6890 = vmatpush1.bf16.msra.mxu0 %v5067
        %6891 = vmatprep.subr.bf16.mxu0 %v5076
        %6892 = vmatpush1.bf16.msra.mxu0 %v5075
        %6893 = vmatprep.subr.bf16.mxu0 %v5084
        %6894 = vmatpush1.bf16.msra.mxu0 %v5083
        %6895 = vmatprep.subr.bf16.mxu0 %v5092
        %6896 = vmatpush1.bf16.msra.mxu0 %v5091
        %6897 = vmatprep.subr.bf16.mxu0 %v5100
        %6898 = vmatpush1.bf16.msra.mxu0 %v5099
        %6899 = vmatprep.subr.bf16.mxu0 %v5108
        %6900 = vmatpush1.bf16.msra.mxu0 %v5107
        %6901 = vmatprep.subr.bf16.mxu0 %v5116
        %6902 = vmatpush1.bf16.msra.mxu0 %v5115
        %6903 = vmatprep.subr.bf16.mxu0 %v5124
        %6904 = vmatpush1.bf16.msra.mxu0 %v5123
        %6905 = vmatprep.subr.bf16.mxu0 %v5132
        %6906 = vmatpush1.bf16.msra.mxu0 %v5131
        %6907 = vmatprep.subr.bf16.mxu0 %v5140
        %6908 = vmatpush1.bf16.msra.mxu0 %v5139
        %6909 = vmatprep.subr.bf16.mxu0 %v5148
        %6910 = vmatpush1.bf16.msra.mxu0 %v5147
        %6911 = vmatprep.subr.bf16.mxu0 %v5156
        %6912 = vmatpush1.bf16.msra.mxu0 %v5155
        %6913 = vmatprep.subr.bf16.mxu0 %v5164
        %6914 = vmatpush1.bf16.msra.mxu0 %v5163
        %6915 = vmatprep.subr.bf16.mxu0 %v5172
        %6916 = vmatpush1.bf16.msra.mxu0 %v5171
        %6917 = vmatprep.subr.bf16.mxu0 %v5180
        %6918 = vmatpush1.bf16.msra.mxu0 %v5179
        %6919 = vmatprep.mubr.bf16.mxu0 %v396
        %6920 = vmatmul.mubr.bf16.gmra.mrb[0].mxu0 %v395
        %v6921 = vpop.f32.mrb[0].mxu0
        %v6922 = vadd.f32 %v6849, %v6921
        %v6923 = vpop.f32.mrb[0].mxu0
        %v6924 = vadd.f32 %v6851, %v6923
        %v6925 = vpop.f32.mrb[0].mxu0
        %v6926 = vadd.f32 %v6853, %v6925
        %v6927 = vpop.f32.mrb[0].mxu0
        %v6928 = vadd.f32 %v6855, %v6927
        %6929 = vmatprep.mubr.bf16.mxu0 %v412
        %6930 = vmatmul.mubr.bf16.gmra.mrb[0].mxu0 %v411
        %v6931 = vpop.f32.mrb[0].mxu0
        %v6932 = vadd.f32 %v6859, %v6931
        %v6933 = vpop.f32.mrb[0].mxu0
        %v6934 = vadd.f32 %v6861, %v6933
        %v6935 = vpop.f32.mrb[0].mxu0
        %v6936 = vadd.f32 %v6863, %v6935
        %v6937 = vpop.f32.mrb[0].mxu0
        %v6938 = vadd.f32 %v6865, %v6937
        %6939 = vmatprep.mubr.bf16.mxu0 %v428
        %6940 = vmatmul.mubr.bf16.gmra.mrb[0].mxu0 %v427
        %v6941 = vpop.f32.mrb[0].mxu0
        %v6942 = vadd.f32 %v6869, %v6941
        %v6943 = vpop.f32.mrb[0].mxu0
        %v6944 = vadd.f32 %v6871, %v6943
        %v6945 = vpop.f32.mrb[0].mxu0
        %v6946 = vadd.f32 %v6873, %v6945
        %v6947 = vpop.f32.mrb[0].mxu0
        %v6948 = vadd.f32 %v6875, %v6947
        %6949 = vmatprep.mubr.bf16.mxu0 %v444
        %6950 = vmatmul.mubr.bf16.gmra.mrb[0].mxu0 %v443
        %v6951 = vpop.f32.mrb[0].mxu0
        %v6952 = vadd.f32 %v6879, %v6951
        %v6953 = vpop.f32.mrb[0].mxu0
        %v6954 = vadd.f32 %v6881, %v6953
        %v6955 = vpop.f32.mrb[0].mxu0
        %v6956 = vadd.f32 %v6883, %v6955
        %v6957 = vpop.f32.mrb[0].mxu0
        %v6958 = vadd.f32 %v6885, %v6957
        %6959 = vdwg.mxu0
        %6960 = vmatprep.subr.bf16.mxu0 %v5188
        %6961 = vmatpush1.bf16.msra.mxu0 %v5187
        %6962 = vmatprep.subr.bf16.mxu0 %v5196
        %6963 = vmatpush1.bf16.msra.mxu0 %v5195
        %6964 = vmatprep.subr.bf16.mxu0 %v5204
        %6965 = vmatpush1.bf16.msra.mxu0 %v5203
        %6966 = vmatprep.subr.bf16.mxu0 %v5212
        %6967 = vmatpush1.bf16.msra.mxu0 %v5211
        %6968 = vmatprep.subr.bf16.mxu0 %v5220
        %6969 = vmatpush1.bf16.msra.mxu0 %v5219
        %6970 = vmatprep.subr.bf16.mxu0 %v5228
        %6971 = vmatpush1.bf16.msra.mxu0 %v5227
        %6972 = vmatprep.subr.bf16.mxu0 %v5236
        %6973 = vmatpush1.bf16.msra.mxu0 %v5235
        %6974 = vmatprep.subr.bf16.mxu0 %v5244
        %6975 = vmatpush1.bf16.msra.mxu0 %v5243
        %6976 = vmatprep.subr.bf16.mxu0 %v5252
        %6977 = vmatpush1.bf16.msra.mxu0 %v5251
        %6978 = vmatprep.subr.bf16.mxu0 %v5260
        %6979 = vmatpush1.bf16.msra.mxu0 %v5259
        %6980 = vmatprep.subr.bf16.mxu0 %v5268
        %6981 = vmatpush1.bf16.msra.mxu0 %v5267
        %6982 = vmatprep.subr.bf16.mxu0 %v5276
        %6983 = vmatpush1.bf16.msra.mxu0 %v5275
        %6984 = vmatprep.subr.bf16.mxu0 %v5284
        %6985 = vmatpush1.bf16.msra.mxu0 %v5283
        %6986 = vmatprep.subr.bf16.mxu0 %v5292
        %6987 = vmatpush1.bf16.msra.mxu0 %v5291
        %6988 = vmatprep.subr.bf16.mxu0 %v5300
        %6989 = vmatpush1.bf16.msra.mxu0 %v5299
        %6990 = vmatprep.subr.bf16.mxu0 %v5308
        %6991 = vmatpush1.bf16.msra.mxu0 %v5307
        %6992 = vmatprep.mubr.bf16.mxu0 %v398
        %6993 = vmatmul.mubr.bf16.gmra.mrb[0].mxu0 %v397
        %v6994 = vpop.f32.mrb[0].mxu0
        %v6995 = vadd.f32 %v6922, %v6994
        %v6996 = vpop.f32.mrb[0].mxu0
        %v6997 = vadd.f32 %v6924, %v6996
        %v6998 = vpop.f32.mrb[0].mxu0
        %v6999 = vadd.f32 %v6926, %v6998
        %v7000 = vpop.f32.mrb[0].mxu0
        %v7001 = vadd.f32 %v6928, %v7000
        %7002 = vmatprep.mubr.bf16.mxu0 %v414
        %7003 = vmatmul.mubr.bf16.gmra.mrb[0].mxu0 %v413
        %v7004 = vpop.f32.mrb[0].mxu0
        %v7005 = vadd.f32 %v6932, %v7004
        %v7006 = vpop.f32.mrb[0].mxu0
        %v7007 = vadd.f32 %v6934, %v7006
        %v7008 = vpop.f32.mrb[0].mxu0
        %v7009 = vadd.f32 %v6936, %v7008
        %v7010 = vpop.f32.mrb[0].mxu0
        %v7011 = vadd.f32 %v6938, %v7010
        %7012 = vmatprep.mubr.bf16.mxu0 %v430
        %7013 = vmatmul.mubr.bf16.gmra.mrb[0].mxu0 %v429
        %v7014 = vpop.f32.mrb[0].mxu0
        %v7015 = vadd.f32 %v6942, %v7014
        %v7016 = vpop.f32.mrb[0].mxu0
        %v7017 = vadd.f32 %v6944, %v7016
        %v7018 = vpop.f32.mrb[0].mxu0
        %v7019 = vadd.f32 %v6946, %v7018
        %v7020 = vpop.f32.mrb[0].mxu0
        %v7021 = vadd.f32 %v6948, %v7020
        %7022 = vmatprep.mubr.bf16.mxu0 %v446
        %7023 = vmatmul.mubr.bf16.gmra.mrb[0].mxu0 %v445
        %v7024 = vpop.f32.mrb[0].mxu0
        %v7025 = vadd.f32 %v6952, %v7024
        %v7026 = vpop.f32.mrb[0].mxu0
        %v7027 = vadd.f32 %v6954, %v7026
        %v7028 = vpop.f32.mrb[0].mxu0
        %v7029 = vadd.f32 %v6956, %v7028
        %v7030 = vpop.f32.mrb[0].mxu0
        %v7031 = vadd.f32 %v6958, %v7030
        %7032 = vdwg.mxu0
        %7033 = vmatprep.subr.bf16.mxu0 %v5316
        %7034 = vmatpush1.bf16.msra.mxu0 %v5315
        %7035 = vmatprep.subr.bf16.mxu0 %v5324
        %7036 = vmatpush1.bf16.msra.mxu0 %v5323
        %7037 = vmatprep.subr.bf16.mxu0 %v5332
        %7038 = vmatpush1.bf16.msra.mxu0 %v5331
        %7039 = vmatprep.subr.bf16.mxu0 %v5340
        %7040 = vmatpush1.bf16.msra.mxu0 %v5339
        %7041 = vmatprep.subr.bf16.mxu0 %v5348
        %7042 = vmatpush1.bf16.msra.mxu0 %v5347
        %7043 = vmatprep.subr.bf16.mxu0 %v5356
        %7044 = vmatpush1.bf16.msra.mxu0 %v5355
        %7045 = vmatprep.subr.bf16.mxu0 %v5364
        %7046 = vmatpush1.bf16.msra.mxu0 %v5363
        %7047 = vmatprep.subr.bf16.mxu0 %v5372
        %7048 = vmatpush1.bf16.msra.mxu0 %v5371
        %7049 = vmatprep.subr.bf16.mxu0 %v5380
        %7050 = vmatpush1.bf16.msra.mxu0 %v5379
        %7051 = vmatprep.subr.bf16.mxu0 %v5388
        %7052 = vmatpush1.bf16.msra.mxu0 %v5387
        %7053 = vmatprep.subr.bf16.mxu0 %v5396
        %7054 = vmatpush1.bf16.msra.mxu0 %v5395
        %7055 = vmatprep.subr.bf16.mxu0 %v5404
        %7056 = vmatpush1.bf16.msra.mxu0 %v5403
        %7057 = vmatprep.subr.bf16.mxu0 %v5412
        %7058 = vmatpush1.bf16.msra.mxu0 %v5411
        %7059 = vmatprep.subr.bf16.mxu0 %v5420
        %7060 = vmatpush1.bf16.msra.mxu0 %v5419
        %7061 = vmatprep.subr.bf16.mxu0 %v5428
        %7062 = vmatpush1.bf16.msra.mxu0 %v5427
        %7063 = vmatprep.subr.bf16.mxu0 %v5436
        %7064 = vmatpush1.bf16.msra.mxu0 %v5435
        %7065 = vmatprep.mubr.bf16.mxu0 %v400
        %7066 = vmatmul.mubr.bf16.gmra.mrb[0].mxu0 %v399
        %v7067 = vpop.f32.mrb[0].mxu0
        %v7068 = vadd.f32 %v6995, %v7067
        %v7069 = vpop.f32.mrb[0].mxu0
        %v7070 = vadd.f32 %v6997, %v7069
        %v7071 = vpop.f32.mrb[0].mxu0
        %v7072 = vadd.f32 %v6999, %v7071
        %v7073 = vpop.f32.mrb[0].mxu0
        %v7074 = vadd.f32 %v7001, %v7073
        %7075 = vmatprep.mubr.bf16.mxu0 %v416
        %7076 = vmatmul.mubr.bf16.gmra.mrb[0].mxu0 %v415
        %v7077 = vpop.f32.mrb[0].mxu0
        %v7078 = vadd.f32 %v7005, %v7077
        %v7079 = vpop.f32.mrb[0].mxu0
        %v7080 = vadd.f32 %v7007, %v7079
        %v7081 = vpop.f32.mrb[0].mxu0
        %v7082 = vadd.f32 %v7009, %v7081
        %v7083 = vpop.f32.mrb[0].mxu0
        %v7084 = vadd.f32 %v7011, %v7083
        %7085 = vmatprep.mubr.bf16.mxu0 %v432
        %7086 = vmatmul.mubr.bf16.gmra.mrb[0].mxu0 %v431
        %v7087 = vpop.f32.mrb[0].mxu0
        %v7088 = vadd.f32 %v7015, %v7087
        %v7089 = vpop.f32.mrb[0].mxu0
        %v7090 = vadd.f32 %v7017, %v7089
        %v7091 = vpop.f32.mrb[0].mxu0
        %v7092 = vadd.f32 %v7019, %v7091
        %v7093 = vpop.f32.mrb[0].mxu0
        %v7094 = vadd.f32 %v7021, %v7093
        %7095 = vmatprep.mubr.bf16.mxu0 %v448
        %7096 = vmatmul.mubr.bf16.gmra.mrb[0].mxu0 %v447
        %v7097 = vpop.f32.mrb[0].mxu0
        %v7098 = vadd.f32 %v7025, %v7097
        %v7099 = vpop.f32.mrb[0].mxu0
        %v7100 = vadd.f32 %v7027, %v7099
        %v7101 = vpop.f32.mrb[0].mxu0
        %v7102 = vadd.f32 %v7029, %v7101
        %v7103 = vpop.f32.mrb[0].mxu0
        %v7104 = vadd.f32 %v7031, %v7103
        %7105 = vdwg.mxu0
        %7106 = vmatprep.subr.bf16.mxu0 %v5444
        %7107 = vmatpush1.bf16.msra.mxu0 %v5443
        %7108 = vmatprep.subr.bf16.mxu0 %v5452
        %7109 = vmatpush1.bf16.msra.mxu0 %v5451
        %7110 = vmatprep.subr.bf16.mxu0 %v5460
        %7111 = vmatpush1.bf16.msra.mxu0 %v5459
        %7112 = vmatprep.subr.bf16.mxu0 %v5468
        %7113 = vmatpush1.bf16.msra.mxu0 %v5467
        %7114 = vmatprep.subr.bf16.mxu0 %v5476
        %7115 = vmatpush1.bf16.msra.mxu0 %v5475
        %7116 = vmatprep.subr.bf16.mxu0 %v5484
        %7117 = vmatpush1.bf16.msra.mxu0 %v5483
        %7118 = vmatprep.subr.bf16.mxu0 %v5492
        %7119 = vmatpush1.bf16.msra.mxu0 %v5491
        %7120 = vmatprep.subr.bf16.mxu0 %v5500
        %7121 = vmatpush1.bf16.msra.mxu0 %v5499
        %7122 = vmatprep.subr.bf16.mxu0 %v5508
        %7123 = vmatpush1.bf16.msra.mxu0 %v5507
        %7124 = vmatprep.subr.bf16.mxu0 %v5516
        %7125 = vmatpush1.bf16.msra.mxu0 %v5515
        %7126 = vmatprep.subr.bf16.mxu0 %v5524
        %7127 = vmatpush1.bf16.msra.mxu0 %v5523
        %7128 = vmatprep.subr.bf16.mxu0 %v5532
        %7129 = vmatpush1.bf16.msra.mxu0 %v5531
        %7130 = vmatprep.subr.bf16.mxu0 %v5540
        %7131 = vmatpush1.bf16.msra.mxu0 %v5539
        %7132 = vmatprep.subr.bf16.mxu0 %v5548
        %7133 = vmatpush1.bf16.msra.mxu0 %v5547
        %7134 = vmatprep.subr.bf16.mxu0 %v5556
        %7135 = vmatpush1.bf16.msra.mxu0 %v5555
        %7136 = vmatprep.subr.bf16.mxu0 %v5564
        %7137 = vmatpush1.bf16.msra.mxu0 %v5563
        %7138 = vmatprep.mubr.bf16.mxu0 %v402
        %7139 = vmatmul.mubr.bf16.gmra.mrb[0].mxu0 %v401
        %v7140 = vpop.f32.mrb[0].mxu0
        %v7141 = vadd.f32 %v7068, %v7140
        %v7142 = vpop.f32.mrb[0].mxu0
        %v7143 = vadd.f32 %v7070, %v7142
        %v7144 = vpop.f32.mrb[0].mxu0
        %v7145 = vadd.f32 %v7072, %v7144
        %v7146 = vpop.f32.mrb[0].mxu0
        %v7147 = vadd.f32 %v7074, %v7146
        %7148 = vmatprep.mubr.bf16.mxu0 %v418
        %7149 = vmatmul.mubr.bf16.gmra.mrb[0].mxu0 %v417
        %v7150 = vpop.f32.mrb[0].mxu0
        %v7151 = vadd.f32 %v7078, %v7150
        %v7152 = vpop.f32.mrb[0].mxu0
        %v7153 = vadd.f32 %v7080, %v7152
        %v7154 = vpop.f32.mrb[0].mxu0
        %v7155 = vadd.f32 %v7082, %v7154
        %v7156 = vpop.f32.mrb[0].mxu0
        %v7157 = vadd.f32 %v7084, %v7156
        %7158 = vmatprep.mubr.bf16.mxu0 %v434
        %7159 = vmatmul.mubr.bf16.gmra.mrb[0].mxu0 %v433
        %v7160 = vpop.f32.mrb[0].mxu0
        %v7161 = vadd.f32 %v7088, %v7160
        %v7162 = vpop.f32.mrb[0].mxu0
        %v7163 = vadd.f32 %v7090, %v7162
        %v7164 = vpop.f32.mrb[0].mxu0
        %v7165 = vadd.f32 %v7092, %v7164
        %v7166 = vpop.f32.mrb[0].mxu0
        %v7167 = vadd.f32 %v7094, %v7166
        %7168 = vmatprep.mubr.bf16.mxu0 %v450
        %7169 = vmatmul.mubr.bf16.gmra.mrb[0].mxu0 %v449
        %v7170 = vpop.f32.mrb[0].mxu0
        %v7171 = vadd.f32 %v7098, %v7170
        %v7172 = vpop.f32.mrb[0].mxu0
        %v7173 = vadd.f32 %v7100, %v7172
        %v7174 = vpop.f32.mrb[0].mxu0
        %v7175 = vadd.f32 %v7102, %v7174
        %v7176 = vpop.f32.mrb[0].mxu0
        %v7177 = vadd.f32 %v7104, %v7176
        %7178 = vdwg.mxu0
        %7179 = vmatprep.subr.bf16.mxu0 %v4550
        %7180 = vmatpush1.bf16.msra.mxu0 %v4549
        %7181 = vmatprep.subr.bf16.mxu0 %v4558
        %7182 = vmatpush1.bf16.msra.mxu0 %v4557
        %7183 = vmatprep.subr.bf16.mxu0 %v4566
        %7184 = vmatpush1.bf16.msra.mxu0 %v4565
        %7185 = vmatprep.subr.bf16.mxu0 %v4574
        %7186 = vmatpush1.bf16.msra.mxu0 %v4573
        %7187 = vmatprep.subr.bf16.mxu0 %v4582
        %7188 = vmatpush1.bf16.msra.mxu0 %v4581
        %7189 = vmatprep.subr.bf16.mxu0 %v4590
        %7190 = vmatpush1.bf16.msra.mxu0 %v4589
        %7191 = vmatprep.subr.bf16.mxu0 %v4598
        %7192 = vmatpush1.bf16.msra.mxu0 %v4597
        %7193 = vmatprep.subr.bf16.mxu0 %v4606
        %7194 = vmatpush1.bf16.msra.mxu0 %v4605
        %7195 = vmatprep.subr.bf16.mxu0 %v4614
        %7196 = vmatpush1.bf16.msra.mxu0 %v4613
        %7197 = vmatprep.subr.bf16.mxu0 %v4622
        %7198 = vmatpush1.bf16.msra.mxu0 %v4621
        %7199 = vmatprep.subr.bf16.mxu0 %v4630
        %7200 = vmatpush1.bf16.msra.mxu0 %v4629
        %7201 = vmatprep.subr.bf16.mxu0 %v4638
        %7202 = vmatpush1.bf16.msra.mxu0 %v4637
        %7203 = vmatprep.subr.bf16.mxu0 %v4646
        %7204 = vmatpush1.bf16.msra.mxu0 %v4645
        %7205 = vmatprep.subr.bf16.mxu0 %v4654
        %7206 = vmatpush1.bf16.msra.mxu0 %v4653
        %7207 = vmatprep.subr.bf16.mxu0 %v4662
        %7208 = vmatpush1.bf16.msra.mxu0 %v4661
        %7209 = vmatprep.subr.bf16.mxu0 %v4670
        %7210 = vmatpush1.bf16.msra.mxu0 %v4669
        %7211 = vmatprep.mubr.bf16.mxu0 %v388
        %7212 = vmatmul.mubr.bf16.gmra.mrb[0].mxu0 %v387
        %v7213 = vpop.f32.mrb[0].mxu0
        %v7214 = vadd.f32 0.0, %v7213
        %v7215 = vpop.f32.mrb[0].mxu0
        %v7216 = vadd.f32 0.0, %v7215
        %v7217 = vpop.f32.mrb[0].mxu0
        %v7218 = vadd.f32 0.0, %v7217
        %v7219 = vpop.f32.mrb[0].mxu0
        %v7220 = vadd.f32 0.0, %v7219
        %7221 = vmatprep.mubr.bf16.mxu0 %v404
        %7222 = vmatmul.mubr.bf16.gmra.mrb[0].mxu0 %v403
        %v7223 = vpop.f32.mrb[0].mxu0
        %v7224 = vadd.f32 0.0, %v7223
        %v7225 = vpop.f32.mrb[0].mxu0
        %v7226 = vadd.f32 0.0, %v7225
        %v7227 = vpop.f32.mrb[0].mxu0
        %v7228 = vadd.f32 0.0, %v7227
        %v7229 = vpop.f32.mrb[0].mxu0
        %v7230 = vadd.f32 0.0, %v7229
        %7231 = vmatprep.mubr.bf16.mxu0 %v420
        %7232 = vmatmul.mubr.bf16.gmra.mrb[0].mxu0 %v419
        %v7233 = vpop.f32.mrb[0].mxu0
        %v7234 = vadd.f32 0.0, %v7233
        %v7235 = vpop.f32.mrb[0].mxu0
        %v7236 = vadd.f32 0.0, %v7235
        %v7237 = vpop.f32.mrb[0].mxu0
        %v7238 = vadd.f32 0.0, %v7237
        %v7239 = vpop.f32.mrb[0].mxu0
        %v7240 = vadd.f32 0.0, %v7239
        %7241 = vmatprep.mubr.bf16.mxu0 %v436
        %7242 = vmatmul.mubr.bf16.gmra.mrb[0].mxu0 %v435
        %v7243 = vpop.f32.mrb[0].mxu0
        %v7244 = vadd.f32 0.0, %v7243
        %v7245 = vpop.f32.mrb[0].mxu0
        %v7246 = vadd.f32 0.0, %v7245
        %v7247 = vpop.f32.mrb[0].mxu0
        %v7248 = vadd.f32 0.0, %v7247
        %v7249 = vpop.f32.mrb[0].mxu0
        %v7250 = vadd.f32 0.0, %v7249
        %7251 = vdwg.mxu0
        %7252 = vmatprep.subr.bf16.mxu0 %v4678
        %7253 = vmatpush1.bf16.msra.mxu0 %v4677
        %7254 = vmatprep.subr.bf16.mxu0 %v4686
        %7255 = vmatpush1.bf16.msra.mxu0 %v4685
        %7256 = vmatprep.subr.bf16.mxu0 %v4694
        %7257 = vmatpush1.bf16.msra.mxu0 %v4693
        %7258 = vmatprep.subr.bf16.mxu0 %v4702
        %7259 = vmatpush1.bf16.msra.mxu0 %v4701
        %7260 = vmatprep.subr.bf16.mxu0 %v4710
        %7261 = vmatpush1.bf16.msra.mxu0 %v4709
        %7262 = vmatprep.subr.bf16.mxu0 %v4718
        %7263 = vmatpush1.bf16.msra.mxu0 %v4717
        %7264 = vmatprep.subr.bf16.mxu0 %v4726
        %7265 = vmatpush1.bf16.msra.mxu0 %v4725
        %7266 = vmatprep.subr.bf16.mxu0 %v4734
        %7267 = vmatpush1.bf16.msra.mxu0 %v4733
        %7268 = vmatprep.subr.bf16.mxu0 %v4742
        %7269 = vmatpush1.bf16.msra.mxu0 %v4741
        %7270 = vmatprep.subr.bf16.mxu0 %v4750
        %7271 = vmatpush1.bf16.msra.mxu0 %v4749
        %7272 = vmatprep.subr.bf16.mxu0 %v4758
        %7273 = vmatpush1.bf16.msra.mxu0 %v4757
        %7274 = vmatprep.subr.bf16.mxu0 %v4766
        %7275 = vmatpush1.bf16.msra.mxu0 %v4765
        %7276 = vmatprep.subr.bf16.mxu0 %v4774
        %7277 = vmatpush1.bf16.msra.mxu0 %v4773
        %7278 = vmatprep.subr.bf16.mxu0 %v4782
        %7279 = vmatpush1.bf16.msra.mxu0 %v4781
        %7280 = vmatprep.subr.bf16.mxu0 %v4790
        %7281 = vmatpush1.bf16.msra.mxu0 %v4789
        %7282 = vmatprep.subr.bf16.mxu0 %v4798
        %7283 = vmatpush1.bf16.msra.mxu0 %v4797
        %7284 = vmatprep.mubr.bf16.mxu0 %v390
        %7285 = vmatmul.mubr.bf16.gmra.mrb[0].mxu0 %v389
        %v7286 = vpop.f32.mrb[0].mxu0
        %v7287 = vadd.f32 %v7214, %v7286
        %v7288 = vpop.f32.mrb[0].mxu0
        %v7289 = vadd.f32 %v7216, %v7288
        %v7290 = vpop.f32.mrb[0].mxu0
        %v7291 = vadd.f32 %v7218, %v7290
        %v7292 = vpop.f32.mrb[0].mxu0
        %v7293 = vadd.f32 %v7220, %v7292
        %7294 = vmatprep.mubr.bf16.mxu0 %v406
        %7295 = vmatmul.mubr.bf16.gmra.mrb[0].mxu0 %v405
        %v7296 = vpop.f32.mrb[0].mxu0
        %v7297 = vadd.f32 %v7224, %v7296
        %v7298 = vpop.f32.mrb[0].mxu0
        %v7299 = vadd.f32 %v7226, %v7298
        %v7300 = vpop.f32.mrb[0].mxu0
        %v7301 = vadd.f32 %v7228, %v7300
        %v7302 = vpop.f32.mrb[0].mxu0
        %v7303 = vadd.f32 %v7230, %v7302
        %7304 = vmatprep.mubr.bf16.mxu0 %v422
        %7305 = vmatmul.mubr.bf16.gmra.mrb[0].mxu0 %v421
        %v7306 = vpop.f32.mrb[0].mxu0
        %v7307 = vadd.f32 %v7234, %v7306
        %v7308 = vpop.f32.mrb[0].mxu0
        %v7309 = vadd.f32 %v7236, %v7308
        %v7310 = vpop.f32.mrb[0].mxu0
        %v7311 = vadd.f32 %v7238, %v7310
        %v7312 = vpop.f32.mrb[0].mxu0
        %v7313 = vadd.f32 %v7240, %v7312
        %7314 = vmatprep.mubr.bf16.mxu0 %v438
        %7315 = vmatmul.mubr.bf16.gmra.mrb[0].mxu0 %v437
        %v7316 = vpop.f32.mrb[0].mxu0
        %v7317 = vadd.f32 %v7244, %v7316
        %v7318 = vpop.f32.mrb[0].mxu0
        %v7319 = vadd.f32 %v7246, %v7318
        %v7320 = vpop.f32.mrb[0].mxu0
        %v7321 = vadd.f32 %v7248, %v7320
        %v7322 = vpop.f32.mrb[0].mxu0
        %v7323 = vadd.f32 %v7250, %v7322
        %7324 = vdwg.mxu0
        %7325 = vmatprep.subr.bf16.mxu0 %v4806
        %7326 = vmatpush1.bf16.msra.mxu0 %v4805
        %7327 = vmatprep.subr.bf16.mxu0 %v4814
        %7328 = vmatpush1.bf16.msra.mxu0 %v4813
        %7329 = vmatprep.subr.bf16.mxu0 %v4822
        %7330 = vmatpush1.bf16.msra.mxu0 %v4821
        %7331 = vmatprep.subr.bf16.mxu0 %v4830
        %7332 = vmatpush1.bf16.msra.mxu0 %v4829
        %7333 = vmatprep.subr.bf16.mxu0 %v4838
        %7334 = vmatpush1.bf16.msra.mxu0 %v4837
        %7335 = vmatprep.subr.bf16.mxu0 %v4846
        %7336 = vmatpush1.bf16.msra.mxu0 %v4845
        %7337 = vmatprep.subr.bf16.mxu0 %v4854
        %7338 = vmatpush1.bf16.msra.mxu0 %v4853
        %7339 = vmatprep.subr.bf16.mxu0 %v4862
        %7340 = vmatpush1.bf16.msra.mxu0 %v4861
        %7341 = vmatprep.subr.bf16.mxu0 %v4870
        %7342 = vmatpush1.bf16.msra.mxu0 %v4869
        %7343 = vmatprep.subr.bf16.mxu0 %v4878
        %7344 = vmatpush1.bf16.msra.mxu0 %v4877
        %7345 = vmatprep.subr.bf16.mxu0 %v4886
        %7346 = vmatpush1.bf16.msra.mxu0 %v4885
        %7347 = vmatprep.subr.bf16.mxu0 %v4894
        %7348 = vmatpush1.bf16.msra.mxu0 %v4893
        %7349 = vmatprep.subr.bf16.mxu0 %v4902
        %7350 = vmatpush1.bf16.msra.mxu0 %v4901
        %7351 = vmatprep.subr.bf16.mxu0 %v4910
        %7352 = vmatpush1.bf16.msra.mxu0 %v4909
        %7353 = vmatprep.subr.bf16.mxu0 %v4918
        %7354 = vmatpush1.bf16.msra.mxu0 %v4917
        %7355 = vmatprep.subr.bf16.mxu0 %v4926
        %7356 = vmatpush1.bf16.msra.mxu0 %v4925
        %7357 = vmatprep.mubr.bf16.mxu0 %v392
        %7358 = vmatmul.mubr.bf16.gmra.mrb[0].mxu0 %v391
        %v7359 = vpop.f32.mrb[0].mxu0
        %v7360 = vadd.f32 %v7287, %v7359
        %v7361 = vpop.f32.mrb[0].mxu0
        %v7362 = vadd.f32 %v7289, %v7361
        %v7363 = vpop.f32.mrb[0].mxu0
        %v7364 = vadd.f32 %v7291, %v7363
        %v7365 = vpop.f32.mrb[0].mxu0
        %v7366 = vadd.f32 %v7293, %v7365
        %7367 = vmatprep.mubr.bf16.mxu0 %v408
        %7368 = vmatmul.mubr.bf16.gmra.mrb[0].mxu0 %v407
        %v7369 = vpop.f32.mrb[0].mxu0
        %v7370 = vadd.f32 %v7297, %v7369
        %v7371 = vpop.f32.mrb[0].mxu0
        %v7372 = vadd.f32 %v7299, %v7371
        %v7373 = vpop.f32.mrb[0].mxu0
        %v7374 = vadd.f32 %v7301, %v7373
        %v7375 = vpop.f32.mrb[0].mxu0
        %v7376 = vadd.f32 %v7303, %v7375
        %7377 = vmatprep.mubr.bf16.mxu0 %v424
        %7378 = vmatmul.mubr.bf16.gmra.mrb[0].mxu0 %v423
        %v7379 = vpop.f32.mrb[0].mxu0
        %v7380 = vadd.f32 %v7307, %v7379
        %v7381 = vpop.f32.mrb[0].mxu0
        %v7382 = vadd.f32 %v7309, %v7381
        %v7383 = vpop.f32.mrb[0].mxu0
        %v7384 = vadd.f32 %v7311, %v7383
        %v7385 = vpop.f32.mrb[0].mxu0
        %v7386 = vadd.f32 %v7313, %v7385
        %7387 = vmatprep.mubr.bf16.mxu0 %v440
        %7388 = vmatmul.mubr.bf16.gmra.mrb[0].mxu0 %v439
        %v7389 = vpop.f32.mrb[0].mxu0
        %v7390 = vadd.f32 %v7317, %v7389
        %v7391 = vpop.f32.mrb[0].mxu0
        %v7392 = vadd.f32 %v7319, %v7391
        %v7393 = vpop.f32.mrb[0].mxu0
        %v7394 = vadd.f32 %v7321, %v7393
        %v7395 = vpop.f32.mrb[0].mxu0
        %v7396 = vadd.f32 %v7323, %v7395
        %7397 = vdwg.mxu0
        %7398 = vmatprep.subr.bf16.mxu0 %v4934
        %7399 = vmatpush1.bf16.msra.mxu0 %v4933
        %7400 = vmatprep.subr.bf16.mxu0 %v4942
        %7401 = vmatpush1.bf16.msra.mxu0 %v4941
        %7402 = vmatprep.subr.bf16.mxu0 %v4950
        %7403 = vmatpush1.bf16.msra.mxu0 %v4949
        %7404 = vmatprep.subr.bf16.mxu0 %v4958
        %7405 = vmatpush1.bf16.msra.mxu0 %v4957
        %7406 = vmatprep.subr.bf16.mxu0 %v4966
        %7407 = vmatpush1.bf16.msra.mxu0 %v4965
        %7408 = vmatprep.subr.bf16.mxu0 %v4974
        %7409 = vmatpush1.bf16.msra.mxu0 %v4973
        %7410 = vmatprep.subr.bf16.mxu0 %v4982
        %7411 = vmatpush1.bf16.msra.mxu0 %v4981
        %7412 = vmatprep.subr.bf16.mxu0 %v4990
        %7413 = vmatpush1.bf16.msra.mxu0 %v4989
        %7414 = vmatprep.subr.bf16.mxu0 %v4998
        %7415 = vmatpush1.bf16.msra.mxu0 %v4997
        %7416 = vmatprep.subr.bf16.mxu0 %v5006
        %7417 = vmatpush1.bf16.msra.mxu0 %v5005
        %7418 = vmatprep.subr.bf16.mxu0 %v5014
        %7419 = vmatpush1.bf16.msra.mxu0 %v5013
        %7420 = vmatprep.subr.bf16.mxu0 %v5022
        %7421 = vmatpush1.bf16.msra.mxu0 %v5021
        %7422 = vmatprep.subr.bf16.mxu0 %v5030
        %7423 = vmatpush1.bf16.msra.mxu0 %v5029
        %7424 = vmatprep.subr.bf16.mxu0 %v5038
        %7425 = vmatpush1.bf16.msra.mxu0 %v5037
        %7426 = vmatprep.subr.bf16.mxu0 %v5046
        %7427 = vmatpush1.bf16.msra.mxu0 %v5045
        %7428 = vmatprep.subr.bf16.mxu0 %v5054
        %7429 = vmatpush1.bf16.msra.mxu0 %v5053
        %7430 = vmatprep.mubr.bf16.mxu0 %v394
        %7431 = vmatmul.mubr.bf16.gmra.mrb[0].mxu0 %v393
        %v7432 = vpop.f32.mrb[0].mxu0
        %v7433 = vadd.f32 %v7360, %v7432
        %v7434 = vpop.f32.mrb[0].mxu0
        %v7435 = vadd.f32 %v7362, %v7434
        %v7436 = vpop.f32.mrb[0].mxu0
        %v7437 = vadd.f32 %v7364, %v7436
        %v7438 = vpop.f32.mrb[0].mxu0
        %v7439 = vadd.f32 %v7366, %v7438
        %7440 = vmatprep.mubr.bf16.mxu0 %v410
        %7441 = vmatmul.mubr.bf16.gmra.mrb[0].mxu0 %v409
        %v7442 = vpop.f32.mrb[0].mxu0
        %v7443 = vadd.f32 %v7370, %v7442
        %v7444 = vpop.f32.mrb[0].mxu0
        %v7445 = vadd.f32 %v7372, %v7444
        %v7446 = vpop.f32.mrb[0].mxu0
        %v7447 = vadd.f32 %v7374, %v7446
        %v7448 = vpop.f32.mrb[0].mxu0
        %v7449 = vadd.f32 %v7376, %v7448
        %7450 = vmatprep.mubr.bf16.mxu0 %v426
        %7451 = vmatmul.mubr.bf16.gmra.mrb[0].mxu0 %v425
        %v7452 = vpop.f32.mrb[0].mxu0
        %v7453 = vadd.f32 %v7380, %v7452
        %v7454 = vpop.f32.mrb[0].mxu0
        %v7455 = vadd.f32 %v7382, %v7454
        %v7456 = vpop.f32.mrb[0].mxu0
        %v7457 = vadd.f32 %v7384, %v7456
        %v7458 = vpop.f32.mrb[0].mxu0
        %v7459 = vadd.f32 %v7386, %v7458
        %7460 = vmatprep.mubr.bf16.mxu0 %v442
        %7461 = vmatmul.mubr.bf16.gmra.mrb[0].mxu0 %v441
        %v7462 = vpop.f32.mrb[0].mxu0
        %v7463 = vadd.f32 %v7390, %v7462
        %v7464 = vpop.f32.mrb[0].mxu0
        %v7465 = vadd.f32 %v7392, %v7464
        %v7466 = vpop.f32.mrb[0].mxu0
        %v7467 = vadd.f32 %v7394, %v7466
        %v7468 = vpop.f32.mrb[0].mxu0
        %v7469 = vadd.f32 %v7396, %v7468
        %7470 = vdwg.mxu0
        %7471 = vmatprep.subr.bf16.mxu0 %v5062
        %7472 = vmatpush1.bf16.msra.mxu0 %v5061
        %7473 = vmatprep.subr.bf16.mxu0 %v5070
        %7474 = vmatpush1.bf16.msra.mxu0 %v5069
        %7475 = vmatprep.subr.bf16.mxu0 %v5078
        %7476 = vmatpush1.bf16.msra.mxu0 %v5077
        %7477 = vmatprep.subr.bf16.mxu0 %v5086
        %7478 = vmatpush1.bf16.msra.mxu0 %v5085
        %7479 = vmatprep.subr.bf16.mxu0 %v5094
        %7480 = vmatpush1.bf16.msra.mxu0 %v5093
        %7481 = vmatprep.subr.bf16.mxu0 %v5102
        %7482 = vmatpush1.bf16.msra.mxu0 %v5101
        %7483 = vmatprep.subr.bf16.mxu0 %v5110
        %7484 = vmatpush1.bf16.msra.mxu0 %v5109
        %7485 = vmatprep.subr.bf16.mxu0 %v5118
        %7486 = vmatpush1.bf16.msra.mxu0 %v5117
        %7487 = vmatprep.subr.bf16.mxu0 %v5126
        %7488 = vmatpush1.bf16.msra.mxu0 %v5125
        %7489 = vmatprep.subr.bf16.mxu0 %v5134
        %7490 = vmatpush1.bf16.msra.mxu0 %v5133
        %7491 = vmatprep.subr.bf16.mxu0 %v5142
        %7492 = vmatpush1.bf16.msra.mxu0 %v5141
        %7493 = vmatprep.subr.bf16.mxu0 %v5150
        %7494 = vmatpush1.bf16.msra.mxu0 %v5149
        %7495 = vmatprep.subr.bf16.mxu0 %v5158
        %7496 = vmatpush1.bf16.msra.mxu0 %v5157
        %7497 = vmatprep.subr.bf16.mxu0 %v5166
        %7498 = vmatpush1.bf16.msra.mxu0 %v5165
        %7499 = vmatprep.subr.bf16.mxu0 %v5174
        %7500 = vmatpush1.bf16.msra.mxu0 %v5173
        %7501 = vmatprep.subr.bf16.mxu0 %v5182
        %7502 = vmatpush1.bf16.msra.mxu0 %v5181
        %7503 = vmatprep.mubr.bf16.mxu0 %v396
        %7504 = vmatmul.mubr.bf16.gmra.mrb[0].mxu0 %v395
        %v7505 = vpop.f32.mrb[0].mxu0
        %v7506 = vadd.f32 %v7433, %v7505
        %v7507 = vpop.f32.mrb[0].mxu0
        %v7508 = vadd.f32 %v7435, %v7507
        %v7509 = vpop.f32.mrb[0].mxu0
        %v7510 = vadd.f32 %v7437, %v7509
        %v7511 = vpop.f32.mrb[0].mxu0
        %v7512 = vadd.f32 %v7439, %v7511
        %7513 = vmatprep.mubr.bf16.mxu0 %v412
        %7514 = vmatmul.mubr.bf16.gmra.mrb[0].mxu0 %v411
        %v7515 = vpop.f32.mrb[0].mxu0
        %v7516 = vadd.f32 %v7443, %v7515
        %v7517 = vpop.f32.mrb[0].mxu0
        %v7518 = vadd.f32 %v7445, %v7517
        %v7519 = vpop.f32.mrb[0].mxu0
        %v7520 = vadd.f32 %v7447, %v7519
        %v7521 = vpop.f32.mrb[0].mxu0
        %v7522 = vadd.f32 %v7449, %v7521
        %7523 = vmatprep.mubr.bf16.mxu0 %v428
        %7524 = vmatmul.mubr.bf16.gmra.mrb[0].mxu0 %v427
        %v7525 = vpop.f32.mrb[0].mxu0
        %v7526 = vadd.f32 %v7453, %v7525
        %v7527 = vpop.f32.mrb[0].mxu0
        %v7528 = vadd.f32 %v7455, %v7527
        %v7529 = vpop.f32.mrb[0].mxu0
        %v7530 = vadd.f32 %v7457, %v7529
        %v7531 = vpop.f32.mrb[0].mxu0
        %v7532 = vadd.f32 %v7459, %v7531
        %7533 = vmatprep.mubr.bf16.mxu0 %v444
        %7534 = vmatmul.mubr.bf16.gmra.mrb[0].mxu0 %v443
        %v7535 = vpop.f32.mrb[0].mxu0
        %v7536 = vadd.f32 %v7463, %v7535
        %v7537 = vpop.f32.mrb[0].mxu0
        %v7538 = vadd.f32 %v7465, %v7537
        %v7539 = vpop.f32.mrb[0].mxu0
        %v7540 = vadd.f32 %v7467, %v7539
        %v7541 = vpop.f32.mrb[0].mxu0
        %v7542 = vadd.f32 %v7469, %v7541
        %7543 = vdwg.mxu0
        %7544 = vmatprep.subr.bf16.mxu0 %v5190
        %7545 = vmatpush1.bf16.msra.mxu0 %v5189
        %7546 = vmatprep.subr.bf16.mxu0 %v5198
        %7547 = vmatpush1.bf16.msra.mxu0 %v5197
        %7548 = vmatprep.subr.bf16.mxu0 %v5206
        %7549 = vmatpush1.bf16.msra.mxu0 %v5205
        %7550 = vmatprep.subr.bf16.mxu0 %v5214
        %7551 = vmatpush1.bf16.msra.mxu0 %v5213
        %7552 = vmatprep.subr.bf16.mxu0 %v5222
        %7553 = vmatpush1.bf16.msra.mxu0 %v5221
        %7554 = vmatprep.subr.bf16.mxu0 %v5230
        %7555 = vmatpush1.bf16.msra.mxu0 %v5229
        %7556 = vmatprep.subr.bf16.mxu0 %v5238
        %7557 = vmatpush1.bf16.msra.mxu0 %v5237
        %7558 = vmatprep.subr.bf16.mxu0 %v5246
        %7559 = vmatpush1.bf16.msra.mxu0 %v5245
        %7560 = vmatprep.subr.bf16.mxu0 %v5254
        %7561 = vmatpush1.bf16.msra.mxu0 %v5253
        %7562 = vmatprep.subr.bf16.mxu0 %v5262
        %7563 = vmatpush1.bf16.msra.mxu0 %v5261
        %7564 = vmatprep.subr.bf16.mxu0 %v5270
        %7565 = vmatpush1.bf16.msra.mxu0 %v5269
        %7566 = vmatprep.subr.bf16.mxu0 %v5278
        %7567 = vmatpush1.bf16.msra.mxu0 %v5277
        %7568 = vmatprep.subr.bf16.mxu0 %v5286
        %7569 = vmatpush1.bf16.msra.mxu0 %v5285
        %7570 = vmatprep.subr.bf16.mxu0 %v5294
        %7571 = vmatpush1.bf16.msra.mxu0 %v5293
        %7572 = vmatprep.subr.bf16.mxu0 %v5302
        %7573 = vmatpush1.bf16.msra.mxu0 %v5301
        %7574 = vmatprep.subr.bf16.mxu0 %v5310
        %7575 = vmatpush1.bf16.msra.mxu0 %v5309
        %7576 = vmatprep.mubr.bf16.mxu0 %v398
        %7577 = vmatmul.mubr.bf16.gmra.mrb[0].mxu0 %v397
        %v7578 = vpop.f32.mrb[0].mxu0
        %v7579 = vadd.f32 %v7506, %v7578
        %v7580 = vpop.f32.mrb[0].mxu0
        %v7581 = vadd.f32 %v7508, %v7580
        %v7582 = vpop.f32.mrb[0].mxu0
        %v7583 = vadd.f32 %v7510, %v7582
        %v7584 = vpop.f32.mrb[0].mxu0
        %v7585 = vadd.f32 %v7512, %v7584
        %7586 = vmatprep.mubr.bf16.mxu0 %v414
        %7587 = vmatmul.mubr.bf16.gmra.mrb[0].mxu0 %v413
        %v7588 = vpop.f32.mrb[0].mxu0
        %v7589 = vadd.f32 %v7516, %v7588
        %v7590 = vpop.f32.mrb[0].mxu0
        %v7591 = vadd.f32 %v7518, %v7590
        %v7592 = vpop.f32.mrb[0].mxu0
        %v7593 = vadd.f32 %v7520, %v7592
        %v7594 = vpop.f32.mrb[0].mxu0
        %v7595 = vadd.f32 %v7522, %v7594
        %7596 = vmatprep.mubr.bf16.mxu0 %v430
        %7597 = vmatmul.mubr.bf16.gmra.mrb[0].mxu0 %v429
        %v7598 = vpop.f32.mrb[0].mxu0
        %v7599 = vadd.f32 %v7526, %v7598
        %v7600 = vpop.f32.mrb[0].mxu0
        %v7601 = vadd.f32 %v7528, %v7600
        %v7602 = vpop.f32.mrb[0].mxu0
        %v7603 = vadd.f32 %v7530, %v7602
        %v7604 = vpop.f32.mrb[0].mxu0
        %v7605 = vadd.f32 %v7532, %v7604
        %7606 = vmatprep.mubr.bf16.mxu0 %v446
        %7607 = vmatmul.mubr.bf16.gmra.mrb[0].mxu0 %v445
        %v7608 = vpop.f32.mrb[0].mxu0
        %v7609 = vadd.f32 %v7536, %v7608
        %v7610 = vpop.f32.mrb[0].mxu0
        %v7611 = vadd.f32 %v7538, %v7610
        %v7612 = vpop.f32.mrb[0].mxu0
        %v7613 = vadd.f32 %v7540, %v7612
        %v7614 = vpop.f32.mrb[0].mxu0
        %v7615 = vadd.f32 %v7542, %v7614
        %7616 = vdwg.mxu0
        %7617 = vmatprep.subr.bf16.mxu0 %v5318
        %7618 = vmatpush1.bf16.msra.mxu0 %v5317
        %7619 = vmatprep.subr.bf16.mxu0 %v5326
        %7620 = vmatpush1.bf16.msra.mxu0 %v5325
        %7621 = vmatprep.subr.bf16.mxu0 %v5334
        %7622 = vmatpush1.bf16.msra.mxu0 %v5333
        %7623 = vmatprep.subr.bf16.mxu0 %v5342
        %7624 = vmatpush1.bf16.msra.mxu0 %v5341
        %7625 = vmatprep.subr.bf16.mxu0 %v5350
        %7626 = vmatpush1.bf16.msra.mxu0 %v5349
        %7627 = vmatprep.subr.bf16.mxu0 %v5358
        %7628 = vmatpush1.bf16.msra.mxu0 %v5357
        %7629 = vmatprep.subr.bf16.mxu0 %v5366
        %7630 = vmatpush1.bf16.msra.mxu0 %v5365
        %7631 = vmatprep.subr.bf16.mxu0 %v5374
        %7632 = vmatpush1.bf16.msra.mxu0 %v5373
        %7633 = vmatprep.subr.bf16.mxu0 %v5382
        %7634 = vmatpush1.bf16.msra.mxu0 %v5381
        %7635 = vmatprep.subr.bf16.mxu0 %v5390
        %7636 = vmatpush1.bf16.msra.mxu0 %v5389
        %7637 = vmatprep.subr.bf16.mxu0 %v5398
        %7638 = vmatpush1.bf16.msra.mxu0 %v5397
        %7639 = vmatprep.subr.bf16.mxu0 %v5406
        %7640 = vmatpush1.bf16.msra.mxu0 %v5405
        %7641 = vmatprep.subr.bf16.mxu0 %v5414
        %7642 = vmatpush1.bf16.msra.mxu0 %v5413
        %7643 = vmatprep.subr.bf16.mxu0 %v5422
        %7644 = vmatpush1.bf16.msra.mxu0 %v5421
        %7645 = vmatprep.subr.bf16.mxu0 %v5430
        %7646 = vmatpush1.bf16.msra.mxu0 %v5429
        %7647 = vmatprep.subr.bf16.mxu0 %v5438
        %7648 = vmatpush1.bf16.msra.mxu0 %v5437
        %7649 = vmatprep.mubr.bf16.mxu0 %v400
        %7650 = vmatmul.mubr.bf16.gmra.mrb[0].mxu0 %v399
        %v7651 = vpop.f32.mrb[0].mxu0
        %v7652 = vadd.f32 %v7579, %v7651
        %v7653 = vpop.f32.mrb[0].mxu0
        %v7654 = vadd.f32 %v7581, %v7653
        %v7655 = vpop.f32.mrb[0].mxu0
        %v7656 = vadd.f32 %v7583, %v7655
        %v7657 = vpop.f32.mrb[0].mxu0
        %v7658 = vadd.f32 %v7585, %v7657
        %7659 = vmatprep.mubr.bf16.mxu0 %v416
        %7660 = vmatmul.mubr.bf16.gmra.mrb[0].mxu0 %v415
        %v7661 = vpop.f32.mrb[0].mxu0
        %v7662 = vadd.f32 %v7589, %v7661
        %v7663 = vpop.f32.mrb[0].mxu0
        %v7664 = vadd.f32 %v7591, %v7663
        %v7665 = vpop.f32.mrb[0].mxu0
        %v7666 = vadd.f32 %v7593, %v7665
        %v7667 = vpop.f32.mrb[0].mxu0
        %v7668 = vadd.f32 %v7595, %v7667
        %7669 = vmatprep.mubr.bf16.mxu0 %v432
        %7670 = vmatmul.mubr.bf16.gmra.mrb[0].mxu0 %v431
        %v7671 = vpop.f32.mrb[0].mxu0
        %v7672 = vadd.f32 %v7599, %v7671
        %v7673 = vpop.f32.mrb[0].mxu0
        %v7674 = vadd.f32 %v7601, %v7673
        %v7675 = vpop.f32.mrb[0].mxu0
        %v7676 = vadd.f32 %v7603, %v7675
        %v7677 = vpop.f32.mrb[0].mxu0
        %v7678 = vadd.f32 %v7605, %v7677
        %7679 = vmatprep.mubr.bf16.mxu0 %v448
        %7680 = vmatmul.mubr.bf16.gmra.mrb[0].mxu0 %v447
        %v7681 = vpop.f32.mrb[0].mxu0
        %v7682 = vadd.f32 %v7609, %v7681
        %v7683 = vpop.f32.mrb[0].mxu0
        %v7684 = vadd.f32 %v7611, %v7683
        %v7685 = vpop.f32.mrb[0].mxu0
        %v7686 = vadd.f32 %v7613, %v7685
        %v7687 = vpop.f32.mrb[0].mxu0
        %v7688 = vadd.f32 %v7615, %v7687
        %7689 = vdwg.mxu0
        %7690 = vmatprep.subr.bf16.mxu0 %v5446
        %7691 = vmatpush1.bf16.msra.mxu0 %v5445
        %7692 = vmatprep.subr.bf16.mxu0 %v5454
        %7693 = vmatpush1.bf16.msra.mxu0 %v5453
        %7694 = vmatprep.subr.bf16.mxu0 %v5462
        %7695 = vmatpush1.bf16.msra.mxu0 %v5461
        %7696 = vmatprep.subr.bf16.mxu0 %v5470
        %7697 = vmatpush1.bf16.msra.mxu0 %v5469
        %7698 = vmatprep.subr.bf16.mxu0 %v5478
        %7699 = vmatpush1.bf16.msra.mxu0 %v5477
        %7700 = vmatprep.subr.bf16.mxu0 %v5486
        %7701 = vmatpush1.bf16.msra.mxu0 %v5485
        %7702 = vmatprep.subr.bf16.mxu0 %v5494
        %7703 = vmatpush1.bf16.msra.mxu0 %v5493
        %7704 = vmatprep.subr.bf16.mxu0 %v5502
        %7705 = vmatpush1.bf16.msra.mxu0 %v5501
        %7706 = vmatprep.subr.bf16.mxu0 %v5510
        %7707 = vmatpush1.bf16.msra.mxu0 %v5509
        %7708 = vmatprep.subr.bf16.mxu0 %v5518
        %7709 = vmatpush1.bf16.msra.mxu0 %v5517
        %7710 = vmatprep.subr.bf16.mxu0 %v5526
        %7711 = vmatpush1.bf16.msra.mxu0 %v5525
        %7712 = vmatprep.subr.bf16.mxu0 %v5534
        %7713 = vmatpush1.bf16.msra.mxu0 %v5533
        %7714 = vmatprep.subr.bf16.mxu0 %v5542
        %7715 = vmatpush1.bf16.msra.mxu0 %v5541
        %7716 = vmatprep.subr.bf16.mxu0 %v5550
        %7717 = vmatpush1.bf16.msra.mxu0 %v5549
        %7718 = vmatprep.subr.bf16.mxu0 %v5558
        %7719 = vmatpush1.bf16.msra.mxu0 %v5557
        %7720 = vmatprep.subr.bf16.mxu0 %v5566
        %7721 = vmatpush1.bf16.msra.mxu0 %v5565
        %7722 = vmatprep.mubr.bf16.mxu0 %v402
        %7723 = vmatmul.mubr.bf16.gmra.mrb[0].mxu0 %v401
        %v7724 = vpop.f32.mrb[0].mxu0
        %v7725 = vadd.f32 %v7652, %v7724
        %v7726 = vpop.f32.mrb[0].mxu0
        %v7727 = vadd.f32 %v7654, %v7726
        %v7728 = vpop.f32.mrb[0].mxu0
        %v7729 = vadd.f32 %v7656, %v7728
        %v7730 = vpop.f32.mrb[0].mxu0
        %v7731 = vadd.f32 %v7658, %v7730
        %7732 = vmatprep.mubr.bf16.mxu0 %v418
        %7733 = vmatmul.mubr.bf16.gmra.mrb[0].mxu0 %v417
        %v7734 = vpop.f32.mrb[0].mxu0
        %v7735 = vadd.f32 %v7662, %v7734
        %v7736 = vpop.f32.mrb[0].mxu0
        %v7737 = vadd.f32 %v7664, %v7736
        %v7738 = vpop.f32.mrb[0].mxu0
        %v7739 = vadd.f32 %v7666, %v7738
        %v7740 = vpop.f32.mrb[0].mxu0
        %v7741 = vadd.f32 %v7668, %v7740
        %7742 = vmatprep.mubr.bf16.mxu0 %v434
        %7743 = vmatmul.mubr.bf16.gmra.mrb[0].mxu0 %v433
        %v7744 = vpop.f32.mrb[0].mxu0
        %v7745 = vadd.f32 %v7672, %v7744
        %v7746 = vpop.f32.mrb[0].mxu0
        %v7747 = vadd.f32 %v7674, %v7746
        %v7748 = vpop.f32.mrb[0].mxu0
        %v7749 = vadd.f32 %v7676, %v7748
        %v7750 = vpop.f32.mrb[0].mxu0
        %v7751 = vadd.f32 %v7678, %v7750
        %7752 = vmatprep.mubr.bf16.mxu0 %v450
        %7753 = vmatmul.mubr.bf16.gmra.mrb[0].mxu0 %v449
        %v7754 = vpop.f32.mrb[0].mxu0
        %v7755 = vadd.f32 %v7682, %v7754
        %v7756 = vpop.f32.mrb[0].mxu0
        %v7757 = vadd.f32 %v7684, %v7756
        %v7758 = vpop.f32.mrb[0].mxu0
        %v7759 = vadd.f32 %v7686, %v7758
        %v7760 = vpop.f32.mrb[0].mxu0
        %v7761 = vadd.f32 %v7688, %v7760
        %7762 = vdwg.mxu0
        %7763 = vmatprep.subr.bf16.mxu0 %v4552
        %7764 = vmatpush1.bf16.msra.mxu0 %v4551
        %7765 = vmatprep.subr.bf16.mxu0 %v4560
        %7766 = vmatpush1.bf16.msra.mxu0 %v4559
        %7767 = vmatprep.subr.bf16.mxu0 %v4568
        %7768 = vmatpush1.bf16.msra.mxu0 %v4567
        %7769 = vmatprep.subr.bf16.mxu0 %v4576
        %7770 = vmatpush1.bf16.msra.mxu0 %v4575
        %7771 = vmatprep.subr.bf16.mxu0 %v4584
        %7772 = vmatpush1.bf16.msra.mxu0 %v4583
        %7773 = vmatprep.subr.bf16.mxu0 %v4592
        %7774 = vmatpush1.bf16.msra.mxu0 %v4591
        %7775 = vmatprep.subr.bf16.mxu0 %v4600
        %7776 = vmatpush1.bf16.msra.mxu0 %v4599
        %7777 = vmatprep.subr.bf16.mxu0 %v4608
        %7778 = vmatpush1.bf16.msra.mxu0 %v4607
        %7779 = vmatprep.subr.bf16.mxu0 %v4616
        %7780 = vmatpush1.bf16.msra.mxu0 %v4615
        %7781 = vmatprep.subr.bf16.mxu0 %v4624
        %7782 = vmatpush1.bf16.msra.mxu0 %v4623
        %7783 = vmatprep.subr.bf16.mxu0 %v4632
        %7784 = vmatpush1.bf16.msra.mxu0 %v4631
        %7785 = vmatprep.subr.bf16.mxu0 %v4640
        %7786 = vmatpush1.bf16.msra.mxu0 %v4639
        %7787 = vmatprep.subr.bf16.mxu0 %v4648
        %7788 = vmatpush1.bf16.msra.mxu0 %v4647
        %7789 = vmatprep.subr.bf16.mxu0 %v4656
        %7790 = vmatpush1.bf16.msra.mxu0 %v4655
        %7791 = vmatprep.subr.bf16.mxu0 %v4664
        %7792 = vmatpush1.bf16.msra.mxu0 %v4663
        %7793 = vmatprep.subr.bf16.mxu0 %v4672
        %7794 = vmatpush1.bf16.msra.mxu0 %v4671
        %7795 = vmatprep.mubr.bf16.mxu0 %v388
        %7796 = vmatmul.mubr.bf16.gmra.mrb[0].mxu0 %v387
        %v7797 = vpop.f32.mrb[0].mxu0
        %v7798 = vadd.f32 0.0, %v7797
        %v7799 = vpop.f32.mrb[0].mxu0
        %v7800 = vadd.f32 0.0, %v7799
        %v7801 = vpop.f32.mrb[0].mxu0
        %v7802 = vpop.f32.mrb[0].mxu0
        %v7803 = vadd.f32 0.0, %v7802
        %7804 = vmatprep.mubr.bf16.mxu0 %v404
        %7805 = vmatmul.mubr.bf16.gmra.mrb[0].mxu0 %v403
        %v7806 = vpop.f32.mrb[0].mxu0
        %v7807 = vpop.f32.mrb[0].mxu0
        %v7808 = vadd.f32 0.0, %v7807
        %v7809 = vpop.f32.mrb[0].mxu0
        %v7810 = vpop.f32.mrb[0].mxu0
        %v7811 = vadd.f32 0.0, %v7810
        %7812 = vmatprep.mubr.bf16.mxu0 %v420
        %7813 = vmatmul.mubr.bf16.gmra.mrb[0].mxu0 %v419
        %v7814 = vpop.f32.mrb[0].mxu0
        %v7815 = vpop.f32.mrb[0].mxu0
        %v7816 = vadd.f32 0.0, %v7815
        %v7817 = vpop.f32.mrb[0].mxu0
        %v7818 = vadd.f32 0.0, %v7817
        %v7819 = vpop.f32.mrb[0].mxu0
        %v7820 = vadd.f32 0.0, %v7819
        %7821 = vmatprep.mubr.bf16.mxu0 %v436
        %7822 = vmatmul.mubr.bf16.gmra.mrb[0].mxu0 %v435
        %v7823 = vpop.f32.mrb[0].mxu0
        %v7824 = vadd.f32 0.0, %v7823
        %v7825 = vpop.f32.mrb[0].mxu0
        %v7826 = vadd.f32 0.0, %v7825
        %v7827 = vpop.f32.mrb[0].mxu0
        %v7828 = vadd.f32 0.0, %v7827
        %v7829 = vpop.f32.mrb[0].mxu0
        %v7830 = vadd.f32 0.0, %v7829
        %7831 = vdwg.mxu0
        %7832 = vmatprep.subr.bf16.mxu0 %v4680
        %7833 = vmatpush1.bf16.msra.mxu0 %v4679
        %7834 = vmatprep.subr.bf16.mxu0 %v4688
        %7835 = vmatpush1.bf16.msra.mxu0 %v4687
        %7836 = vmatprep.subr.bf16.mxu0 %v4696
        %7837 = vmatpush1.bf16.msra.mxu0 %v4695
        %7838 = vmatprep.subr.bf16.mxu0 %v4704
        %7839 = vmatpush1.bf16.msra.mxu0 %v4703
        %7840 = vmatprep.subr.bf16.mxu0 %v4712
        %7841 = vmatpush1.bf16.msra.mxu0 %v4711
        %7842 = vmatprep.subr.bf16.mxu0 %v4720
        %7843 = vmatpush1.bf16.msra.mxu0 %v4719
        %7844 = vmatprep.subr.bf16.mxu0 %v4728
        %7845 = vmatpush1.bf16.msra.mxu0 %v4727
        %7846 = vmatprep.subr.bf16.mxu0 %v4736
        %7847 = vmatpush1.bf16.msra.mxu0 %v4735
        %7848 = vmatprep.subr.bf16.mxu0 %v4744
        %7849 = vmatpush1.bf16.msra.mxu0 %v4743
        %7850 = vmatprep.subr.bf16.mxu0 %v4752
        %7851 = vmatpush1.bf16.msra.mxu0 %v4751
        %7852 = vmatprep.subr.bf16.mxu0 %v4760
        %7853 = vmatpush1.bf16.msra.mxu0 %v4759
        %7854 = vmatprep.subr.bf16.mxu0 %v4768
        %7855 = vmatpush1.bf16.msra.mxu0 %v4767
        %7856 = vmatprep.subr.bf16.mxu0 %v4776
        %7857 = vmatpush1.bf16.msra.mxu0 %v4775
        %7858 = vmatprep.subr.bf16.mxu0 %v4784
        %7859 = vmatpush1.bf16.msra.mxu0 %v4783
        %7860 = vmatprep.subr.bf16.mxu0 %v4792
        %7861 = vmatpush1.bf16.msra.mxu0 %v4791
        %7862 = vmatprep.subr.bf16.mxu0 %v4800
        %7863 = vmatpush1.bf16.msra.mxu0 %v4799
        %7864 = vmatprep.mubr.bf16.mxu0 %v390
        %7865 = vmatmul.mubr.bf16.gmra.mrb[0].mxu0 %v389
        %v7866 = vpop.f32.mrb[0].mxu0
        %v7867 = vadd.f32 %v7798, %v7866
        %v7868 = vpop.f32.mrb[0].mxu0
        %v7869 = vadd.f32 %v7800, %v7868
        %v7870 = vpop.f32.mrb[0].mxu0
        %v7871 = vpop.f32.mrb[0].mxu0
        %v7872 = vadd.f32 %v7803, %v7871
        %7873 = vmatprep.mubr.bf16.mxu0 %v406
        %7874 = vmatmul.mubr.bf16.gmra.mrb[0].mxu0 %v405
        %v7875 = vpop.f32.mrb[0].mxu0
        %v7876 = vpop.f32.mrb[0].mxu0
        %v7877 = vadd.f32 %v7808, %v7876
        %v7878 = vpop.f32.mrb[0].mxu0
        %v7879 = vpop.f32.mrb[0].mxu0
        %v7880 = vadd.f32 %v7811, %v7879
        %7881 = vmatprep.mubr.bf16.mxu0 %v422
        %7882 = vmatmul.mubr.bf16.gmra.mrb[0].mxu0 %v421
        %v7883 = vpop.f32.mrb[0].mxu0
        %v7884 = vpop.f32.mrb[0].mxu0
        %v7885 = vadd.f32 %v7816, %v7884
        %v7886 = vpop.f32.mrb[0].mxu0
        %v7887 = vadd.f32 %v7818, %v7886
        %v7888 = vpop.f32.mrb[0].mxu0
        %v7889 = vadd.f32 %v7820, %v7888
        %7890 = vmatprep.mubr.bf16.mxu0 %v438
        %7891 = vmatmul.mubr.bf16.gmra.mrb[0].mxu0 %v437
        %v7892 = vpop.f32.mrb[0].mxu0
        %v7893 = vadd.f32 %v7824, %v7892
        %v7894 = vpop.f32.mrb[0].mxu0
        %v7895 = vadd.f32 %v7826, %v7894
        %v7896 = vpop.f32.mrb[0].mxu0
        %v7897 = vadd.f32 %v7828, %v7896
        %v7898 = vpop.f32.mrb[0].mxu0
        %v7899 = vadd.f32 %v7830, %v7898
        %7900 = vdwg.mxu0
        %7901 = vmatprep.subr.bf16.mxu0 %v4808
        %7902 = vmatpush1.bf16.msra.mxu0 %v4807
        %7903 = vmatprep.subr.bf16.mxu0 %v4816
        %7904 = vmatpush1.bf16.msra.mxu0 %v4815
        %7905 = vmatprep.subr.bf16.mxu0 %v4824
        %7906 = vmatpush1.bf16.msra.mxu0 %v4823
        %7907 = vmatprep.subr.bf16.mxu0 %v4832
        %7908 = vmatpush1.bf16.msra.mxu0 %v4831
        %7909 = vmatprep.subr.bf16.mxu0 %v4840
        %7910 = vmatpush1.bf16.msra.mxu0 %v4839
        %7911 = vmatprep.subr.bf16.mxu0 %v4848
        %7912 = vmatpush1.bf16.msra.mxu0 %v4847
        %7913 = vmatprep.subr.bf16.mxu0 %v4856
        %7914 = vmatpush1.bf16.msra.mxu0 %v4855
        %7915 = vmatprep.subr.bf16.mxu0 %v4864
        %7916 = vmatpush1.bf16.msra.mxu0 %v4863
        %7917 = vmatprep.subr.bf16.mxu0 %v4872
        %7918 = vmatpush1.bf16.msra.mxu0 %v4871
        %7919 = vmatprep.subr.bf16.mxu0 %v4880
        %7920 = vmatpush1.bf16.msra.mxu0 %v4879
        %7921 = vmatprep.subr.bf16.mxu0 %v4888
        %7922 = vmatpush1.bf16.msra.mxu0 %v4887
        %7923 = vmatprep.subr.bf16.mxu0 %v4896
        %7924 = vmatpush1.bf16.msra.mxu0 %v4895
        %7925 = vmatprep.subr.bf16.mxu0 %v4904
        %7926 = vmatpush1.bf16.msra.mxu0 %v4903
        %7927 = vmatprep.subr.bf16.mxu0 %v4912
        %7928 = vmatpush1.bf16.msra.mxu0 %v4911
        %7929 = vmatprep.subr.bf16.mxu0 %v4920
        %7930 = vmatpush1.bf16.msra.mxu0 %v4919
        %7931 = vmatprep.subr.bf16.mxu0 %v4928
        %7932 = vmatpush1.bf16.msra.mxu0 %v4927
        %7933 = vmatprep.mubr.bf16.mxu0 %v392
        %7934 = vmatmul.mubr.bf16.gmra.mrb[0].mxu0 %v391
        %v7935 = vpop.f32.mrb[0].mxu0
        %v7936 = vadd.f32 %v7867, %v7935
        %v7937 = vpop.f32.mrb[0].mxu0
        %v7938 = vadd.f32 %v7869, %v7937
        %v7939 = vpop.f32.mrb[0].mxu0
        %v7940 = vpop.f32.mrb[0].mxu0
        %v7941 = vadd.f32 %v7872, %v7940
        %7942 = vmatprep.mubr.bf16.mxu0 %v408
        %7943 = vmatmul.mubr.bf16.gmra.mrb[0].mxu0 %v407
        %v7944 = vpop.f32.mrb[0].mxu0
        %v7945 = vpop.f32.mrb[0].mxu0
        %v7946 = vadd.f32 %v7877, %v7945
        %v7947 = vpop.f32.mrb[0].mxu0
        %v7948 = vpop.f32.mrb[0].mxu0
        %v7949 = vadd.f32 %v7880, %v7948
        %7950 = vmatprep.mubr.bf16.mxu0 %v424
        %7951 = vmatmul.mubr.bf16.gmra.mrb[0].mxu0 %v423
        %v7952 = vpop.f32.mrb[0].mxu0
        %v7953 = vpop.f32.mrb[0].mxu0
        %v7954 = vadd.f32 %v7885, %v7953
        %v7955 = vpop.f32.mrb[0].mxu0
        %v7956 = vadd.f32 %v7887, %v7955
        %v7957 = vpop.f32.mrb[0].mxu0
        %v7958 = vadd.f32 %v7889, %v7957
        %7959 = vmatprep.mubr.bf16.mxu0 %v440
        %7960 = vmatmul.mubr.bf16.gmra.mrb[0].mxu0 %v439
        %v7961 = vpop.f32.mrb[0].mxu0
        %v7962 = vadd.f32 %v7893, %v7961
        %v7963 = vpop.f32.mrb[0].mxu0
        %v7964 = vadd.f32 %v7895, %v7963
        %v7965 = vpop.f32.mrb[0].mxu0
        %v7966 = vadd.f32 %v7897, %v7965
        %v7967 = vpop.f32.mrb[0].mxu0
        %v7968 = vadd.f32 %v7899, %v7967
        %7969 = vdwg.mxu0
        %7970 = vmatprep.subr.bf16.mxu0 %v4936
        %7971 = vmatpush1.bf16.msra.mxu0 %v4935
        %7972 = vmatprep.subr.bf16.mxu0 %v4944
        %7973 = vmatpush1.bf16.msra.mxu0 %v4943
        %7974 = vmatprep.subr.bf16.mxu0 %v4952
        %7975 = vmatpush1.bf16.msra.mxu0 %v4951
        %7976 = vmatprep.subr.bf16.mxu0 %v4960
        %7977 = vmatpush1.bf16.msra.mxu0 %v4959
        %7978 = vmatprep.subr.bf16.mxu0 %v4968
        %7979 = vmatpush1.bf16.msra.mxu0 %v4967
        %7980 = vmatprep.subr.bf16.mxu0 %v4976
        %7981 = vmatpush1.bf16.msra.mxu0 %v4975
        %7982 = vmatprep.subr.bf16.mxu0 %v4984
        %7983 = vmatpush1.bf16.msra.mxu0 %v4983
        %7984 = vmatprep.subr.bf16.mxu0 %v4992
        %7985 = vmatpush1.bf16.msra.mxu0 %v4991
        %7986 = vmatprep.subr.bf16.mxu0 %v5000
        %7987 = vmatpush1.bf16.msra.mxu0 %v4999
        %7988 = vmatprep.subr.bf16.mxu0 %v5008
        %7989 = vmatpush1.bf16.msra.mxu0 %v5007
        %7990 = vmatprep.subr.bf16.mxu0 %v5016
        %7991 = vmatpush1.bf16.msra.mxu0 %v5015
        %7992 = vmatprep.subr.bf16.mxu0 %v5024
        %7993 = vmatpush1.bf16.msra.mxu0 %v5023
        %7994 = vmatprep.subr.bf16.mxu0 %v5032
        %7995 = vmatpush1.bf16.msra.mxu0 %v5031
        %7996 = vmatprep.subr.bf16.mxu0 %v5040
        %7997 = vmatpush1.bf16.msra.mxu0 %v5039
        %7998 = vmatprep.subr.bf16.mxu0 %v5048
        %7999 = vmatpush1.bf16.msra.mxu0 %v5047
        %8000 = vmatprep.subr.bf16.mxu0 %v5056
        %8001 = vmatpush1.bf16.msra.mxu0 %v5055
        %8002 = vmatprep.mubr.bf16.mxu0 %v394
        %8003 = vmatmul.mubr.bf16.gmra.mrb[0].mxu0 %v393
        %v8004 = vpop.f32.mrb[0].mxu0
        %v8005 = vadd.f32 %v7936, %v8004
        %v8006 = vpop.f32.mrb[0].mxu0
        %v8007 = vadd.f32 %v7938, %v8006
        %v8008 = vpop.f32.mrb[0].mxu0
        %v8009 = vpop.f32.mrb[0].mxu0
        %v8010 = vadd.f32 %v7941, %v8009
        %8011 = vmatprep.mubr.bf16.mxu0 %v410
        %8012 = vmatmul.mubr.bf16.gmra.mrb[0].mxu0 %v409
        %v8013 = vpop.f32.mrb[0].mxu0
        %v8014 = vpop.f32.mrb[0].mxu0
        %v8015 = vadd.f32 %v7946, %v8014
        %v8016 = vpop.f32.mrb[0].mxu0
        %v8017 = vpop.f32.mrb[0].mxu0
        %v8018 = vadd.f32 %v7949, %v8017
        %8019 = vmatprep.mubr.bf16.mxu0 %v426
        %8020 = vmatmul.mubr.bf16.gmra.mrb[0].mxu0 %v425
        %v8021 = vpop.f32.mrb[0].mxu0
        %v8022 = vpop.f32.mrb[0].mxu0
        %v8023 = vadd.f32 %v7954, %v8022
        %v8024 = vpop.f32.mrb[0].mxu0
        %v8025 = vadd.f32 %v7956, %v8024
        %v8026 = vpop.f32.mrb[0].mxu0
        %v8027 = vadd.f32 %v7958, %v8026
        %8028 = vmatprep.mubr.bf16.mxu0 %v442
        %8029 = vmatmul.mubr.bf16.gmra.mrb[0].mxu0 %v441
        %v8030 = vpop.f32.mrb[0].mxu0
        %v8031 = vadd.f32 %v7962, %v8030
        %v8032 = vpop.f32.mrb[0].mxu0
        %v8033 = vadd.f32 %v7964, %v8032
        %v8034 = vpop.f32.mrb[0].mxu0
        %v8035 = vadd.f32 %v7966, %v8034
        %v8036 = vpop.f32.mrb[0].mxu0
        %v8037 = vadd.f32 %v7968, %v8036
        %8038 = vdwg.mxu0
        %8039 = vmatprep.subr.bf16.mxu0 %v5064
        %8040 = vmatpush1.bf16.msra.mxu0 %v5063
        %8041 = vmatprep.subr.bf16.mxu0 %v5072
        %8042 = vmatpush1.bf16.msra.mxu0 %v5071
        %8043 = vmatprep.subr.bf16.mxu0 %v5080
        %8044 = vmatpush1.bf16.msra.mxu0 %v5079
        %8045 = vmatprep.subr.bf16.mxu0 %v5088
        %8046 = vmatpush1.bf16.msra.mxu0 %v5087
        %8047 = vmatprep.subr.bf16.mxu0 %v5096
        %8048 = vmatpush1.bf16.msra.mxu0 %v5095
        %8049 = vmatprep.subr.bf16.mxu0 %v5104
        %8050 = vmatpush1.bf16.msra.mxu0 %v5103
        %8051 = vmatprep.subr.bf16.mxu0 %v5112
        %8052 = vmatpush1.bf16.msra.mxu0 %v5111
        %8053 = vmatprep.subr.bf16.mxu0 %v5120
        %8054 = vmatpush1.bf16.msra.mxu0 %v5119
        %8055 = vmatprep.subr.bf16.mxu0 %v5128
        %8056 = vmatpush1.bf16.msra.mxu0 %v5127
        %8057 = vmatprep.subr.bf16.mxu0 %v5136
        %8058 = vmatpush1.bf16.msra.mxu0 %v5135
        %8059 = vmatprep.subr.bf16.mxu0 %v5144
        %8060 = vmatpush1.bf16.msra.mxu0 %v5143
        %8061 = vmatprep.subr.bf16.mxu0 %v5152
        %8062 = vmatpush1.bf16.msra.mxu0 %v5151
        %8063 = vmatprep.subr.bf16.mxu0 %v5160
        %8064 = vmatpush1.bf16.msra.mxu0 %v5159
        %8065 = vmatprep.subr.bf16.mxu0 %v5168
        %8066 = vmatpush1.bf16.msra.mxu0 %v5167
        %8067 = vmatprep.subr.bf16.mxu0 %v5176
        %8068 = vmatpush1.bf16.msra.mxu0 %v5175
        %8069 = vmatprep.subr.bf16.mxu0 %v5184
        %8070 = vmatpush1.bf16.msra.mxu0 %v5183
        %8071 = vmatprep.mubr.bf16.mxu0 %v396
        %8072 = vmatmul.mubr.bf16.gmra.mrb[0].mxu0 %v395
        %v8073 = vpop.f32.mrb[0].mxu0
        %v8074 = vadd.f32 %v8005, %v8073
        %v8075 = vpop.f32.mrb[0].mxu0
        %v8076 = vadd.f32 %v8007, %v8075
        %v8077 = vpop.f32.mrb[0].mxu0
        %v8078 = vpop.f32.mrb[0].mxu0
        %v8079 = vadd.f32 %v8010, %v8078
        %8080 = vmatprep.mubr.bf16.mxu0 %v412
        %8081 = vmatmul.mubr.bf16.gmra.mrb[0].mxu0 %v411
        %v8082 = vpop.f32.mrb[0].mxu0
        %v8083 = vpop.f32.mrb[0].mxu0
        %v8084 = vadd.f32 %v8015, %v8083
        %v8085 = vpop.f32.mrb[0].mxu0
        %v8086 = vpop.f32.mrb[0].mxu0
        %v8087 = vadd.f32 %v8018, %v8086
        %8088 = vmatprep.mubr.bf16.mxu0 %v428
        %8089 = vmatmul.mubr.bf16.gmra.mrb[0].mxu0 %v427
        %v8090 = vpop.f32.mrb[0].mxu0
        %v8091 = vpop.f32.mrb[0].mxu0
        %v8092 = vadd.f32 %v8023, %v8091
        %v8093 = vpop.f32.mrb[0].mxu0
        %v8094 = vadd.f32 %v8025, %v8093
        %v8095 = vpop.f32.mrb[0].mxu0
        %v8096 = vadd.f32 %v8027, %v8095
        %8097 = vmatprep.mubr.bf16.mxu0 %v444
        %8098 = vmatmul.mubr.bf16.gmra.mrb[0].mxu0 %v443
        %v8099 = vpop.f32.mrb[0].mxu0
        %v8100 = vadd.f32 %v8031, %v8099
        %v8101 = vpop.f32.mrb[0].mxu0
        %v8102 = vadd.f32 %v8033, %v8101
        %v8103 = vpop.f32.mrb[0].mxu0
        %v8104 = vadd.f32 %v8035, %v8103
        %v8105 = vpop.f32.mrb[0].mxu0
        %v8106 = vadd.f32 %v8037, %v8105
        %8107 = vdwg.mxu0
        %8108 = vmatprep.subr.bf16.mxu0 %v5192
        %8109 = vmatpush1.bf16.msra.mxu0 %v5191
        %8110 = vmatprep.subr.bf16.mxu0 %v5200
        %8111 = vmatpush1.bf16.msra.mxu0 %v5199
        %8112 = vmatprep.subr.bf16.mxu0 %v5208
        %8113 = vmatpush1.bf16.msra.mxu0 %v5207
        %8114 = vmatprep.subr.bf16.mxu0 %v5216
        %8115 = vmatpush1.bf16.msra.mxu0 %v5215
        %8116 = vmatprep.subr.bf16.mxu0 %v5224
        %8117 = vmatpush1.bf16.msra.mxu0 %v5223
        %8118 = vmatprep.subr.bf16.mxu0 %v5232
        %8119 = vmatpush1.bf16.msra.mxu0 %v5231
        %8120 = vmatprep.subr.bf16.mxu0 %v5240
        %8121 = vmatpush1.bf16.msra.mxu0 %v5239
        %8122 = vmatprep.subr.bf16.mxu0 %v5248
        %8123 = vmatpush1.bf16.msra.mxu0 %v5247
        %8124 = vmatprep.subr.bf16.mxu0 %v5256
        %8125 = vmatpush1.bf16.msra.mxu0 %v5255
        %8126 = vmatprep.subr.bf16.mxu0 %v5264
        %8127 = vmatpush1.bf16.msra.mxu0 %v5263
        %8128 = vmatprep.subr.bf16.mxu0 %v5272
        %8129 = vmatpush1.bf16.msra.mxu0 %v5271
        %8130 = vmatprep.subr.bf16.mxu0 %v5280
        %8131 = vmatpush1.bf16.msra.mxu0 %v5279
        %8132 = vmatprep.subr.bf16.mxu0 %v5288
        %8133 = vmatpush1.bf16.msra.mxu0 %v5287
        %8134 = vmatprep.subr.bf16.mxu0 %v5296
        %8135 = vmatpush1.bf16.msra.mxu0 %v5295
        %8136 = vmatprep.subr.bf16.mxu0 %v5304
        %8137 = vmatpush1.bf16.msra.mxu0 %v5303
        %8138 = vmatprep.subr.bf16.mxu0 %v5312
        %8139 = vmatpush1.bf16.msra.mxu0 %v5311
        %8140 = vmatprep.mubr.bf16.mxu0 %v398
        %8141 = vmatmul.mubr.bf16.gmra.mrb[0].mxu0 %v397
        %v8142 = vpop.f32.mrb[0].mxu0
        %v8143 = vadd.f32 %v8074, %v8142
        %v8144 = vpop.f32.mrb[0].mxu0
        %v8145 = vadd.f32 %v8076, %v8144
        %v8146 = vpop.f32.mrb[0].mxu0
        %v8147 = vpop.f32.mrb[0].mxu0
        %v8148 = vadd.f32 %v8079, %v8147
        %8149 = vmatprep.mubr.bf16.mxu0 %v414
        %8150 = vmatmul.mubr.bf16.gmra.mrb[0].mxu0 %v413
        %v8151 = vpop.f32.mrb[0].mxu0
        %v8152 = vpop.f32.mrb[0].mxu0
        %v8153 = vadd.f32 %v8084, %v8152
        %v8154 = vpop.f32.mrb[0].mxu0
        %v8155 = vpop.f32.mrb[0].mxu0
        %v8156 = vadd.f32 %v8087, %v8155
        %8157 = vmatprep.mubr.bf16.mxu0 %v430
        %8158 = vmatmul.mubr.bf16.gmra.mrb[0].mxu0 %v429
        %v8159 = vpop.f32.mrb[0].mxu0
        %v8160 = vpop.f32.mrb[0].mxu0
        %v8161 = vadd.f32 %v8092, %v8160
        %v8162 = vpop.f32.mrb[0].mxu0
        %v8163 = vadd.f32 %v8094, %v8162
        %v8164 = vpop.f32.mrb[0].mxu0
        %v8165 = vadd.f32 %v8096, %v8164
        %8166 = vmatprep.mubr.bf16.mxu0 %v446
        %8167 = vmatmul.mubr.bf16.gmra.mrb[0].mxu0 %v445
        %v8168 = vpop.f32.mrb[0].mxu0
        %v8169 = vadd.f32 %v8100, %v8168
        %v8170 = vpop.f32.mrb[0].mxu0
        %v8171 = vadd.f32 %v8102, %v8170
        %v8172 = vpop.f32.mrb[0].mxu0
        %v8173 = vadd.f32 %v8104, %v8172
        %v8174 = vpop.f32.mrb[0].mxu0
        %v8175 = vadd.f32 %v8106, %v8174
        %8176 = vdwg.mxu0
        %8177 = vmatprep.subr.bf16.mxu0 %v5320
        %8178 = vmatpush1.bf16.msra.mxu0 %v5319
        %8179 = vmatprep.subr.bf16.mxu0 %v5328
        %8180 = vmatpush1.bf16.msra.mxu0 %v5327
        %8181 = vmatprep.subr.bf16.mxu0 %v5336
        %8182 = vmatpush1.bf16.msra.mxu0 %v5335
        %8183 = vmatprep.subr.bf16.mxu0 %v5344
        %8184 = vmatpush1.bf16.msra.mxu0 %v5343
        %8185 = vmatprep.subr.bf16.mxu0 %v5352
        %8186 = vmatpush1.bf16.msra.mxu0 %v5351
        %8187 = vmatprep.subr.bf16.mxu0 %v5360
        %8188 = vmatpush1.bf16.msra.mxu0 %v5359
        %8189 = vmatprep.subr.bf16.mxu0 %v5368
        %8190 = vmatpush1.bf16.msra.mxu0 %v5367
        %8191 = vmatprep.subr.bf16.mxu0 %v5376
        %8192 = vmatpush1.bf16.msra.mxu0 %v5375
        %8193 = vmatprep.subr.bf16.mxu0 %v5384
        %8194 = vmatpush1.bf16.msra.mxu0 %v5383
        %8195 = vmatprep.subr.bf16.mxu0 %v5392
        %8196 = vmatpush1.bf16.msra.mxu0 %v5391
        %8197 = vmatprep.subr.bf16.mxu0 %v5400
        %8198 = vmatpush1.bf16.msra.mxu0 %v5399
        %8199 = vmatprep.subr.bf16.mxu0 %v5408
        %8200 = vmatpush1.bf16.msra.mxu0 %v5407
        %8201 = vmatprep.subr.bf16.mxu0 %v5416
        %8202 = vmatpush1.bf16.msra.mxu0 %v5415
        %8203 = vmatprep.subr.bf16.mxu0 %v5424
        %8204 = vmatpush1.bf16.msra.mxu0 %v5423
        %8205 = vmatprep.subr.bf16.mxu0 %v5432
        %8206 = vmatpush1.bf16.msra.mxu0 %v5431
        %8207 = vmatprep.subr.bf16.mxu0 %v5440
        %8208 = vmatpush1.bf16.msra.mxu0 %v5439
        %8209 = vmatprep.mubr.bf16.mxu0 %v400
        %8210 = vmatmul.mubr.bf16.gmra.mrb[0].mxu0 %v399
        %v8211 = vpop.f32.mrb[0].mxu0
        %v8212 = vadd.f32 %v8143, %v8211
        %v8213 = vpop.f32.mrb[0].mxu0
        %v8214 = vadd.f32 %v8145, %v8213
        %v8215 = vpop.f32.mrb[0].mxu0
        %v8216 = vpop.f32.mrb[0].mxu0
        %v8217 = vadd.f32 %v8148, %v8216
        %8218 = vmatprep.mubr.bf16.mxu0 %v416
        %8219 = vmatmul.mubr.bf16.gmra.mrb[0].mxu0 %v415
        %v8220 = vpop.f32.mrb[0].mxu0
        %v8221 = vpop.f32.mrb[0].mxu0
        %v8222 = vadd.f32 %v8153, %v8221
        %v8223 = vpop.f32.mrb[0].mxu0
        %v8224 = vpop.f32.mrb[0].mxu0
        %v8225 = vadd.f32 %v8156, %v8224
        %8226 = vmatprep.mubr.bf16.mxu0 %v432
        %8227 = vmatmul.mubr.bf16.gmra.mrb[0].mxu0 %v431
        %v8228 = vpop.f32.mrb[0].mxu0
        %v8229 = vpop.f32.mrb[0].mxu0
        %v8230 = vadd.f32 %v8161, %v8229
        %v8231 = vpop.f32.mrb[0].mxu0
        %v8232 = vadd.f32 %v8163, %v8231
        %v8233 = vpop.f32.mrb[0].mxu0
        %v8234 = vadd.f32 %v8165, %v8233
        %8235 = vmatprep.mubr.bf16.mxu0 %v448
        %8236 = vmatmul.mubr.bf16.gmra.mrb[0].mxu0 %v447
        %v8237 = vpop.f32.mrb[0].mxu0
        %v8238 = vadd.f32 %v8169, %v8237
        %v8239 = vpop.f32.mrb[0].mxu0
        %v8240 = vadd.f32 %v8171, %v8239
        %v8241 = vpop.f32.mrb[0].mxu0
        %v8242 = vadd.f32 %v8173, %v8241
        %v8243 = vpop.f32.mrb[0].mxu0
        %v8244 = vadd.f32 %v8175, %v8243
        %8245 = vdwg.mxu0
        %8246 = vmatprep.subr.bf16.mxu0 %v5448
        %8247 = vmatpush1.bf16.msra.mxu0 %v5447
        %8248 = vmatprep.subr.bf16.mxu0 %v5456
        %8249 = vmatpush1.bf16.msra.mxu0 %v5455
        %8250 = vmatprep.subr.bf16.mxu0 %v5464
        %8251 = vmatpush1.bf16.msra.mxu0 %v5463
        %8252 = vmatprep.subr.bf16.mxu0 %v5472
        %8253 = vmatpush1.bf16.msra.mxu0 %v5471
        %8254 = vmatprep.subr.bf16.mxu0 %v5480
        %8255 = vmatpush1.bf16.msra.mxu0 %v5479
        %8256 = vmatprep.subr.bf16.mxu0 %v5488
        %8257 = vmatpush1.bf16.msra.mxu0 %v5487
        %8258 = vmatprep.subr.bf16.mxu0 %v5496
        %8259 = vmatpush1.bf16.msra.mxu0 %v5495
        %8260 = vmatprep.subr.bf16.mxu0 %v5504
        %8261 = vmatpush1.bf16.msra.mxu0 %v5503
        %8262 = vmatprep.subr.bf16.mxu0 %v5512
        %8263 = vmatpush1.bf16.msra.mxu0 %v5511
        %8264 = vmatprep.subr.bf16.mxu0 %v5520
        %8265 = vmatpush1.bf16.msra.mxu0 %v5519
        %8266 = vmatprep.subr.bf16.mxu0 %v5528
        %8267 = vmatpush1.bf16.msra.mxu0 %v5527
        %8268 = vmatprep.subr.bf16.mxu0 %v5536
        %8269 = vmatpush1.bf16.msra.mxu0 %v5535
        %8270 = vmatprep.subr.bf16.mxu0 %v5544
        %8271 = vmatpush1.bf16.msra.mxu0 %v5543
        %8272 = vmatprep.subr.bf16.mxu0 %v5552
        %8273 = vmatpush1.bf16.msra.mxu0 %v5551
        %8274 = vmatprep.subr.bf16.mxu0 %v5560
        %8275 = vmatpush1.bf16.msra.mxu0 %v5559
        %8276 = vmatprep.subr.bf16.mxu0 %v5568
        %8277 = vmatpush1.bf16.msra.mxu0 %v5567
        %8278 = vmatprep.mubr.bf16.mxu0 %v402
        %8279 = vmatmul.mubr.bf16.gmra.mrb[0].mxu0 %v401
        %v8280 = vpop.f32.mrb[0].mxu0
        %v8281 = vadd.f32 %v8212, %v8280
        %v8282 = vpop.f32.mrb[0].mxu0
        %v8283 = vadd.f32 %v8214, %v8282
        %v8284 = vpop.f32.mrb[0].mxu0
        %v8285 = vpop.f32.mrb[0].mxu0
        %v8286 = vadd.f32 %v8217, %v8285
        %8287 = vmatprep.mubr.bf16.mxu0 %v418
        %8288 = vmatmul.mubr.bf16.gmra.mrb[0].mxu0 %v417
        %v8289 = vpop.f32.mrb[0].mxu0
        %v8290 = vpop.f32.mrb[0].mxu0
        %v8291 = vadd.f32 %v8222, %v8290
        %v8292 = vpop.f32.mrb[0].mxu0
        %v8293 = vpop.f32.mrb[0].mxu0
        %v8294 = vadd.f32 %v8225, %v8293
        %8295 = vmatprep.mubr.bf16.mxu0 %v434
        %8296 = vmatmul.mubr.bf16.gmra.mrb[0].mxu0 %v433
        %v8297 = vpop.f32.mrb[0].mxu0
        %v8298 = vpop.f32.mrb[0].mxu0
        %v8299 = vadd.f32 %v8230, %v8298
        %v8300 = vpop.f32.mrb[0].mxu0
        %v8301 = vadd.f32 %v8232, %v8300
        %v8302 = vpop.f32.mrb[0].mxu0
        %v8303 = vadd.f32 %v8234, %v8302
        %8304 = vmatprep.mubr.bf16.mxu0 %v450
        %8305 = vmatmul.mubr.bf16.gmra.mrb[0].mxu0 %v449
        %v8306 = vpop.f32.mrb[0].mxu0
        %v8307 = vadd.f32 %v8238, %v8306
        %v8308 = vpop.f32.mrb[0].mxu0
        %v8309 = vadd.f32 %v8240, %v8308
        %v8310 = vpop.f32.mrb[0].mxu0
        %v8311 = vadd.f32 %v8242, %v8310
        %v8312 = vpop.f32.mrb[0].mxu0
        %v8313 = vadd.f32 %v8244, %v8312
        %8314 = vdwg.mxu0
        %8315 = vmatprep.subr.bf16.mxu0 %v4554
        %8316 = vmatpush1.bf16.msra.mxu0 %v4553
        %8317 = vmatprep.subr.bf16.mxu0 %v4562
        %8318 = vmatpush1.bf16.msra.mxu0 %v4561
        %8319 = vmatprep.subr.bf16.mxu0 %v4570
        %8320 = vmatpush1.bf16.msra.mxu0 %v4569
        %8321 = vmatprep.subr.bf16.mxu0 %v4578
        %8322 = vmatpush1.bf16.msra.mxu0 %v4577
        %8323 = vmatprep.subr.bf16.mxu0 %v4586
        %8324 = vmatpush1.bf16.msra.mxu0 %v4585
        %8325 = vmatprep.subr.bf16.mxu0 %v4594
        %8326 = vmatpush1.bf16.msra.mxu0 %v4593
        %8327 = vmatprep.subr.bf16.mxu0 %v4602
        %8328 = vmatpush1.bf16.msra.mxu0 %v4601
        %8329 = vmatprep.subr.bf16.mxu0 %v4610
        %8330 = vmatpush1.bf16.msra.mxu0 %v4609
        %8331 = vmatprep.subr.bf16.mxu0 %v4618
        %8332 = vmatpush1.bf16.msra.mxu0 %v4617
        %8333 = vmatprep.subr.bf16.mxu0 %v4626
        %8334 = vmatpush1.bf16.msra.mxu0 %v4625
        %8335 = vmatprep.subr.bf16.mxu0 %v4634
        %8336 = vmatpush1.bf16.msra.mxu0 %v4633
        %8337 = vmatprep.subr.bf16.mxu0 %v4642
        %8338 = vmatpush1.bf16.msra.mxu0 %v4641
        %8339 = vmatprep.subr.bf16.mxu0 %v4650
        %8340 = vmatpush1.bf16.msra.mxu0 %v4649
        %8341 = vmatprep.subr.bf16.mxu0 %v4658
        %8342 = vmatpush1.bf16.msra.mxu0 %v4657
        %8343 = vmatprep.subr.bf16.mxu0 %v4666
        %8344 = vmatpush1.bf16.msra.mxu0 %v4665
        %8345 = vmatprep.subr.bf16.mxu0 %v4674
        %8346 = vmatpush1.bf16.msra.mxu0 %v4673
        %8347 = vmatprep.mubr.bf16.mxu0 %v388
        %8348 = vmatmul.mubr.bf16.gmra.mrb[0].mxu0 %v387
        %v8349 = vpop.f32.mrb[0].mxu0
        %v8350 = vadd.f32 0.0, %v8349
        %v8351 = vpop.f32.mrb[0].mxu0
        %v8352 = vadd.f32 0.0, %v8351
        %v8353 = vpop.f32.mrb[0].mxu0
        %v8354 = vadd.f32 0.0, %v8353
        %v8355 = vpop.f32.mrb[0].mxu0
        %v8356 = vadd.f32 0.0, %v8355
        %8357 = vmatprep.mubr.bf16.mxu0 %v404
        %8358 = vmatmul.mubr.bf16.gmra.mrb[0].mxu0 %v403
        %v8359 = vpop.f32.mrb[0].mxu0
        %v8360 = vadd.f32 0.0, %v8359
        %v8361 = vpop.f32.mrb[0].mxu0
        %v8362 = vadd.f32 0.0, %v8361
        %v8363 = vpop.f32.mrb[0].mxu0
        %v8364 = vadd.f32 0.0, %v8363
        %v8365 = vpop.f32.mrb[0].mxu0
        %v8366 = vadd.f32 0.0, %v8365
        %8367 = vmatprep.mubr.bf16.mxu0 %v420
        %8368 = vmatmul.mubr.bf16.gmra.mrb[0].mxu0 %v419
        %v8369 = vpop.f32.mrb[0].mxu0
        %v8370 = vadd.f32 0.0, %v8369
        %v8371 = vpop.f32.mrb[0].mxu0
        %v8372 = vadd.f32 0.0, %v8371
        %v8373 = vpop.f32.mrb[0].mxu0
        %v8374 = vadd.f32 0.0, %v8373
        %v8375 = vpop.f32.mrb[0].mxu0
        %v8376 = vadd.f32 0.0, %v8375
        %8377 = vmatprep.mubr.bf16.mxu0 %v436
        %8378 = vmatmul.mubr.bf16.gmra.mrb[0].mxu0 %v435
        %v8379 = vpop.f32.mrb[0].mxu0
        %v8380 = vadd.f32 0.0, %v8379
        %v8381 = vpop.f32.mrb[0].mxu0
        %v8382 = vadd.f32 0.0, %v8381
        %v8383 = vpop.f32.mrb[0].mxu0
        %v8384 = vadd.f32 0.0, %v8383
        %v8385 = vpop.f32.mrb[0].mxu0
        %v8386 = vadd.f32 0.0, %v8385
        %8387 = vdwg.mxu0
        %8388 = vmatprep.subr.bf16.mxu0 %v4682
        %8389 = vmatpush1.bf16.msra.mxu0 %v4681
        %8390 = vmatprep.subr.bf16.mxu0 %v4690
        %8391 = vmatpush1.bf16.msra.mxu0 %v4689
        %8392 = vmatprep.subr.bf16.mxu0 %v4698
        %8393 = vmatpush1.bf16.msra.mxu0 %v4697
        %8394 = vmatprep.subr.bf16.mxu0 %v4706
        %8395 = vmatpush1.bf16.msra.mxu0 %v4705
        %8396 = vmatprep.subr.bf16.mxu0 %v4714
        %8397 = vmatpush1.bf16.msra.mxu0 %v4713
        %8398 = vmatprep.subr.bf16.mxu0 %v4722
        %8399 = vmatpush1.bf16.msra.mxu0 %v4721
        %8400 = vmatprep.subr.bf16.mxu0 %v4730
        %8401 = vmatpush1.bf16.msra.mxu0 %v4729
        %8402 = vmatprep.subr.bf16.mxu0 %v4738
        %8403 = vmatpush1.bf16.msra.mxu0 %v4737
        %8404 = vmatprep.subr.bf16.mxu0 %v4746
        %8405 = vmatpush1.bf16.msra.mxu0 %v4745
        %8406 = vmatprep.subr.bf16.mxu0 %v4754
        %8407 = vmatpush1.bf16.msra.mxu0 %v4753
        %8408 = vmatprep.subr.bf16.mxu0 %v4762
        %8409 = vmatpush1.bf16.msra.mxu0 %v4761
        %8410 = vmatprep.subr.bf16.mxu0 %v4770
        %8411 = vmatpush1.bf16.msra.mxu0 %v4769
        %8412 = vmatprep.subr.bf16.mxu0 %v4778
        %8413 = vmatpush1.bf16.msra.mxu0 %v4777
        %8414 = vmatprep.subr.bf16.mxu0 %v4786
        %8415 = vmatpush1.bf16.msra.mxu0 %v4785
        %8416 = vmatprep.subr.bf16.mxu0 %v4794
        %8417 = vmatpush1.bf16.msra.mxu0 %v4793
        %8418 = vmatprep.subr.bf16.mxu0 %v4802
        %8419 = vmatpush1.bf16.msra.mxu0 %v4801
        %8420 = vmatprep.mubr.bf16.mxu0 %v390
        %8421 = vmatmul.mubr.bf16.gmra.mrb[0].mxu0 %v389
        %v8422 = vpop.f32.mrb[0].mxu0
        %v8423 = vadd.f32 %v8350, %v8422
        %v8424 = vpop.f32.mrb[0].mxu0
        %v8425 = vadd.f32 %v8352, %v8424
        %v8426 = vpop.f32.mrb[0].mxu0
        %v8427 = vadd.f32 %v8354, %v8426
        %v8428 = vpop.f32.mrb[0].mxu0
        %v8429 = vadd.f32 %v8356, %v8428
        %8430 = vmatprep.mubr.bf16.mxu0 %v406
        %8431 = vmatmul.mubr.bf16.gmra.mrb[0].mxu0 %v405
        %v8432 = vpop.f32.mrb[0].mxu0
        %v8433 = vadd.f32 %v8360, %v8432
        %v8434 = vpop.f32.mrb[0].mxu0
        %v8435 = vadd.f32 %v8362, %v8434
        %v8436 = vpop.f32.mrb[0].mxu0
        %v8437 = vadd.f32 %v8364, %v8436
        %v8438 = vpop.f32.mrb[0].mxu0
        %v8439 = vadd.f32 %v8366, %v8438
        %8440 = vmatprep.mubr.bf16.mxu0 %v422
        %8441 = vmatmul.mubr.bf16.gmra.mrb[0].mxu0 %v421
        %v8442 = vpop.f32.mrb[0].mxu0
        %v8443 = vadd.f32 %v8370, %v8442
        %v8444 = vpop.f32.mrb[0].mxu0
        %v8445 = vadd.f32 %v8372, %v8444
        %v8446 = vpop.f32.mrb[0].mxu0
        %v8447 = vadd.f32 %v8374, %v8446
        %v8448 = vpop.f32.mrb[0].mxu0
        %v8449 = vadd.f32 %v8376, %v8448
        %8450 = vmatprep.mubr.bf16.mxu0 %v438
        %8451 = vmatmul.mubr.bf16.gmra.mrb[0].mxu0 %v437
        %v8452 = vpop.f32.mrb[0].mxu0
        %v8453 = vadd.f32 %v8380, %v8452
        %v8454 = vpop.f32.mrb[0].mxu0
        %v8455 = vadd.f32 %v8382, %v8454
        %v8456 = vpop.f32.mrb[0].mxu0
        %v8457 = vadd.f32 %v8384, %v8456
        %v8458 = vpop.f32.mrb[0].mxu0
        %v8459 = vadd.f32 %v8386, %v8458
        %8460 = vdwg.mxu0
        %8461 = vmatprep.subr.bf16.mxu0 %v4810
        %8462 = vmatpush1.bf16.msra.mxu0 %v4809
        %8463 = vmatprep.subr.bf16.mxu0 %v4818
        %8464 = vmatpush1.bf16.msra.mxu0 %v4817
        %8465 = vmatprep.subr.bf16.mxu0 %v4826
        %8466 = vmatpush1.bf16.msra.mxu0 %v4825
        %8467 = vmatprep.subr.bf16.mxu0 %v4834
        %8468 = vmatpush1.bf16.msra.mxu0 %v4833
        %8469 = vmatprep.subr.bf16.mxu0 %v4842
        %8470 = vmatpush1.bf16.msra.mxu0 %v4841
        %8471 = vmatprep.subr.bf16.mxu0 %v4850
        %8472 = vmatpush1.bf16.msra.mxu0 %v4849
        %8473 = vmatprep.subr.bf16.mxu0 %v4858
        %8474 = vmatpush1.bf16.msra.mxu0 %v4857
        %8475 = vmatprep.subr.bf16.mxu0 %v4866
        %8476 = vmatpush1.bf16.msra.mxu0 %v4865
        %8477 = vmatprep.subr.bf16.mxu0 %v4874
        %8478 = vmatpush1.bf16.msra.mxu0 %v4873
        %8479 = vmatprep.subr.bf16.mxu0 %v4882
        %8480 = vmatpush1.bf16.msra.mxu0 %v4881
        %8481 = vmatprep.subr.bf16.mxu0 %v4890
        %8482 = vmatpush1.bf16.msra.mxu0 %v4889
        %8483 = vmatprep.subr.bf16.mxu0 %v4898
        %8484 = vmatpush1.bf16.msra.mxu0 %v4897
        %8485 = vmatprep.subr.bf16.mxu0 %v4906
        %8486 = vmatpush1.bf16.msra.mxu0 %v4905
        %8487 = vmatprep.subr.bf16.mxu0 %v4914
        %8488 = vmatpush1.bf16.msra.mxu0 %v4913
        %8489 = vmatprep.subr.bf16.mxu0 %v4922
        %8490 = vmatpush1.bf16.msra.mxu0 %v4921
        %8491 = vmatprep.subr.bf16.mxu0 %v4930
        %8492 = vmatpush1.bf16.msra.mxu0 %v4929
        %8493 = vmatprep.mubr.bf16.mxu0 %v392
        %8494 = vmatmul.mubr.bf16.gmra.mrb[0].mxu0 %v391
        %v8495 = vpop.f32.mrb[0].mxu0
        %v8496 = vadd.f32 %v8423, %v8495
        %v8497 = vpop.f32.mrb[0].mxu0
        %v8498 = vadd.f32 %v8425, %v8497
        %v8499 = vpop.f32.mrb[0].mxu0
        %v8500 = vadd.f32 %v8427, %v8499
        %v8501 = vpop.f32.mrb[0].mxu0
        %v8502 = vadd.f32 %v8429, %v8501
        %8503 = vmatprep.mubr.bf16.mxu0 %v408
        %8504 = vmatmul.mubr.bf16.gmra.mrb[0].mxu0 %v407
        %v8505 = vpop.f32.mrb[0].mxu0
        %v8506 = vadd.f32 %v8433, %v8505
        %v8507 = vpop.f32.mrb[0].mxu0
        %v8508 = vadd.f32 %v8435, %v8507
        %v8509 = vpop.f32.mrb[0].mxu0
        %v8510 = vadd.f32 %v8437, %v8509
        %v8511 = vpop.f32.mrb[0].mxu0
        %v8512 = vadd.f32 %v8439, %v8511
        %8513 = vmatprep.mubr.bf16.mxu0 %v424
        %8514 = vmatmul.mubr.bf16.gmra.mrb[0].mxu0 %v423
        %v8515 = vpop.f32.mrb[0].mxu0
        %v8516 = vadd.f32 %v8443, %v8515
        %v8517 = vpop.f32.mrb[0].mxu0
        %v8518 = vadd.f32 %v8445, %v8517
        %v8519 = vpop.f32.mrb[0].mxu0
        %v8520 = vadd.f32 %v8447, %v8519
        %v8521 = vpop.f32.mrb[0].mxu0
        %v8522 = vadd.f32 %v8449, %v8521
        %8523 = vmatprep.mubr.bf16.mxu0 %v440
        %8524 = vmatmul.mubr.bf16.gmra.mrb[0].mxu0 %v439
        %v8525 = vpop.f32.mrb[0].mxu0
        %v8526 = vadd.f32 %v8453, %v8525
        %v8527 = vpop.f32.mrb[0].mxu0
        %v8528 = vadd.f32 %v8455, %v8527
        %v8529 = vpop.f32.mrb[0].mxu0
        %v8530 = vadd.f32 %v8457, %v8529
        %v8531 = vpop.f32.mrb[0].mxu0
        %v8532 = vadd.f32 %v8459, %v8531
        %8533 = vdwg.mxu0
        %8534 = vmatprep.subr.bf16.mxu0 %v4938
        %8535 = vmatpush1.bf16.msra.mxu0 %v4937
        %8536 = vmatprep.subr.bf16.mxu0 %v4946
        %8537 = vmatpush1.bf16.msra.mxu0 %v4945
        %8538 = vmatprep.subr.bf16.mxu0 %v4954
        %8539 = vmatpush1.bf16.msra.mxu0 %v4953
        %8540 = vmatprep.subr.bf16.mxu0 %v4962
        %8541 = vmatpush1.bf16.msra.mxu0 %v4961
        %8542 = vmatprep.subr.bf16.mxu0 %v4970
        %8543 = vmatpush1.bf16.msra.mxu0 %v4969
        %8544 = vmatprep.subr.bf16.mxu0 %v4978
        %8545 = vmatpush1.bf16.msra.mxu0 %v4977
        %8546 = vmatprep.subr.bf16.mxu0 %v4986
        %8547 = vmatpush1.bf16.msra.mxu0 %v4985
        %8548 = vmatprep.subr.bf16.mxu0 %v4994
        %8549 = vmatpush1.bf16.msra.mxu0 %v4993
        %8550 = vmatprep.subr.bf16.mxu0 %v5002
        %8551 = vmatpush1.bf16.msra.mxu0 %v5001
        %8552 = vmatprep.subr.bf16.mxu0 %v5010
        %8553 = vmatpush1.bf16.msra.mxu0 %v5009
        %8554 = vmatprep.subr.bf16.mxu0 %v5018
        %8555 = vmatpush1.bf16.msra.mxu0 %v5017
        %8556 = vmatprep.subr.bf16.mxu0 %v5026
        %8557 = vmatpush1.bf16.msra.mxu0 %v5025
        %8558 = vmatprep.subr.bf16.mxu0 %v5034
        %8559 = vmatpush1.bf16.msra.mxu0 %v5033
        %8560 = vmatprep.subr.bf16.mxu0 %v5042
        %8561 = vmatpush1.bf16.msra.mxu0 %v5041
        %8562 = vmatprep.subr.bf16.mxu0 %v5050
        %8563 = vmatpush1.bf16.msra.mxu0 %v5049
        %8564 = vmatprep.subr.bf16.mxu0 %v5058
        %8565 = vmatpush1.bf16.msra.mxu0 %v5057
        %8566 = vmatprep.mubr.bf16.mxu0 %v394
        %8567 = vmatmul.mubr.bf16.gmra.mrb[0].mxu0 %v393
        %v8568 = vpop.f32.mrb[0].mxu0
        %v8569 = vadd.f32 %v8496, %v8568
        %v8570 = vpop.f32.mrb[0].mxu0
        %v8571 = vadd.f32 %v8498, %v8570
        %v8572 = vpop.f32.mrb[0].mxu0
        %v8573 = vadd.f32 %v8500, %v8572
        %v8574 = vpop.f32.mrb[0].mxu0
        %v8575 = vadd.f32 %v8502, %v8574
        %8576 = vmatprep.mubr.bf16.mxu0 %v410
        %8577 = vmatmul.mubr.bf16.gmra.mrb[0].mxu0 %v409
        %v8578 = vpop.f32.mrb[0].mxu0
        %v8579 = vadd.f32 %v8506, %v8578
        %v8580 = vpop.f32.mrb[0].mxu0
        %v8581 = vadd.f32 %v8508, %v8580
        %v8582 = vpop.f32.mrb[0].mxu0
        %v8583 = vadd.f32 %v8510, %v8582
        %v8584 = vpop.f32.mrb[0].mxu0
        %v8585 = vadd.f32 %v8512, %v8584
        %8586 = vmatprep.mubr.bf16.mxu0 %v426
        %8587 = vmatmul.mubr.bf16.gmra.mrb[0].mxu0 %v425
        %v8588 = vpop.f32.mrb[0].mxu0
        %v8589 = vadd.f32 %v8516, %v8588
        %v8590 = vpop.f32.mrb[0].mxu0
        %v8591 = vadd.f32 %v8518, %v8590
        %v8592 = vpop.f32.mrb[0].mxu0
        %v8593 = vadd.f32 %v8520, %v8592
        %v8594 = vpop.f32.mrb[0].mxu0
        %v8595 = vadd.f32 %v8522, %v8594
        %8596 = vmatprep.mubr.bf16.mxu0 %v442
        %8597 = vmatmul.mubr.bf16.gmra.mrb[0].mxu0 %v441
        %v8598 = vpop.f32.mrb[0].mxu0
        %v8599 = vadd.f32 %v8526, %v8598
        %v8600 = vpop.f32.mrb[0].mxu0
        %v8601 = vadd.f32 %v8528, %v8600
        %v8602 = vpop.f32.mrb[0].mxu0
        %v8603 = vadd.f32 %v8530, %v8602
        %v8604 = vpop.f32.mrb[0].mxu0
        %v8605 = vadd.f32 %v8532, %v8604
        %8606 = vdwg.mxu0
        %8607 = vmatprep.subr.bf16.mxu0 %v5066
        %8608 = vmatpush1.bf16.msra.mxu0 %v5065
        %8609 = vmatprep.subr.bf16.mxu0 %v5074
        %8610 = vmatpush1.bf16.msra.mxu0 %v5073
        %8611 = vmatprep.subr.bf16.mxu0 %v5082
        %8612 = vmatpush1.bf16.msra.mxu0 %v5081
        %8613 = vmatprep.subr.bf16.mxu0 %v5090
        %8614 = vmatpush1.bf16.msra.mxu0 %v5089
        %8615 = vmatprep.subr.bf16.mxu0 %v5098
        %8616 = vmatpush1.bf16.msra.mxu0 %v5097
        %8617 = vmatprep.subr.bf16.mxu0 %v5106
        %8618 = vmatpush1.bf16.msra.mxu0 %v5105
        %8619 = vmatprep.subr.bf16.mxu0 %v5114
        %8620 = vmatpush1.bf16.msra.mxu0 %v5113
        %8621 = vmatprep.subr.bf16.mxu0 %v5122
        %8622 = vmatpush1.bf16.msra.mxu0 %v5121
        %8623 = vmatprep.subr.bf16.mxu0 %v5130
        %8624 = vmatpush1.bf16.msra.mxu0 %v5129
        %8625 = vmatprep.subr.bf16.mxu0 %v5138
        %8626 = vmatpush1.bf16.msra.mxu0 %v5137
        %8627 = vmatprep.subr.bf16.mxu0 %v5146
        %8628 = vmatpush1.bf16.msra.mxu0 %v5145
        %8629 = vmatprep.subr.bf16.mxu0 %v5154
        %8630 = vmatpush1.bf16.msra.mxu0 %v5153
        %8631 = vmatprep.subr.bf16.mxu0 %v5162
        %8632 = vmatpush1.bf16.msra.mxu0 %v5161
        %8633 = vmatprep.subr.bf16.mxu0 %v5170
        %8634 = vmatpush1.bf16.msra.mxu0 %v5169
        %8635 = vmatprep.subr.bf16.mxu0 %v5178
        %8636 = vmatpush1.bf16.msra.mxu0 %v5177
        %8637 = vmatprep.subr.bf16.mxu0 %v5186
        %8638 = vmatpush1.bf16.msra.mxu0 %v5185
        %8639 = vmatprep.mubr.bf16.mxu0 %v396
        %8640 = vmatmul.mubr.bf16.gmra.mrb[0].mxu0 %v395
        %v8641 = vpop.f32.mrb[0].mxu0
        %v8642 = vadd.f32 %v8569, %v8641
        %v8643 = vpop.f32.mrb[0].mxu0
        %v8644 = vadd.f32 %v8571, %v8643
        %v8645 = vpop.f32.mrb[0].mxu0
        %v8646 = vadd.f32 %v8573, %v8645
        %v8647 = vpop.f32.mrb[0].mxu0
        %v8648 = vadd.f32 %v8575, %v8647
        %8649 = vmatprep.mubr.bf16.mxu0 %v412
        %8650 = vmatmul.mubr.bf16.gmra.mrb[0].mxu0 %v411
        %v8651 = vpop.f32.mrb[0].mxu0
        %v8652 = vadd.f32 %v8579, %v8651
        %v8653 = vpop.f32.mrb[0].mxu0
        %v8654 = vadd.f32 %v8581, %v8653
        %v8655 = vpop.f32.mrb[0].mxu0
        %v8656 = vadd.f32 %v8583, %v8655
        %v8657 = vpop.f32.mrb[0].mxu0
        %v8658 = vadd.f32 %v8585, %v8657
        %8659 = vmatprep.mubr.bf16.mxu0 %v428
        %8660 = vmatmul.mubr.bf16.gmra.mrb[0].mxu0 %v427
        %v8661 = vpop.f32.mrb[0].mxu0
        %v8662 = vadd.f32 %v8589, %v8661
        %v8663 = vpop.f32.mrb[0].mxu0
        %v8664 = vadd.f32 %v8591, %v8663
        %v8665 = vpop.f32.mrb[0].mxu0
        %v8666 = vadd.f32 %v8593, %v8665
        %v8667 = vpop.f32.mrb[0].mxu0
        %v8668 = vadd.f32 %v8595, %v8667
        %8669 = vmatprep.mubr.bf16.mxu0 %v444
        %8670 = vmatmul.mubr.bf16.gmra.mrb[0].mxu0 %v443
        %v8671 = vpop.f32.mrb[0].mxu0
        %v8672 = vadd.f32 %v8599, %v8671
        %v8673 = vpop.f32.mrb[0].mxu0
        %v8674 = vadd.f32 %v8601, %v8673
        %v8675 = vpop.f32.mrb[0].mxu0
        %v8676 = vadd.f32 %v8603, %v8675
        %v8677 = vpop.f32.mrb[0].mxu0
        %v8678 = vadd.f32 %v8605, %v8677
        %8679 = vdwg.mxu0
        %8680 = vmatprep.subr.bf16.mxu0 %v5194
        %8681 = vmatpush1.bf16.msra.mxu0 %v5193
        %8682 = vmatprep.subr.bf16.mxu0 %v5202
        %8683 = vmatpush1.bf16.msra.mxu0 %v5201
        %8684 = vmatprep.subr.bf16.mxu0 %v5210
        %8685 = vmatpush1.bf16.msra.mxu0 %v5209
        %8686 = vmatprep.subr.bf16.mxu0 %v5218
        %8687 = vmatpush1.bf16.msra.mxu0 %v5217
        %8688 = vmatprep.subr.bf16.mxu0 %v5226
        %8689 = vmatpush1.bf16.msra.mxu0 %v5225
        %8690 = vmatprep.subr.bf16.mxu0 %v5234
        %8691 = vmatpush1.bf16.msra.mxu0 %v5233
        %8692 = vmatprep.subr.bf16.mxu0 %v5242
        %8693 = vmatpush1.bf16.msra.mxu0 %v5241
        %8694 = vmatprep.subr.bf16.mxu0 %v5250
        %8695 = vmatpush1.bf16.msra.mxu0 %v5249
        %8696 = vmatprep.subr.bf16.mxu0 %v5258
        %8697 = vmatpush1.bf16.msra.mxu0 %v5257
        %8698 = vmatprep.subr.bf16.mxu0 %v5266
        %8699 = vmatpush1.bf16.msra.mxu0 %v5265
        %8700 = vmatprep.subr.bf16.mxu0 %v5274
        %8701 = vmatpush1.bf16.msra.mxu0 %v5273
        %8702 = vmatprep.subr.bf16.mxu0 %v5282
        %8703 = vmatpush1.bf16.msra.mxu0 %v5281
        %8704 = vmatprep.subr.bf16.mxu0 %v5290
        %8705 = vmatpush1.bf16.msra.mxu0 %v5289
        %8706 = vmatprep.subr.bf16.mxu0 %v5298
        %8707 = vmatpush1.bf16.msra.mxu0 %v5297
        %8708 = vmatprep.subr.bf16.mxu0 %v5306
        %8709 = vmatpush1.bf16.msra.mxu0 %v5305
        %8710 = vmatprep.subr.bf16.mxu0 %v5314
        %8711 = vmatpush1.bf16.msra.mxu0 %v5313
        %8712 = vmatprep.mubr.bf16.mxu0 %v398
        %8713 = vmatmul.mubr.bf16.gmra.mrb[0].mxu0 %v397
        %v8714 = vpop.f32.mrb[0].mxu0
        %v8715 = vadd.f32 %v8642, %v8714
        %v8716 = vpop.f32.mrb[0].mxu0
        %v8717 = vadd.f32 %v8644, %v8716
        %v8718 = vpop.f32.mrb[0].mxu0
        %v8719 = vadd.f32 %v8646, %v8718
        %v8720 = vpop.f32.mrb[0].mxu0
        %v8721 = vadd.f32 %v8648, %v8720
        %8722 = vmatprep.mubr.bf16.mxu0 %v414
        %8723 = vmatmul.mubr.bf16.gmra.mrb[0].mxu0 %v413
        %v8724 = vpop.f32.mrb[0].mxu0
        %v8725 = vadd.f32 %v8652, %v8724
        %v8726 = vpop.f32.mrb[0].mxu0
        %v8727 = vadd.f32 %v8654, %v8726
        %v8728 = vpop.f32.mrb[0].mxu0
        %v8729 = vadd.f32 %v8656, %v8728
        %v8730 = vpop.f32.mrb[0].mxu0
        %v8731 = vadd.f32 %v8658, %v8730
        %8732 = vmatprep.mubr.bf16.mxu0 %v430
        %8733 = vmatmul.mubr.bf16.gmra.mrb[0].mxu0 %v429
        %v8734 = vpop.f32.mrb[0].mxu0
        %v8735 = vadd.f32 %v8662, %v8734
        %v8736 = vpop.f32.mrb[0].mxu0
        %v8737 = vadd.f32 %v8664, %v8736
        %v8738 = vpop.f32.mrb[0].mxu0
        %v8739 = vadd.f32 %v8666, %v8738
        %v8740 = vpop.f32.mrb[0].mxu0
        %v8741 = vadd.f32 %v8668, %v8740
        %8742 = vmatprep.mubr.bf16.mxu0 %v446
        %8743 = vmatmul.mubr.bf16.gmra.mrb[0].mxu0 %v445
        %v8744 = vpop.f32.mrb[0].mxu0
        %v8745 = vadd.f32 %v8672, %v8744
        %v8746 = vpop.f32.mrb[0].mxu0
        %v8747 = vadd.f32 %v8674, %v8746
        %v8748 = vpop.f32.mrb[0].mxu0
        %v8749 = vadd.f32 %v8676, %v8748
        %v8750 = vpop.f32.mrb[0].mxu0
        %v8751 = vadd.f32 %v8678, %v8750
        %8752 = vdwg.mxu0
        %8753 = vmatprep.subr.bf16.mxu0 %v5322
        %8754 = vmatpush1.bf16.msra.mxu0 %v5321
        %8755 = vmatprep.subr.bf16.mxu0 %v5330
        %8756 = vmatpush1.bf16.msra.mxu0 %v5329
        %8757 = vmatprep.subr.bf16.mxu0 %v5338
        %8758 = vmatpush1.bf16.msra.mxu0 %v5337
        %8759 = vmatprep.subr.bf16.mxu0 %v5346
        %8760 = vmatpush1.bf16.msra.mxu0 %v5345
        %8761 = vmatprep.subr.bf16.mxu0 %v5354
        %8762 = vmatpush1.bf16.msra.mxu0 %v5353
        %8763 = vmatprep.subr.bf16.mxu0 %v5362
        %8764 = vmatpush1.bf16.msra.mxu0 %v5361
        %8765 = vmatprep.subr.bf16.mxu0 %v5370
        %8766 = vmatpush1.bf16.msra.mxu0 %v5369
        %8767 = vmatprep.subr.bf16.mxu0 %v5378
        %8768 = vmatpush1.bf16.msra.mxu0 %v5377
        %8769 = vmatprep.subr.bf16.mxu0 %v5386
        %8770 = vmatpush1.bf16.msra.mxu0 %v5385
        %8771 = vmatprep.subr.bf16.mxu0 %v5394
        %8772 = vmatpush1.bf16.msra.mxu0 %v5393
        %8773 = vmatprep.subr.bf16.mxu0 %v5402
        %8774 = vmatpush1.bf16.msra.mxu0 %v5401
        %8775 = vmatprep.subr.bf16.mxu0 %v5410
        %8776 = vmatpush1.bf16.msra.mxu0 %v5409
        %8777 = vmatprep.subr.bf16.mxu0 %v5418
        %8778 = vmatpush1.bf16.msra.mxu0 %v5417
        %8779 = vmatprep.subr.bf16.mxu0 %v5426
        %8780 = vmatpush1.bf16.msra.mxu0 %v5425
        %8781 = vmatprep.subr.bf16.mxu0 %v5434
        %8782 = vmatpush1.bf16.msra.mxu0 %v5433
        %8783 = vmatprep.subr.bf16.mxu0 %v5442
        %8784 = vmatpush1.bf16.msra.mxu0 %v5441
        %8785 = vmatprep.mubr.bf16.mxu0 %v400
        %8786 = vmatmul.mubr.bf16.gmra.mrb[0].mxu0 %v399
        %v8787 = vpop.f32.mrb[0].mxu0
        %v8788 = vadd.f32 %v8715, %v8787
        %v8789 = vpop.f32.mrb[0].mxu0
        %v8790 = vadd.f32 %v8717, %v8789
        %v8791 = vpop.f32.mrb[0].mxu0
        %v8792 = vadd.f32 %v8719, %v8791
        %v8793 = vpop.f32.mrb[0].mxu0
        %v8794 = vadd.f32 %v8721, %v8793
        %8795 = vmatprep.mubr.bf16.mxu0 %v416
        %8796 = vmatmul.mubr.bf16.gmra.mrb[0].mxu0 %v415
        %v8797 = vpop.f32.mrb[0].mxu0
        %v8798 = vadd.f32 %v8725, %v8797
        %v8799 = vpop.f32.mrb[0].mxu0
        %v8800 = vadd.f32 %v8727, %v8799
        %v8801 = vpop.f32.mrb[0].mxu0
        %v8802 = vadd.f32 %v8729, %v8801
        %v8803 = vpop.f32.mrb[0].mxu0
        %v8804 = vadd.f32 %v8731, %v8803
        %8805 = vmatprep.mubr.bf16.mxu0 %v432
        %8806 = vmatmul.mubr.bf16.gmra.mrb[0].mxu0 %v431
        %v8807 = vpop.f32.mrb[0].mxu0
        %v8808 = vadd.f32 %v8735, %v8807
        %v8809 = vpop.f32.mrb[0].mxu0
        %v8810 = vadd.f32 %v8737, %v8809
        %v8811 = vpop.f32.mrb[0].mxu0
        %v8812 = vadd.f32 %v8739, %v8811
        %v8813 = vpop.f32.mrb[0].mxu0
        %v8814 = vadd.f32 %v8741, %v8813
        %8815 = vmatprep.mubr.bf16.mxu0 %v448
        %8816 = vmatmul.mubr.bf16.gmra.mrb[0].mxu0 %v447
        %v8817 = vpop.f32.mrb[0].mxu0
        %v8818 = vadd.f32 %v8745, %v8817
        %v8819 = vpop.f32.mrb[0].mxu0
        %v8820 = vadd.f32 %v8747, %v8819
        %v8821 = vpop.f32.mrb[0].mxu0
        %v8822 = vadd.f32 %v8749, %v8821
        %v8823 = vpop.f32.mrb[0].mxu0
        %v8824 = vadd.f32 %v8751, %v8823
        %8825 = vdwg.mxu0
        %8826 = vmatprep.subr.bf16.mxu0 %v5450
        %8827 = vmatpush1.bf16.msra.mxu0 %v5449
        %8828 = vmatprep.subr.bf16.mxu0 %v5458
        %8829 = vmatpush1.bf16.msra.mxu0 %v5457
        %8830 = vmatprep.subr.bf16.mxu0 %v5466
        %8831 = vmatpush1.bf16.msra.mxu0 %v5465
        %8832 = vmatprep.subr.bf16.mxu0 %v5474
        %8833 = vmatpush1.bf16.msra.mxu0 %v5473
        %8834 = vmatprep.subr.bf16.mxu0 %v5482
        %8835 = vmatpush1.bf16.msra.mxu0 %v5481
        %8836 = vmatprep.subr.bf16.mxu0 %v5490
        %8837 = vmatpush1.bf16.msra.mxu0 %v5489
        %8838 = vmatprep.subr.bf16.mxu0 %v5498
        %8839 = vmatpush1.bf16.msra.mxu0 %v5497
        %8840 = vmatprep.subr.bf16.mxu0 %v5506
        %8841 = vmatpush1.bf16.msra.mxu0 %v5505
        %8842 = vmatprep.subr.bf16.mxu0 %v5514
        %8843 = vmatpush1.bf16.msra.mxu0 %v5513
        %8844 = vmatprep.subr.bf16.mxu0 %v5522
        %8845 = vmatpush1.bf16.msra.mxu0 %v5521
        %8846 = vmatprep.subr.bf16.mxu0 %v5530
        %8847 = vmatpush1.bf16.msra.mxu0 %v5529
        %8848 = vmatprep.subr.bf16.mxu0 %v5538
        %8849 = vmatpush1.bf16.msra.mxu0 %v5537
        %8850 = vmatprep.subr.bf16.mxu0 %v5546
        %8851 = vmatpush1.bf16.msra.mxu0 %v5545
        %8852 = vmatprep.subr.bf16.mxu0 %v5554
        %8853 = vmatpush1.bf16.msra.mxu0 %v5553
        %8854 = vmatprep.subr.bf16.mxu0 %v5562
        %8855 = vmatpush1.bf16.msra.mxu0 %v5561
        %8856 = vmatprep.subr.bf16.mxu0 %v5570
        %8857 = vmatpush1.bf16.msra.mxu0 %v5569
        %8858 = vmatprep.mubr.bf16.mxu0 %v402
        %8859 = vmatmul.mubr.bf16.gmra.mrb[0].mxu0 %v401
        %v8860 = vpop.f32.mrb[0].mxu0
        %v8861 = vadd.f32 %v8788, %v8860
        %v8862 = vpop.f32.mrb[0].mxu0
        %v8863 = vadd.f32 %v8790, %v8862
        %v8864 = vpop.f32.mrb[0].mxu0
        %v8865 = vadd.f32 %v8792, %v8864
        %v8866 = vpop.f32.mrb[0].mxu0
        %v8867 = vadd.f32 %v8794, %v8866
        %8868 = vmatprep.mubr.bf16.mxu0 %v418
        %8869 = vmatmul.mubr.bf16.gmra.mrb[0].mxu0 %v417
        %v8870 = vpop.f32.mrb[0].mxu0
        %v8871 = vadd.f32 %v8798, %v8870
        %v8872 = vpop.f32.mrb[0].mxu0
        %v8873 = vadd.f32 %v8800, %v8872
        %v8874 = vpop.f32.mrb[0].mxu0
        %v8875 = vadd.f32 %v8802, %v8874
        %v8876 = vpop.f32.mrb[0].mxu0
        %v8877 = vadd.f32 %v8804, %v8876
        %8878 = vmatprep.mubr.bf16.mxu0 %v434
        %8879 = vmatmul.mubr.bf16.gmra.mrb[0].mxu0 %v433
        %v8880 = vpop.f32.mrb[0].mxu0
        %v8881 = vadd.f32 %v8808, %v8880
        %v8882 = vpop.f32.mrb[0].mxu0
        %v8883 = vadd.f32 %v8810, %v8882
        %v8884 = vpop.f32.mrb[0].mxu0
        %v8885 = vadd.f32 %v8812, %v8884
        %v8886 = vpop.f32.mrb[0].mxu0
        %v8887 = vadd.f32 %v8814, %v8886
        %8888 = vmatprep.mubr.bf16.mxu0 %v450
        %8889 = vmatmul.mubr.bf16.gmra.mrb[0].mxu0 %v449
        %v8890 = vpop.f32.mrb[0].mxu0
        %v8891 = vadd.f32 %v8818, %v8890
        %v8892 = vpop.f32.mrb[0].mxu0
        %v8893 = vadd.f32 %v8820, %v8892
        %v8894 = vpop.f32.mrb[0].mxu0
        %v8895 = vadd.f32 %v8822, %v8894
        %v8896 = vpop.f32.mrb[0].mxu0
        %v8897 = vadd.f32 %v8824, %v8896
        %8898 = vdwg.mxu0
        %v8899 = vld [vmem:[#allocation8] sm:$0x1]
        %v8900 = vlaneseq
        %v8901 = vshrl.u32 %v8900, 7
        %v8902 = vsub.s32 0, %v8901
        %v8903 = vrot.slane %v8899, %v8902
        %v8904 = vadd.f32 %v7141, %v8903
        %v8905 = vadd.f32 %v7145, %v8903
        %v8906 = vadd.f32 %v7151, %v8903
        %v8907 = vadd.f32 %v7155, %v8903
        %v8908 = vadd.f32 %v7161, %v8903
        %v8909 = vadd.f32 %v7165, %v8903
        %v8910 = vadd.f32 %v7171, %v8903
        %v8911 = vadd.f32 %v7175, %v8903
        %v8912 = vmax.f32 %v8904, 0.0
        %v8913 = vmax.f32 %v8905, 0.0
        %v8914 = vmax.f32 %v8906, 0.0
        %v8915 = vmax.f32 %v8907, 0.0
        %v8916 = vmax.f32 %v8908, 0.0
        %v8917 = vmax.f32 %v8909, 0.0
        %v8918 = vmax.f32 %v8910, 0.0
        %v8919 = vmax.f32 %v8911, 0.0
        %8926 = vrot.lane.b32.xlu0 %v7141, 96
        %v8927 = vpop.permute.xlu0 %8926
        %8928 = vrot.lane.b32.xlu0 %v7145, 96
        %v8929 = vpop.permute.xlu0 %8928
        %8930 = vrot.lane.b32.xlu0 %v7151, 96
        %v8931 = vpop.permute.xlu0 %8930
        %8932 = vrot.lane.b32.xlu0 %v7155, 96
        %v8933 = vpop.permute.xlu0 %8932
        %8934 = vrot.lane.b32.xlu0 %v7161, 96
        %v8935 = vpop.permute.xlu0 %8934
        %8936 = vrot.lane.b32.xlu0 %v7165, 96
        %v8937 = vpop.permute.xlu0 %8936
        %v8939 = vrot.slane 0.0, 6
        %v8940 = vrot.slane %v8927, 6
        %v8941 = vrot.slane %v8929, 6
        %v8942 = vrot.slane %v8931, 6
        %v8943 = vrot.slane %v8933, 6
        %v8944 = vrot.slane %v8935, 6
        %v8945 = vrot.slane %v8937, 6
        %vm8953 = vcmask 1041408
        %v8954 = vsel %vm8953, 0.0, %v8939
        %v8955 = vsel %vm8953, 0.0, %v8940
        %v8956 = vsel %vm8953, 0.0, %v8941
        %v8957 = vsel %vm8953, 0.0, %v8942
        %v8958 = vsel %vm8953, 0.0, %v8943
        %v8959 = vsel %vm8953, 0.0, %v8944
        %v8960 = vsel %vm8953, 0.0, %v8945
        %v8961 = vadd.f32 %v8954, 0.0
        %v8962 = vadd.f32 %v8955, 0.0
        %v8963 = vadd.f32 %v8956, 0.0
        %v8964 = vadd.f32 %v8957, 0.0
        %v8965 = vadd.f32 %v8958, 0.0
        %v8966 = vadd.f32 %v8959, 0.0
        %v8967 = vadd.f32 %v8960, 0.0
        %8968 = vrot.lane.b32.xlu0 %v7141, 64
        %v8969 = vpop.permute.xlu0 %8968
        %8970 = vrot.lane.b32.xlu0 %v7145, 64
        %v8971 = vpop.permute.xlu0 %8970
        %8972 = vrot.lane.b32.xlu0 %v7151, 64
        %v8973 = vpop.permute.xlu0 %8972
        %8974 = vrot.lane.b32.xlu0 %v7155, 64
        %v8975 = vpop.permute.xlu0 %8974
        %8976 = vrot.lane.b32.xlu0 %v7161, 64
        %v8977 = vpop.permute.xlu0 %8976
        %8978 = vrot.lane.b32.xlu0 %v7165, 64
        %v8979 = vpop.permute.xlu0 %8978
        %v8986 = vadd.f32 %v8961, 0.0
        %v8987 = vadd.f32 %v8962, %v8969
        %v8988 = vadd.f32 %v8963, %v8971
        %v8989 = vadd.f32 %v8964, %v8973
        %v8990 = vadd.f32 %v8965, %v8975
        %v8991 = vadd.f32 %v8966, %v8977
        %v8992 = vadd.f32 %v8967, %v8979
        %8993 = vrot.lane.b32.xlu0 %v7141, 32
        %v8994 = vpop.permute.xlu0 %8993
        %8995 = vrot.lane.b32.xlu0 %v7145, 32
        %v8996 = vpop.permute.xlu0 %8995
        %8997 = vrot.lane.b32.xlu0 %v7151, 32
        %v8998 = vpop.permute.xlu0 %8997
        %8999 = vrot.lane.b32.xlu0 %v7155, 32
        %v9000 = vpop.permute.xlu0 %8999
        %9001 = vrot.lane.b32.xlu0 %v7161, 32
        %v9002 = vpop.permute.xlu0 %9001
        %9003 = vrot.lane.b32.xlu0 %v7165, 32
        %v9004 = vpop.permute.xlu0 %9003
        %v9005 = vrot.slane 0.0, 2
        %v9006 = vrot.slane %v8994, 2
        %v9007 = vrot.slane %v8996, 2
        %v9008 = vrot.slane %v8998, 2
        %v9009 = vrot.slane %v9000, 2
        %v9010 = vrot.slane %v9002, 2
        %v9011 = vrot.slane %v9004, 2
        %vm9019 = vcmask 1045504
        %v9020 = vsel %vm9019, %v9005, 0.0
        %v9021 = vsel %vm9019, %v9006, 0.0
        %v9022 = vsel %vm9019, %v9007, 0.0
        %v9023 = vsel %vm9019, %v9008, 0.0
        %v9024 = vsel %vm9019, %v9009, 0.0
        %v9025 = vsel %vm9019, %v9010, 0.0
        %v9026 = vsel %vm9019, %v9011, 0.0
        %v9027 = vadd.f32 %v8986, %v9020
        %v9028 = vadd.f32 %v8987, %v9021
        %v9029 = vadd.f32 %v8988, %v9022
        %v9030 = vadd.f32 %v8989, %v9023
        %v9031 = vadd.f32 %v8990, %v9024
        %v9032 = vadd.f32 %v8991, %v9025
        %v9033 = vadd.f32 %v8992, %v9026
        %v9042 = vrot.slane %v7143, 6
        %v9043 = vrot.slane %v7147, 6
        %v9044 = vrot.slane %v7153, 6
        %v9045 = vrot.slane %v7157, 6
        %v9046 = vrot.slane %v7163, 6
        %v9047 = vrot.slane %v7167, 6
        %v9048 = vrot.slane %v7173, 6
        %v9049 = vrot.slane %v7177, 6
        %v9058 = vsel %vm8953, 0.0, %v9042
        %v9059 = vsel %vm8953, 0.0, %v9043
        %v9060 = vsel %vm8953, 0.0, %v9044
        %v9061 = vsel %vm8953, 0.0, %v9045
        %v9062 = vsel %vm8953, 0.0, %v9046
        %v9063 = vsel %vm8953, 0.0, %v9047
        %v9064 = vsel %vm8953, 0.0, %v9048
        %v9065 = vsel %vm8953, 0.0, %v9049
        %v9066 = vadd.f32 %v9027, %v9058
        %v9067 = vadd.f32 %v9027, %v9059
        %v9068 = vadd.f32 %v9028, %v9060
        %v9069 = vadd.f32 %v9029, %v9061
        %v9070 = vadd.f32 %v9030, %v9062
        %v9071 = vadd.f32 %v9031, %v9063
        %v9072 = vadd.f32 %v9032, %v9064
        %v9073 = vadd.f32 %v9033, %v9065
        %9074 = vrot.lane.b32.xlu0 %v7143, 96
        %v9075 = vpop.permute.xlu0 %9074
        %9076 = vrot.lane.b32.xlu0 %v7147, 96
        %v9077 = vpop.permute.xlu0 %9076
        %9078 = vrot.lane.b32.xlu0 %v7153, 96
        %v9079 = vpop.permute.xlu0 %9078
        %9080 = vrot.lane.b32.xlu0 %v7157, 96
        %v9081 = vpop.permute.xlu0 %9080
        %9082 = vrot.lane.b32.xlu0 %v7163, 96
        %v9083 = vpop.permute.xlu0 %9082
        %9084 = vrot.lane.b32.xlu0 %v7167, 96
        %v9085 = vpop.permute.xlu0 %9084
        %9086 = vrot.lane.b32.xlu0 %v7173, 96
        %v9087 = vpop.permute.xlu0 %9086
        %9088 = vrot.lane.b32.xlu0 %v7177, 96
        %v9089 = vpop.permute.xlu0 %9088
        %v9098 = vadd.f32 %v9066, %v9075
        %v9099 = vadd.f32 %v9067, %v9077
        %v9100 = vadd.f32 %v9068, %v9079
        %v9101 = vadd.f32 %v9069, %v9081
        %v9102 = vadd.f32 %v9070, %v9083
        %v9103 = vadd.f32 %v9071, %v9085
        %v9104 = vadd.f32 %v9072, %v9087
        %v9105 = vadd.f32 %v9073, %v9089
        %v9106 = vrot.slane %v7143, 2
        %v9107 = vrot.slane %v7147, 2
        %v9108 = vrot.slane %v7153, 2
        %v9109 = vrot.slane %v7157, 2
        %v9110 = vrot.slane %v7163, 2
        %v9111 = vrot.slane %v7167, 2
        %v9112 = vrot.slane %v7173, 2
        %v9113 = vrot.slane %v7177, 2
        %v9122 = vsel %vm9019, %v9106, 0.0
        %v9123 = vsel %vm9019, %v9107, 0.0
        %v9124 = vsel %vm9019, %v9108, 0.0
        %v9125 = vsel %vm9019, %v9109, 0.0
        %v9126 = vsel %vm9019, %v9110, 0.0
        %v9127 = vsel %vm9019, %v9111, 0.0
        %v9128 = vsel %vm9019, %v9112, 0.0
        %v9129 = vsel %vm9019, %v9113, 0.0
        %9138 = vrot.lane.b32.xlu0 %v9122, 64
        %v9139 = vpop.permute.xlu0 %9138
        %9140 = vrot.lane.b32.xlu0 %v9123, 64
        %v9141 = vpop.permute.xlu0 %9140
        %9142 = vrot.lane.b32.xlu0 %v9124, 64
        %v9143 = vpop.permute.xlu0 %9142
        %9144 = vrot.lane.b32.xlu0 %v9125, 64
        %v9145 = vpop.permute.xlu0 %9144
        %9146 = vrot.lane.b32.xlu0 %v9126, 64
        %v9147 = vpop.permute.xlu0 %9146
        %9148 = vrot.lane.b32.xlu0 %v9127, 64
        %v9149 = vpop.permute.xlu0 %9148
        %9150 = vrot.lane.b32.xlu0 %v9128, 64
        %v9151 = vpop.permute.xlu0 %9150
        %9152 = vrot.lane.b32.xlu0 %v9129, 64
        %v9153 = vpop.permute.xlu0 %9152
        %v9162 = vadd.f32 %v9098, %v9139
        %v9163 = vadd.f32 %v9099, %v9141
        %v9164 = vadd.f32 %v9100, %v9143
        %v9165 = vadd.f32 %v9101, %v9145
        %v9166 = vadd.f32 %v9102, %v9147
        %v9167 = vadd.f32 %v9103, %v9149
        %v9168 = vadd.f32 %v9104, %v9151
        %v9169 = vadd.f32 %v9105, %v9153
        %9170 = vrot.lane.b32.xlu0 %v9044, 32
        %v9171 = vpop.permute.xlu0 %9170
        %9172 = vrot.lane.b32.xlu0 %v9045, 32
        %v9173 = vpop.permute.xlu0 %9172
        %9174 = vrot.lane.b32.xlu0 %v9046, 32
        %v9175 = vpop.permute.xlu0 %9174
        %9176 = vrot.lane.b32.xlu0 %v9047, 32
        %v9177 = vpop.permute.xlu0 %9176
        %9178 = vrot.lane.b32.xlu0 %v9048, 32
        %v9179 = vpop.permute.xlu0 %9178
        %9180 = vrot.lane.b32.xlu0 %v9049, 32
        %v9181 = vpop.permute.xlu0 %9180
        %9182 = vrot.lane.b32.xlu0 %v8939, 32
        %v9183 = vpop.permute.xlu0 %9182
        %v9191 = vsel %vm8953, 0.0, %v9171
        %v9192 = vsel %vm8953, 0.0, %v9173
        %v9193 = vsel %vm8953, 0.0, %v9175
        %v9194 = vsel %vm8953, 0.0, %v9177
        %v9195 = vsel %vm8953, 0.0, %v9179
        %v9196 = vsel %vm8953, 0.0, %v9181
        %v9197 = vsel %vm8953, 0.0, %v9183
        %v9198 = vadd.f32 %v9162, %v9191
        %v9199 = vadd.f32 %v9163, %v9192
        %v9200 = vadd.f32 %v9164, %v9193
        %v9201 = vadd.f32 %v9165, %v9194
        %v9202 = vadd.f32 %v9166, %v9195
        %v9203 = vadd.f32 %v9167, %v9196
        %v9204 = vadd.f32 %v9168, %v9197
        %v9205 = vadd.f32 %v9169, %v9197
        %v9206 = vadd.f32 %v9198, %v7735
        %v9207 = vadd.f32 %v9199, %v7739
        %v9208 = vadd.f32 %v9200, %v7745
        %v9209 = vadd.f32 %v9201, %v7749
        %v9210 = vadd.f32 %v9202, %v7755
        %v9211 = vadd.f32 %v9203, %v7759
        %v9212 = vadd.f32 %v9204, 0.0
        %v9213 = vadd.f32 %v9205, 0.0
        %v9220 = vrot.slane %v7735, 2
        %v9221 = vrot.slane %v7739, 2
        %v9222 = vrot.slane %v7745, 2
        %v9223 = vrot.slane %v7749, 2
        %v9224 = vrot.slane %v7755, 2
        %v9225 = vrot.slane %v7759, 2
        %v9232 = vsel %vm9019, %v9220, 0.0
        %v9233 = vsel %vm9019, %v9221, 0.0
        %v9234 = vsel %vm9019, %v9222, 0.0
        %v9235 = vsel %vm9019, %v9223, 0.0
        %v9236 = vsel %vm9019, %v9224, 0.0
        %v9237 = vsel %vm9019, %v9225, 0.0
        %9245 = vrot.lane.b32.xlu0 %v9232, 96
        %v9246 = vpop.permute.xlu0 %9245
        %9247 = vrot.lane.b32.xlu0 %v9233, 96
        %v9248 = vpop.permute.xlu0 %9247
        %9249 = vrot.lane.b32.xlu0 %v9234, 96
        %v9250 = vpop.permute.xlu0 %9249
        %9251 = vrot.lane.b32.xlu0 %v9235, 96
        %v9252 = vpop.permute.xlu0 %9251
        %9253 = vrot.lane.b32.xlu0 %v9236, 96
        %v9254 = vpop.permute.xlu0 %9253
        %9255 = vrot.lane.b32.xlu0 %v9237, 96
        %v9256 = vpop.permute.xlu0 %9255
        %9257 = vrot.lane.b32.xlu0 %v9020, 96
        %v9258 = vpop.permute.xlu0 %9257
        %v9266 = vadd.f32 %v9206, %v9246
        %v9267 = vadd.f32 %v9207, %v9248
        %v9268 = vadd.f32 %v9208, %v9250
        %v9269 = vadd.f32 %v9209, %v9252
        %v9270 = vadd.f32 %v9210, %v9254
        %v9271 = vadd.f32 %v9211, %v9256
        %v9272 = vadd.f32 %v9212, %v9258
        %v9273 = vadd.f32 %v9213, %v9258
        %v9274 = vld [vmem:[#allocation8 + $0x1] sm:$0x1]
        %v9275 = vlaneseq
        %v9276 = vshrl.u32 %v9275, 7
        %v9277 = vsub.s32 0, %v9276
        %v9278 = vrot.slane %v9274, %v9277
        %v9279 = vadd.f32 %v9266, %v9278
        %v9280 = vadd.f32 %v9267, %v9278
        %v9281 = vadd.f32 %v9268, %v9278
        %v9282 = vadd.f32 %v9269, %v9278
        %v9283 = vadd.f32 %v9270, %v9278
        %v9284 = vadd.f32 %v9271, %v9278
        %v9285 = vadd.f32 %v9272, %v9278
        %v9286 = vadd.f32 %v9273, %v9278
        %v9287 = vmax.f32 %v9279, 0.0
        %v9288 = vmax.f32 %v9280, 0.0
        %v9289 = vmax.f32 %v9281, 0.0
        %v9290 = vmax.f32 %v9282, 0.0
        %v9291 = vmax.f32 %v9283, 0.0
        %v9292 = vmax.f32 %v9284, 0.0
        %v9293 = vmax.f32 %v9285, 0.0
        %v9294 = vmax.f32 %v9286, 0.0
        %9297 = vrot.lane.b32.xlu0 %v7725, 64
        %v9298 = vpop.permute.xlu0 %9297
        %9299 = vrot.lane.b32.xlu0 %v7729, 64
        %v9300 = vpop.permute.xlu0 %9299
        %9301 = vrot.lane.b32.xlu0 %v7735, 64
        %v9302 = vpop.permute.xlu0 %9301
        %v9303 = vrot.slane 0.0, 3
        %v9304 = vrot.slane %v9298, 3
        %v9305 = vrot.slane %v9300, 3
        %v9306 = vrot.slane %v9302, 3
        %vm9311 = vcmask 1044480
        %v9312 = vsel %vm9311, 0.0, %v9303
        %v9313 = vsel %vm9311, 0.0, %v9304
        %v9314 = vsel %vm9311, 0.0, %v9305
        %v9315 = vsel %vm9311, 0.0, %v9306
        %v9316 = vadd.f32 %v9312, 0.0
        %v9317 = vadd.f32 %v9313, 0.0
        %v9318 = vadd.f32 %v9314, 0.0
        %v9319 = vadd.f32 %v9315, 0.0
        %9320 = vrot.lane.b32.xlu0 %v7725, 32
        %v9321 = vpop.permute.xlu0 %9320
        %9322 = vrot.lane.b32.xlu0 %v7729, 32
        %v9323 = vpop.permute.xlu0 %9322
        %9324 = vrot.lane.b32.xlu0 %v7735, 32
        %v9325 = vpop.permute.xlu0 %9324
        %v9329 = vadd.f32 %v9316, 0.0
        %v9330 = vadd.f32 %v9317, %v9321
        %v9331 = vadd.f32 %v9318, %v9323
        %v9332 = vadd.f32 %v9319, %v9325
        %v9336 = vrot.slane 0.0, 5
        %v9337 = vrot.slane %v7727, 5
        %v9338 = vrot.slane %v7731, 5
        %v9339 = vrot.slane %v7737, 5
        %vm9344 = vcmask 1042432
        %v9345 = vsel %vm9344, %v9336, 0.0
        %v9346 = vsel %vm9344, %v9337, 0.0
        %v9347 = vsel %vm9344, %v9338, 0.0
        %v9348 = vsel %vm9344, %v9339, 0.0
        %v9349 = vadd.f32 %v9329, %v9345
        %v9350 = vadd.f32 %v9330, %v9346
        %v9351 = vadd.f32 %v9331, %v9347
        %v9352 = vadd.f32 %v9332, %v9348
        %v9358 = vrot.slane %v7727, 3
        %v9359 = vrot.slane %v7731, 3
        %v9360 = vrot.slane %v7737, 3
        %v9361 = vrot.slane %v7741, 3
        %v9362 = vrot.slane %v7747, 3
        %v9363 = vrot.slane %v7751, 3
        %v9364 = vrot.slane %v7757, 3
        %v9365 = vrot.slane %v7761, 3
        %9366 = vrot.lane.b32.xlu0 %v9358, 96
        %v9367 = vpop.permute.xlu0 %9366
        %9368 = vrot.lane.b32.xlu0 %v9359, 96
        %v9369 = vpop.permute.xlu0 %9368
        %9370 = vrot.lane.b32.xlu0 %v9360, 96
        %v9371 = vpop.permute.xlu0 %9370
        %9372 = vrot.lane.b32.xlu0 %v9361, 96
        %v9373 = vpop.permute.xlu0 %9372
        %9374 = vrot.lane.b32.xlu0 %v9362, 96
        %v9375 = vpop.permute.xlu0 %9374
        %9376 = vrot.lane.b32.xlu0 %v9363, 96
        %v9377 = vpop.permute.xlu0 %9376
        %9378 = vrot.lane.b32.xlu0 %v9364, 96
        %v9379 = vpop.permute.xlu0 %9378
        %9380 = vrot.lane.b32.xlu0 %v9365, 96
        %v9381 = vpop.permute.xlu0 %9380
        %v9390 = vsel %vm9311, 0.0, %v9367
        %v9391 = vsel %vm9311, 0.0, %v9369
        %v9392 = vsel %vm9311, 0.0, %v9371
        %v9393 = vsel %vm9311, 0.0, %v9373
        %v9394 = vsel %vm9311, 0.0, %v9375
        %v9395 = vsel %vm9311, 0.0, %v9377
        %v9396 = vsel %vm9311, 0.0, %v9379
        %v9397 = vsel %vm9311, 0.0, %v9381
        %v9398 = vadd.f32 %v9349, %v9390
        %v9399 = vadd.f32 %v9349, %v9391
        %v9400 = vadd.f32 %v9349, %v9392
        %v9401 = vadd.f32 %v9349, %v9393
        %v9402 = vadd.f32 %v9349, %v9394
        %v9403 = vadd.f32 %v9350, %v9395
        %v9404 = vadd.f32 %v9351, %v9396
        %v9405 = vadd.f32 %v9352, %v9397
        %9406 = vrot.lane.b32.xlu0 %v7727, 64
        %v9407 = vpop.permute.xlu0 %9406
        %9408 = vrot.lane.b32.xlu0 %v7731, 64
        %v9409 = vpop.permute.xlu0 %9408
        %9410 = vrot.lane.b32.xlu0 %v7737, 64
        %v9411 = vpop.permute.xlu0 %9410
        %9412 = vrot.lane.b32.xlu0 %v7741, 64
        %v9413 = vpop.permute.xlu0 %9412
        %9414 = vrot.lane.b32.xlu0 %v7747, 64
        %v9415 = vpop.permute.xlu0 %9414
        %9416 = vrot.lane.b32.xlu0 %v7751, 64
        %v9417 = vpop.permute.xlu0 %9416
        %9418 = vrot.lane.b32.xlu0 %v7757, 64
        %v9419 = vpop.permute.xlu0 %9418
        %9420 = vrot.lane.b32.xlu0 %v7761, 64
        %v9421 = vpop.permute.xlu0 %9420
        %v9430 = vadd.f32 %v9398, %v9407
        %v9431 = vadd.f32 %v9399, %v9409
        %v9432 = vadd.f32 %v9400, %v9411
        %v9433 = vadd.f32 %v9401, %v9413
        %v9434 = vadd.f32 %v9402, %v9415
        %v9435 = vadd.f32 %v9403, %v9417
        %v9436 = vadd.f32 %v9404, %v9419
        %v9437 = vadd.f32 %v9405, %v9421
        %v9438 = vrot.slane %v7741, 5
        %v9439 = vrot.slane %v7747, 5
        %v9440 = vrot.slane %v7751, 5
        %v9441 = vrot.slane %v7757, 5
        %v9442 = vrot.slane %v7761, 5
        %v9448 = vsel %vm9344, %v9438, 0.0
        %v9449 = vsel %vm9344, %v9439, 0.0
        %v9450 = vsel %vm9344, %v9440, 0.0
        %v9451 = vsel %vm9344, %v9441, 0.0
        %v9452 = vsel %vm9344, %v9442, 0.0
        %9461 = vrot.lane.b32.xlu0 %v9346, 32
        %v9462 = vpop.permute.xlu0 %9461
        %9463 = vrot.lane.b32.xlu0 %v9347, 32
        %v9464 = vpop.permute.xlu0 %9463
        %9465 = vrot.lane.b32.xlu0 %v9348, 32
        %v9466 = vpop.permute.xlu0 %9465
        %9467 = vrot.lane.b32.xlu0 %v9448, 32
        %v9468 = vpop.permute.xlu0 %9467
        %9469 = vrot.lane.b32.xlu0 %v9449, 32
        %v9470 = vpop.permute.xlu0 %9469
        %9471 = vrot.lane.b32.xlu0 %v9450, 32
        %v9472 = vpop.permute.xlu0 %9471
        %9473 = vrot.lane.b32.xlu0 %v9451, 32
        %v9474 = vpop.permute.xlu0 %9473
        %9475 = vrot.lane.b32.xlu0 %v9452, 32
        %v9476 = vpop.permute.xlu0 %9475
        %v9485 = vadd.f32 %v9430, %v9462
        %v9486 = vadd.f32 %v9431, %v9464
        %v9487 = vadd.f32 %v9432, %v9466
        %v9488 = vadd.f32 %v9433, %v9468
        %v9489 = vadd.f32 %v9434, %v9470
        %v9490 = vadd.f32 %v9435, %v9472
        %v9491 = vadd.f32 %v9436, %v9474
        %v9492 = vadd.f32 %v9437, %v9476
        %v9496 = vrot.slane %v8301, 3
        %v9497 = vrot.slane %v8307, 3
        %v9498 = vrot.slane %v8311, 3
        %v9502 = vsel %vm9311, 0.0, %v9496
        %v9503 = vsel %vm9311, 0.0, %v9497
        %v9504 = vsel %vm9311, 0.0, %v9498
        %v9505 = vadd.f32 %v9485, %v9502
        %v9506 = vadd.f32 %v9486, %v9503
        %v9507 = vadd.f32 %v9487, %v9504
        %v9508 = vadd.f32 %v9488, %v9312
        %v9509 = vadd.f32 %v9489, %v9312
        %v9510 = vadd.f32 %v9490, %v9312
        %v9511 = vadd.f32 %v9491, %v9312
        %v9512 = vadd.f32 %v9492, %v9312
        %9513 = vrot.lane.b32.xlu0 %v8301, 96
        %v9514 = vpop.permute.xlu0 %9513
        %9515 = vrot.lane.b32.xlu0 %v8307, 96
        %v9516 = vpop.permute.xlu0 %9515
        %9517 = vrot.lane.b32.xlu0 %v8311, 96
        %v9518 = vpop.permute.xlu0 %9517
        %9519 = vrot.lane.b32.xlu0 0.0, 96
        %v9520 = vpop.permute.xlu0 %9519
        %v9525 = vadd.f32 %v9505, %v9514
        %v9526 = vadd.f32 %v9506, %v9516
        %v9527 = vadd.f32 %v9507, %v9518
        %v9528 = vadd.f32 %v9508, %v9520
        %v9529 = vadd.f32 %v9509, %v9520
        %v9530 = vadd.f32 %v9510, %v9520
        %v9531 = vadd.f32 %v9511, %v9520
        %v9532 = vadd.f32 %v9512, %v9520
        %v9533 = vrot.slane %v8301, 5
        %v9534 = vrot.slane %v8307, 5
        %v9535 = vrot.slane %v8311, 5
        %v9539 = vsel %vm9344, %v9533, 0.0
        %v9540 = vsel %vm9344, %v9534, 0.0
        %v9541 = vsel %vm9344, %v9535, 0.0
        %9546 = vrot.lane.b32.xlu0 %v9539, 64
        %v9547 = vpop.permute.xlu0 %9546
        %9548 = vrot.lane.b32.xlu0 %v9540, 64
        %v9549 = vpop.permute.xlu0 %9548
        %9550 = vrot.lane.b32.xlu0 %v9541, 64
        %v9551 = vpop.permute.xlu0 %9550
        %9552 = vrot.lane.b32.xlu0 %v9345, 64
        %v9553 = vpop.permute.xlu0 %9552
        %v9558 = vadd.f32 %v9525, %v9547
        %v9559 = vadd.f32 %v9526, %v9549
        %v9560 = vadd.f32 %v9527, %v9551
        %v9561 = vadd.f32 %v9528, %v9553
        %v9562 = vadd.f32 %v9529, %v9553
        %v9563 = vadd.f32 %v9530, %v9553
        %v9564 = vadd.f32 %v9531, %v9553
        %v9565 = vadd.f32 %v9532, %v9553
        %v9566 = vld [vmem:[#allocation8 + $0x2] sm:$0x1]
        %v9567 = vlaneseq
        %v9568 = vshrl.u32 %v9567, 7
        %v9569 = vsub.s32 0, %v9568
        %v9570 = vrot.slane %v9566, %v9569
        %v9571 = vadd.f32 %v9558, %v9570
        %v9572 = vadd.f32 %v9559, %v9570
        %v9573 = vadd.f32 %v9560, %v9570
        %v9574 = vadd.f32 %v9561, %v9570
        %v9575 = vadd.f32 %v9562, %v9570
        %v9576 = vadd.f32 %v9563, %v9570
        %v9577 = vadd.f32 %v9564, %v9570
        %v9578 = vadd.f32 %v9565, %v9570
        %v9579 = vmax.f32 %v9571, 0.0
        %v9580 = vmax.f32 %v9572, 0.0
        %v9581 = vmax.f32 %v9573, 0.0
        %v9582 = vmax.f32 %v9574, 0.0
        %v9583 = vmax.f32 %v9575, 0.0
        %v9584 = vmax.f32 %v9576, 0.0
        %v9585 = vmax.f32 %v9577, 0.0
        %v9586 = vmax.f32 %v9578, 0.0
        %9588 = vrot.lane.b32.xlu0 %v8281, 32
        %v9589 = vpop.permute.xlu0 %9588
        %v9590 = vrot.slane 0.0, 1
        %v9591 = vrot.slane %v9589, 1
        %vm9594 = vcmask 1046528
        %v9595 = vsel %vm9594, 0.0, %v9590
        %v9596 = vsel %vm9594, 0.0, %v9591
        %v9597 = vadd.f32 %v9595, 0.0
        %v9598 = vadd.f32 %v9596, 0.0
        %v9599 = vadd.f32 %v9597, 0.0
        %v9600 = vadd.f32 %v9598, %v8283
        %9602 = vrot.lane.b32.xlu0 %v8283, 96
        %v9603 = vpop.permute.xlu0 %9602
        %v9604 = vrot.slane 0.0, 7
        %v9605 = vrot.slane %v9603, 7
        %vm9608 = vcmask 1040384
        %v9609 = vsel %vm9608, %v9604, 0.0
        %v9610 = vsel %vm9608, %v9605, 0.0
        %v9611 = vadd.f32 %v9599, %v9609
        %v9612 = vadd.f32 %v9600, %v9610
        %v9620 = vrot.slane %v8283, 1
        %v9621 = vrot.slane %v8286, 1
        %v9622 = vrot.slane %v8291, 1
        %v9623 = vrot.slane %v8294, 1
        %v9624 = vrot.slane %v8299, 1
        %v9625 = vrot.slane %v8303, 1
        %v9626 = vrot.slane %v8309, 1
        %v9627 = vrot.slane %v8313, 1
        %9628 = vrot.lane.b32.xlu0 %v9620, 64
        %v9629 = vpop.permute.xlu0 %9628
        %9630 = vrot.lane.b32.xlu0 %v9621, 64
        %v9631 = vpop.permute.xlu0 %9630
        %9632 = vrot.lane.b32.xlu0 %v9622, 64
        %v9633 = vpop.permute.xlu0 %9632
        %9634 = vrot.lane.b32.xlu0 %v9623, 64
        %v9635 = vpop.permute.xlu0 %9634
        %9636 = vrot.lane.b32.xlu0 %v9624, 64
        %v9637 = vpop.permute.xlu0 %9636
        %9638 = vrot.lane.b32.xlu0 %v9625, 64
        %v9639 = vpop.permute.xlu0 %9638
        %9640 = vrot.lane.b32.xlu0 %v9626, 64
        %v9641 = vpop.permute.xlu0 %9640
        %9642 = vrot.lane.b32.xlu0 %v9627, 64
        %v9643 = vpop.permute.xlu0 %9642
        %v9652 = vsel %vm9594, 0.0, %v9629
        %v9653 = vsel %vm9594, 0.0, %v9631
        %v9654 = vsel %vm9594, 0.0, %v9633
        %v9655 = vsel %vm9594, 0.0, %v9635
        %v9656 = vsel %vm9594, 0.0, %v9637
        %v9657 = vsel %vm9594, 0.0, %v9639
        %v9658 = vsel %vm9594, 0.0, %v9641
        %v9659 = vsel %vm9594, 0.0, %v9643
        %v9660 = vadd.f32 %v9611, %v9652
        %v9661 = vadd.f32 %v9611, %v9653
        %v9662 = vadd.f32 %v9611, %v9654
        %v9663 = vadd.f32 %v9611, %v9655
        %v9664 = vadd.f32 %v9611, %v9656
        %v9665 = vadd.f32 %v9611, %v9657
        %v9666 = vadd.f32 %v9611, %v9658
        %v9667 = vadd.f32 %v9612, %v9659
        %9668 = vrot.lane.b32.xlu0 %v8283, 32
        %v9669 = vpop.permute.xlu0 %9668
        %9670 = vrot.lane.b32.xlu0 %v8286, 32
        %v9671 = vpop.permute.xlu0 %9670
        %9672 = vrot.lane.b32.xlu0 %v8291, 32
        %v9673 = vpop.permute.xlu0 %9672
        %9674 = vrot.lane.b32.xlu0 %v8294, 32
        %v9675 = vpop.permute.xlu0 %9674
        %9676 = vrot.lane.b32.xlu0 %v8299, 32
        %v9677 = vpop.permute.xlu0 %9676
        %9678 = vrot.lane.b32.xlu0 %v8303, 32
        %v9679 = vpop.permute.xlu0 %9678
        %9680 = vrot.lane.b32.xlu0 %v8309, 32
        %v9681 = vpop.permute.xlu0 %9680
        %9682 = vrot.lane.b32.xlu0 %v8313, 32
        %v9683 = vpop.permute.xlu0 %9682
        %v9692 = vadd.f32 %v9660, %v9669
        %v9693 = vadd.f32 %v9661, %v9671
        %v9694 = vadd.f32 %v9662, %v9673
        %v9695 = vadd.f32 %v9663, %v9675
        %v9696 = vadd.f32 %v9664, %v9677
        %v9697 = vadd.f32 %v9665, %v9679
        %v9698 = vadd.f32 %v9666, %v9681
        %v9699 = vadd.f32 %v9667, %v9683
        %v9708 = vrot.slane %v8861, 7
        %v9709 = vrot.slane %v8865, 7
        %v9710 = vrot.slane %v8871, 7
        %v9711 = vrot.slane %v8875, 7
        %v9712 = vrot.slane %v8881, 7
        %v9713 = vrot.slane %v8885, 7
        %v9714 = vrot.slane %v8891, 7
        %v9715 = vrot.slane %v8895, 7
        %v9724 = vsel %vm9608, %v9708, 0.0
        %v9725 = vsel %vm9608, %v9709, 0.0
        %v9726 = vsel %vm9608, %v9710, 0.0
        %v9727 = vsel %vm9608, %v9711, 0.0
        %v9728 = vsel %vm9608, %v9712, 0.0
        %v9729 = vsel %vm9608, %v9713, 0.0
        %v9730 = vsel %vm9608, %v9714, 0.0
        %v9731 = vsel %vm9608, %v9715, 0.0
        %v9732 = vadd.f32 %v9692, %v9724
        %v9733 = vadd.f32 %v9693, %v9725
        %v9734 = vadd.f32 %v9694, %v9726
        %v9735 = vadd.f32 %v9695, %v9727
        %v9736 = vadd.f32 %v9696, %v9728
        %v9737 = vadd.f32 %v9697, %v9729
        %v9738 = vadd.f32 %v9698, %v9730
        %v9739 = vadd.f32 %v9699, %v9731
        %v9740 = vrot.slane %v8895, 1
        %9741 = vrot.lane.b32.xlu0 %v9740, 96
        %v9742 = vpop.permute.xlu0 %9741
        %9743 = vrot.lane.b32.xlu0 %v9590, 96
        %v9744 = vpop.permute.xlu0 %9743
        %v9747 = vsel %vm9594, 0.0, %v9742
        %v9748 = vsel %vm9594, 0.0, %v9744
        %v9749 = vadd.f32 %v9732, %v9747
        %v9750 = vadd.f32 %v9733, %v9748
        %v9751 = vadd.f32 %v9734, %v9748
        %v9752 = vadd.f32 %v9735, %v9748
        %v9753 = vadd.f32 %v9736, %v9748
        %v9754 = vadd.f32 %v9737, %v9748
        %v9755 = vadd.f32 %v9738, %v9748
        %v9756 = vadd.f32 %v9739, %v9748
        %9757 = vrot.lane.b32.xlu0 %v8895, 64
        %v9758 = vpop.permute.xlu0 %9757
        %9759 = vrot.lane.b32.xlu0 0.0, 64
        %v9760 = vpop.permute.xlu0 %9759
        %v9763 = vadd.f32 %v9749, %v9758
        %v9764 = vadd.f32 %v9750, %v9760
        %v9765 = vadd.f32 %v9751, %v9760
        %v9766 = vadd.f32 %v9752, %v9760
        %v9767 = vadd.f32 %v9753, %v9760
        %v9768 = vadd.f32 %v9754, %v9760
        %v9769 = vadd.f32 %v9755, %v9760
        %v9770 = vadd.f32 %v9756, %v9760
        %9773 = vrot.lane.b32.xlu0 %v9731, 32
        %v9774 = vpop.permute.xlu0 %9773
        %9775 = vrot.lane.b32.xlu0 %v9609, 32
        %v9776 = vpop.permute.xlu0 %9775
        %v9779 = vadd.f32 %v9763, %v9774
        %v9780 = vadd.f32 %v9764, %v9776
        %v9781 = vadd.f32 %v9765, %v9776
        %v9782 = vadd.f32 %v9766, %v9776
        %v9783 = vadd.f32 %v9767, %v9776
        %v9784 = vadd.f32 %v9768, %v9776
        %v9785 = vadd.f32 %v9769, %v9776
        %v9786 = vadd.f32 %v9770, %v9776
        %v9787 = vld [vmem:[#allocation8 + $0x3] sm:$0x1]
        %v9788 = vlaneseq
        %v9789 = vshrl.u32 %v9788, 7
        %v9790 = vsub.s32 0, %v9789
        %v9791 = vrot.slane %v9787, %v9790
        %v9792 = vadd.f32 %v9779, %v9791
        %v9793 = vadd.f32 %v9780, %v9791
        %v9794 = vadd.f32 %v9781, %v9791
        %v9795 = vadd.f32 %v9782, %v9791
        %v9796 = vadd.f32 %v9783, %v9791
        %v9797 = vadd.f32 %v9784, %v9791
        %v9798 = vadd.f32 %v9785, %v9791
        %v9799 = vadd.f32 %v9786, %v9791
        %v9800 = vmax.f32 %v9792, 0.0
        %v9801 = vmax.f32 %v9793, 0.0
        %v9802 = vmax.f32 %v9794, 0.0
        %v9803 = vmax.f32 %v9795, 0.0
        %v9804 = vmax.f32 %v9796, 0.0
        %v9805 = vmax.f32 %v9797, 0.0
        %v9806 = vmax.f32 %v9798, 0.0
        %v9807 = vmax.f32 %v9799, 0.0
        %vm9808 = vcmask 261120
        %v9809 = vsel %vm9808, %v8863, 0.0
        %v9810 = vsel %vm9808, %v8867, 0.0
        %v9811 = vadd.f32 %v9809, %v9810
        %v9812 = vsel %vm9808, %v8873, 0.0
        %v9813 = vadd.f32 %v9811, %v9812
        %v9814 = vsel %vm9808, %v8877, 0.0
        %v9815 = vadd.f32 %v9813, %v9814
        %v9816 = vsel %vm9808, %v8883, 0.0
        %v9817 = vadd.f32 %v9815, %v9816
        %v9818 = vsel %vm9808, %v8887, 0.0
        %v9819 = vadd.f32 %v9817, %v9818
        %v9820 = vsel %vm9808, %v8893, 0.0
        %v9821 = vadd.f32 %v9819, %v9820
        %v9822 = vsel %vm9808, %v8897, 0.0
        %v9823 = vadd.f32 %v9821, %v9822
        %v9824 = vrot.slane %v9823, 4
        %v9825 = vadd.f32 %v9823, %v9824
        %v9826 = vrot.slane %v9825, 2
        %v9827 = vadd.f32 %v9825, %v9826
        %v9828 = vrot.slane %v9827, 1
        %v9829 = vadd.f32 %v9827, %v9828
        %v9830 = vrcp.pop 64.0
        %v9831 = vmul.f32 %v9829, %v9830
        %v9832 = vld [vmem:[#allocation8 + $0x4] sm:$0x1]
        %v9833 = vadd.f32 %v9831, %v9832
        %v9834 = vmax.f32 %v9833, 0.0
        %v9835 = vlaneseq
        %v9836 = vshrl.u32 %v9835, 7
        %v9837 = vsub.s32 0, %v9836
        %v9838 = vrot.slane %v9834, %v9837
        %9847 = vrot.lane.b32.xlu0 %v9287, 32
        %v9848 = vpop.permute.xlu0 %9847
        %9849 = vrot.lane.b32.xlu0 %v9288, 32
        %v9850 = vpop.permute.xlu0 %9849
        %9851 = vrot.lane.b32.xlu0 %v9289, 32
        %v9852 = vpop.permute.xlu0 %9851
        %9853 = vrot.lane.b32.xlu0 %v9290, 32
        %v9854 = vpop.permute.xlu0 %9853
        %9855 = vrot.lane.b32.xlu0 %v9291, 32
        %v9856 = vpop.permute.xlu0 %9855
        %9857 = vrot.lane.b32.xlu0 %v9292, 32
        %v9858 = vpop.permute.xlu0 %9857
        %9859 = vrot.lane.b32.xlu0 %v9293, 32
        %v9860 = vpop.permute.xlu0 %9859
        %9861 = vrot.lane.b32.xlu0 %v9294, 32
        %v9862 = vpop.permute.xlu0 %9861
        %9879 = vrot.lane.b32.xlu0 %v9579, 64
        %v9880 = vpop.permute.xlu0 %9879
        %9881 = vrot.lane.b32.xlu0 %v9580, 64
        %v9882 = vpop.permute.xlu0 %9881
        %9883 = vrot.lane.b32.xlu0 %v9581, 64
        %v9884 = vpop.permute.xlu0 %9883
        %9885 = vrot.lane.b32.xlu0 %v9582, 64
        %v9886 = vpop.permute.xlu0 %9885
        %9887 = vrot.lane.b32.xlu0 %v9583, 64
        %v9888 = vpop.permute.xlu0 %9887
        %9889 = vrot.lane.b32.xlu0 %v9584, 64
        %v9890 = vpop.permute.xlu0 %9889
        %9891 = vrot.lane.b32.xlu0 %v9585, 64
        %v9892 = vpop.permute.xlu0 %9891
        %9893 = vrot.lane.b32.xlu0 %v9586, 64
        %v9894 = vpop.permute.xlu0 %9893
        %9911 = vrot.lane.b32.xlu0 %v9800, 96
        %v9912 = vpop.permute.xlu0 %9911
        %9913 = vrot.lane.b32.xlu0 %v9801, 96
        %v9914 = vpop.permute.xlu0 %9913
        %9915 = vrot.lane.b32.xlu0 %v9802, 96
        %v9916 = vpop.permute.xlu0 %9915
        %9917 = vrot.lane.b32.xlu0 %v9803, 96
        %v9918 = vpop.permute.xlu0 %9917
        %9919 = vrot.lane.b32.xlu0 %v9804, 96
        %v9920 = vpop.permute.xlu0 %9919
        %9921 = vrot.lane.b32.xlu0 %v9805, 96
        %v9922 = vpop.permute.xlu0 %9921
        %9923 = vrot.lane.b32.xlu0 %v9806, 96
        %v9924 = vpop.permute.xlu0 %9923
        %9925 = vrot.lane.b32.xlu0 %v9807, 96
        %v9926 = vpop.permute.xlu0 %9925
        %v9935 = vsel %vm9808, %v8912, %v9848
        %v9936 = vsel %vm9808, %v8913, %v9850
        %v9937 = vsel %vm9808, %v8914, %v9852
        %v9938 = vsel %vm9808, %v8915, %v9854
        %v9939 = vsel %vm9808, %v8916, %v9856
        %v9940 = vsel %vm9808, %v8917, %v9858
        %v9941 = vsel %vm9808, %v8918, %v9860
        %v9942 = vsel %vm9808, %v8919, %v9862
        %vm9943 = vcmask 523264
        %v9944 = vsel %vm9943, %v9935, %v9880
        %v9945 = vsel %vm9943, %v9936, %v9882
        %v9946 = vsel %vm9943, %v9937, %v9884
        %v9947 = vsel %vm9943, %v9938, %v9886
        %v9948 = vsel %vm9943, %v9939, %v9888
        %v9949 = vsel %vm9943, %v9940, %v9890
        %v9950 = vsel %vm9943, %v9941, %v9892
        %v9951 = vsel %vm9943, %v9942, %v9894
        %vm9952 = vcmask 785408
        %v9953 = vsel %vm9952, %v9944, %v9912
        %v9954 = vsel %vm9952, %v9945, %v9914
        %v9955 = vsel %vm9952, %v9946, %v9916
        %v9956 = vsel %vm9952, %v9947, %v9918
        %v9957 = vsel %vm9952, %v9948, %v9920
        %v9958 = vsel %vm9952, %v9949, %v9922
        %v9959 = vsel %vm9952, %v9950, %v9924
        %v9960 = vsel %vm9952, %v9951, %v9926
        %v9961 = vpack.c.bf16 %v9954, %v9953
        %v9962 = vpack.c.bf16 %v9838, %v9838
        %v9963 = vpack.c.bf16 %v9956, %v9955
        %v9964 = vpack.c.bf16 %v9958, %v9957
        %v9965 = vpack.c.bf16 %v9960, %v9959
        %v9966 = vld [vmem:[#allocation7] sm:$0xff]
        %v9967 = vld [vmem:[#allocation7 + $0x8] sm:$0xf]
        %v9968 = vld [vmem:[#allocation7 + $0xc] sm:$0xff]
        %v9969 = vld [vmem:[#allocation7 + $0x14] sm:$0xf]
        %v9970 = vld [vmem:[#allocation7 + $0x18] sm:$0xff]
        %v9971 = vld [vmem:[#allocation7 + $0x20] sm:$0xf]
        %v9972 = vld [vmem:[#allocation7 + $0x24] sm:$0xff]
        %v9973 = vld [vmem:[#allocation7 + $0x2c] sm:$0xf]
        %v9974 = vld [vmem:[#allocation7 + $0x30] sm:$0xff]
        %v9975 = vld [vmem:[#allocation7 + $0x38] sm:$0xf]
        %v9976 = vld [vmem:[#allocation7 + $0x3c] sm:$0xff]
        %v9977 = vld [vmem:[#allocation7 + $0x44] sm:$0xf]
        %v9978 = vld [vmem:[#allocation7 + $0x48] sm:$0xff]
        %v9979 = vld [vmem:[#allocation7 + $0x50] sm:$0xf]
        %v9980 = vld [vmem:[#allocation7 + $0x54] sm:$0xff]
        %v9981 = vld [vmem:[#allocation7 + $0x5c] sm:$0xf]
        %v9982 = vld [vmem:[#allocation7 + $0x60] sm:$0xff]
        %v9983 = vld [vmem:[#allocation7 + $0x68] sm:$0xf]
        %v9984 = vld [vmem:[#allocation7 + $0x6c] sm:$0xff]
        %v9985 = vld [vmem:[#allocation7 + $0x74] sm:$0xf]
        %v9986 = vld [vmem:[#allocation7 + $0x78] sm:$0xff]
        %v9987 = vld [vmem:[#allocation7 + $0x80] sm:$0xf]
        %v9988 = vld [vmem:[#allocation7 + $0x84] sm:$0xff]
        %v9989 = vld [vmem:[#allocation7 + $0x8c] sm:$0xf]
        %v9990 = vld [vmem:[#allocation7 + $0x90] sm:$0xff]
        %v9991 = vld [vmem:[#allocation7 + $0x98] sm:$0xf]
        %v9992 = vld [vmem:[#allocation7 + $0x9c] sm:$0xff]
        %v9993 = vld [vmem:[#allocation7 + $0xa4] sm:$0xf]
        %v9994 = vld [vmem:[#allocation7 + $0xa8] sm:$0xff]
        %v9995 = vld [vmem:[#allocation7 + $0xb0] sm:$0xf]
        %v9996 = vld [vmem:[#allocation7 + $0xb4] sm:$0xff]
        %v9997 = vld [vmem:[#allocation7 + $0xbc] sm:$0xf]
        %v9998 = vld [vmem:[#allocation7 + $0xc0] sm:$0xff]
        %v9999 = vld [vmem:[#allocation7 + $0xc8] sm:$0xf]
        %v10000 = vld [vmem:[#allocation7 + $0xcc] sm:$0xff]
        %v10001 = vld [vmem:[#allocation7 + $0xd4] sm:$0xf]
        %v10002 = vld [vmem:[#allocation7 + $0xd8] sm:$0xff]
        %v10003 = vld [vmem:[#allocation7 + $0xe0] sm:$0xf]
        %v10004 = vld [vmem:[#allocation7 + $0xe4] sm:$0xff]
        %v10005 = vld [vmem:[#allocation7 + $0xec] sm:$0xf]
        %v10046 = vunpack.c.l.b16 %v9966
        %v10047 = vunpack.c.h.b16 %v9966
        %v10048 = vunpack.c.l.b16 %v9967
        %v10049 = vunpack.c.l.b16 %v9968
        %v10050 = vunpack.c.h.b16 %v9968
        %v10051 = vunpack.c.l.b16 %v9969
        %v10052 = vunpack.c.l.b16 %v9970
        %v10053 = vunpack.c.h.b16 %v9970
        %v10054 = vunpack.c.l.b16 %v9971
        %v10055 = vunpack.c.l.b16 %v9972
        %v10056 = vunpack.c.h.b16 %v9972
        %v10057 = vunpack.c.l.b16 %v9973
        %v10058 = vunpack.c.l.b16 %v9974
        %v10059 = vunpack.c.h.b16 %v9974
        %v10060 = vunpack.c.l.b16 %v9975
        %v10061 = vunpack.c.l.b16 %v9976
        %v10062 = vunpack.c.h.b16 %v9976
        %v10063 = vunpack.c.l.b16 %v9977
        %v10064 = vunpack.c.l.b16 %v9978
        %v10065 = vunpack.c.h.b16 %v9978
        %v10066 = vunpack.c.l.b16 %v9979
        %v10067 = vunpack.c.l.b16 %v9980
        %v10068 = vunpack.c.h.b16 %v9980
        %v10069 = vunpack.c.l.b16 %v9981
        %v10070 = vunpack.c.l.b16 %v9982
        %v10071 = vunpack.c.h.b16 %v9982
        %v10072 = vunpack.c.l.b16 %v9983
        %v10073 = vunpack.c.l.b16 %v9984
        %v10074 = vunpack.c.h.b16 %v9984
        %v10075 = vunpack.c.l.b16 %v9985
        %v10076 = vunpack.c.l.b16 %v9986
        %v10077 = vunpack.c.h.b16 %v9986
        %v10078 = vunpack.c.l.b16 %v9987
        %v10079 = vunpack.c.l.b16 %v9988
        %v10080 = vunpack.c.h.b16 %v9988
        %v10081 = vunpack.c.l.b16 %v9989
        %v10082 = vunpack.c.l.b16 %v9990
        %v10083 = vunpack.c.h.b16 %v9990
        %v10084 = vunpack.c.l.b16 %v9991
        %v10085 = vunpack.c.l.b16 %v9992
        %v10086 = vunpack.c.h.b16 %v9992
        %v10087 = vunpack.c.l.b16 %v9993
        %v10088 = vunpack.c.l.b16 %v9994
        %v10089 = vunpack.c.h.b16 %v9994
        %v10090 = vunpack.c.l.b16 %v9995
        %v10091 = vunpack.c.l.b16 %v9996
        %v10092 = vunpack.c.h.b16 %v9996
        %v10093 = vunpack.c.l.b16 %v9997
        %v10094 = vunpack.c.l.b16 %v9998
        %v10095 = vunpack.c.h.b16 %v9998
        %v10096 = vunpack.c.l.b16 %v9999
        %v10097 = vunpack.c.l.b16 %v10000
        %v10098 = vunpack.c.h.b16 %v10000
        %v10099 = vunpack.c.l.b16 %v10001
        %v10100 = vunpack.c.l.b16 %v10002
        %v10101 = vunpack.c.h.b16 %v10002
        %v10102 = vunpack.c.l.b16 %v10003
        %v10103 = vunpack.c.l.b16 %v10004
        %v10104 = vunpack.c.h.b16 %v10004
        %v10105 = vunpack.c.l.b16 %v10005
        %v10106 = vpack.c.b16 %v10049, %v10046
        %v10107 = vpack.c.b16 %v10050, %v10047
        %v10108 = vpack.c.b16 %v10051, %v10048
        %v10109 = vpack.c.b16 %v10055, %v10052
        %v10110 = vpack.c.b16 %v10056, %v10053
        %v10111 = vpack.c.b16 %v10057, %v10054
        %v10112 = vpack.c.b16 %v10061, %v10058
        %v10113 = vpack.c.b16 %v10062, %v10059
        %v10114 = vpack.c.b16 %v10063, %v10060
        %v10115 = vpack.c.b16 %v10067, %v10064
        %v10116 = vpack.c.b16 %v10068, %v10065
        %v10117 = vpack.c.b16 %v10069, %v10066
        %v10118 = vpack.c.b16 %v10073, %v10070
        %v10119 = vpack.c.b16 %v10074, %v10071
        %v10120 = vpack.c.b16 %v10075, %v10072
        %v10121 = vpack.c.b16 %v10079, %v10076
        %v10122 = vpack.c.b16 %v10080, %v10077
        %v10123 = vpack.c.b16 %v10081, %v10078
        %v10124 = vpack.c.b16 %v10085, %v10082
        %v10125 = vpack.c.b16 %v10086, %v10083
        %v10126 = vpack.c.b16 %v10087, %v10084
        %v10127 = vpack.c.b16 %v10091, %v10088
        %v10128 = vpack.c.b16 %v10092, %v10089
        %v10129 = vpack.c.b16 %v10093, %v10090
        %v10130 = vpack.c.b16 %v10097, %v10094
        %v10131 = vpack.c.b16 %v10098, %v10095
        %v10132 = vpack.c.b16 %v10099, %v10096
        %v10133 = vpack.c.b16 %v10103, %v10100
        %v10134 = vpack.c.b16 %v10104, %v10101
        %v10135 = vpack.c.b16 %v10105, %v10102
        %v10167 = vsel %vm9808, %v9962, 0
        %10169 = vmatprep.subr.bf16.mxu0 %v10107
        %10170 = vmatpush1.bf16.msra.mxu0 %v10106
        %10171 = vmatprep.subr.bf16.mxu0 %v10110
        %10172 = vmatpush1.bf16.msra.mxu0 %v10109
        %10173 = vmatprep.subr.bf16.mxu0 %v10113
        %10174 = vmatpush1.bf16.msra.mxu0 %v10112
        %10175 = vmatprep.subr.bf16.mxu0 %v10116
        %10176 = vmatpush1.bf16.msra.mxu0 %v10115
        %10177 = vmatprep.subr.bf16.mxu0 %v10119
        %10178 = vmatpush1.bf16.msra.mxu0 %v10118
        %10179 = vmatprep.subr.bf16.mxu0 %v10122
        %10180 = vmatpush1.bf16.msra.mxu0 %v10121
        %10181 = vmatprep.subr.bf16.mxu0 %v10125
        %10182 = vmatpush1.bf16.msra.mxu0 %v10124
        %10183 = vmatprep.subr.bf16.mxu0 %v10128
        %10184 = vmatpush1.bf16.msra.mxu0 %v10127
        %10185 = vmatprep.subr.bf16.mxu0 %v10131
        %10186 = vmatpush1.bf16.msra.mxu0 %v10130
        %10187 = vmatprep.subr.bf16.mxu0 %v10134
        %10188 = vmatpush1.bf16.msra.mxu0 %v10133
        %10189 = vmatprep.subr.bf16.mxu0 0
        %10190 = vmatpush1.bf16.msra.mxu0 0
        %10191 = vmatprep.subr.bf16.mxu0 0
        %10192 = vmatpush1.bf16.msra.mxu0 0
        %10193 = vmatprep.subr.bf16.mxu0 0
        %10194 = vmatpush1.bf16.msra.mxu0 0
        %10195 = vmatprep.subr.bf16.mxu0 0
        %10196 = vmatpush1.bf16.msra.mxu0 0
        %10197 = vmatprep.subr.bf16.mxu0 0
        %10198 = vmatpush1.bf16.msra.mxu0 0
        %10199 = vmatprep.subr.bf16.mxu0 0
        %10200 = vmatpush1.bf16.msra.mxu0 0
        %10201 = vmatprep.mubr.bf16.mxu0 %v10167
        %10202 = vmatmul.mubr.bf16.gmra.mrb[0].mxu0 %v9961
        %v10203 = vpop.f32.mrb[0].mxu0
        %v10204 = vadd.f32 0.0, %v10203
        %v10205 = vpop.f32.mrb[0].mxu0
        %v10206 = vadd.f32 0.0, %v10205
        %v10207 = vpop.f32.mrb[0].mxu0
        %v10208 = vadd.f32 0.0, %v10207
        %v10209 = vpop.f32.mrb[0].mxu0
        %v10210 = vadd.f32 0.0, %v10209
        %10211 = vmatprep.mubr.bf16.mxu0 %v10167
        %10212 = vmatmul.mubr.bf16.gmra.mrb[0].mxu0 %v9963
        %v10213 = vpop.f32.mrb[0].mxu0
        %v10214 = vadd.f32 0.0, %v10213
        %v10215 = vpop.f32.mrb[0].mxu0
        %v10216 = vadd.f32 0.0, %v10215
        %v10217 = vpop.f32.mrb[0].mxu0
        %v10218 = vadd.f32 0.0, %v10217
        %v10219 = vpop.f32.mrb[0].mxu0
        %v10220 = vadd.f32 0.0, %v10219
        %10221 = vmatprep.mubr.bf16.mxu0 %v10167
        %10222 = vmatmul.mubr.bf16.gmra.mrb[0].mxu0 %v9964
        %v10223 = vpop.f32.mrb[0].mxu0
        %v10224 = vadd.f32 0.0, %v10223
        %v10225 = vpop.f32.mrb[0].mxu0
        %v10226 = vadd.f32 0.0, %v10225
        %v10227 = vpop.f32.mrb[0].mxu0
        %v10228 = vadd.f32 0.0, %v10227
        %v10229 = vpop.f32.mrb[0].mxu0
        %v10230 = vadd.f32 0.0, %v10229
        %10231 = vmatprep.mubr.bf16.mxu0 %v10167
        %10232 = vmatmul.mubr.bf16.gmra.mrb[0].mxu0 %v9965
        %v10233 = vpop.f32.mrb[0].mxu0
        %v10234 = vadd.f32 0.0, %v10233
        %v10235 = vpop.f32.mrb[0].mxu0
        %v10236 = vadd.f32 0.0, %v10235
        %v10237 = vpop.f32.mrb[0].mxu0
        %v10238 = vadd.f32 0.0, %v10237
        %v10239 = vpop.f32.mrb[0].mxu0
        %v10240 = vadd.f32 0.0, %v10239
        %10241 = vdwg.mxu0
        %10242 = vmatprep.subr.bf16.mxu0 0
        %10243 = vmatpush1.bf16.msra.mxu0 %v10108
        %10244 = vmatprep.subr.bf16.mxu0 0
        %10245 = vmatpush1.bf16.msra.mxu0 %v10111
        %10246 = vmatprep.subr.bf16.mxu0 0
        %10247 = vmatpush1.bf16.msra.mxu0 %v10114
        %10248 = vmatprep.subr.bf16.mxu0 0
        %10249 = vmatpush1.bf16.msra.mxu0 %v10117
        %10250 = vmatprep.subr.bf16.mxu0 0
        %10251 = vmatpush1.bf16.msra.mxu0 %v10120
        %10252 = vmatprep.subr.bf16.mxu0 0
        %10253 = vmatpush1.bf16.msra.mxu0 %v10123
        %10254 = vmatprep.subr.bf16.mxu0 0
        %10255 = vmatpush1.bf16.msra.mxu0 %v10126
        %10256 = vmatprep.subr.bf16.mxu0 0
        %10257 = vmatpush1.bf16.msra.mxu0 %v10129
        %10258 = vmatprep.subr.bf16.mxu0 0
        %10259 = vmatpush1.bf16.msra.mxu0 %v10132
        %10260 = vmatprep.subr.bf16.mxu0 0
        %10261 = vmatpush1.bf16.msra.mxu0 %v10135
        %10262 = vmatprep.subr.bf16.mxu0 0
        %10263 = vmatpush1.bf16.msra.mxu0 0
        %10264 = vmatprep.subr.bf16.mxu0 0
        %10265 = vmatpush1.bf16.msra.mxu0 0
        %10266 = vmatprep.subr.bf16.mxu0 0
        %10267 = vmatpush1.bf16.msra.mxu0 0
        %10268 = vmatprep.subr.bf16.mxu0 0
        %10269 = vmatpush1.bf16.msra.mxu0 0
        %10270 = vmatprep.subr.bf16.mxu0 0
        %10271 = vmatpush1.bf16.msra.mxu0 0
        %10272 = vmatprep.subr.bf16.mxu0 0
        %10273 = vmatpush1.bf16.msra.mxu0 0
        %10274 = vmatprep.mubr.bf16.mxu0 %v10167
        %10275 = vmatmul.mubr.bf16.gmra.mrb[0].mxu0 %v9961
        %v10276 = vpop.f32.mrb[0].mxu0
        %v10277 = vpop.f32.mrb[0].mxu0
        %v10278 = vpop.f32.mrb[0].mxu0
        %v10279 = vadd.f32 0.0, %v10278
        %v10280 = vpop.f32.mrb[0].mxu0
        %10281 = vmatprep.mubr.bf16.mxu0 %v10167
        %10282 = vmatmul.mubr.bf16.gmra.mrb[0].mxu0 %v9963
        %v10283 = vpop.f32.mrb[0].mxu0
        %v10284 = vadd.f32 0.0, %v10283
        %v10285 = vpop.f32.mrb[0].mxu0
        %v10286 = vpop.f32.mrb[0].mxu0
        %v10287 = vadd.f32 0.0, %v10286
        %v10288 = vpop.f32.mrb[0].mxu0
        %10289 = vmatprep.mubr.bf16.mxu0 %v10167
        %10290 = vmatmul.mubr.bf16.gmra.mrb[0].mxu0 %v9964
        %v10291 = vpop.f32.mrb[0].mxu0
        %v10292 = vadd.f32 0.0, %v10291
        %v10293 = vpop.f32.mrb[0].mxu0
        %v10294 = vpop.f32.mrb[0].mxu0
        %v10295 = vadd.f32 0.0, %v10294
        %v10296 = vpop.f32.mrb[0].mxu0
        %10297 = vmatprep.mubr.bf16.mxu0 %v10167
        %10298 = vmatmul.mubr.bf16.gmra.mrb[0].mxu0 %v9965
        %v10299 = vpop.f32.mrb[0].mxu0
        %v10300 = vadd.f32 0.0, %v10299
        %v10301 = vpop.f32.mrb[0].mxu0
        %v10302 = vpop.f32.mrb[0].mxu0
        %v10303 = vadd.f32 0.0, %v10302
        %v10304 = vpop.f32.mrb[0].mxu0
        %10305 = vdwg.mxu0
        %v10313 = vrot.slane %v10204, 7
        %v10314 = vrot.slane %v10208, 7
        %v10315 = vrot.slane %v10214, 7
        %v10316 = vrot.slane %v10218, 7
        %v10317 = vrot.slane %v10224, 7
        %v10318 = vrot.slane %v10228, 7
        %v10319 = vrot.slane %v10234, 7
        %v10327 = vsel %vm9608, 0.0, %v9604
        %v10328 = vsel %vm9608, 0.0, %v10313
        %v10329 = vsel %vm9608, 0.0, %v10314
        %v10330 = vsel %vm9608, 0.0, %v10315
        %v10331 = vsel %vm9608, 0.0, %v10316
        %v10332 = vsel %vm9608, 0.0, %v10317
        %v10333 = vsel %vm9608, 0.0, %v10318
        %v10334 = vsel %vm9608, 0.0, %v10319
        %v10335 = vadd.f32 %v10327, 0.0
        %v10336 = vadd.f32 %v10328, 0.0
        %v10337 = vadd.f32 %v10329, 0.0
        %v10338 = vadd.f32 %v10330, 0.0
        %v10339 = vadd.f32 %v10331, 0.0
        %v10340 = vadd.f32 %v10332, 0.0
        %v10341 = vadd.f32 %v10333, 0.0
        %v10342 = vadd.f32 %v10334, 0.0
        %10343 = vrot.lane.b32.xlu0 %v10204, 96
        %v10344 = vpop.permute.xlu0 %10343
        %10345 = vrot.lane.b32.xlu0 %v10208, 96
        %v10346 = vpop.permute.xlu0 %10345
        %10347 = vrot.lane.b32.xlu0 %v10214, 96
        %v10348 = vpop.permute.xlu0 %10347
        %10349 = vrot.lane.b32.xlu0 %v10218, 96
        %v10350 = vpop.permute.xlu0 %10349
        %10351 = vrot.lane.b32.xlu0 %v10224, 96
        %v10352 = vpop.permute.xlu0 %10351
        %10353 = vrot.lane.b32.xlu0 %v10228, 96
        %v10354 = vpop.permute.xlu0 %10353
        %10355 = vrot.lane.b32.xlu0 %v10234, 96
        %v10356 = vpop.permute.xlu0 %10355
        %v10364 = vadd.f32 %v10335, 0.0
        %v10365 = vadd.f32 %v10336, %v10344
        %v10366 = vadd.f32 %v10337, %v10346
        %v10367 = vadd.f32 %v10338, %v10348
        %v10368 = vadd.f32 %v10339, %v10350
        %v10369 = vadd.f32 %v10340, %v10352
        %v10370 = vadd.f32 %v10341, %v10354
        %v10371 = vadd.f32 %v10342, %v10356
        %10372 = vrot.lane.b32.xlu0 %v10204, 64
        %v10373 = vpop.permute.xlu0 %10372
        %10374 = vrot.lane.b32.xlu0 %v10208, 64
        %v10375 = vpop.permute.xlu0 %10374
        %10376 = vrot.lane.b32.xlu0 %v10214, 64
        %v10377 = vpop.permute.xlu0 %10376
        %10378 = vrot.lane.b32.xlu0 %v10218, 64
        %v10379 = vpop.permute.xlu0 %10378
        %10380 = vrot.lane.b32.xlu0 %v10224, 64
        %v10381 = vpop.permute.xlu0 %10380
        %10382 = vrot.lane.b32.xlu0 %v10228, 64
        %v10383 = vpop.permute.xlu0 %10382
        %10384 = vrot.lane.b32.xlu0 %v10234, 64
        %v10385 = vpop.permute.xlu0 %10384
        %v10386 = vrot.slane %v10373, 1
        %v10387 = vrot.slane %v10375, 1
        %v10388 = vrot.slane %v10377, 1
        %v10389 = vrot.slane %v10379, 1
        %v10390 = vrot.slane %v10381, 1
        %v10391 = vrot.slane %v10383, 1
        %v10392 = vrot.slane %v10385, 1
        %v10400 = vsel %vm9594, %v9590, 0.0
        %v10401 = vsel %vm9594, %v10386, 0.0
        %v10402 = vsel %vm9594, %v10387, 0.0
        %v10403 = vsel %vm9594, %v10388, 0.0
        %v10404 = vsel %vm9594, %v10389, 0.0
        %v10405 = vsel %vm9594, %v10390, 0.0
        %v10406 = vsel %vm9594, %v10391, 0.0
        %v10407 = vsel %vm9594, %v10392, 0.0
        %v10408 = vadd.f32 %v10364, %v10400
        %v10409 = vadd.f32 %v10365, %v10401
        %v10410 = vadd.f32 %v10366, %v10402
        %v10411 = vadd.f32 %v10367, %v10403
        %v10412 = vadd.f32 %v10368, %v10404
        %v10413 = vadd.f32 %v10369, %v10405
        %v10414 = vadd.f32 %v10370, %v10406
        %v10415 = vadd.f32 %v10371, %v10407
        %v10417 = vrot.slane %v10238, 7
        %10418 = vrot.lane.b32.xlu0 %v10313, 32
        %v10419 = vpop.permute.xlu0 %10418
        %10420 = vrot.lane.b32.xlu0 %v10314, 32
        %v10421 = vpop.permute.xlu0 %10420
        %10422 = vrot.lane.b32.xlu0 %v10315, 32
        %v10423 = vpop.permute.xlu0 %10422
        %10424 = vrot.lane.b32.xlu0 %v10316, 32
        %v10425 = vpop.permute.xlu0 %10424
        %10426 = vrot.lane.b32.xlu0 %v10317, 32
        %v10427 = vpop.permute.xlu0 %10426
        %10428 = vrot.lane.b32.xlu0 %v10318, 32
        %v10429 = vpop.permute.xlu0 %10428
        %10430 = vrot.lane.b32.xlu0 %v10319, 32
        %v10431 = vpop.permute.xlu0 %10430
        %10432 = vrot.lane.b32.xlu0 %v10417, 32
        %v10433 = vpop.permute.xlu0 %10432
        %v10442 = vsel %vm9608, 0.0, %v10419
        %v10443 = vsel %vm9608, 0.0, %v10421
        %v10444 = vsel %vm9608, 0.0, %v10423
        %v10445 = vsel %vm9608, 0.0, %v10425
        %v10446 = vsel %vm9608, 0.0, %v10427
        %v10447 = vsel %vm9608, 0.0, %v10429
        %v10448 = vsel %vm9608, 0.0, %v10431
        %v10449 = vsel %vm9608, 0.0, %v10433
        %v10450 = vadd.f32 %v10408, %v10442
        %v10451 = vadd.f32 %v10409, %v10443
        %v10452 = vadd.f32 %v10410, %v10444
        %v10453 = vadd.f32 %v10411, %v10445
        %v10454 = vadd.f32 %v10412, %v10446
        %v10455 = vadd.f32 %v10413, %v10447
        %v10456 = vadd.f32 %v10414, %v10448
        %v10457 = vadd.f32 %v10415, %v10449
        %v10458 = vadd.f32 %v10450, %v10206
        %v10459 = vadd.f32 %v10451, %v10210
        %v10460 = vadd.f32 %v10452, %v10216
        %v10461 = vadd.f32 %v10453, %v10220
        %v10462 = vadd.f32 %v10454, %v10226
        %v10463 = vadd.f32 %v10455, %v10230
        %v10464 = vadd.f32 %v10456, %v10236
        %v10465 = vadd.f32 %v10457, %v10240
        %v10474 = vrot.slane %v10206, 1
        %v10475 = vrot.slane %v10210, 1
        %v10476 = vrot.slane %v10216, 1
        %v10477 = vrot.slane %v10220, 1
        %v10478 = vrot.slane %v10226, 1
        %v10479 = vrot.slane %v10230, 1
        %v10480 = vrot.slane %v10236, 1
        %v10481 = vrot.slane %v10240, 1
        %v10490 = vsel %vm9594, %v10474, 0.0
        %v10491 = vsel %vm9594, %v10475, 0.0
        %v10492 = vsel %vm9594, %v10476, 0.0
        %v10493 = vsel %vm9594, %v10477, 0.0
        %v10494 = vsel %vm9594, %v10478, 0.0
        %v10495 = vsel %vm9594, %v10479, 0.0
        %v10496 = vsel %vm9594, %v10480, 0.0
        %v10497 = vsel %vm9594, %v10481, 0.0
        %10506 = vrot.lane.b32.xlu0 %v10490, 96
        %v10507 = vpop.permute.xlu0 %10506
        %10508 = vrot.lane.b32.xlu0 %v10491, 96
        %v10509 = vpop.permute.xlu0 %10508
        %10510 = vrot.lane.b32.xlu0 %v10492, 96
        %v10511 = vpop.permute.xlu0 %10510
        %10512 = vrot.lane.b32.xlu0 %v10493, 96
        %v10513 = vpop.permute.xlu0 %10512
        %10514 = vrot.lane.b32.xlu0 %v10494, 96
        %v10515 = vpop.permute.xlu0 %10514
        %10516 = vrot.lane.b32.xlu0 %v10495, 96
        %v10517 = vpop.permute.xlu0 %10516
        %10518 = vrot.lane.b32.xlu0 %v10496, 96
        %v10519 = vpop.permute.xlu0 %10518
        %10520 = vrot.lane.b32.xlu0 %v10497, 96
        %v10521 = vpop.permute.xlu0 %10520
        %v10530 = vadd.f32 %v10458, %v10507
        %v10531 = vadd.f32 %v10459, %v10509
        %v10532 = vadd.f32 %v10460, %v10511
        %v10533 = vadd.f32 %v10461, %v10513
        %v10534 = vadd.f32 %v10462, %v10515
        %v10535 = vadd.f32 %v10463, %v10517
        %v10536 = vadd.f32 %v10464, %v10519
        %v10537 = vadd.f32 %v10465, %v10521
        %v10538 = vrot.slane %v10210, 7
        %v10539 = vrot.slane %v10216, 7
        %v10540 = vrot.slane %v10220, 7
        %v10541 = vrot.slane %v10226, 7
        %v10542 = vrot.slane %v10230, 7
        %v10543 = vrot.slane %v10236, 7
        %v10544 = vrot.slane %v10240, 7
        %10545 = vrot.lane.b32.xlu0 %v10538, 64
        %v10546 = vpop.permute.xlu0 %10545
        %10547 = vrot.lane.b32.xlu0 %v10539, 64
        %v10548 = vpop.permute.xlu0 %10547
        %10549 = vrot.lane.b32.xlu0 %v10540, 64
        %v10550 = vpop.permute.xlu0 %10549
        %10551 = vrot.lane.b32.xlu0 %v10541, 64
        %v10552 = vpop.permute.xlu0 %10551
        %10553 = vrot.lane.b32.xlu0 %v10542, 64
        %v10554 = vpop.permute.xlu0 %10553
        %10555 = vrot.lane.b32.xlu0 %v10543, 64
        %v10556 = vpop.permute.xlu0 %10555
        %10557 = vrot.lane.b32.xlu0 %v10544, 64
        %v10558 = vpop.permute.xlu0 %10557
        %10559 = vrot.lane.b32.xlu0 %v9604, 64
        %v10560 = vpop.permute.xlu0 %10559
        %v10569 = vsel %vm9608, 0.0, %v10546
        %v10570 = vsel %vm9608, 0.0, %v10548
        %v10571 = vsel %vm9608, 0.0, %v10550
        %v10572 = vsel %vm9608, 0.0, %v10552
        %v10573 = vsel %vm9608, 0.0, %v10554
        %v10574 = vsel %vm9608, 0.0, %v10556
        %v10575 = vsel %vm9608, 0.0, %v10558
        %v10576 = vsel %vm9608, 0.0, %v10560
        %v10577 = vadd.f32 %v10530, %v10569
        %v10578 = vadd.f32 %v10531, %v10570
        %v10579 = vadd.f32 %v10532, %v10571
        %v10580 = vadd.f32 %v10533, %v10572
        %v10581 = vadd.f32 %v10534, %v10573
        %v10582 = vadd.f32 %v10535, %v10574
        %v10583 = vadd.f32 %v10536, %v10575
        %v10584 = vadd.f32 %v10537, %v10576
        %10585 = vrot.lane.b32.xlu0 %v10210, 32
        %v10586 = vpop.permute.xlu0 %10585
        %10587 = vrot.lane.b32.xlu0 %v10216, 32
        %v10588 = vpop.permute.xlu0 %10587
        %10589 = vrot.lane.b32.xlu0 %v10220, 32
        %v10590 = vpop.permute.xlu0 %10589
        %10591 = vrot.lane.b32.xlu0 %v10226, 32
        %v10592 = vpop.permute.xlu0 %10591
        %10593 = vrot.lane.b32.xlu0 %v10230, 32
        %v10594 = vpop.permute.xlu0 %10593
        %10595 = vrot.lane.b32.xlu0 %v10236, 32
        %v10596 = vpop.permute.xlu0 %10595
        %10597 = vrot.lane.b32.xlu0 %v10240, 32
        %v10598 = vpop.permute.xlu0 %10597
        %10599 = vrot.lane.b32.xlu0 0.0, 32
        %v10600 = vpop.permute.xlu0 %10599
        %v10609 = vadd.f32 %v10577, %v10586
        %v10610 = vadd.f32 %v10578, %v10588
        %v10611 = vadd.f32 %v10579, %v10590
        %v10612 = vadd.f32 %v10580, %v10592
        %v10613 = vadd.f32 %v10581, %v10594
        %v10614 = vadd.f32 %v10582, %v10596
        %v10615 = vadd.f32 %v10583, %v10598
        %v10616 = vadd.f32 %v10584, %v10600
        %v10624 = vrot.slane %v10279, 1
        %v10625 = vrot.slane %v10284, 1
        %v10626 = vrot.slane %v10287, 1
        %v10627 = vrot.slane %v10292, 1
        %v10628 = vrot.slane %v10295, 1
        %v10629 = vrot.slane %v10300, 1
        %v10630 = vrot.slane %v10303, 1
        %v10638 = vsel %vm9594, %v10624, 0.0
        %v10639 = vsel %vm9594, %v10625, 0.0
        %v10640 = vsel %vm9594, %v10626, 0.0
        %v10641 = vsel %vm9594, %v10627, 0.0
        %v10642 = vsel %vm9594, %v10628, 0.0
        %v10643 = vsel %vm9594, %v10629, 0.0
        %v10644 = vsel %vm9594, %v10630, 0.0
        %v10645 = vadd.f32 %v10609, %v10638
        %v10646 = vadd.f32 %v10610, %v10639
        %v10647 = vadd.f32 %v10611, %v10640
        %v10648 = vadd.f32 %v10612, %v10641
        %v10649 = vadd.f32 %v10613, %v10642
        %v10650 = vadd.f32 %v10614, %v10643
        %v10651 = vadd.f32 %v10615, %v10644
        %v10652 = vadd.f32 %v10616, %v10400
        %v10653 = vld [vmem:[#allocation8 + $0x5] sm:$0x1]
        %v10654 = vlaneseq
        %v10655 = vshrl.u32 %v10654, 7
        %v10656 = vsub.s32 0, %v10655
        %v10657 = vrot.slane %v10653, %v10656
        %v10658 = vadd.f32 %v10645, %v10657
        %v10659 = vadd.f32 %v10646, %v10657
        %v10660 = vadd.f32 %v10647, %v10657
        %v10661 = vadd.f32 %v10648, %v10657
        %v10662 = vadd.f32 %v10649, %v10657
        %v10663 = vadd.f32 %v10650, %v10657
        %v10664 = vadd.f32 %v10651, %v10657
        %v10665 = vadd.f32 %v10652, %v10657
        %v10666 = vmax.f32 %v10658, 0.0
        %v10667 = vmax.f32 %v10659, 0.0
        %v10668 = vmax.f32 %v10660, 0.0
        %v10669 = vmax.f32 %v10661, 0.0
        %v10670 = vmax.f32 %v10662, 0.0
        %v10671 = vmax.f32 %v10663, 0.0
        %v10672 = vmax.f32 %v10664, 0.0
        %v10673 = vmax.f32 %v10665, 0.0
        %10674 = vst.msk [vmem:[%s257] sm:$0xff] %vm9808, %v10666
        %10675 = vst.msk [vmem:[%s257 + $0x8] sm:$0xff] %vm9808, %v10667
        %10676 = vst.msk [vmem:[%s257 + $0x10] sm:$0xff] %vm9808, %v10668
        %10677 = vst.msk [vmem:[%s257 + $0x18] sm:$0xff] %vm9808, %v10669
        %10678 = vst.msk [vmem:[%s257 + $0x20] sm:$0xff] %vm9808, %v10670
        %10679 = vst.msk [vmem:[%s257 + $0x28] sm:$0xff] %vm9808, %v10671
        %10680 = vst.msk [vmem:[%s257 + $0x30] sm:$0xff] %vm9808, %v10672
        %10681 = vst.msk [vmem:[%s257 + $0x38] sm:$0xff] %vm9808, %v10673
        %s10682 = sand.u32 %s120, 1
        %s10683 = scalar_lea.sflag [#allocation4], %s10682
        %s10684 = sand.u32 %s120, 1
        %s10685 = smul.addr %s10684, 64
        %s10686 = scalar_lea.vmem [#allocation10], %s10685
        // Predicated region
        $region53: #{tpu_custom_call.1} parent=35 // pred_check
          %p10687 = pneg %p130
        $region54: #{tpu_custom_call.1} parent=35 // pred_check_branch
          %10689 = sbr.rel (%p10687) target = $region56
        $region55: #{tpu_custom_call.1} parent=35 // pred_region
          %s10691 = ssub.s32 1024, 1024
          %10692 = vsyncadd %s10683, %s10691
          %s10693 = smul.addr %s23, 8
          %s10694 = smul.addr %s10693, 128
          %s10695 = scalar_lea.hbm %s4, %s10694
          %s10696 = sshll.u32 %s10686, 4
          %s10697 = int_to_ptr.vmem [resolvable:$true] %s10696
          %10702 = dma.vmem_to_hbm [thread:$0]  %s10697, 1024, %s10695, %s10683, 128, 128, 8
        $region56: #{tpu_custom_call.1} parent=35 // pred_fallthru
          _
      $region36: #{tpu_custom_call.1} parent=5 // pred_fallthru
        _
      %p10703 = scmp.le.s32.totalorder 2, %s18
      // Predicated region
      $region57: #{tpu_custom_call.1} parent=5 // pred_check
        %p10704 = pneg %p10703
      $region58: #{tpu_custom_call.1} parent=5 // pred_check_branch
        %10706 = sbr.rel (%p10704) target = $region60
      $region59: #{tpu_custom_call.1} parent=5 // pred_region
        %s10707 = ssub.s32 %s18, 2
        // Predicated region
        $region61: #{tpu_custom_call.1} parent=59 // pred_check
          %p10708 = pneg %p136
        $region62: #{tpu_custom_call.1} parent=59 // pred_check_branch
          %10710 = sbr.rel (%p10708) target = $region64
        $region63: #{tpu_custom_call.1} parent=59 // pred_region
          %s10711 = sand.u32 %s121, 1
          %s10712 = scalar_lea.sflag [#allocation4], %s10711
          %s10713 = sand.u32 %s121, 1
          %s10714 = smul.addr %s10713, 64
          %s10715 = scalar_lea.vmem [#allocation10], %s10714
          %10716 = dma.done %s10712, 1024
        $region64: #{tpu_custom_call.1} parent=59 // pred_fallthru
          _
      $region60: #{tpu_custom_call.1} parent=5 // pred_fallthru
        _
    $region6: #{tpu_custom_call.1} parent=1 // loop_footer
      %s22 = sadd.s32 1, %s18
    $region7: #{tpu_custom_call.1} parent=1 // loop_footer_branch
      %17 = sbr.rel target = $region3
    $region8: #{tpu_custom_call.1} parent=1 // loop_exit
      _
    %10717 = vsyncpa [#allocation3], 1
    %s10718 = scalar_lea.sflag [#allocation3], 1
    %10719 = vsyncpa %s10718, 1
    %10720 = vsyncpa [#allocation6], 1
    %10721 = vsyncpa [#allocation9], 1
    %10722 = vsyncpa [#allocation4], 1
    %s10723 = scalar_lea.sflag [#allocation4], 1
    %10724 = vsyncpa %s10723, 1

</llo_original>
